<compile_context>
chip_gen: v5e
topology: v5e:2x2
jax: 0.10.0
libtpu: 0.0.40
codegen_flags: <defaults>
</compile_context>

<pallas_src>
from functools import partial

import jax
import jax.numpy as jnp
from jax.experimental import pallas as pl
from jax.experimental.pallas import tpu as pltpu

_SQUASH_EPS = 1e-7


def _round_up(x, m):
    return ((x + m - 1) // m) * m


def _routing_kernel(wt_ref, seg_ref, x_ref, o_ref, u_sc,
                    *, I, N, J, M, num_routing):
    """One batch tile (BT elements) per grid step.

    wt_ref : (I, N, J*M)   weights, wt[i, n, j*M+m] == W[i, j, n, m]  (constant)
    seg_ref: (J*M, J*M)    block-diagonal ones, seg[(j,m),(j',m')] = [j==j']
    x_ref  : (BT, I*N)     input capsules, x[b, i*N+n] == inputs[b, i, n]
    o_ref  : (BT, J*M)     squashed output capsules (lane-dense)
    u_sc   : (I, BT, J*M)  f32 VMEM scratch for u_hat
    """
    JM = J * M
    BT = o_ref.shape[0]

    x = x_ref[...].astype(jnp.float32)          # (BT, I*N)
    seg = seg_ref[...]                          # (JM, JM) f32, resident

    # ---- capsule transform on the MXU: for each input capsule i,
    #      u_hat_i (BT, JM) = x_i (BT, N) @ wt[i] (N, JM)
    for i in range(I):
        x_i = x[:, i * N:(i + 1) * N]           # static lane slice (BT, N)
        u_sc[i] = jnp.dot(x_i, wt_ref[i].astype(jnp.float32),
                          preferred_element_type=jnp.float32)
    u_hat = u_sc[...]                           # (I, BT, JM) f32

    def squash(s):                              # s: (BT, JM)
        # per-capsule ||s_j||^2, replicated across the m lanes of capsule j
        nsq = jnp.dot(s * s, seg, preferred_element_type=jnp.float32)
        scale = (nsq * pl.reciprocal(1.0 + nsq, approx=True)
                 * jax.lax.rsqrt(nsq + _SQUASH_EPS))
        return s * scale

    def agree(v):                               # v: (BT, JM) -> (I, BT, JM)
        # <v_j, u_hat[i,j,:]> replicated across m via one MXU matmul
        prod = (u_hat * v[None, :, :]).reshape(I * BT, JM)
        a = jnp.dot(prod, seg, preferred_element_type=jnp.float32)
        return a.reshape(I, BT, JM)

    # ---- routing iteration 0: logits are all zero -> softmax is uniform
    s = jnp.sum(u_hat, axis=0) * jnp.float32(1.0 / I)    # (BT, JM)
    v = squash(s)
    if num_routing > 1:
        b_log = agree(v)                        # b was 0, so b + agree == agree

    # ---- remaining routing iterations (static, unrolled)
    for r in range(1, num_routing):
        b_max = jnp.max(b_log, axis=0, keepdims=True)     # (1, BT, JM)
        e = jnp.exp(b_log - b_max)                        # (I, BT, JM)
        sum_e = jnp.sum(e, axis=0)                        # (BT, JM)
        s_un = jnp.sum(e * u_hat, axis=0)                 # (BT, JM)
        # never normalize c; normalize s with one EUP reciprocal on a row
        s = s_un * pl.reciprocal(sum_e, approx=True)
        v = squash(s)
        if r < num_routing - 1:
            b_log = b_log + agree(v)

    o_ref[...] = v.astype(o_ref.dtype)


# TODO(synk): the routing=False branch of the PyTorch module sums inputs_hat
# over axis=2 (the output-capsule axis), which changes the output shape and
# looks inconsistent with the routed path; only routing=True is implemented.
@partial(jax.jit, static_argnames=("num_routing", "batch_tile"))
def routing_forward(inputs, W, *, num_routing=3, batch_tile=128):
    """inputs: [B, input_num_capsule, input_dim_capsule]
       W     : [input_num_capsule, num_capsule, input_dim_capsule, dim_capsule]
       returns [B, num_capsule, dim_capsule]"""
    B, I, N = inputs.shape
    I2, J, N2, M = W.shape
    assert I == I2 and N == N2
    JM = J * M

    # ---- batch tile choice (static): multiple of 8 sublanes, capped.
    BT = min(_round_up(batch_tile, 8), _round_up(B, 8))
    B_pad = _round_up(B, BT)
    if B_pad != B:
        # zero padding is numerically inert (v = 0 for zero inputs)
        inputs = jnp.pad(inputs, ((0, B_pad - B), (0, 0), (0, 0)))
    n_steps = B_pad // BT

    # ---- one-time layout plumbing in the wrapper (not per-step work)
    # weights: (I,J,N,M) -> (I, N, J*M), lane-dense, wt[i,n,j*M+m] = W[i,j,n,m]
    wt = jnp.transpose(W, (0, 2, 1, 3)).reshape(I, N, JM)
    # inputs: (B, I, N) -> (B, I*N) so each batch-tile DMA is contiguous
    x_flat = inputs.reshape(B_pad, I * N)
    # block-diagonal segment matrix (built once, resident in VMEM)
    cap_id = jnp.arange(JM, dtype=jnp.int32) // M
    seg = (cap_id[:, None] == cap_id[None, :]).astype(jnp.float32)

    kernel = partial(_routing_kernel, I=I, N=N, J=J, M=M,
                     num_routing=num_routing)

    out_flat = pl.pallas_call(
        kernel,
        out_shape=jax.ShapeDtypeStruct((B_pad, JM), inputs.dtype),
        grid_spec=pltpu.PrefetchScalarGridSpec(
            num_scalar_prefetch=0,
            grid=(n_steps,),                       # BT batch elements / step
            in_specs=[
                # constant block index -> DMA'd once, kept in VMEM
                pl.BlockSpec((I, N, JM), lambda b: (0, 0, 0)),
                pl.BlockSpec((JM, JM), lambda b: (0, 0)),
                # per-step contiguous batch tile
                pl.BlockSpec((BT, I * N), lambda b: (b, 0)),
            ],
            out_specs=pl.BlockSpec((BT, JM), lambda b: (b, 0)),
            scratch_shapes=[pltpu.VMEM((I, BT, JM), jnp.float32)],
        ),
        compiler_params=pltpu.CompilerParams(
            # batch tiles are independent -> megacore-shardable on v7x,
            # neutral on v5e/v6e.
            dimension_semantics=("parallel",),
        ),
    )(wt, seg, x_flat)

    return out_flat[:B].reshape(B, J, M)


# ----------------------------- pure-JAX reference ---------------------------
def _squash_ref(s):
    sq = jnp.sum(jnp.square(s), axis=-1, keepdims=True)
    return s * (sq / (1.0 + sq)) / jnp.sqrt(sq + _SQUASH_EPS)


def routing_ref(inputs, W, num_routing=3):
    hp = jax.lax.Precision.HIGHEST
    u_hat = jnp.einsum('ijnm,bin->bijm', W, inputs, precision=hp)
    Bsz, I, J, M = u_hat.shape
    b = jnp.zeros((Bsz, I, J), u_hat.dtype)
    v = None
    for r in range(num_routing):
        c = jax.nn.softmax(b, axis=1)
        s = jnp.einsum('bij,bijm->bjm', c, u_hat, precision=hp)
        v = _squash_ref(s)
        if r < num_routing - 1:
            b = b + jnp.einsum('bjm,bijm->bij', v, u_hat, precision=hp)
    return v


if __name__ == "__main__":
    # Match kernel/reference matmul pass counts (avoid single-pass bf16 MXU
    # rounding dominating the comparison).
    jax.config.update("jax_default_matmul_precision", "highest")

    key = jax.random.PRNGKey(0)
    k1, k2 = jax.random.split(key)

    # batch=16, input_num_capsule=32, input_dim_capsule=8,
    # num_capsule=8, dim_capsule=16  (J*M = 128 -> lane-dense)
    B, I, N = 16, 32, 8
    J, M = 8, 16

    inputs = jax.random.normal(k1, (B, I, N), dtype=jnp.float32)
    W = jax.random.uniform(k2, (I, J, N, M), dtype=jnp.float32,
                           minval=-1.0, maxval=1.0)

    # batch_tile=8 -> 2 grid steps at this small demo size (exercises the
    # pipelined / megacore-shardable path); production would use the default.
    out = routing_forward(inputs, W, num_routing=3, batch_tile=8)
    jax.block_until_ready(out)

    ref = routing_ref(inputs, W, num_routing=3)
    assert out.shape == (B, J, M)
    max_err = float(jnp.max(jnp.abs(out - ref)))
    assert jnp.allclose(out, ref, atol=2e-3, rtol=2e-3), max_err

    print("KERNEL_OK")
</pallas_src>

<mosaic_0001>
module attributes {stable_mosaic.version = 11 : i64} {
  func.func @_routing_kernel(%arg0: i32, %arg1: memref<32x8x128xf32, #tpu.memory_space<vmem>>, %arg2: memref<128x128xf32, #tpu.memory_space<vmem>>, %arg3: memref<8x256xf32, #tpu.memory_space<vmem>>, %arg4: memref<8x128xf32, #tpu.memory_space<vmem>>, %arg5: memref<32x8x128xf32, #tpu.memory_space<vmem>>) attributes {dimension_semantics = [#tpu.dimension_semantics<parallel>], iteration_bounds = array<i64: 2>, scalar_prefetch = 0 : i64, scratch_operands = 1 : i64, tpu.core_type = #tpu.core_type<tc>, window_params = [{pipeline_mode = #tpu.pipeline_mode<synchronous>, transform_indices = @transform_0, window_bounds = array<i64: 32, 8, 128>}, {pipeline_mode = #tpu.pipeline_mode<synchronous>, transform_indices = @transform_1, window_bounds = array<i64: 128, 128>}, {transform_indices = @transform_2, window_bounds = array<i64: 8, 256>}, {transform_indices = @transform_3, window_bounds = array<i64: 8, 128>}]} {
    %c0 = arith.constant 0 : index
    %c0_0 = arith.constant 0 : index
    %0 = vector.load %arg3[%c0, %c0_0] : memref<8x256xf32, #tpu.memory_space<vmem>>, vector<8x256xf32>
    %c0_1 = arith.constant 0 : index
    %c0_2 = arith.constant 0 : index
    %1 = vector.load %arg2[%c0_1, %c0_2] : memref<128x128xf32, #tpu.memory_space<vmem>>, vector<128x128xf32>
    %2 = vector.extract_strided_slice %0 {offsets = [0, 0], sizes = [8, 8], strides = [1, 1]} : vector<8x256xf32> to vector<8x8xf32>
    %c0_3 = arith.constant 0 : index
    %c0_4 = arith.constant 0 : index
    %c0_5 = arith.constant 0 : index
    %3 = vector.load %arg1[%c0_3, %c0_4, %c0_5] : memref<32x8x128xf32, #tpu.memory_space<vmem>>, vector<1x8x128xf32>
    %4 = vector.shape_cast %3 : vector<1x8x128xf32> to vector<8x128xf32>
    %cst = arith.constant dense<0.000000e+00> : vector<8x128xf32>
    %5 = tpu.matmul %2, %4, %cst {dimension_numbers = #tpu.dot_dimension_numbers<[1], [0], [0], [1], [0, 0, 1, 1], [], []>, precision = #tpu.contract_precision<fp32>} : vector<8x8xf32>, vector<8x128xf32>, vector<8x128xf32> -> vector<8x128xf32>
    %c0_6 = arith.constant 0 : index
    %c0_7 = arith.constant 0 : index
    %c0_8 = arith.constant 0 : index
    %6 = vector.load %arg5[%c0_6, %c0_7, %c0_8] : memref<32x8x128xf32, #tpu.memory_space<vmem>>, vector<1x8x128xf32>
    %7 = vector.shape_cast %6 : vector<1x8x128xf32> to vector<8x128xf32>
    %8 = vector.shape_cast %5 : vector<8x128xf32> to vector<1x8x128xf32>
    tpu.vector_store %arg5[%c0_6, %c0_7, %c0_8], %8 {strides = array<i32>} : memref<32x8x128xf32, #tpu.memory_space<vmem>>, vector<1x8x128xf32>,
    %9 = vector.extract_strided_slice %0 {offsets = [0, 8], sizes = [8, 8], strides = [1, 1]} : vector<8x256xf32> to vector<8x8xf32>
    %c1 = arith.constant 1 : index
    %c0_9 = arith.constant 0 : index
    %c0_10 = arith.constant 0 : index
    %10 = vector.load %arg1[%c1, %c0_9, %c0_10] : memref<32x8x128xf32, #tpu.memory_space<vmem>>, vector<1x8x128xf32>
    %11 = vector.shape_cast %10 : vector<1x8x128xf32> to vector<8x128xf32>
    %cst_11 = arith.constant dense<0.000000e+00> : vector<8x128xf32>
    %12 = tpu.matmul %9, %11, %cst_11 {dimension_numbers = #tpu.dot_dimension_numbers<[1], [0], [0], [1], [0, 0, 1, 1], [], []>, precision = #tpu.contract_precision<fp32>} : vector<8x8xf32>, vector<8x128xf32>, vector<8x128xf32> -> vector<8x128xf32>
    %c1_12 = arith.constant 1 : index
    %c0_13 = arith.constant 0 : index
    %c0_14 = arith.constant 0 : index
    %13 = vector.load %arg5[%c1_12, %c0_13, %c0_14] : memref<32x8x128xf32, #tpu.memory_space<vmem>>, vector<1x8x128xf32>
    %14 = vector.shape_cast %13 : vector<1x8x128xf32> to vector<8x128xf32>
    %15 = vector.shape_cast %12 : vector<8x128xf32> to vector<1x8x128xf32>
    tpu.vector_store %arg5[%c1_12, %c0_13, %c0_14], %15 {strides = array<i32>} : memref<32x8x128xf32, #tpu.memory_space<vmem>>, vector<1x8x128xf32>,
    %16 = vector.extract_strided_slice %0 {offsets = [0, 16], sizes = [8, 8], strides = [1, 1]} : vector<8x256xf32> to vector<8x8xf32>
    %c2 = arith.constant 2 : index
    %c0_15 = arith.constant 0 : index
    %c0_16 = arith.constant 0 : index
    %17 = vector.load %arg1[%c2, %c0_15, %c0_16] : memref<32x8x128xf32, #tpu.memory_space<vmem>>, vector<1x8x128xf32>
    %18 = vector.shape_cast %17 : vector<1x8x128xf32> to vector<8x128xf32>
    %cst_17 = arith.constant dense<0.000000e+00> : vector<8x128xf32>
    %19 = tpu.matmul %16, %18, %cst_17 {dimension_numbers = #tpu.dot_dimension_numbers<[1], [0], [0], [1], [0, 0, 1, 1], [], []>, precision = #tpu.contract_precision<fp32>} : vector<8x8xf32>, vector<8x128xf32>, vector<8x128xf32> -> vector<8x128xf32>
    %c2_18 = arith.constant 2 : index
    %c0_19 = arith.constant 0 : index
    %c0_20 = arith.constant 0 : index
    %20 = vector.load %arg5[%c2_18, %c0_19, %c0_20] : memref<32x8x128xf32, #tpu.memory_space<vmem>>, vector<1x8x128xf32>
    %21 = vector.shape_cast %20 : vector<1x8x128xf32> to vector<8x128xf32>
    %22 = vector.shape_cast %19 : vector<8x128xf32> to vector<1x8x128xf32>
    tpu.vector_store %arg5[%c2_18, %c0_19, %c0_20], %22 {strides = array<i32>} : memref<32x8x128xf32, #tpu.memory_space<vmem>>, vector<1x8x128xf32>,
    %23 = vector.extract_strided_slice %0 {offsets = [0, 24], sizes = [8, 8], strides = [1, 1]} : vector<8x256xf32> to vector<8x8xf32>
    %c3 = arith.constant 3 : index
    %c0_21 = arith.constant 0 : index
    %c0_22 = arith.constant 0 : index
    %24 = vector.load %arg1[%c3, %c0_21, %c0_22] : memref<32x8x128xf32, #tpu.memory_space<vmem>>, vector<1x8x128xf32>
    %25 = vector.shape_cast %24 : vector<1x8x128xf32> to vector<8x128xf32>
    %cst_23 = arith.constant dense<0.000000e+00> : vector<8x128xf32>
    %26 = tpu.matmul %23, %25, %cst_23 {dimension_numbers = #tpu.dot_dimension_numbers<[1], [0], [0], [1], [0, 0, 1, 1], [], []>, precision = #tpu.contract_precision<fp32>} : vector<8x8xf32>, vector<8x128xf32>, vector<8x128xf32> -> vector<8x128xf32>
    %c3_24 = arith.constant 3 : index
    %c0_25 = arith.constant 0 : index
    %c0_26 = arith.constant 0 : index
    %27 = vector.load %arg5[%c3_24, %c0_25, %c0_26] : memref<32x8x128xf32, #tpu.memory_space<vmem>>, vector<1x8x128xf32>
    %28 = vector.shape_cast %27 : vector<1x8x128xf32> to vector<8x128xf32>
    %29 = vector.shape_cast %26 : vector<8x128xf32> to vector<1x8x128xf32>
    tpu.vector_store %arg5[%c3_24, %c0_25, %c0_26], %29 {strides = array<i32>} : memref<32x8x128xf32, #tpu.memory_space<vmem>>, vector<1x8x128xf32>,
    %30 = vector.extract_strided_slice %0 {offsets = [0, 32], sizes = [8, 8], strides = [1, 1]} : vector<8x256xf32> to vector<8x8xf32>
    %c4 = arith.constant 4 : index
    %c0_27 = arith.constant 0 : index
    %c0_28 = arith.constant 0 : index
    %31 = vector.load %arg1[%c4, %c0_27, %c0_28] : memref<32x8x128xf32, #tpu.memory_space<vmem>>, vector<1x8x128xf32>
    %32 = vector.shape_cast %31 : vector<1x8x128xf32> to vector<8x128xf32>
    %cst_29 = arith.constant dense<0.000000e+00> : vector<8x128xf32>
    %33 = tpu.matmul %30, %32, %cst_29 {dimension_numbers = #tpu.dot_dimension_numbers<[1], [0], [0], [1], [0, 0, 1, 1], [], []>, precision = #tpu.contract_precision<fp32>} : vector<8x8xf32>, vector<8x128xf32>, vector<8x128xf32> -> vector<8x128xf32>
    %c4_30 = arith.constant 4 : index
    %c0_31 = arith.constant 0 : index
    %c0_32 = arith.constant 0 : index
    %34 = vector.load %arg5[%c4_30, %c0_31, %c0_32] : memref<32x8x128xf32, #tpu.memory_space<vmem>>, vector<1x8x128xf32>
    %35 = vector.shape_cast %34 : vector<1x8x128xf32> to vector<8x128xf32>
    %36 = vector.shape_cast %33 : vector<8x128xf32> to vector<1x8x128xf32>
    tpu.vector_store %arg5[%c4_30, %c0_31, %c0_32], %36 {strides = array<i32>} : memref<32x8x128xf32, #tpu.memory_space<vmem>>, vector<1x8x128xf32>,
    %37 = vector.extract_strided_slice %0 {offsets = [0, 40], sizes = [8, 8], strides = [1, 1]} : vector<8x256xf32> to vector<8x8xf32>
    %c5 = arith.constant 5 : index
    %c0_33 = arith.constant 0 : index
    %c0_34 = arith.constant 0 : index
    %38 = vector.load %arg1[%c5, %c0_33, %c0_34] : memref<32x8x128xf32, #tpu.memory_space<vmem>>, vector<1x8x128xf32>
    %39 = vector.shape_cast %38 : vector<1x8x128xf32> to vector<8x128xf32>
    %cst_35 = arith.constant dense<0.000000e+00> : vector<8x128xf32>
    %40 = tpu.matmul %37, %39, %cst_35 {dimension_numbers = #tpu.dot_dimension_numbers<[1], [0], [0], [1], [0, 0, 1, 1], [], []>, precision = #tpu.contract_precision<fp32>} : vector<8x8xf32>, vector<8x128xf32>, vector<8x128xf32> -> vector<8x128xf32>
    %c5_36 = arith.constant 5 : index
    %c0_37 = arith.constant 0 : index
    %c0_38 = arith.constant 0 : index
    %41 = vector.load %arg5[%c5_36, %c0_37, %c0_38] : memref<32x8x128xf32, #tpu.memory_space<vmem>>, vector<1x8x128xf32>
    %42 = vector.shape_cast %41 : vector<1x8x128xf32> to vector<8x128xf32>
    %43 = vector.shape_cast %40 : vector<8x128xf32> to vector<1x8x128xf32>
    tpu.vector_store %arg5[%c5_36, %c0_37, %c0_38], %43 {strides = array<i32>} : memref<32x8x128xf32, #tpu.memory_space<vmem>>, vector<1x8x128xf32>,
    %44 = vector.extract_strided_slice %0 {offsets = [0, 48], sizes = [8, 8], strides = [1, 1]} : vector<8x256xf32> to vector<8x8xf32>
    %c6 = arith.constant 6 : index
    %c0_39 = arith.constant 0 : index
    %c0_40 = arith.constant 0 : index
    %45 = vector.load %arg1[%c6, %c0_39, %c0_40] : memref<32x8x128xf32, #tpu.memory_space<vmem>>, vector<1x8x128xf32>
    %46 = vector.shape_cast %45 : vector<1x8x128xf32> to vector<8x128xf32>
    %cst_41 = arith.constant dense<0.000000e+00> : vector<8x128xf32>
    %47 = tpu.matmul %44, %46, %cst_41 {dimension_numbers = #tpu.dot_dimension_numbers<[1], [0], [0], [1], [0, 0, 1, 1], [], []>, precision = #tpu.contract_precision<fp32>} : vector<8x8xf32>, vector<8x128xf32>, vector<8x128xf32> -> vector<8x128xf32>
    %c6_42 = arith.constant 6 : index
    %c0_43 = arith.constant 0 : index
    %c0_44 = arith.constant 0 : index
    %48 = vector.load %arg5[%c6_42, %c0_43, %c0_44] : memref<32x8x128xf32, #tpu.memory_space<vmem>>, vector<1x8x128xf32>
    %49 = vector.shape_cast %48 : vector<1x8x128xf32> to vector<8x128xf32>
    %50 = vector.shape_cast %47 : vector<8x128xf32> to vector<1x8x128xf32>
    tpu.vector_store %arg5[%c6_42, %c0_43, %c0_44], %50 {strides = array<i32>} : memref<32x8x128xf32, #tpu.memory_space<vmem>>, vector<1x8x128xf32>,
    %51 = vector.extract_strided_slice %0 {offsets = [0, 56], sizes = [8, 8], strides = [1, 1]} : vector<8x256xf32> to vector<8x8xf32>
    %c7 = arith.constant 7 : index
    %c0_45 = arith.constant 0 : index
    %c0_46 = arith.constant 0 : index
    %52 = vector.load %arg1[%c7, %c0_45, %c0_46] : memref<32x8x128xf32, #tpu.memory_space<vmem>>, vector<1x8x128xf32>
    %53 = vector.shape_cast %52 : vector<1x8x128xf32> to vector<8x128xf32>
    %cst_47 = arith.constant dense<0.000000e+00> : vector<8x128xf32>
    %54 = tpu.matmul %51, %53, %cst_47 {dimension_numbers = #tpu.dot_dimension_numbers<[1], [0], [0], [1], [0, 0, 1, 1], [], []>, precision = #tpu.contract_precision<fp32>} : vector<8x8xf32>, vector<8x128xf32>, vector<8x128xf32> -> vector<8x128xf32>
    %c7_48 = arith.constant 7 : index
    %c0_49 = arith.constant 0 : index
    %c0_50 = arith.constant 0 : index
    %55 = vector.load %arg5[%c7_48, %c0_49, %c0_50] : memref<32x8x128xf32, #tpu.memory_space<vmem>>, vector<1x8x128xf32>
    %56 = vector.shape_cast %55 : vector<1x8x128xf32> to vector<8x128xf32>
    %57 = vector.shape_cast %54 : vector<8x128xf32> to vector<1x8x128xf32>
    tpu.vector_store %arg5[%c7_48, %c0_49, %c0_50], %57 {strides = array<i32>} : memref<32x8x128xf32, #tpu.memory_space<vmem>>, vector<1x8x128xf32>,
    %58 = vector.extract_strided_slice %0 {offsets = [0, 64], sizes = [8, 8], strides = [1, 1]} : vector<8x256xf32> to vector<8x8xf32>
    %c8 = arith.constant 8 : index
    %c0_51 = arith.constant 0 : index
    %c0_52 = arith.constant 0 : index
    %59 = vector.load %arg1[%c8, %c0_51, %c0_52] : memref<32x8x128xf32, #tpu.memory_space<vmem>>, vector<1x8x128xf32>
    %60 = vector.shape_cast %59 : vector<1x8x128xf32> to vector<8x128xf32>
    %cst_53 = arith.constant dense<0.000000e+00> : vector<8x128xf32>
    %61 = tpu.matmul %58, %60, %cst_53 {dimension_numbers = #tpu.dot_dimension_numbers<[1], [0], [0], [1], [0, 0, 1, 1], [], []>, precision = #tpu.contract_precision<fp32>} : vector<8x8xf32>, vector<8x128xf32>, vector<8x128xf32> -> vector<8x128xf32>
    %c8_54 = arith.constant 8 : index
    %c0_55 = arith.constant 0 : index
    %c0_56 = arith.constant 0 : index
    %62 = vector.load %arg5[%c8_54, %c0_55, %c0_56] : memref<32x8x128xf32, #tpu.memory_space<vmem>>, vector<1x8x128xf32>
    %63 = vector.shape_cast %62 : vector<1x8x128xf32> to vector<8x128xf32>
    %64 = vector.shape_cast %61 : vector<8x128xf32> to vector<1x8x128xf32>
    tpu.vector_store %arg5[%c8_54, %c0_55, %c0_56], %64 {strides = array<i32>} : memref<32x8x128xf32, #tpu.memory_space<vmem>>, vector<1x8x128xf32>,
    %65 = vector.extract_strided_slice %0 {offsets = [0, 72], sizes = [8, 8], strides = [1, 1]} : vector<8x256xf32> to vector<8x8xf32>
    %c9 = arith.constant 9 : index
    %c0_57 = arith.constant 0 : index
    %c0_58 = arith.constant 0 : index
    %66 = vector.load %arg1[%c9, %c0_57, %c0_58] : memref<32x8x128xf32, #tpu.memory_space<vmem>>, vector<1x8x128xf32>
    %67 = vector.shape_cast %66 : vector<1x8x128xf32> to vector<8x128xf32>
    %cst_59 = arith.constant dense<0.000000e+00> : vector<8x128xf32>
    %68 = tpu.matmul %65, %67, %cst_59 {dimension_numbers = #tpu.dot_dimension_numbers<[1], [0], [0], [1], [0, 0, 1, 1], [], []>, precision = #tpu.contract_precision<fp32>} : vector<8x8xf32>, vector<8x128xf32>, vector<8x128xf32> -> vector<8x128xf32>
    %c9_60 = arith.constant 9 : index
    %c0_61 = arith.constant 0 : index
    %c0_62 = arith.constant 0 : index
    %69 = vector.load %arg5[%c9_60, %c0_61, %c0_62] : memref<32x8x128xf32, #tpu.memory_space<vmem>>, vector<1x8x128xf32>
    %70 = vector.shape_cast %69 : vector<1x8x128xf32> to vector<8x128xf32>
    %71 = vector.shape_cast %68 : vector<8x128xf32> to vector<1x8x128xf32>
    tpu.vector_store %arg5[%c9_60, %c0_61, %c0_62], %71 {strides = array<i32>} : memref<32x8x128xf32, #tpu.memory_space<vmem>>, vector<1x8x128xf32>,
    %72 = vector.extract_strided_slice %0 {offsets = [0, 80], sizes = [8, 8], strides = [1, 1]} : vector<8x256xf32> to vector<8x8xf32>
    %c10 = arith.constant 10 : index
    %c0_63 = arith.constant 0 : index
    %c0_64 = arith.constant 0 : index
    %73 = vector.load %arg1[%c10, %c0_63, %c0_64] : memref<32x8x128xf32, #tpu.memory_space<vmem>>, vector<1x8x128xf32>
    %74 = vector.shape_cast %73 : vector<1x8x128xf32> to vector<8x128xf32>
    %cst_65 = arith.constant dense<0.000000e+00> : vector<8x128xf32>
    %75 = tpu.matmul %72, %74, %cst_65 {dimension_numbers = #tpu.dot_dimension_numbers<[1], [0], [0], [1], [0, 0, 1, 1], [], []>, precision = #tpu.contract_precision<fp32>} : vector<8x8xf32>, vector<8x128xf32>, vector<8x128xf32> -> vector<8x128xf32>
    %c10_66 = arith.constant 10 : index
    %c0_67 = arith.constant 0 : index
    %c0_68 = arith.constant 0 : index
    %76 = vector.load %arg5[%c10_66, %c0_67, %c0_68] : memref<32x8x128xf32, #tpu.memory_space<vmem>>, vector<1x8x128xf32>
    %77 = vector.shape_cast %76 : vector<1x8x128xf32> to vector<8x128xf32>
    %78 = vector.shape_cast %75 : vector<8x128xf32> to vector<1x8x128xf32>
    tpu.vector_store %arg5[%c10_66, %c0_67, %c0_68], %78 {strides = array<i32>} : memref<32x8x128xf32, #tpu.memory_space<vmem>>, vector<1x8x128xf32>,
    %79 = vector.extract_strided_slice %0 {offsets = [0, 88], sizes = [8, 8], strides = [1, 1]} : vector<8x256xf32> to vector<8x8xf32>
    %c11 = arith.constant 11 : index
    %c0_69 = arith.constant 0 : index
    %c0_70 = arith.constant 0 : index
    %80 = vector.load %arg1[%c11, %c0_69, %c0_70] : memref<32x8x128xf32, #tpu.memory_space<vmem>>, vector<1x8x128xf32>
    %81 = vector.shape_cast %80 : vector<1x8x128xf32> to vector<8x128xf32>
    %cst_71 = arith.constant dense<0.000000e+00> : vector<8x128xf32>
    %82 = tpu.matmul %79, %81, %cst_71 {dimension_numbers = #tpu.dot_dimension_numbers<[1], [0], [0], [1], [0, 0, 1, 1], [], []>, precision = #tpu.contract_precision<fp32>} : vector<8x8xf32>, vector<8x128xf32>, vector<8x128xf32> -> vector<8x128xf32>
    %c11_72 = arith.constant 11 : index
    %c0_73 = arith.constant 0 : index
    %c0_74 = arith.constant 0 : index
    %83 = vector.load %arg5[%c11_72, %c0_73, %c0_74] : memref<32x8x128xf32, #tpu.memory_space<vmem>>, vector<1x8x128xf32>
    %84 = vector.shape_cast %83 : vector<1x8x128xf32> to vector<8x128xf32>
    %85 = vector.shape_cast %82 : vector<8x128xf32> to vector<1x8x128xf32>
    tpu.vector_store %arg5[%c11_72, %c0_73, %c0_74], %85 {strides = array<i32>} : memref<32x8x128xf32, #tpu.memory_space<vmem>>, vector<1x8x128xf32>,
    %86 = vector.extract_strided_slice %0 {offsets = [0, 96], sizes = [8, 8], strides = [1, 1]} : vector<8x256xf32> to vector<8x8xf32>
    %c12 = arith.constant 12 : index
    %c0_75 = arith.constant 0 : index
    %c0_76 = arith.constant 0 : index
    %87 = vector.load %arg1[%c12, %c0_75, %c0_76] : memref<32x8x128xf32, #tpu.memory_space<vmem>>, vector<1x8x128xf32>
    %88 = vector.shape_cast %87 : vector<1x8x128xf32> to vector<8x128xf32>
    %cst_77 = arith.constant dense<0.000000e+00> : vector<8x128xf32>
    %89 = tpu.matmul %86, %88, %cst_77 {dimension_numbers = #tpu.dot_dimension_numbers<[1], [0], [0], [1], [0, 0, 1, 1], [], []>, precision = #tpu.contract_precision<fp32>} : vector<8x8xf32>, vector<8x128xf32>, vector<8x128xf32> -> vector<8x128xf32>
    %c12_78 = arith.constant 12 : index
    %c0_79 = arith.constant 0 : index
    %c0_80 = arith.constant 0 : index
    %90 = vector.load %arg5[%c12_78, %c0_79, %c0_80] : memref<32x8x128xf32, #tpu.memory_space<vmem>>, vector<1x8x128xf32>
    %91 = vector.shape_cast %90 : vector<1x8x128xf32> to vector<8x128xf32>
    %92 = vector.shape_cast %89 : vector<8x128xf32> to vector<1x8x128xf32>
    tpu.vector_store %arg5[%c12_78, %c0_79, %c0_80], %92 {strides = array<i32>} : memref<32x8x128xf32, #tpu.memory_space<vmem>>, vector<1x8x128xf32>,
    %93 = vector.extract_strided_slice %0 {offsets = [0, 104], sizes = [8, 8], strides = [1, 1]} : vector<8x256xf32> to vector<8x8xf32>
    %c13 = arith.constant 13 : index
    %c0_81 = arith.constant 0 : index
    %c0_82 = arith.constant 0 : index
    %94 = vector.load %arg1[%c13, %c0_81, %c0_82] : memref<32x8x128xf32, #tpu.memory_space<vmem>>, vector<1x8x128xf32>
    %95 = vector.shape_cast %94 : vector<1x8x128xf32> to vector<8x128xf32>
    %cst_83 = arith.constant dense<0.000000e+00> : vector<8x128xf32>
    %96 = tpu.matmul %93, %95, %cst_83 {dimension_numbers = #tpu.dot_dimension_numbers<[1], [0], [0], [1], [0, 0, 1, 1], [], []>, precision = #tpu.contract_precision<fp32>} : vector<8x8xf32>, vector<8x128xf32>, vector<8x128xf32> -> vector<8x128xf32>
    %c13_84 = arith.constant 13 : index
    %c0_85 = arith.constant 0 : index
    %c0_86 = arith.constant 0 : index
    %97 = vector.load %arg5[%c13_84, %c0_85, %c0_86] : memref<32x8x128xf32, #tpu.memory_space<vmem>>, vector<1x8x128xf32>
    %98 = vector.shape_cast %97 : vector<1x8x128xf32> to vector<8x128xf32>
    %99 = vector.shape_cast %96 : vector<8x128xf32> to vector<1x8x128xf32>
    tpu.vector_store %arg5[%c13_84, %c0_85, %c0_86], %99 {strides = array<i32>} : memref<32x8x128xf32, #tpu.memory_space<vmem>>, vector<1x8x128xf32>,
    %100 = vector.extract_strided_slice %0 {offsets = [0, 112], sizes = [8, 8], strides = [1, 1]} : vector<8x256xf32> to vector<8x8xf32>
    %c14 = arith.constant 14 : index
    %c0_87 = arith.constant 0 : index
    %c0_88 = arith.constant 0 : index
    %101 = vector.load %arg1[%c14, %c0_87, %c0_88] : memref<32x8x128xf32, #tpu.memory_space<vmem>>, vector<1x8x128xf32>
    %102 = vector.shape_cast %101 : vector<1x8x128xf32> to vector<8x128xf32>
    %cst_89 = arith.constant dense<0.000000e+00> : vector<8x128xf32>
    %103 = tpu.matmul %100, %102, %cst_89 {dimension_numbers = #tpu.dot_dimension_numbers<[1], [0], [0], [1], [0, 0, 1, 1], [], []>, precision = #tpu.contract_precision<fp32>} : vector<8x8xf32>, vector<8x128xf32>, vector<8x128xf32> -> vector<8x128xf32>
    %c14_90 = arith.constant 14 : index
    %c0_91 = arith.constant 0 : index
    %c0_92 = arith.constant 0 : index
    %104 = vector.load %arg5[%c14_90, %c0_91, %c0_92] : memref<32x8x128xf32, #tpu.memory_space<vmem>>, vector<1x8x128xf32>
    %105 = vector.shape_cast %104 : vector<1x8x128xf32> to vector<8x128xf32>
    %106 = vector.shape_cast %103 : vector<8x128xf32> to vector<1x8x128xf32>
    tpu.vector_store %arg5[%c14_90, %c0_91, %c0_92], %106 {strides = array<i32>} : memref<32x8x128xf32, #tpu.memory_space<vmem>>, vector<1x8x128xf32>,
    %107 = vector.extract_strided_slice %0 {offsets = [0, 120], sizes = [8, 8], strides = [1, 1]} : vector<8x256xf32> to vector<8x8xf32>
    %c15 = arith.constant 15 : index
    %c0_93 = arith.constant 0 : index
    %c0_94 = arith.constant 0 : index
    %108 = vector.load %arg1[%c15, %c0_93, %c0_94] : memref<32x8x128xf32, #tpu.memory_space<vmem>>, vector<1x8x128xf32>
    %109 = vector.shape_cast %108 : vector<1x8x128xf32> to vector<8x128xf32>
    %cst_95 = arith.constant dense<0.000000e+00> : vector<8x128xf32>
    %110 = tpu.matmul %107, %109, %cst_95 {dimension_numbers = #tpu.dot_dimension_numbers<[1], [0], [0], [1], [0, 0, 1, 1], [], []>, precision = #tpu.contract_precision<fp32>} : vector<8x8xf32>, vector<8x128xf32>, vector<8x128xf32> -> vector<8x128xf32>
    %c15_96 = arith.constant 15 : index
    %c0_97 = arith.constant 0 : index
    %c0_98 = arith.constant 0 : index
    %111 = vector.load %arg5[%c15_96, %c0_97, %c0_98] : memref<32x8x128xf32, #tpu.memory_space<vmem>>, vector<1x8x128xf32>
    %112 = vector.shape_cast %111 : vector<1x8x128xf32> to vector<8x128xf32>
    %113 = vector.shape_cast %110 : vector<8x128xf32> to vector<1x8x128xf32>
    tpu.vector_store %arg5[%c15_96, %c0_97, %c0_98], %113 {strides = array<i32>} : memref<32x8x128xf32, #tpu.memory_space<vmem>>, vector<1x8x128xf32>,
    %114 = vector.extract_strided_slice %0 {offsets = [0, 128], sizes = [8, 8], strides = [1, 1]} : vector<8x256xf32> to vector<8x8xf32>
    %c16 = arith.constant 16 : index
    %c0_99 = arith.constant 0 : index
    %c0_100 = arith.constant 0 : index
    %115 = vector.load %arg1[%c16, %c0_99, %c0_100] : memref<32x8x128xf32, #tpu.memory_space<vmem>>, vector<1x8x128xf32>
    %116 = vector.shape_cast %115 : vector<1x8x128xf32> to vector<8x128xf32>
    %cst_101 = arith.constant dense<0.000000e+00> : vector<8x128xf32>
    %117 = tpu.matmul %114, %116, %cst_101 {dimension_numbers = #tpu.dot_dimension_numbers<[1], [0], [0], [1], [0, 0, 1, 1], [], []>, precision = #tpu.contract_precision<fp32>} : vector<8x8xf32>, vector<8x128xf32>, vector<8x128xf32> -> vector<8x128xf32>
    %c16_102 = arith.constant 16 : index
    %c0_103 = arith.constant 0 : index
    %c0_104 = arith.constant 0 : index
    %118 = vector.load %arg5[%c16_102, %c0_103, %c0_104] : memref<32x8x128xf32, #tpu.memory_space<vmem>>, vector<1x8x128xf32>
    %119 = vector.shape_cast %118 : vector<1x8x128xf32> to vector<8x128xf32>
    %120 = vector.shape_cast %117 : vector<8x128xf32> to vector<1x8x128xf32>
    tpu.vector_store %arg5[%c16_102, %c0_103, %c0_104], %120 {strides = array<i32>} : memref<32x8x128xf32, #tpu.memory_space<vmem>>, vector<1x8x128xf32>,
    %121 = vector.extract_strided_slice %0 {offsets = [0, 136], sizes = [8, 8], strides = [1, 1]} : vector<8x256xf32> to vector<8x8xf32>
    %c17 = arith.constant 17 : index
    %c0_105 = arith.constant 0 : index
    %c0_106 = arith.constant 0 : index
    %122 = vector.load %arg1[%c17, %c0_105, %c0_106] : memref<32x8x128xf32, #tpu.memory_space<vmem>>, vector<1x8x128xf32>
    %123 = vector.shape_cast %122 : vector<1x8x128xf32> to vector<8x128xf32>
    %cst_107 = arith.constant dense<0.000000e+00> : vector<8x128xf32>
    %124 = tpu.matmul %121, %123, %cst_107 {dimension_numbers = #tpu.dot_dimension_numbers<[1], [0], [0], [1], [0, 0, 1, 1], [], []>, precision = #tpu.contract_precision<fp32>} : vector<8x8xf32>, vector<8x128xf32>, vector<8x128xf32> -> vector<8x128xf32>
    %c17_108 = arith.constant 17 : index
    %c0_109 = arith.constant 0 : index
    %c0_110 = arith.constant 0 : index
    %125 = vector.load %arg5[%c17_108, %c0_109, %c0_110] : memref<32x8x128xf32, #tpu.memory_space<vmem>>, vector<1x8x128xf32>
    %126 = vector.shape_cast %125 : vector<1x8x128xf32> to vector<8x128xf32>
    %127 = vector.shape_cast %124 : vector<8x128xf32> to vector<1x8x128xf32>
    tpu.vector_store %arg5[%c17_108, %c0_109, %c0_110], %127 {strides = array<i32>} : memref<32x8x128xf32, #tpu.memory_space<vmem>>, vector<1x8x128xf32>,
    %128 = vector.extract_strided_slice %0 {offsets = [0, 144], sizes = [8, 8], strides = [1, 1]} : vector<8x256xf32> to vector<8x8xf32>
    %c18 = arith.constant 18 : index
    %c0_111 = arith.constant 0 : index
    %c0_112 = arith.constant 0 : index
    %129 = vector.load %arg1[%c18, %c0_111, %c0_112] : memref<32x8x128xf32, #tpu.memory_space<vmem>>, vector<1x8x128xf32>
    %130 = vector.shape_cast %129 : vector<1x8x128xf32> to vector<8x128xf32>
    %cst_113 = arith.constant dense<0.000000e+00> : vector<8x128xf32>
    %131 = tpu.matmul %128, %130, %cst_113 {dimension_numbers = #tpu.dot_dimension_numbers<[1], [0], [0], [1], [0, 0, 1, 1], [], []>, precision = #tpu.contract_precision<fp32>} : vector<8x8xf32>, vector<8x128xf32>, vector<8x128xf32> -> vector<8x128xf32>
    %c18_114 = arith.constant 18 : index
    %c0_115 = arith.constant 0 : index
    %c0_116 = arith.constant 0 : index
    %132 = vector.load %arg5[%c18_114, %c0_115, %c0_116] : memref<32x8x128xf32, #tpu.memory_space<vmem>>, vector<1x8x128xf32>
    %133 = vector.shape_cast %132 : vector<1x8x128xf32> to vector<8x128xf32>
    %134 = vector.shape_cast %131 : vector<8x128xf32> to vector<1x8x128xf32>
    tpu.vector_store %arg5[%c18_114, %c0_115, %c0_116], %134 {strides = array<i32>} : memref<32x8x128xf32, #tpu.memory_space<vmem>>, vector<1x8x128xf32>,
    %135 = vector.extract_strided_slice %0 {offsets = [0, 152], sizes = [8, 8], strides = [1, 1]} : vector<8x256xf32> to vector<8x8xf32>
    %c19 = arith.constant 19 : index
    %c0_117 = arith.constant 0 : index
    %c0_118 = arith.constant 0 : index
    %136 = vector.load %arg1[%c19, %c0_117, %c0_118] : memref<32x8x128xf32, #tpu.memory_space<vmem>>, vector<1x8x128xf32>
    %137 = vector.shape_cast %136 : vector<1x8x128xf32> to vector<8x128xf32>
    %cst_119 = arith.constant dense<0.000000e+00> : vector<8x128xf32>
    %138 = tpu.matmul %135, %137, %cst_119 {dimension_numbers = #tpu.dot_dimension_numbers<[1], [0], [0], [1], [0, 0, 1, 1], [], []>, precision = #tpu.contract_precision<fp32>} : vector<8x8xf32>, vector<8x128xf32>, vector<8x128xf32> -> vector<8x128xf32>
    %c19_120 = arith.constant 19 : index
    %c0_121 = arith.constant 0 : index
    %c0_122 = arith.constant 0 : index
    %139 = vector.load %arg5[%c19_120, %c0_121, %c0_122] : memref<32x8x128xf32, #tpu.memory_space<vmem>>, vector<1x8x128xf32>
    %140 = vector.shape_cast %139 : vector<1x8x128xf32> to vector<8x128xf32>
    %141 = vector.shape_cast %138 : vector<8x128xf32> to vector<1x8x128xf32>
    tpu.vector_store %arg5[%c19_120, %c0_121, %c0_122], %141 {strides = array<i32>} : memref<32x8x128xf32, #tpu.memory_space<vmem>>, vector<1x8x128xf32>,
    %142 = vector.extract_strided_slice %0 {offsets = [0, 160], sizes = [8, 8], strides = [1, 1]} : vector<8x256xf32> to vector<8x8xf32>
    %c20 = arith.constant 20 : index
    %c0_123 = arith.constant 0 : index
    %c0_124 = arith.constant 0 : index
    %143 = vector.load %arg1[%c20, %c0_123, %c0_124] : memref<32x8x128xf32, #tpu.memory_space<vmem>>, vector<1x8x128xf32>
    %144 = vector.shape_cast %143 : vector<1x8x128xf32> to vector<8x128xf32>
    %cst_125 = arith.constant dense<0.000000e+00> : vector<8x128xf32>
    %145 = tpu.matmul %142, %144, %cst_125 {dimension_numbers = #tpu.dot_dimension_numbers<[1], [0], [0], [1], [0, 0, 1, 1], [], []>, precision = #tpu.contract_precision<fp32>} : vector<8x8xf32>, vector<8x128xf32>, vector<8x128xf32> -> vector<8x128xf32>
    %c20_126 = arith.constant 20 : index
    %c0_127 = arith.constant 0 : index
    %c0_128 = arith.constant 0 : index
    %146 = vector.load %arg5[%c20_126, %c0_127, %c0_128] : memref<32x8x128xf32, #tpu.memory_space<vmem>>, vector<1x8x128xf32>
    %147 = vector.shape_cast %146 : vector<1x8x128xf32> to vector<8x128xf32>
    %148 = vector.shape_cast %145 : vector<8x128xf32> to vector<1x8x128xf32>
    tpu.vector_store %arg5[%c20_126, %c0_127, %c0_128], %148 {strides = array<i32>} : memref<32x8x128xf32, #tpu.memory_space<vmem>>, vector<1x8x128xf32>,
    %149 = vector.extract_strided_slice %0 {offsets = [0, 168], sizes = [8, 8], strides = [1, 1]} : vector<8x256xf32> to vector<8x8xf32>
    %c21 = arith.constant 21 : index
    %c0_129 = arith.constant 0 : index
    %c0_130 = arith.constant 0 : index
    %150 = vector.load %arg1[%c21, %c0_129, %c0_130] : memref<32x8x128xf32, #tpu.memory_space<vmem>>, vector<1x8x128xf32>
    %151 = vector.shape_cast %150 : vector<1x8x128xf32> to vector<8x128xf32>
    %cst_131 = arith.constant dense<0.000000e+00> : vector<8x128xf32>
    %152 = tpu.matmul %149, %151, %cst_131 {dimension_numbers = #tpu.dot_dimension_numbers<[1], [0], [0], [1], [0, 0, 1, 1], [], []>, precision = #tpu.contract_precision<fp32>} : vector<8x8xf32>, vector<8x128xf32>, vector<8x128xf32> -> vector<8x128xf32>
    %c21_132 = arith.constant 21 : index
    %c0_133 = arith.constant 0 : index
    %c0_134 = arith.constant 0 : index
    %153 = vector.load %arg5[%c21_132, %c0_133, %c0_134] : memref<32x8x128xf32, #tpu.memory_space<vmem>>, vector<1x8x128xf32>
    %154 = vector.shape_cast %153 : vector<1x8x128xf32> to vector<8x128xf32>
    %155 = vector.shape_cast %152 : vector<8x128xf32> to vector<1x8x128xf32>
    tpu.vector_store %arg5[%c21_132, %c0_133, %c0_134], %155 {strides = array<i32>} : memref<32x8x128xf32, #tpu.memory_space<vmem>>, vector<1x8x128xf32>,
    %156 = vector.extract_strided_slice %0 {offsets = [0, 176], sizes = [8, 8], strides = [1, 1]} : vector<8x256xf32> to vector<8x8xf32>
    %c22 = arith.constant 22 : index
    %c0_135 = arith.constant 0 : index
    %c0_136 = arith.constant 0 : index
    %157 = vector.load %arg1[%c22, %c0_135, %c0_136] : memref<32x8x128xf32, #tpu.memory_space<vmem>>, vector<1x8x128xf32>
    %158 = vector.shape_cast %157 : vector<1x8x128xf32> to vector<8x128xf32>
    %cst_137 = arith.constant dense<0.000000e+00> : vector<8x128xf32>
    %159 = tpu.matmul %156, %158, %cst_137 {dimension_numbers = #tpu.dot_dimension_numbers<[1], [0], [0], [1], [0, 0, 1, 1], [], []>, precision = #tpu.contract_precision<fp32>} : vector<8x8xf32>, vector<8x128xf32>, vector<8x128xf32> -> vector<8x128xf32>
    %c22_138 = arith.constant 22 : index
    %c0_139 = arith.constant 0 : index
    %c0_140 = arith.constant 0 : index
    %160 = vector.load %arg5[%c22_138, %c0_139, %c0_140] : memref<32x8x128xf32, #tpu.memory_space<vmem>>, vector<1x8x128xf32>
    %161 = vector.shape_cast %160 : vector<1x8x128xf32> to vector<8x128xf32>
    %162 = vector.shape_cast %159 : vector<8x128xf32> to vector<1x8x128xf32>
    tpu.vector_store %arg5[%c22_138, %c0_139, %c0_140], %162 {strides = array<i32>} : memref<32x8x128xf32, #tpu.memory_space<vmem>>, vector<1x8x128xf32>,
    %163 = vector.extract_strided_slice %0 {offsets = [0, 184], sizes = [8, 8], strides = [1, 1]} : vector<8x256xf32> to vector<8x8xf32>
    %c23 = arith.constant 23 : index
    %c0_141 = arith.constant 0 : index
    %c0_142 = arith.constant 0 : index
    %164 = vector.load %arg1[%c23, %c0_141, %c0_142] : memref<32x8x128xf32, #tpu.memory_space<vmem>>, vector<1x8x128xf32>
    %165 = vector.shape_cast %164 : vector<1x8x128xf32> to vector<8x128xf32>
    %cst_143 = arith.constant dense<0.000000e+00> : vector<8x128xf32>
    %166 = tpu.matmul %163, %165, %cst_143 {dimension_numbers = #tpu.dot_dimension_numbers<[1], [0], [0], [1], [0, 0, 1, 1], [], []>, precision = #tpu.contract_precision<fp32>} : vector<8x8xf32>, vector<8x128xf32>, vector<8x128xf32> -> vector<8x128xf32>
    %c23_144 = arith.constant 23 : index
    %c0_145 = arith.constant 0 : index
    %c0_146 = arith.constant 0 : index
    %167 = vector.load %arg5[%c23_144, %c0_145, %c0_146] : memref<32x8x128xf32, #tpu.memory_space<vmem>>, vector<1x8x128xf32>
    %168 = vector.shape_cast %167 : vector<1x8x128xf32> to vector<8x128xf32>
    %169 = vector.shape_cast %166 : vector<8x128xf32> to vector<1x8x128xf32>
    tpu.vector_store %arg5[%c23_144, %c0_145, %c0_146], %169 {strides = array<i32>} : memref<32x8x128xf32, #tpu.memory_space<vmem>>, vector<1x8x128xf32>,
    %170 = vector.extract_strided_slice %0 {offsets = [0, 192], sizes = [8, 8], strides = [1, 1]} : vector<8x256xf32> to vector<8x8xf32>
    %c24 = arith.constant 24 : index
    %c0_147 = arith.constant 0 : index
    %c0_148 = arith.constant 0 : index
    %171 = vector.load %arg1[%c24, %c0_147, %c0_148] : memref<32x8x128xf32, #tpu.memory_space<vmem>>, vector<1x8x128xf32>
    %172 = vector.shape_cast %171 : vector<1x8x128xf32> to vector<8x128xf32>
    %cst_149 = arith.constant dense<0.000000e+00> : vector<8x128xf32>
    %173 = tpu.matmul %170, %172, %cst_149 {dimension_numbers = #tpu.dot_dimension_numbers<[1], [0], [0], [1], [0, 0, 1, 1], [], []>, precision = #tpu.contract_precision<fp32>} : vector<8x8xf32>, vector<8x128xf32>, vector<8x128xf32> -> vector<8x128xf32>
    %c24_150 = arith.constant 24 : index
    %c0_151 = arith.constant 0 : index
    %c0_152 = arith.constant 0 : index
    %174 = vector.load %arg5[%c24_150, %c0_151, %c0_152] : memref<32x8x128xf32, #tpu.memory_space<vmem>>, vector<1x8x128xf32>
    %175 = vector.shape_cast %174 : vector<1x8x128xf32> to vector<8x128xf32>
    %176 = vector.shape_cast %173 : vector<8x128xf32> to vector<1x8x128xf32>
    tpu.vector_store %arg5[%c24_150, %c0_151, %c0_152], %176 {strides = array<i32>} : memref<32x8x128xf32, #tpu.memory_space<vmem>>, vector<1x8x128xf32>,
    %177 = vector.extract_strided_slice %0 {offsets = [0, 200], sizes = [8, 8], strides = [1, 1]} : vector<8x256xf32> to vector<8x8xf32>
    %c25 = arith.constant 25 : index
    %c0_153 = arith.constant 0 : index
    %c0_154 = arith.constant 0 : index
    %178 = vector.load %arg1[%c25, %c0_153, %c0_154] : memref<32x8x128xf32, #tpu.memory_space<vmem>>, vector<1x8x128xf32>
    %179 = vector.shape_cast %178 : vector<1x8x128xf32> to vector<8x128xf32>
    %cst_155 = arith.constant dense<0.000000e+00> : vector<8x128xf32>
    %180 = tpu.matmul %177, %179, %cst_155 {dimension_numbers = #tpu.dot_dimension_numbers<[1], [0], [0], [1], [0, 0, 1, 1], [], []>, precision = #tpu.contract_precision<fp32>} : vector<8x8xf32>, vector<8x128xf32>, vector<8x128xf32> -> vector<8x128xf32>
    %c25_156 = arith.constant 25 : index
    %c0_157 = arith.constant 0 : index
    %c0_158 = arith.constant 0 : index
    %181 = vector.load %arg5[%c25_156, %c0_157, %c0_158] : memref<32x8x128xf32, #tpu.memory_space<vmem>>, vector<1x8x128xf32>
    %182 = vector.shape_cast %181 : vector<1x8x128xf32> to vector<8x128xf32>
    %183 = vector.shape_cast %180 : vector<8x128xf32> to vector<1x8x128xf32>
    tpu.vector_store %arg5[%c25_156, %c0_157, %c0_158], %183 {strides = array<i32>} : memref<32x8x128xf32, #tpu.memory_space<vmem>>, vector<1x8x128xf32>,
    %184 = vector.extract_strided_slice %0 {offsets = [0, 208], sizes = [8, 8], strides = [1, 1]} : vector<8x256xf32> to vector<8x8xf32>
    %c26 = arith.constant 26 : index
    %c0_159 = arith.constant 0 : index
    %c0_160 = arith.constant 0 : index
    %185 = vector.load %arg1[%c26, %c0_159, %c0_160] : memref<32x8x128xf32, #tpu.memory_space<vmem>>, vector<1x8x128xf32>
    %186 = vector.shape_cast %185 : vector<1x8x128xf32> to vector<8x128xf32>
    %cst_161 = arith.constant dense<0.000000e+00> : vector<8x128xf32>
    %187 = tpu.matmul %184, %186, %cst_161 {dimension_numbers = #tpu.dot_dimension_numbers<[1], [0], [0], [1], [0, 0, 1, 1], [], []>, precision = #tpu.contract_precision<fp32>} : vector<8x8xf32>, vector<8x128xf32>, vector<8x128xf32> -> vector<8x128xf32>
    %c26_162 = arith.constant 26 : index
    %c0_163 = arith.constant 0 : index
    %c0_164 = arith.constant 0 : index
    %188 = vector.load %arg5[%c26_162, %c0_163, %c0_164] : memref<32x8x128xf32, #tpu.memory_space<vmem>>, vector<1x8x128xf32>
    %189 = vector.shape_cast %188 : vector<1x8x128xf32> to vector<8x128xf32>
    %190 = vector.shape_cast %187 : vector<8x128xf32> to vector<1x8x128xf32>
    tpu.vector_store %arg5[%c26_162, %c0_163, %c0_164], %190 {strides = array<i32>} : memref<32x8x128xf32, #tpu.memory_space<vmem>>, vector<1x8x128xf32>,
    %191 = vector.extract_strided_slice %0 {offsets = [0, 216], sizes = [8, 8], strides = [1, 1]} : vector<8x256xf32> to vector<8x8xf32>
    %c27 = arith.constant 27 : index
    %c0_165 = arith.constant 0 : index
    %c0_166 = arith.constant 0 : index
    %192 = vector.load %arg1[%c27, %c0_165, %c0_166] : memref<32x8x128xf32, #tpu.memory_space<vmem>>, vector<1x8x128xf32>
    %193 = vector.shape_cast %192 : vector<1x8x128xf32> to vector<8x128xf32>
    %cst_167 = arith.constant dense<0.000000e+00> : vector<8x128xf32>
    %194 = tpu.matmul %191, %193, %cst_167 {dimension_numbers = #tpu.dot_dimension_numbers<[1], [0], [0], [1], [0, 0, 1, 1], [], []>, precision = #tpu.contract_precision<fp32>} : vector<8x8xf32>, vector<8x128xf32>, vector<8x128xf32> -> vector<8x128xf32>
    %c27_168 = arith.constant 27 : index
    %c0_169 = arith.constant 0 : index
    %c0_170 = arith.constant 0 : index
    %195 = vector.load %arg5[%c27_168, %c0_169, %c0_170] : memref<32x8x128xf32, #tpu.memory_space<vmem>>, vector<1x8x128xf32>
    %196 = vector.shape_cast %195 : vector<1x8x128xf32> to vector<8x128xf32>
    %197 = vector.shape_cast %194 : vector<8x128xf32> to vector<1x8x128xf32>
    tpu.vector_store %arg5[%c27_168, %c0_169, %c0_170], %197 {strides = array<i32>} : memref<32x8x128xf32, #tpu.memory_space<vmem>>, vector<1x8x128xf32>,
    %198 = vector.extract_strided_slice %0 {offsets = [0, 224], sizes = [8, 8], strides = [1, 1]} : vector<8x256xf32> to vector<8x8xf32>
    %c28 = arith.constant 28 : index
    %c0_171 = arith.constant 0 : index
    %c0_172 = arith.constant 0 : index
    %199 = vector.load %arg1[%c28, %c0_171, %c0_172] : memref<32x8x128xf32, #tpu.memory_space<vmem>>, vector<1x8x128xf32>
    %200 = vector.shape_cast %199 : vector<1x8x128xf32> to vector<8x128xf32>
    %cst_173 = arith.constant dense<0.000000e+00> : vector<8x128xf32>
    %201 = tpu.matmul %198, %200, %cst_173 {dimension_numbers = #tpu.dot_dimension_numbers<[1], [0], [0], [1], [0, 0, 1, 1], [], []>, precision = #tpu.contract_precision<fp32>} : vector<8x8xf32>, vector<8x128xf32>, vector<8x128xf32> -> vector<8x128xf32>
    %c28_174 = arith.constant 28 : index
    %c0_175 = arith.constant 0 : index
    %c0_176 = arith.constant 0 : index
    %202 = vector.load %arg5[%c28_174, %c0_175, %c0_176] : memref<32x8x128xf32, #tpu.memory_space<vmem>>, vector<1x8x128xf32>
    %203 = vector.shape_cast %202 : vector<1x8x128xf32> to vector<8x128xf32>
    %204 = vector.shape_cast %201 : vector<8x128xf32> to vector<1x8x128xf32>
    tpu.vector_store %arg5[%c28_174, %c0_175, %c0_176], %204 {strides = array<i32>} : memref<32x8x128xf32, #tpu.memory_space<vmem>>, vector<1x8x128xf32>,
    %205 = vector.extract_strided_slice %0 {offsets = [0, 232], sizes = [8, 8], strides = [1, 1]} : vector<8x256xf32> to vector<8x8xf32>
    %c29 = arith.constant 29 : index
    %c0_177 = arith.constant 0 : index
    %c0_178 = arith.constant 0 : index
    %206 = vector.load %arg1[%c29, %c0_177, %c0_178] : memref<32x8x128xf32, #tpu.memory_space<vmem>>, vector<1x8x128xf32>
    %207 = vector.shape_cast %206 : vector<1x8x128xf32> to vector<8x128xf32>
    %cst_179 = arith.constant dense<0.000000e+00> : vector<8x128xf32>
    %208 = tpu.matmul %205, %207, %cst_179 {dimension_numbers = #tpu.dot_dimension_numbers<[1], [0], [0], [1], [0, 0, 1, 1], [], []>, precision = #tpu.contract_precision<fp32>} : vector<8x8xf32>, vector<8x128xf32>, vector<8x128xf32> -> vector<8x128xf32>
    %c29_180 = arith.constant 29 : index
    %c0_181 = arith.constant 0 : index
    %c0_182 = arith.constant 0 : index
    %209 = vector.load %arg5[%c29_180, %c0_181, %c0_182] : memref<32x8x128xf32, #tpu.memory_space<vmem>>, vector<1x8x128xf32>
    %210 = vector.shape_cast %209 : vector<1x8x128xf32> to vector<8x128xf32>
    %211 = vector.shape_cast %208 : vector<8x128xf32> to vector<1x8x128xf32>
    tpu.vector_store %arg5[%c29_180, %c0_181, %c0_182], %211 {strides = array<i32>} : memref<32x8x128xf32, #tpu.memory_space<vmem>>, vector<1x8x128xf32>,
    %212 = vector.extract_strided_slice %0 {offsets = [0, 240], sizes = [8, 8], strides = [1, 1]} : vector<8x256xf32> to vector<8x8xf32>
    %c30 = arith.constant 30 : index
    %c0_183 = arith.constant 0 : index
    %c0_184 = arith.constant 0 : index
    %213 = vector.load %arg1[%c30, %c0_183, %c0_184] : memref<32x8x128xf32, #tpu.memory_space<vmem>>, vector<1x8x128xf32>
    %214 = vector.shape_cast %213 : vector<1x8x128xf32> to vector<8x128xf32>
    %cst_185 = arith.constant dense<0.000000e+00> : vector<8x128xf32>
    %215 = tpu.matmul %212, %214, %cst_185 {dimension_numbers = #tpu.dot_dimension_numbers<[1], [0], [0], [1], [0, 0, 1, 1], [], []>, precision = #tpu.contract_precision<fp32>} : vector<8x8xf32>, vector<8x128xf32>, vector<8x128xf32> -> vector<8x128xf32>
    %c30_186 = arith.constant 30 : index
    %c0_187 = arith.constant 0 : index
    %c0_188 = arith.constant 0 : index
    %216 = vector.load %arg5[%c30_186, %c0_187, %c0_188] : memref<32x8x128xf32, #tpu.memory_space<vmem>>, vector<1x8x128xf32>
    %217 = vector.shape_cast %216 : vector<1x8x128xf32> to vector<8x128xf32>
    %218 = vector.shape_cast %215 : vector<8x128xf32> to vector<1x8x128xf32>
    tpu.vector_store %arg5[%c30_186, %c0_187, %c0_188], %218 {strides = array<i32>} : memref<32x8x128xf32, #tpu.memory_space<vmem>>, vector<1x8x128xf32>,
    %219 = vector.extract_strided_slice %0 {offsets = [0, 248], sizes = [8, 8], strides = [1, 1]} : vector<8x256xf32> to vector<8x8xf32>
    %c31 = arith.constant 31 : index
    %c0_189 = arith.constant 0 : index
    %c0_190 = arith.constant 0 : index
    %220 = vector.load %arg1[%c31, %c0_189, %c0_190] : memref<32x8x128xf32, #tpu.memory_space<vmem>>, vector<1x8x128xf32>
    %221 = vector.shape_cast %220 : vector<1x8x128xf32> to vector<8x128xf32>
    %cst_191 = arith.constant dense<0.000000e+00> : vector<8x128xf32>
    %222 = tpu.matmul %219, %221, %cst_191 {dimension_numbers = #tpu.dot_dimension_numbers<[1], [0], [0], [1], [0, 0, 1, 1], [], []>, precision = #tpu.contract_precision<fp32>} : vector<8x8xf32>, vector<8x128xf32>, vector<8x128xf32> -> vector<8x128xf32>
    %c31_192 = arith.constant 31 : index
    %c0_193 = arith.constant 0 : index
    %c0_194 = arith.constant 0 : index
    %223 = vector.load %arg5[%c31_192, %c0_193, %c0_194] : memref<32x8x128xf32, #tpu.memory_space<vmem>>, vector<1x8x128xf32>
    %224 = vector.shape_cast %223 : vector<1x8x128xf32> to vector<8x128xf32>
    %225 = vector.shape_cast %222 : vector<8x128xf32> to vector<1x8x128xf32>
    tpu.vector_store %arg5[%c31_192, %c0_193, %c0_194], %225 {strides = array<i32>} : memref<32x8x128xf32, #tpu.memory_space<vmem>>, vector<1x8x128xf32>,
    %c0_195 = arith.constant 0 : index
    %c0_196 = arith.constant 0 : index
    %c0_197 = arith.constant 0 : index
    %226 = vector.load %arg5[%c0_195, %c0_196, %c0_197] : memref<32x8x128xf32, #tpu.memory_space<vmem>>, vector<32x8x128xf32>
    %cst_198 = arith.constant dense<0.000000e+00> : vector<8x128xf32>
    %227 = vector.multi_reduction <add>, %226, %cst_198 [0] : vector<32x8x128xf32> to vector<8x128xf32>
    %cst_199 = arith.constant 3.125000e-02 : f32
    %228 = vector.broadcast %cst_199 : f32 to vector<8x128xf32>
    %229 = arith.mulf %227, %228 : vector<8x128xf32>
    %230 = arith.mulf %229, %229 : vector<8x128xf32>
    %cst_200 = arith.constant dense<0.000000e+00> : vector<8x128xf32>
    %231 = tpu.matmul %230, %1, %cst_200 {dimension_numbers = #tpu.dot_dimension_numbers<[1], [0], [0], [1], [0, 0, 1, 1], [], []>, precision = #tpu.contract_precision<fp32>} : vector<8x128xf32>, vector<128x128xf32>, vector<8x128xf32> -> vector<8x128xf32>
    %cst_201 = arith.constant 1.000000e+00 : f32
    %232 = vector.broadcast %cst_201 : f32 to vector<8x128xf32>
    %233 = arith.addf %232, %231 : vector<8x128xf32>
    %234 = tpu.reciprocal %233 {approx = true} : vector<8x128xf32> -> vector<8x128xf32>
    %235 = arith.mulf %231, %234 : vector<8x128xf32>
    %cst_202 = arith.constant 1.000000e-07 : f32
    %236 = vector.broadcast %cst_202 : f32 to vector<8x128xf32>
    %237 = arith.addf %231, %236 : vector<8x128xf32>
    %238 = math.rsqrt %237 : vector<8x128xf32>
    %239 = arith.mulf %235, %238 : vector<8x128xf32>
    %240 = arith.mulf %229, %239 : vector<8x128xf32>
    %241 = vector.shape_cast %240 : vector<8x128xf32> to vector<1x8x128xf32>
    %242 = vector.broadcast %241 : vector<1x8x128xf32> to vector<32x8x128xf32>
    %243 = arith.mulf %226, %242 : vector<32x8x128xf32>
    %244 = vector.shape_cast %243 : vector<32x8x128xf32> to vector<256x128xf32>
    %cst_203 = arith.constant dense<0.000000e+00> : vector<256x128xf32>
    %245 = tpu.matmul %244, %1, %cst_203 {dimension_numbers = #tpu.dot_dimension_numbers<[1], [0], [0], [1], [0, 0, 1, 1], [], []>, precision = #tpu.contract_precision<fp32>} : vector<256x128xf32>, vector<128x128xf32>, vector<256x128xf32> -> vector<256x128xf32>
    %246 = vector.shape_cast %245 : vector<256x128xf32> to vector<32x8x128xf32>
    %cst_204 = arith.constant dense<0xFF800000> : vector<8x128xf32>
    %247 = vector.multi_reduction <maximumf>, %246, %cst_204 [0] : vector<32x8x128xf32> to vector<8x128xf32>
    %248 = vector.shape_cast %247 : vector<8x128xf32> to vector<1x8x128xf32>
    %249 = vector.broadcast %248 : vector<1x8x128xf32> to vector<32x8x128xf32>
    %250 = arith.subf %246, %249 : vector<32x8x128xf32>
    %251 = math.exp %250 : vector<32x8x128xf32>
    %cst_205 = arith.constant dense<0.000000e+00> : vector<8x128xf32>
    %252 = vector.multi_reduction <add>, %251, %cst_205 [0] : vector<32x8x128xf32> to vector<8x128xf32>
    %253 = arith.mulf %251, %226 : vector<32x8x128xf32>
    %cst_206 = arith.constant dense<0.000000e+00> : vector<8x128xf32>
    %254 = vector.multi_reduction <add>, %253, %cst_206 [0] : vector<32x8x128xf32> to vector<8x128xf32>
    %255 = tpu.reciprocal %252 {approx = true} : vector<8x128xf32> -> vector<8x128xf32>
    %256 = arith.mulf %254, %255 : vector<8x128xf32>
    %257 = arith.mulf %256, %256 : vector<8x128xf32>
    %cst_207 = arith.constant dense<0.000000e+00> : vector<8x128xf32>
    %258 = tpu.matmul %257, %1, %cst_207 {dimension_numbers = #tpu.dot_dimension_numbers<[1], [0], [0], [1], [0, 0, 1, 1], [], []>, precision = #tpu.contract_precision<fp32>} : vector<8x128xf32>, vector<128x128xf32>, vector<8x128xf32> -> vector<8x128xf32>
    %cst_208 = arith.constant 1.000000e+00 : f32
    %259 = vector.broadcast %cst_208 : f32 to vector<8x128xf32>
    %260 = arith.addf %259, %258 : vector<8x128xf32>
    %261 = tpu.reciprocal %260 {approx = true} : vector<8x128xf32> -> vector<8x128xf32>
    %262 = arith.mulf %258, %261 : vector<8x128xf32>
    %cst_209 = arith.constant 1.000000e-07 : f32
    %263 = vector.broadcast %cst_209 : f32 to vector<8x128xf32>
    %264 = arith.addf %258, %263 : vector<8x128xf32>
    %265 = math.rsqrt %264 : vector<8x128xf32>
    %266 = arith.mulf %262, %265 : vector<8x128xf32>
    %267 = arith.mulf %256, %266 : vector<8x128xf32>
    %268 = vector.shape_cast %267 : vector<8x128xf32> to vector<1x8x128xf32>
    %269 = vector.broadcast %268 : vector<1x8x128xf32> to vector<32x8x128xf32>
    %270 = arith.mulf %226, %269 : vector<32x8x128xf32>
    %271 = vector.shape_cast %270 : vector<32x8x128xf32> to vector<256x128xf32>
    %cst_210 = arith.constant dense<0.000000e+00> : vector<256x128xf32>
    %272 = tpu.matmul %271, %1, %cst_210 {dimension_numbers = #tpu.dot_dimension_numbers<[1], [0], [0], [1], [0, 0, 1, 1], [], []>, precision = #tpu.contract_precision<fp32>} : vector<256x128xf32>, vector<128x128xf32>, vector<256x128xf32> -> vector<256x128xf32>
    %273 = vector.shape_cast %272 : vector<256x128xf32> to vector<32x8x128xf32>
    %274 = arith.addf %246, %273 : vector<32x8x128xf32>
    %cst_211 = arith.constant dense<0xFF800000> : vector<8x128xf32>
    %275 = vector.multi_reduction <maximumf>, %274, %cst_211 [0] : vector<32x8x128xf32> to vector<8x128xf32>
    %276 = vector.shape_cast %275 : vector<8x128xf32> to vector<1x8x128xf32>
    %277 = vector.broadcast %276 : vector<1x8x128xf32> to vector<32x8x128xf32>
    %278 = arith.subf %274, %277 : vector<32x8x128xf32>
    %279 = math.exp %278 : vector<32x8x128xf32>
    %cst_212 = arith.constant dense<0.000000e+00> : vector<8x128xf32>
    %280 = vector.multi_reduction <add>, %279, %cst_212 [0] : vector<32x8x128xf32> to vector<8x128xf32>
    %281 = arith.mulf %279, %226 : vector<32x8x128xf32>
    %cst_213 = arith.constant dense<0.000000e+00> : vector<8x128xf32>
    %282 = vector.multi_reduction <add>, %281, %cst_213 [0] : vector<32x8x128xf32> to vector<8x128xf32>
    %283 = tpu.reciprocal %280 {approx = true} : vector<8x128xf32> -> vector<8x128xf32>
    %284 = arith.mulf %282, %283 : vector<8x128xf32>
    %285 = arith.mulf %284, %284 : vector<8x128xf32>
    %cst_214 = arith.constant dense<0.000000e+00> : vector<8x128xf32>
    %286 = tpu.matmul %285, %1, %cst_214 {dimension_numbers = #tpu.dot_dimension_numbers<[1], [0], [0], [1], [0, 0, 1, 1], [], []>, precision = #tpu.contract_precision<fp32>} : vector<8x128xf32>, vector<128x128xf32>, vector<8x128xf32> -> vector<8x128xf32>
    %cst_215 = arith.constant 1.000000e+00 : f32
    %287 = vector.broadcast %cst_215 : f32 to vector<8x128xf32>
    %288 = arith.addf %287, %286 : vector<8x128xf32>
    %289 = tpu.reciprocal %288 {approx = true} : vector<8x128xf32> -> vector<8x128xf32>
    %290 = arith.mulf %286, %289 : vector<8x128xf32>
    %cst_216 = arith.constant 1.000000e-07 : f32
    %291 = vector.broadcast %cst_216 : f32 to vector<8x128xf32>
    %292 = arith.addf %286, %291 : vector<8x128xf32>
    %293 = math.rsqrt %292 : vector<8x128xf32>
    %294 = arith.mulf %290, %293 : vector<8x128xf32>
    %295 = arith.mulf %284, %294 : vector<8x128xf32>
    %c0_217 = arith.constant 0 : index
    %c0_218 = arith.constant 0 : index
    %296 = vector.load %arg4[%c0_217, %c0_218] : memref<8x128xf32, #tpu.memory_space<vmem>>, vector<8x128xf32>
    tpu.vector_store %arg4[%c0_217, %c0_218], %295 {strides = array<i32>} : memref<8x128xf32, #tpu.memory_space<vmem>>, vector<8x128xf32>,
    return
  }
  func.func @transform_0(%arg0: i32) -> (i32, i32, i32) {
    %c0_i32 = arith.constant 0 : i32
    %c0_i32_0 = arith.constant 0 : i32
    %c0_i32_1 = arith.constant 0 : i32
    %c0_i32_2 = arith.constant 0 : i32
    return %c0_i32, %c0_i32_0, %c0_i32_1 : i32, i32, i32
  }
  func.func @transform_1(%arg0: i32) -> (i32, i32) {
    %c0_i32 = arith.constant 0 : i32
    %c0_i32_0 = arith.constant 0 : i32
    %c0_i32_1 = arith.constant 0 : i32
    return %c0_i32, %c0_i32_0 : i32, i32
  }
  func.func @transform_2(%arg0: i32) -> (i32, i32) {
    %c0_i32 = arith.constant 0 : i32
    %c0_i32_0 = arith.constant 0 : i32
    return %arg0, %c0_i32 : i32, i32
  }
  func.func @transform_3(%arg0: i32) -> (i32, i32) {
    %c0_i32 = arith.constant 0 : i32
    %c0_i32_0 = arith.constant 0 : i32
    return %arg0, %c0_i32 : i32, i32
  }
}

</mosaic_0001>

<llo_original>
// kernel: routing_forward.1
$region0: #{routing_forward.1}
  #allocation0 [shape = 'u32[]', space=smem, size = 0x4, offset = 0x4, fixed_abs, tag = 'smem constant byte address 0x4 - core index']
  #allocation1 [shape = 'u32[72,128]{1,0:T(1,128)}', space=vmem, size = 0x9000, scoped, tag = 'internal scratch']
  #allocation2 [shape = 'f32[32,8,128]{2,1,0:T(8,128)}', space=vmem, size = 0x20000, scoped, tag = 'scratch operand']
  %s0 = inlined_call_operand.vmem [shape: f32[32,8,128], index: 0, kind: input, shape index: {}]
  %s1 = inlined_call_operand.vmem [shape: f32[128,128], index: 1, kind: input, shape index: {}]
  %s2 = inlined_call_operand.vmem [shape: f32[16,256], index: 2, kind: input, shape index: {}]
  %s3 = inlined_call_operand.vmem [shape: f32[16,128], index: 3, kind: output, shape index: {}]
  %s4 = sld [smem:[#allocation0]]
  $region45: #{routing_forward.1} parent=0
    _
  %s6 = ssub.s32 1, %s4
  %s7 = scalar_select 0, %s6, %s4
  loop: start=0, step=1, limit=4
  $region2: #{routing_forward.1} parent=0 // loop_pre_header
    _
  $region3: #{routing_forward.1} parent=0 // loop_header
    %s9 = sphi 0, %s13
    %p10 = scmp.ge.s32.totalorder %s9, 4
    %s17 = sphi 0, %s17
    %s19 = sphi 0, %s17
    %s20 = sphi 0, %s19
    %s34 = sphi 0, %s20
    %s38 = sphi 0, %s38
    %s40 = sphi 0, %s38
    %s41 = sphi 0, %s40
    %s55 = sphi 0, %s41
    %s61 = sphi 0, %s63
    %s64 = sphi 0, %s61
    %s65 = sphi 0, %s64
    %s81 = sphi 0, %s65
    %s87 = sphi 0, %s89
    %s90 = sphi 0, %s87
    %s91 = sphi 0, %s90
    %s107 = sphi 0, %s91
  $region4: #{routing_forward.1} parent=0 // loop_header_branch
    %12 = sbr.rel (%p10) target = $region8
  $region5: #{routing_forward.1} parent=0 // loop_body
    %s14 = ssub.s32 %s9, 1
    %s15 = ssub.s32 %s9, 2
    %s16 = sadd.s32 %s9, 1
    %s18 = sadd.s32 %s17, 1
    %p21 = scmp.eq.s32.totalorder %s9, 1
    %p22 = scmp.ne.s32.totalorder %s17, %s19
    %p23 = scmp.eq.s32.totalorder %s9, 0
    %p24 = por %p22, %p23
    %p25 = scmp.ne.s32.totalorder %s17, %s19
    %p26 = scmp.eq.s32.totalorder %s14, 1
    %p27 = por %p25, %p26
    %p28 = scmp.ne.s32.totalorder %s19, %s20
    %p29 = scmp.eq.s32.totalorder %s14, 0
    %p30 = por %p28, %p29
    %p31 = scmp.ne.s32.totalorder %s19, %s20
    %p32 = scmp.eq.s32.totalorder %s15, 1
    %p33 = por %p31, %p32
    %p35 = scmp.ne.s32.totalorder %s20, %s34
    %p36 = scmp.eq.s32.totalorder %s15, 0
    %p37 = por %p35, %p36
    %s39 = sadd.s32 %s38, 1
    %p42 = scmp.eq.s32.totalorder %s9, 1
    %p43 = scmp.ne.s32.totalorder %s38, %s40
    %p44 = scmp.eq.s32.totalorder %s9, 0
    %p45 = por %p43, %p44
    %p46 = scmp.ne.s32.totalorder %s38, %s40
    %p47 = scmp.eq.s32.totalorder %s14, 1
    %p48 = por %p46, %p47
    %p49 = scmp.ne.s32.totalorder %s40, %s41
    %p50 = scmp.eq.s32.totalorder %s14, 0
    %p51 = por %p49, %p50
    %p52 = scmp.ne.s32.totalorder %s40, %s41
    %p53 = scmp.eq.s32.totalorder %s15, 1
    %p54 = por %p52, %p53
    %p56 = scmp.ne.s32.totalorder %s41, %s55
    %p57 = scmp.eq.s32.totalorder %s15, 0
    %p58 = por %p56, %p57
    %s59 = ssub.s32 %s9, %s16
    %p60 = scmp.eq.s32.totalorder %s59, 0
    %s62 = sadd.s32 %s61, 1
    %s63 = scalar_select %p60, %s61, %s62
    %p66 = pneg %p60
    %p67 = scmp.eq.s32.totalorder %s9, 1
    %p68 = por %p66, %p67
    %p69 = scmp.ne.s32.totalorder %s61, %s64
    %p70 = scmp.eq.s32.totalorder %s9, 0
    %p71 = por %p69, %p70
    %p72 = scmp.ne.s32.totalorder %s61, %s64
    %p73 = scmp.eq.s32.totalorder %s14, 1
    %p74 = por %p72, %p73
    %p75 = scmp.ne.s32.totalorder %s64, %s65
    %p76 = scmp.eq.s32.totalorder %s14, 0
    %p77 = por %p75, %p76
    %p78 = scmp.ne.s32.totalorder %s64, %s65
    %p79 = scmp.eq.s32.totalorder %s15, 1
    %p80 = por %p78, %p79
    %p82 = scmp.ne.s32.totalorder %s65, %s81
    %p83 = scmp.eq.s32.totalorder %s15, 0
    %p84 = por %p82, %p83
    %s85 = ssub.s32 %s9, %s16
    %p86 = scmp.eq.s32.totalorder %s85, 0
    %s88 = sadd.s32 %s87, 1
    %s89 = scalar_select %p86, %s87, %s88
    %p92 = pneg %p86
    %p93 = scmp.eq.s32.totalorder %s9, 1
    %p94 = por %p92, %p93
    %p95 = scmp.ne.s32.totalorder %s87, %s90
    %p96 = scmp.eq.s32.totalorder %s9, 0
    %p97 = por %p95, %p96
    %p98 = scmp.ne.s32.totalorder %s87, %s90
    %p99 = scmp.eq.s32.totalorder %s14, 1
    %p100 = por %p98, %p99
    %p101 = scmp.ne.s32.totalorder %s90, %s91
    %p102 = scmp.eq.s32.totalorder %s14, 0
    %p103 = por %p101, %p102
    %p104 = scmp.ne.s32.totalorder %s90, %s91
    %p105 = scmp.eq.s32.totalorder %s15, 1
    %p106 = por %p104, %p105
    %p108 = scmp.ne.s32.totalorder %s91, %s107
    %p109 = scmp.eq.s32.totalorder %s15, 0
    %p110 = por %p108, %p109
    %p111 = scmp.le.s32.totalorder 1, %s9
    %p112 = scmp.lt.s32.totalorder %s9, 3
    %p113 = pnand %p111, %p112
    %p114 = pneg %p113
    // Predicated region
    $region9: #{routing_forward.1} parent=5 // pred_check
      _
    $region10: #{routing_forward.1} parent=5 // pred_check_branch
      %116 = sbr.rel (%p113) target = $region12
    $region11: #{routing_forward.1} parent=5 // pred_region
      %s117 = ssub.s32 %s9, 1
      // Predicated region
      $region13: #{routing_forward.1} parent=11 // pred_check
        %p118 = pneg %p30
      $region14: #{routing_forward.1} parent=11 // pred_check_branch
        %120 = sbr.rel (%p118) target = $region16
      $region15: #{routing_forward.1} parent=11 // pred_region
        _
      $region16: #{routing_forward.1} parent=11 // pred_fallthru
        _
      // Predicated region
      $region17: #{routing_forward.1} parent=11 // pred_check
        %p121 = pneg %p51
      $region18: #{routing_forward.1} parent=11 // pred_check_branch
        %123 = sbr.rel (%p121) target = $region20
      $region19: #{routing_forward.1} parent=11 // pred_region
        _
      $region20: #{routing_forward.1} parent=11 // pred_fallthru
        _
    $region12: #{routing_forward.1} parent=5 // pred_fallthru
      _
    %p124 = scmp.lt.s32.totalorder %s9, 2
    // Predicated region
    $region21: #{routing_forward.1} parent=5 // pred_check
      %p125 = pneg %p124
    $region22: #{routing_forward.1} parent=5 // pred_check_branch
      %127 = sbr.rel (%p125) target = $region24
    $region23: #{routing_forward.1} parent=5 // pred_region
      // Predicated region
      $region25: #{routing_forward.1} parent=23 // pred_check
        %p128 = pneg %p71
      $region26: #{routing_forward.1} parent=23 // pred_check_branch
        %130 = sbr.rel (%p128) target = $region28
      $region27: #{routing_forward.1} parent=23 // pred_region
        %p131 = scmp.lt.s32.totalorder %s9, 1
        %s132 = scalar_select %p131, %s9, 1
        %s133 = smul.addr %s132, 2
        %s134 = smul.addr %s133, 8
        %s135 = scalar_lea.vmem %s2, %s134
      $region28: #{routing_forward.1} parent=23 // pred_fallthru
        _
    $region24: #{routing_forward.1} parent=5 // pred_fallthru
      _
    %p136 = scmp.le.s32.totalorder 1, %s9
    %p137 = scmp.lt.s32.totalorder %s9, 3
    %p138 = pnand %p136, %p137
    %p139 = pneg %p138
    // Predicated region
    $region29: #{routing_forward.1} parent=5 // pred_check
      _
    $region30: #{routing_forward.1} parent=5 // pred_check_branch
      %141 = sbr.rel (%p138) target = $region32
    $region31: #{routing_forward.1} parent=5 // pred_region
      %s142 = ssub.s32 %s9, 1
      %p143 = pneg %p30
      %p144 = pneg %p27
      %p145 = pneg %p51
      %p146 = pneg %p48
      %p147 = scmp.lt.s32.totalorder %s14, 1
      %s148 = scalar_select %p147, %s14, 1
      %s149 = smul.addr %s148, 2
      %s150 = smul.addr %s149, 8
      %s151 = scalar_lea.vmem %s2, %s150
      %p152 = pneg %p77
      %p153 = pneg %p74
      %p154 = pneg %p103
      %p155 = pneg %p100
      %p156 = scmp.lt.s32.totalorder %s14, 1
      %s157 = scalar_select %p156, %s14, 1
      %s158 = smul.addr %s157, 8
      %s159 = scalar_lea.vmem %s3, %s158
      %p160 = scmp.lt.s32.totalorder %s14, 1
      %s161 = scalar_select %p160, %s14, 1
      %s162 = smul.addr %s161, 2
      %s163 = smul.addr %s162, 8
      %s164 = scalar_lea.vmem %s2, %s163
      %p165 = scmp.lt.s32.totalorder %s14, 1
      %s166 = scalar_select %p165, %s14, 1
      %s167 = smul.addr %s166, 8
      %s168 = scalar_lea.vmem %s3, %s167
      %v169 = vld [vmem:[%s164] sm:$0xff]
      %v170 = vld [vmem:[%s164 + $0x8] sm:$0xff]
      %v171 = vld [vmem:[%s1] sm:$0xff]
      %v172 = vld [vmem:[%s1 + $0x8] sm:$0xff]
      %v173 = vld [vmem:[%s1 + $0x10] sm:$0xff]
      %v174 = vld [vmem:[%s1 + $0x18] sm:$0xff]
      %v175 = vld [vmem:[%s1 + $0x20] sm:$0xff]
      %v176 = vld [vmem:[%s1 + $0x28] sm:$0xff]
      %v177 = vld [vmem:[%s1 + $0x30] sm:$0xff]
      %v178 = vld [vmem:[%s1 + $0x38] sm:$0xff]
      %v179 = vld [vmem:[%s1 + $0x40] sm:$0xff]
      %v180 = vld [vmem:[%s1 + $0x48] sm:$0xff]
      %v181 = vld [vmem:[%s1 + $0x50] sm:$0xff]
      %v182 = vld [vmem:[%s1 + $0x58] sm:$0xff]
      %v183 = vld [vmem:[%s1 + $0x60] sm:$0xff]
      %v184 = vld [vmem:[%s1 + $0x68] sm:$0xff]
      %v185 = vld [vmem:[%s1 + $0x70] sm:$0xff]
      %v186 = vld [vmem:[%s1 + $0x78] sm:$0xff]
      %v187 = vld [vmem:[%s0] sm:$0xff]
      %vm188 = vcmask 64512
      %v190 = vsel %vm188, %v169, 0
      %192 = vmatpush.msra.mxu0 0.0
      %193 = vmatpush.msra.mxu0 0.0
      %194 = vmatpush.msra.mxu0 0.0
      %195 = vmatpush.msra.mxu0 0.0
      %196 = vmatpush.msra.mxu0 0.0
      %197 = vmatpush.msra.mxu0 0.0
      %198 = vmatpush.msra.mxu0 0.0
      %199 = vmatpush.msra.mxu0 0.0
      %200 = vmatpush.msra.mxu0 0.0
      %201 = vmatpush.msra.mxu0 0.0
      %202 = vmatpush.msra.mxu0 0.0
      %203 = vmatpush.msra.mxu0 0.0
      %204 = vmatpush.msra.mxu0 0.0
      %205 = vmatpush.msra.mxu0 0.0
      %206 = vmatpush.msra.mxu0 0.0
      %v207 = vand.u32 %v187, 4294901760
      %208 = vmatpush.msra.mxu0 %v207
      %v209 = vand.u32 %v190, 4294901760
      %v210 = vsub.f32 %v190, %v209
      %v211 = vand.u32 %v210, 4294901760
      %v212 = vsub.f32 %v210, %v211
      %v213 = vand.u32 %v212, 4294901760
      %214 = vmatmul.f32.gmra.mxu0 %v213
      %v215 = vpop.f32.mrf.mxu0
      %v216 = vadd.f32 0.0, %v215
      %217 = vdwg.mxu0
      %218 = vmatpush.msra.mxu0 0.0
      %219 = vmatpush.msra.mxu0 0.0
      %220 = vmatpush.msra.mxu0 0.0
      %221 = vmatpush.msra.mxu0 0.0
      %222 = vmatpush.msra.mxu0 0.0
      %223 = vmatpush.msra.mxu0 0.0
      %224 = vmatpush.msra.mxu0 0.0
      %225 = vmatpush.msra.mxu0 0.0
      %226 = vmatpush.msra.mxu0 0.0
      %227 = vmatpush.msra.mxu0 0.0
      %228 = vmatpush.msra.mxu0 0.0
      %229 = vmatpush.msra.mxu0 0.0
      %230 = vmatpush.msra.mxu0 0.0
      %231 = vmatpush.msra.mxu0 0.0
      %232 = vmatpush.msra.mxu0 0.0
      %v233 = vand.u32 %v187, 4294901760
      %v234 = vsub.f32 %v187, %v233
      %v235 = vand.u32 %v234, 4294901760
      %v236 = vsub.f32 %v234, %v235
      %v237 = vand.u32 %v236, 4294901760
      %238 = vmatpush.msra.mxu0 %v237
      %v239 = vand.u32 %v190, 4294901760
      %240 = vmatmul.f32.gmra.mxu0 %v239
      %v241 = vpop.f32.mrf.mxu0
      %v242 = vadd.f32 %v216, %v241
      %243 = vdwg.mxu0
      %244 = vmatpush.msra.mxu0 0.0
      %245 = vmatpush.msra.mxu0 0.0
      %246 = vmatpush.msra.mxu0 0.0
      %247 = vmatpush.msra.mxu0 0.0
      %248 = vmatpush.msra.mxu0 0.0
      %249 = vmatpush.msra.mxu0 0.0
      %250 = vmatpush.msra.mxu0 0.0
      %251 = vmatpush.msra.mxu0 0.0
      %252 = vmatpush.msra.mxu0 0.0
      %253 = vmatpush.msra.mxu0 0.0
      %254 = vmatpush.msra.mxu0 0.0
      %255 = vmatpush.msra.mxu0 0.0
      %256 = vmatpush.msra.mxu0 0.0
      %257 = vmatpush.msra.mxu0 0.0
      %258 = vmatpush.msra.mxu0 0.0
      %v259 = vand.u32 %v187, 4294901760
      %v260 = vsub.f32 %v187, %v259
      %261 = vmatpush.msra.mxu0 %v260
      %v262 = vand.u32 %v190, 4294901760
      %v263 = vsub.f32 %v190, %v262
      %264 = vmatmul.f32.gmra.mxu0 %v263
      %v265 = vpop.f32.mrf.mxu0
      %v266 = vadd.f32 %v242, %v265
      %267 = vdwg.mxu0
      %268 = vmatpush.msra.mxu0 0.0
      %269 = vmatpush.msra.mxu0 0.0
      %270 = vmatpush.msra.mxu0 0.0
      %271 = vmatpush.msra.mxu0 0.0
      %272 = vmatpush.msra.mxu0 0.0
      %273 = vmatpush.msra.mxu0 0.0
      %274 = vmatpush.msra.mxu0 0.0
      %275 = vmatpush.msra.mxu0 0.0
      %276 = vmatpush.msra.mxu0 0.0
      %277 = vmatpush.msra.mxu0 0.0
      %278 = vmatpush.msra.mxu0 0.0
      %279 = vmatpush.msra.mxu0 0.0
      %280 = vmatpush.msra.mxu0 0.0
      %281 = vmatpush.msra.mxu0 0.0
      %282 = vmatpush.msra.mxu0 0.0
      %v283 = vand.u32 %v187, 4294901760
      %284 = vmatpush.msra.mxu0 %v283
      %v285 = vand.u32 %v190, 4294901760
      %v286 = vsub.f32 %v190, %v285
      %v287 = vand.u32 %v286, 4294901760
      %288 = vmatmul.f32.gmra.mxu0 %v287
      %v289 = vpop.f32.mrf.mxu0
      %v290 = vadd.f32 %v266, %v289
      %291 = vdwg.mxu0
      %292 = vmatpush.msra.mxu0 0.0
      %293 = vmatpush.msra.mxu0 0.0
      %294 = vmatpush.msra.mxu0 0.0
      %295 = vmatpush.msra.mxu0 0.0
      %296 = vmatpush.msra.mxu0 0.0
      %297 = vmatpush.msra.mxu0 0.0
      %298 = vmatpush.msra.mxu0 0.0
      %299 = vmatpush.msra.mxu0 0.0
      %300 = vmatpush.msra.mxu0 0.0
      %301 = vmatpush.msra.mxu0 0.0
      %302 = vmatpush.msra.mxu0 0.0
      %303 = vmatpush.msra.mxu0 0.0
      %304 = vmatpush.msra.mxu0 0.0
      %305 = vmatpush.msra.mxu0 0.0
      %306 = vmatpush.msra.mxu0 0.0
      %v307 = vand.u32 %v187, 4294901760
      %v308 = vsub.f32 %v187, %v307
      %v309 = vand.u32 %v308, 4294901760
      %310 = vmatpush.msra.mxu0 %v309
      %v311 = vand.u32 %v190, 4294901760
      %312 = vmatmul.f32.gmra.mxu0 %v311
      %v313 = vpop.f32.mrf.mxu0
      %v314 = vadd.f32 %v290, %v313
      %315 = vdwg.mxu0
      %316 = vmatpush.msra.mxu0 0.0
      %317 = vmatpush.msra.mxu0 0.0
      %318 = vmatpush.msra.mxu0 0.0
      %319 = vmatpush.msra.mxu0 0.0
      %320 = vmatpush.msra.mxu0 0.0
      %321 = vmatpush.msra.mxu0 0.0
      %322 = vmatpush.msra.mxu0 0.0
      %323 = vmatpush.msra.mxu0 0.0
      %324 = vmatpush.msra.mxu0 0.0
      %325 = vmatpush.msra.mxu0 0.0
      %326 = vmatpush.msra.mxu0 0.0
      %327 = vmatpush.msra.mxu0 0.0
      %328 = vmatpush.msra.mxu0 0.0
      %329 = vmatpush.msra.mxu0 0.0
      %330 = vmatpush.msra.mxu0 0.0
      %v331 = vand.u32 %v187, 4294901760
      %332 = vmatpush.msra.mxu0 %v331
      %v333 = vand.u32 %v190, 4294901760
      %334 = vmatmul.f32.gmra.mxu0 %v333
      %v335 = vpop.f32.mrf.mxu0
      %v336 = vadd.f32 %v314, %v335
      %337 = vdwg.mxu0
      %338 = vst [vmem:[#allocation2] sm:$0xff] %v336
      %s339 = scalar_lea.vmem %s0, 8
      %v340 = vld [vmem:[%s339] sm:$0xff]
      %341 = vrot.lane.b32.xlu0 %v169, 120
      %v342 = vpop.permute.xlu0 %341
      %v343 = vsel %vm188, %v342, 0
      %345 = vmatpush.msra.mxu0 0.0
      %346 = vmatpush.msra.mxu0 0.0
      %347 = vmatpush.msra.mxu0 0.0
      %348 = vmatpush.msra.mxu0 0.0
      %349 = vmatpush.msra.mxu0 0.0
      %350 = vmatpush.msra.mxu0 0.0
      %351 = vmatpush.msra.mxu0 0.0
      %352 = vmatpush.msra.mxu0 0.0
      %353 = vmatpush.msra.mxu0 0.0
      %354 = vmatpush.msra.mxu0 0.0
      %355 = vmatpush.msra.mxu0 0.0
      %356 = vmatpush.msra.mxu0 0.0
      %357 = vmatpush.msra.mxu0 0.0
      %358 = vmatpush.msra.mxu0 0.0
      %359 = vmatpush.msra.mxu0 0.0
      %v360 = vand.u32 %v340, 4294901760
      %361 = vmatpush.msra.mxu0 %v360
      %v362 = vand.u32 %v343, 4294901760
      %v363 = vsub.f32 %v343, %v362
      %v364 = vand.u32 %v363, 4294901760
      %v365 = vsub.f32 %v363, %v364
      %v366 = vand.u32 %v365, 4294901760
      %367 = vmatmul.f32.gmra.mxu0 %v366
      %v368 = vpop.f32.mrf.mxu0
      %v369 = vadd.f32 0.0, %v368
      %370 = vdwg.mxu0
      %371 = vmatpush.msra.mxu0 0.0
      %372 = vmatpush.msra.mxu0 0.0
      %373 = vmatpush.msra.mxu0 0.0
      %374 = vmatpush.msra.mxu0 0.0
      %375 = vmatpush.msra.mxu0 0.0
      %376 = vmatpush.msra.mxu0 0.0
      %377 = vmatpush.msra.mxu0 0.0
      %378 = vmatpush.msra.mxu0 0.0
      %379 = vmatpush.msra.mxu0 0.0
      %380 = vmatpush.msra.mxu0 0.0
      %381 = vmatpush.msra.mxu0 0.0
      %382 = vmatpush.msra.mxu0 0.0
      %383 = vmatpush.msra.mxu0 0.0
      %384 = vmatpush.msra.mxu0 0.0
      %385 = vmatpush.msra.mxu0 0.0
      %v386 = vand.u32 %v340, 4294901760
      %v387 = vsub.f32 %v340, %v386
      %v388 = vand.u32 %v387, 4294901760
      %v389 = vsub.f32 %v387, %v388
      %v390 = vand.u32 %v389, 4294901760
      %391 = vmatpush.msra.mxu0 %v390
      %v392 = vand.u32 %v343, 4294901760
      %393 = vmatmul.f32.gmra.mxu0 %v392
      %v394 = vpop.f32.mrf.mxu0
      %v395 = vadd.f32 %v369, %v394
      %396 = vdwg.mxu0
      %397 = vmatpush.msra.mxu0 0.0
      %398 = vmatpush.msra.mxu0 0.0
      %399 = vmatpush.msra.mxu0 0.0
      %400 = vmatpush.msra.mxu0 0.0
      %401 = vmatpush.msra.mxu0 0.0
      %402 = vmatpush.msra.mxu0 0.0
      %403 = vmatpush.msra.mxu0 0.0
      %404 = vmatpush.msra.mxu0 0.0
      %405 = vmatpush.msra.mxu0 0.0
      %406 = vmatpush.msra.mxu0 0.0
      %407 = vmatpush.msra.mxu0 0.0
      %408 = vmatpush.msra.mxu0 0.0
      %409 = vmatpush.msra.mxu0 0.0
      %410 = vmatpush.msra.mxu0 0.0
      %411 = vmatpush.msra.mxu0 0.0
      %v412 = vand.u32 %v340, 4294901760
      %v413 = vsub.f32 %v340, %v412
      %414 = vmatpush.msra.mxu0 %v413
      %v415 = vand.u32 %v343, 4294901760
      %v416 = vsub.f32 %v343, %v415
      %417 = vmatmul.f32.gmra.mxu0 %v416
      %v418 = vpop.f32.mrf.mxu0
      %v419 = vadd.f32 %v395, %v418
      %420 = vdwg.mxu0
      %421 = vmatpush.msra.mxu0 0.0
      %422 = vmatpush.msra.mxu0 0.0
      %423 = vmatpush.msra.mxu0 0.0
      %424 = vmatpush.msra.mxu0 0.0
      %425 = vmatpush.msra.mxu0 0.0
      %426 = vmatpush.msra.mxu0 0.0
      %427 = vmatpush.msra.mxu0 0.0
      %428 = vmatpush.msra.mxu0 0.0
      %429 = vmatpush.msra.mxu0 0.0
      %430 = vmatpush.msra.mxu0 0.0
      %431 = vmatpush.msra.mxu0 0.0
      %432 = vmatpush.msra.mxu0 0.0
      %433 = vmatpush.msra.mxu0 0.0
      %434 = vmatpush.msra.mxu0 0.0
      %435 = vmatpush.msra.mxu0 0.0
      %v436 = vand.u32 %v340, 4294901760
      %437 = vmatpush.msra.mxu0 %v436
      %v438 = vand.u32 %v343, 4294901760
      %v439 = vsub.f32 %v343, %v438
      %v440 = vand.u32 %v439, 4294901760
      %441 = vmatmul.f32.gmra.mxu0 %v440
      %v442 = vpop.f32.mrf.mxu0
      %v443 = vadd.f32 %v419, %v442
      %444 = vdwg.mxu0
      %445 = vmatpush.msra.mxu0 0.0
      %446 = vmatpush.msra.mxu0 0.0
      %447 = vmatpush.msra.mxu0 0.0
      %448 = vmatpush.msra.mxu0 0.0
      %449 = vmatpush.msra.mxu0 0.0
      %450 = vmatpush.msra.mxu0 0.0
      %451 = vmatpush.msra.mxu0 0.0
      %452 = vmatpush.msra.mxu0 0.0
      %453 = vmatpush.msra.mxu0 0.0
      %454 = vmatpush.msra.mxu0 0.0
      %455 = vmatpush.msra.mxu0 0.0
      %456 = vmatpush.msra.mxu0 0.0
      %457 = vmatpush.msra.mxu0 0.0
      %458 = vmatpush.msra.mxu0 0.0
      %459 = vmatpush.msra.mxu0 0.0
      %v460 = vand.u32 %v340, 4294901760
      %v461 = vsub.f32 %v340, %v460
      %v462 = vand.u32 %v461, 4294901760
      %463 = vmatpush.msra.mxu0 %v462
      %v464 = vand.u32 %v343, 4294901760
      %465 = vmatmul.f32.gmra.mxu0 %v464
      %v466 = vpop.f32.mrf.mxu0
      %v467 = vadd.f32 %v443, %v466
      %468 = vdwg.mxu0
      %469 = vmatpush.msra.mxu0 0.0
      %470 = vmatpush.msra.mxu0 0.0
      %471 = vmatpush.msra.mxu0 0.0
      %472 = vmatpush.msra.mxu0 0.0
      %473 = vmatpush.msra.mxu0 0.0
      %474 = vmatpush.msra.mxu0 0.0
      %475 = vmatpush.msra.mxu0 0.0
      %476 = vmatpush.msra.mxu0 0.0
      %477 = vmatpush.msra.mxu0 0.0
      %478 = vmatpush.msra.mxu0 0.0
      %479 = vmatpush.msra.mxu0 0.0
      %480 = vmatpush.msra.mxu0 0.0
      %481 = vmatpush.msra.mxu0 0.0
      %482 = vmatpush.msra.mxu0 0.0
      %483 = vmatpush.msra.mxu0 0.0
      %v484 = vand.u32 %v340, 4294901760
      %485 = vmatpush.msra.mxu0 %v484
      %v486 = vand.u32 %v343, 4294901760
      %487 = vmatmul.f32.gmra.mxu0 %v486
      %v488 = vpop.f32.mrf.mxu0
      %v489 = vadd.f32 %v467, %v488
      %490 = vdwg.mxu0
      %s491 = scalar_lea.vmem [#allocation2], 8
      %492 = vst [vmem:[%s491] sm:$0xff] %v489
      %s493 = scalar_lea.vmem %s0, 16
      %v494 = vld [vmem:[%s493] sm:$0xff]
      %495 = vrot.lane.b32.xlu0 %v169, 112
      %v496 = vpop.permute.xlu0 %495
      %v497 = vsel %vm188, %v496, 0
      %499 = vmatpush.msra.mxu0 0.0
      %500 = vmatpush.msra.mxu0 0.0
      %501 = vmatpush.msra.mxu0 0.0
      %502 = vmatpush.msra.mxu0 0.0
      %503 = vmatpush.msra.mxu0 0.0
      %504 = vmatpush.msra.mxu0 0.0
      %505 = vmatpush.msra.mxu0 0.0
      %506 = vmatpush.msra.mxu0 0.0
      %507 = vmatpush.msra.mxu0 0.0
      %508 = vmatpush.msra.mxu0 0.0
      %509 = vmatpush.msra.mxu0 0.0
      %510 = vmatpush.msra.mxu0 0.0
      %511 = vmatpush.msra.mxu0 0.0
      %512 = vmatpush.msra.mxu0 0.0
      %513 = vmatpush.msra.mxu0 0.0
      %v514 = vand.u32 %v494, 4294901760
      %515 = vmatpush.msra.mxu0 %v514
      %v516 = vand.u32 %v497, 4294901760
      %v517 = vsub.f32 %v497, %v516
      %v518 = vand.u32 %v517, 4294901760
      %v519 = vsub.f32 %v517, %v518
      %v520 = vand.u32 %v519, 4294901760
      %521 = vmatmul.f32.gmra.mxu0 %v520
      %v522 = vpop.f32.mrf.mxu0
      %v523 = vadd.f32 0.0, %v522
      %524 = vdwg.mxu0
      %525 = vmatpush.msra.mxu0 0.0
      %526 = vmatpush.msra.mxu0 0.0
      %527 = vmatpush.msra.mxu0 0.0
      %528 = vmatpush.msra.mxu0 0.0
      %529 = vmatpush.msra.mxu0 0.0
      %530 = vmatpush.msra.mxu0 0.0
      %531 = vmatpush.msra.mxu0 0.0
      %532 = vmatpush.msra.mxu0 0.0
      %533 = vmatpush.msra.mxu0 0.0
      %534 = vmatpush.msra.mxu0 0.0
      %535 = vmatpush.msra.mxu0 0.0
      %536 = vmatpush.msra.mxu0 0.0
      %537 = vmatpush.msra.mxu0 0.0
      %538 = vmatpush.msra.mxu0 0.0
      %539 = vmatpush.msra.mxu0 0.0
      %v540 = vand.u32 %v494, 4294901760
      %v541 = vsub.f32 %v494, %v540
      %v542 = vand.u32 %v541, 4294901760
      %v543 = vsub.f32 %v541, %v542
      %v544 = vand.u32 %v543, 4294901760
      %545 = vmatpush.msra.mxu0 %v544
      %v546 = vand.u32 %v497, 4294901760
      %547 = vmatmul.f32.gmra.mxu0 %v546
      %v548 = vpop.f32.mrf.mxu0
      %v549 = vadd.f32 %v523, %v548
      %550 = vdwg.mxu0
      %551 = vmatpush.msra.mxu0 0.0
      %552 = vmatpush.msra.mxu0 0.0
      %553 = vmatpush.msra.mxu0 0.0
      %554 = vmatpush.msra.mxu0 0.0
      %555 = vmatpush.msra.mxu0 0.0
      %556 = vmatpush.msra.mxu0 0.0
      %557 = vmatpush.msra.mxu0 0.0
      %558 = vmatpush.msra.mxu0 0.0
      %559 = vmatpush.msra.mxu0 0.0
      %560 = vmatpush.msra.mxu0 0.0
      %561 = vmatpush.msra.mxu0 0.0
      %562 = vmatpush.msra.mxu0 0.0
      %563 = vmatpush.msra.mxu0 0.0
      %564 = vmatpush.msra.mxu0 0.0
      %565 = vmatpush.msra.mxu0 0.0
      %v566 = vand.u32 %v494, 4294901760
      %v567 = vsub.f32 %v494, %v566
      %568 = vmatpush.msra.mxu0 %v567
      %v569 = vand.u32 %v497, 4294901760
      %v570 = vsub.f32 %v497, %v569
      %571 = vmatmul.f32.gmra.mxu0 %v570
      %v572 = vpop.f32.mrf.mxu0
      %v573 = vadd.f32 %v549, %v572
      %574 = vdwg.mxu0
      %575 = vmatpush.msra.mxu0 0.0
      %576 = vmatpush.msra.mxu0 0.0
      %577 = vmatpush.msra.mxu0 0.0
      %578 = vmatpush.msra.mxu0 0.0
      %579 = vmatpush.msra.mxu0 0.0
      %580 = vmatpush.msra.mxu0 0.0
      %581 = vmatpush.msra.mxu0 0.0
      %582 = vmatpush.msra.mxu0 0.0
      %583 = vmatpush.msra.mxu0 0.0
      %584 = vmatpush.msra.mxu0 0.0
      %585 = vmatpush.msra.mxu0 0.0
      %586 = vmatpush.msra.mxu0 0.0
      %587 = vmatpush.msra.mxu0 0.0
      %588 = vmatpush.msra.mxu0 0.0
      %589 = vmatpush.msra.mxu0 0.0
      %v590 = vand.u32 %v494, 4294901760
      %591 = vmatpush.msra.mxu0 %v590
      %v592 = vand.u32 %v497, 4294901760
      %v593 = vsub.f32 %v497, %v592
      %v594 = vand.u32 %v593, 4294901760
      %595 = vmatmul.f32.gmra.mxu0 %v594
      %v596 = vpop.f32.mrf.mxu0
      %v597 = vadd.f32 %v573, %v596
      %598 = vdwg.mxu0
      %599 = vmatpush.msra.mxu0 0.0
      %600 = vmatpush.msra.mxu0 0.0
      %601 = vmatpush.msra.mxu0 0.0
      %602 = vmatpush.msra.mxu0 0.0
      %603 = vmatpush.msra.mxu0 0.0
      %604 = vmatpush.msra.mxu0 0.0
      %605 = vmatpush.msra.mxu0 0.0
      %606 = vmatpush.msra.mxu0 0.0
      %607 = vmatpush.msra.mxu0 0.0
      %608 = vmatpush.msra.mxu0 0.0
      %609 = vmatpush.msra.mxu0 0.0
      %610 = vmatpush.msra.mxu0 0.0
      %611 = vmatpush.msra.mxu0 0.0
      %612 = vmatpush.msra.mxu0 0.0
      %613 = vmatpush.msra.mxu0 0.0
      %v614 = vand.u32 %v494, 4294901760
      %v615 = vsub.f32 %v494, %v614
      %v616 = vand.u32 %v615, 4294901760
      %617 = vmatpush.msra.mxu0 %v616
      %v618 = vand.u32 %v497, 4294901760
      %619 = vmatmul.f32.gmra.mxu0 %v618
      %v620 = vpop.f32.mrf.mxu0
      %v621 = vadd.f32 %v597, %v620
      %622 = vdwg.mxu0
      %623 = vmatpush.msra.mxu0 0.0
      %624 = vmatpush.msra.mxu0 0.0
      %625 = vmatpush.msra.mxu0 0.0
      %626 = vmatpush.msra.mxu0 0.0
      %627 = vmatpush.msra.mxu0 0.0
      %628 = vmatpush.msra.mxu0 0.0
      %629 = vmatpush.msra.mxu0 0.0
      %630 = vmatpush.msra.mxu0 0.0
      %631 = vmatpush.msra.mxu0 0.0
      %632 = vmatpush.msra.mxu0 0.0
      %633 = vmatpush.msra.mxu0 0.0
      %634 = vmatpush.msra.mxu0 0.0
      %635 = vmatpush.msra.mxu0 0.0
      %636 = vmatpush.msra.mxu0 0.0
      %637 = vmatpush.msra.mxu0 0.0
      %v638 = vand.u32 %v494, 4294901760
      %639 = vmatpush.msra.mxu0 %v638
      %v640 = vand.u32 %v497, 4294901760
      %641 = vmatmul.f32.gmra.mxu0 %v640
      %v642 = vpop.f32.mrf.mxu0
      %v643 = vadd.f32 %v621, %v642
      %644 = vdwg.mxu0
      %s645 = scalar_lea.vmem [#allocation2], 16
      %646 = vst [vmem:[%s645] sm:$0xff] %v643
      %s647 = scalar_lea.vmem %s0, 24
      %v648 = vld [vmem:[%s647] sm:$0xff]
      %649 = vrot.lane.b32.xlu0 %v169, 104
      %v650 = vpop.permute.xlu0 %649
      %v651 = vsel %vm188, %v650, 0
      %653 = vmatpush.msra.mxu0 0.0
      %654 = vmatpush.msra.mxu0 0.0
      %655 = vmatpush.msra.mxu0 0.0
      %656 = vmatpush.msra.mxu0 0.0
      %657 = vmatpush.msra.mxu0 0.0
      %658 = vmatpush.msra.mxu0 0.0
      %659 = vmatpush.msra.mxu0 0.0
      %660 = vmatpush.msra.mxu0 0.0
      %661 = vmatpush.msra.mxu0 0.0
      %662 = vmatpush.msra.mxu0 0.0
      %663 = vmatpush.msra.mxu0 0.0
      %664 = vmatpush.msra.mxu0 0.0
      %665 = vmatpush.msra.mxu0 0.0
      %666 = vmatpush.msra.mxu0 0.0
      %667 = vmatpush.msra.mxu0 0.0
      %v668 = vand.u32 %v648, 4294901760
      %669 = vmatpush.msra.mxu0 %v668
      %v670 = vand.u32 %v651, 4294901760
      %v671 = vsub.f32 %v651, %v670
      %v672 = vand.u32 %v671, 4294901760
      %v673 = vsub.f32 %v671, %v672
      %v674 = vand.u32 %v673, 4294901760
      %675 = vmatmul.f32.gmra.mxu0 %v674
      %v676 = vpop.f32.mrf.mxu0
      %v677 = vadd.f32 0.0, %v676
      %678 = vdwg.mxu0
      %679 = vmatpush.msra.mxu0 0.0
      %680 = vmatpush.msra.mxu0 0.0
      %681 = vmatpush.msra.mxu0 0.0
      %682 = vmatpush.msra.mxu0 0.0
      %683 = vmatpush.msra.mxu0 0.0
      %684 = vmatpush.msra.mxu0 0.0
      %685 = vmatpush.msra.mxu0 0.0
      %686 = vmatpush.msra.mxu0 0.0
      %687 = vmatpush.msra.mxu0 0.0
      %688 = vmatpush.msra.mxu0 0.0
      %689 = vmatpush.msra.mxu0 0.0
      %690 = vmatpush.msra.mxu0 0.0
      %691 = vmatpush.msra.mxu0 0.0
      %692 = vmatpush.msra.mxu0 0.0
      %693 = vmatpush.msra.mxu0 0.0
      %v694 = vand.u32 %v648, 4294901760
      %v695 = vsub.f32 %v648, %v694
      %v696 = vand.u32 %v695, 4294901760
      %v697 = vsub.f32 %v695, %v696
      %v698 = vand.u32 %v697, 4294901760
      %699 = vmatpush.msra.mxu0 %v698
      %v700 = vand.u32 %v651, 4294901760
      %701 = vmatmul.f32.gmra.mxu0 %v700
      %v702 = vpop.f32.mrf.mxu0
      %v703 = vadd.f32 %v677, %v702
      %704 = vdwg.mxu0
      %705 = vmatpush.msra.mxu0 0.0
      %706 = vmatpush.msra.mxu0 0.0
      %707 = vmatpush.msra.mxu0 0.0
      %708 = vmatpush.msra.mxu0 0.0
      %709 = vmatpush.msra.mxu0 0.0
      %710 = vmatpush.msra.mxu0 0.0
      %711 = vmatpush.msra.mxu0 0.0
      %712 = vmatpush.msra.mxu0 0.0
      %713 = vmatpush.msra.mxu0 0.0
      %714 = vmatpush.msra.mxu0 0.0
      %715 = vmatpush.msra.mxu0 0.0
      %716 = vmatpush.msra.mxu0 0.0
      %717 = vmatpush.msra.mxu0 0.0
      %718 = vmatpush.msra.mxu0 0.0
      %719 = vmatpush.msra.mxu0 0.0
      %v720 = vand.u32 %v648, 4294901760
      %v721 = vsub.f32 %v648, %v720
      %722 = vmatpush.msra.mxu0 %v721
      %v723 = vand.u32 %v651, 4294901760
      %v724 = vsub.f32 %v651, %v723
      %725 = vmatmul.f32.gmra.mxu0 %v724
      %v726 = vpop.f32.mrf.mxu0
      %v727 = vadd.f32 %v703, %v726
      %728 = vdwg.mxu0
      %729 = vmatpush.msra.mxu0 0.0
      %730 = vmatpush.msra.mxu0 0.0
      %731 = vmatpush.msra.mxu0 0.0
      %732 = vmatpush.msra.mxu0 0.0
      %733 = vmatpush.msra.mxu0 0.0
      %734 = vmatpush.msra.mxu0 0.0
      %735 = vmatpush.msra.mxu0 0.0
      %736 = vmatpush.msra.mxu0 0.0
      %737 = vmatpush.msra.mxu0 0.0
      %738 = vmatpush.msra.mxu0 0.0
      %739 = vmatpush.msra.mxu0 0.0
      %740 = vmatpush.msra.mxu0 0.0
      %741 = vmatpush.msra.mxu0 0.0
      %742 = vmatpush.msra.mxu0 0.0
      %743 = vmatpush.msra.mxu0 0.0
      %v744 = vand.u32 %v648, 4294901760
      %745 = vmatpush.msra.mxu0 %v744
      %v746 = vand.u32 %v651, 4294901760
      %v747 = vsub.f32 %v651, %v746
      %v748 = vand.u32 %v747, 4294901760
      %749 = vmatmul.f32.gmra.mxu0 %v748
      %v750 = vpop.f32.mrf.mxu0
      %v751 = vadd.f32 %v727, %v750
      %752 = vdwg.mxu0
      %753 = vmatpush.msra.mxu0 0.0
      %754 = vmatpush.msra.mxu0 0.0
      %755 = vmatpush.msra.mxu0 0.0
      %756 = vmatpush.msra.mxu0 0.0
      %757 = vmatpush.msra.mxu0 0.0
      %758 = vmatpush.msra.mxu0 0.0
      %759 = vmatpush.msra.mxu0 0.0
      %760 = vmatpush.msra.mxu0 0.0
      %761 = vmatpush.msra.mxu0 0.0
      %762 = vmatpush.msra.mxu0 0.0
      %763 = vmatpush.msra.mxu0 0.0
      %764 = vmatpush.msra.mxu0 0.0
      %765 = vmatpush.msra.mxu0 0.0
      %766 = vmatpush.msra.mxu0 0.0
      %767 = vmatpush.msra.mxu0 0.0
      %v768 = vand.u32 %v648, 4294901760
      %v769 = vsub.f32 %v648, %v768
      %v770 = vand.u32 %v769, 4294901760
      %771 = vmatpush.msra.mxu0 %v770
      %v772 = vand.u32 %v651, 4294901760
      %773 = vmatmul.f32.gmra.mxu0 %v772
      %v774 = vpop.f32.mrf.mxu0
      %v775 = vadd.f32 %v751, %v774
      %776 = vdwg.mxu0
      %777 = vmatpush.msra.mxu0 0.0
      %778 = vmatpush.msra.mxu0 0.0
      %779 = vmatpush.msra.mxu0 0.0
      %780 = vmatpush.msra.mxu0 0.0
      %781 = vmatpush.msra.mxu0 0.0
      %782 = vmatpush.msra.mxu0 0.0
      %783 = vmatpush.msra.mxu0 0.0
      %784 = vmatpush.msra.mxu0 0.0
      %785 = vmatpush.msra.mxu0 0.0
      %786 = vmatpush.msra.mxu0 0.0
      %787 = vmatpush.msra.mxu0 0.0
      %788 = vmatpush.msra.mxu0 0.0
      %789 = vmatpush.msra.mxu0 0.0
      %790 = vmatpush.msra.mxu0 0.0
      %791 = vmatpush.msra.mxu0 0.0
      %v792 = vand.u32 %v648, 4294901760
      %793 = vmatpush.msra.mxu0 %v792
      %v794 = vand.u32 %v651, 4294901760
      %795 = vmatmul.f32.gmra.mxu0 %v794
      %v796 = vpop.f32.mrf.mxu0
      %v797 = vadd.f32 %v775, %v796
      %798 = vdwg.mxu0
      %s799 = scalar_lea.vmem [#allocation2], 24
      %800 = vst [vmem:[%s799] sm:$0xff] %v797
      %s801 = scalar_lea.vmem %s0, 32
      %v802 = vld [vmem:[%s801] sm:$0xff]
      %803 = vrot.lane.b32.xlu0 %v169, 96
      %v804 = vpop.permute.xlu0 %803
      %v805 = vsel %vm188, %v804, 0
      %807 = vmatpush.msra.mxu0 0.0
      %808 = vmatpush.msra.mxu0 0.0
      %809 = vmatpush.msra.mxu0 0.0
      %810 = vmatpush.msra.mxu0 0.0
      %811 = vmatpush.msra.mxu0 0.0
      %812 = vmatpush.msra.mxu0 0.0
      %813 = vmatpush.msra.mxu0 0.0
      %814 = vmatpush.msra.mxu0 0.0
      %815 = vmatpush.msra.mxu0 0.0
      %816 = vmatpush.msra.mxu0 0.0
      %817 = vmatpush.msra.mxu0 0.0
      %818 = vmatpush.msra.mxu0 0.0
      %819 = vmatpush.msra.mxu0 0.0
      %820 = vmatpush.msra.mxu0 0.0
      %821 = vmatpush.msra.mxu0 0.0
      %v822 = vand.u32 %v802, 4294901760
      %823 = vmatpush.msra.mxu0 %v822
      %v824 = vand.u32 %v805, 4294901760
      %v825 = vsub.f32 %v805, %v824
      %v826 = vand.u32 %v825, 4294901760
      %v827 = vsub.f32 %v825, %v826
      %v828 = vand.u32 %v827, 4294901760
      %829 = vmatmul.f32.gmra.mxu0 %v828
      %v830 = vpop.f32.mrf.mxu0
      %v831 = vadd.f32 0.0, %v830
      %832 = vdwg.mxu0
      %833 = vmatpush.msra.mxu0 0.0
      %834 = vmatpush.msra.mxu0 0.0
      %835 = vmatpush.msra.mxu0 0.0
      %836 = vmatpush.msra.mxu0 0.0
      %837 = vmatpush.msra.mxu0 0.0
      %838 = vmatpush.msra.mxu0 0.0
      %839 = vmatpush.msra.mxu0 0.0
      %840 = vmatpush.msra.mxu0 0.0
      %841 = vmatpush.msra.mxu0 0.0
      %842 = vmatpush.msra.mxu0 0.0
      %843 = vmatpush.msra.mxu0 0.0
      %844 = vmatpush.msra.mxu0 0.0
      %845 = vmatpush.msra.mxu0 0.0
      %846 = vmatpush.msra.mxu0 0.0
      %847 = vmatpush.msra.mxu0 0.0
      %v848 = vand.u32 %v802, 4294901760
      %v849 = vsub.f32 %v802, %v848
      %v850 = vand.u32 %v849, 4294901760
      %v851 = vsub.f32 %v849, %v850
      %v852 = vand.u32 %v851, 4294901760
      %853 = vmatpush.msra.mxu0 %v852
      %v854 = vand.u32 %v805, 4294901760
      %855 = vmatmul.f32.gmra.mxu0 %v854
      %v856 = vpop.f32.mrf.mxu0
      %v857 = vadd.f32 %v831, %v856
      %858 = vdwg.mxu0
      %859 = vmatpush.msra.mxu0 0.0
      %860 = vmatpush.msra.mxu0 0.0
      %861 = vmatpush.msra.mxu0 0.0
      %862 = vmatpush.msra.mxu0 0.0
      %863 = vmatpush.msra.mxu0 0.0
      %864 = vmatpush.msra.mxu0 0.0
      %865 = vmatpush.msra.mxu0 0.0
      %866 = vmatpush.msra.mxu0 0.0
      %867 = vmatpush.msra.mxu0 0.0
      %868 = vmatpush.msra.mxu0 0.0
      %869 = vmatpush.msra.mxu0 0.0
      %870 = vmatpush.msra.mxu0 0.0
      %871 = vmatpush.msra.mxu0 0.0
      %872 = vmatpush.msra.mxu0 0.0
      %873 = vmatpush.msra.mxu0 0.0
      %v874 = vand.u32 %v802, 4294901760
      %v875 = vsub.f32 %v802, %v874
      %876 = vmatpush.msra.mxu0 %v875
      %v877 = vand.u32 %v805, 4294901760
      %v878 = vsub.f32 %v805, %v877
      %879 = vmatmul.f32.gmra.mxu0 %v878
      %v880 = vpop.f32.mrf.mxu0
      %v881 = vadd.f32 %v857, %v880
      %882 = vdwg.mxu0
      %883 = vmatpush.msra.mxu0 0.0
      %884 = vmatpush.msra.mxu0 0.0
      %885 = vmatpush.msra.mxu0 0.0
      %886 = vmatpush.msra.mxu0 0.0
      %887 = vmatpush.msra.mxu0 0.0
      %888 = vmatpush.msra.mxu0 0.0
      %889 = vmatpush.msra.mxu0 0.0
      %890 = vmatpush.msra.mxu0 0.0
      %891 = vmatpush.msra.mxu0 0.0
      %892 = vmatpush.msra.mxu0 0.0
      %893 = vmatpush.msra.mxu0 0.0
      %894 = vmatpush.msra.mxu0 0.0
      %895 = vmatpush.msra.mxu0 0.0
      %896 = vmatpush.msra.mxu0 0.0
      %897 = vmatpush.msra.mxu0 0.0
      %v898 = vand.u32 %v802, 4294901760
      %899 = vmatpush.msra.mxu0 %v898
      %v900 = vand.u32 %v805, 4294901760
      %v901 = vsub.f32 %v805, %v900
      %v902 = vand.u32 %v901, 4294901760
      %903 = vmatmul.f32.gmra.mxu0 %v902
      %v904 = vpop.f32.mrf.mxu0
      %v905 = vadd.f32 %v881, %v904
      %906 = vdwg.mxu0
      %907 = vmatpush.msra.mxu0 0.0
      %908 = vmatpush.msra.mxu0 0.0
      %909 = vmatpush.msra.mxu0 0.0
      %910 = vmatpush.msra.mxu0 0.0
      %911 = vmatpush.msra.mxu0 0.0
      %912 = vmatpush.msra.mxu0 0.0
      %913 = vmatpush.msra.mxu0 0.0
      %914 = vmatpush.msra.mxu0 0.0
      %915 = vmatpush.msra.mxu0 0.0
      %916 = vmatpush.msra.mxu0 0.0
      %917 = vmatpush.msra.mxu0 0.0
      %918 = vmatpush.msra.mxu0 0.0
      %919 = vmatpush.msra.mxu0 0.0
      %920 = vmatpush.msra.mxu0 0.0
      %921 = vmatpush.msra.mxu0 0.0
      %v922 = vand.u32 %v802, 4294901760
      %v923 = vsub.f32 %v802, %v922
      %v924 = vand.u32 %v923, 4294901760
      %925 = vmatpush.msra.mxu0 %v924
      %v926 = vand.u32 %v805, 4294901760
      %927 = vmatmul.f32.gmra.mxu0 %v926
      %v928 = vpop.f32.mrf.mxu0
      %v929 = vadd.f32 %v905, %v928
      %930 = vdwg.mxu0
      %931 = vmatpush.msra.mxu0 0.0
      %932 = vmatpush.msra.mxu0 0.0
      %933 = vmatpush.msra.mxu0 0.0
      %934 = vmatpush.msra.mxu0 0.0
      %935 = vmatpush.msra.mxu0 0.0
      %936 = vmatpush.msra.mxu0 0.0
      %937 = vmatpush.msra.mxu0 0.0
      %938 = vmatpush.msra.mxu0 0.0
      %939 = vmatpush.msra.mxu0 0.0
      %940 = vmatpush.msra.mxu0 0.0
      %941 = vmatpush.msra.mxu0 0.0
      %942 = vmatpush.msra.mxu0 0.0
      %943 = vmatpush.msra.mxu0 0.0
      %944 = vmatpush.msra.mxu0 0.0
      %945 = vmatpush.msra.mxu0 0.0
      %v946 = vand.u32 %v802, 4294901760
      %947 = vmatpush.msra.mxu0 %v946
      %v948 = vand.u32 %v805, 4294901760
      %949 = vmatmul.f32.gmra.mxu0 %v948
      %v950 = vpop.f32.mrf.mxu0
      %v951 = vadd.f32 %v929, %v950
      %952 = vdwg.mxu0
      %s953 = scalar_lea.vmem [#allocation2], 32
      %954 = vst [vmem:[%s953] sm:$0xff] %v951
      %s955 = scalar_lea.vmem %s0, 40
      %v956 = vld [vmem:[%s955] sm:$0xff]
      %957 = vrot.lane.b32.xlu0 %v169, 88
      %v958 = vpop.permute.xlu0 %957
      %v959 = vsel %vm188, %v958, 0
      %961 = vmatpush.msra.mxu0 0.0
      %962 = vmatpush.msra.mxu0 0.0
      %963 = vmatpush.msra.mxu0 0.0
      %964 = vmatpush.msra.mxu0 0.0
      %965 = vmatpush.msra.mxu0 0.0
      %966 = vmatpush.msra.mxu0 0.0
      %967 = vmatpush.msra.mxu0 0.0
      %968 = vmatpush.msra.mxu0 0.0
      %969 = vmatpush.msra.mxu0 0.0
      %970 = vmatpush.msra.mxu0 0.0
      %971 = vmatpush.msra.mxu0 0.0
      %972 = vmatpush.msra.mxu0 0.0
      %973 = vmatpush.msra.mxu0 0.0
      %974 = vmatpush.msra.mxu0 0.0
      %975 = vmatpush.msra.mxu0 0.0
      %v976 = vand.u32 %v956, 4294901760
      %977 = vmatpush.msra.mxu0 %v976
      %v978 = vand.u32 %v959, 4294901760
      %v979 = vsub.f32 %v959, %v978
      %v980 = vand.u32 %v979, 4294901760
      %v981 = vsub.f32 %v979, %v980
      %v982 = vand.u32 %v981, 4294901760
      %983 = vmatmul.f32.gmra.mxu0 %v982
      %v984 = vpop.f32.mrf.mxu0
      %v985 = vadd.f32 0.0, %v984
      %986 = vdwg.mxu0
      %987 = vmatpush.msra.mxu0 0.0
      %988 = vmatpush.msra.mxu0 0.0
      %989 = vmatpush.msra.mxu0 0.0
      %990 = vmatpush.msra.mxu0 0.0
      %991 = vmatpush.msra.mxu0 0.0
      %992 = vmatpush.msra.mxu0 0.0
      %993 = vmatpush.msra.mxu0 0.0
      %994 = vmatpush.msra.mxu0 0.0
      %995 = vmatpush.msra.mxu0 0.0
      %996 = vmatpush.msra.mxu0 0.0
      %997 = vmatpush.msra.mxu0 0.0
      %998 = vmatpush.msra.mxu0 0.0
      %999 = vmatpush.msra.mxu0 0.0
      %1000 = vmatpush.msra.mxu0 0.0
      %1001 = vmatpush.msra.mxu0 0.0
      %v1002 = vand.u32 %v956, 4294901760
      %v1003 = vsub.f32 %v956, %v1002
      %v1004 = vand.u32 %v1003, 4294901760
      %v1005 = vsub.f32 %v1003, %v1004
      %v1006 = vand.u32 %v1005, 4294901760
      %1007 = vmatpush.msra.mxu0 %v1006
      %v1008 = vand.u32 %v959, 4294901760
      %1009 = vmatmul.f32.gmra.mxu0 %v1008
      %v1010 = vpop.f32.mrf.mxu0
      %v1011 = vadd.f32 %v985, %v1010
      %1012 = vdwg.mxu0
      %1013 = vmatpush.msra.mxu0 0.0
      %1014 = vmatpush.msra.mxu0 0.0
      %1015 = vmatpush.msra.mxu0 0.0
      %1016 = vmatpush.msra.mxu0 0.0
      %1017 = vmatpush.msra.mxu0 0.0
      %1018 = vmatpush.msra.mxu0 0.0
      %1019 = vmatpush.msra.mxu0 0.0
      %1020 = vmatpush.msra.mxu0 0.0
      %1021 = vmatpush.msra.mxu0 0.0
      %1022 = vmatpush.msra.mxu0 0.0
      %1023 = vmatpush.msra.mxu0 0.0
      %1024 = vmatpush.msra.mxu0 0.0
      %1025 = vmatpush.msra.mxu0 0.0
      %1026 = vmatpush.msra.mxu0 0.0
      %1027 = vmatpush.msra.mxu0 0.0
      %v1028 = vand.u32 %v956, 4294901760
      %v1029 = vsub.f32 %v956, %v1028
      %1030 = vmatpush.msra.mxu0 %v1029
      %v1031 = vand.u32 %v959, 4294901760
      %v1032 = vsub.f32 %v959, %v1031
      %1033 = vmatmul.f32.gmra.mxu0 %v1032
      %v1034 = vpop.f32.mrf.mxu0
      %v1035 = vadd.f32 %v1011, %v1034
      %1036 = vdwg.mxu0
      %1037 = vmatpush.msra.mxu0 0.0
      %1038 = vmatpush.msra.mxu0 0.0
      %1039 = vmatpush.msra.mxu0 0.0
      %1040 = vmatpush.msra.mxu0 0.0
      %1041 = vmatpush.msra.mxu0 0.0
      %1042 = vmatpush.msra.mxu0 0.0
      %1043 = vmatpush.msra.mxu0 0.0
      %1044 = vmatpush.msra.mxu0 0.0
      %1045 = vmatpush.msra.mxu0 0.0
      %1046 = vmatpush.msra.mxu0 0.0
      %1047 = vmatpush.msra.mxu0 0.0
      %1048 = vmatpush.msra.mxu0 0.0
      %1049 = vmatpush.msra.mxu0 0.0
      %1050 = vmatpush.msra.mxu0 0.0
      %1051 = vmatpush.msra.mxu0 0.0
      %v1052 = vand.u32 %v956, 4294901760
      %1053 = vmatpush.msra.mxu0 %v1052
      %v1054 = vand.u32 %v959, 4294901760
      %v1055 = vsub.f32 %v959, %v1054
      %v1056 = vand.u32 %v1055, 4294901760
      %1057 = vmatmul.f32.gmra.mxu0 %v1056
      %v1058 = vpop.f32.mrf.mxu0
      %v1059 = vadd.f32 %v1035, %v1058
      %1060 = vdwg.mxu0
      %1061 = vmatpush.msra.mxu0 0.0
      %1062 = vmatpush.msra.mxu0 0.0
      %1063 = vmatpush.msra.mxu0 0.0
      %1064 = vmatpush.msra.mxu0 0.0
      %1065 = vmatpush.msra.mxu0 0.0
      %1066 = vmatpush.msra.mxu0 0.0
      %1067 = vmatpush.msra.mxu0 0.0
      %1068 = vmatpush.msra.mxu0 0.0
      %1069 = vmatpush.msra.mxu0 0.0
      %1070 = vmatpush.msra.mxu0 0.0
      %1071 = vmatpush.msra.mxu0 0.0
      %1072 = vmatpush.msra.mxu0 0.0
      %1073 = vmatpush.msra.mxu0 0.0
      %1074 = vmatpush.msra.mxu0 0.0
      %1075 = vmatpush.msra.mxu0 0.0
      %v1076 = vand.u32 %v956, 4294901760
      %v1077 = vsub.f32 %v956, %v1076
      %v1078 = vand.u32 %v1077, 4294901760
      %1079 = vmatpush.msra.mxu0 %v1078
      %v1080 = vand.u32 %v959, 4294901760
      %1081 = vmatmul.f32.gmra.mxu0 %v1080
      %v1082 = vpop.f32.mrf.mxu0
      %v1083 = vadd.f32 %v1059, %v1082
      %1084 = vdwg.mxu0
      %1085 = vmatpush.msra.mxu0 0.0
      %1086 = vmatpush.msra.mxu0 0.0
      %1087 = vmatpush.msra.mxu0 0.0
      %1088 = vmatpush.msra.mxu0 0.0
      %1089 = vmatpush.msra.mxu0 0.0
      %1090 = vmatpush.msra.mxu0 0.0
      %1091 = vmatpush.msra.mxu0 0.0
      %1092 = vmatpush.msra.mxu0 0.0
      %1093 = vmatpush.msra.mxu0 0.0
      %1094 = vmatpush.msra.mxu0 0.0
      %1095 = vmatpush.msra.mxu0 0.0
      %1096 = vmatpush.msra.mxu0 0.0
      %1097 = vmatpush.msra.mxu0 0.0
      %1098 = vmatpush.msra.mxu0 0.0
      %1099 = vmatpush.msra.mxu0 0.0
      %v1100 = vand.u32 %v956, 4294901760
      %1101 = vmatpush.msra.mxu0 %v1100
      %v1102 = vand.u32 %v959, 4294901760
      %1103 = vmatmul.f32.gmra.mxu0 %v1102
      %v1104 = vpop.f32.mrf.mxu0
      %v1105 = vadd.f32 %v1083, %v1104
      %1106 = vdwg.mxu0
      %s1107 = scalar_lea.vmem [#allocation2], 40
      %1108 = vst [vmem:[%s1107] sm:$0xff] %v1105
      %s1109 = scalar_lea.vmem %s0, 48
      %v1110 = vld [vmem:[%s1109] sm:$0xff]
      %1111 = vrot.lane.b32.xlu0 %v169, 80
      %v1112 = vpop.permute.xlu0 %1111
      %v1113 = vsel %vm188, %v1112, 0
      %1115 = vmatpush.msra.mxu0 0.0
      %1116 = vmatpush.msra.mxu0 0.0
      %1117 = vmatpush.msra.mxu0 0.0
      %1118 = vmatpush.msra.mxu0 0.0
      %1119 = vmatpush.msra.mxu0 0.0
      %1120 = vmatpush.msra.mxu0 0.0
      %1121 = vmatpush.msra.mxu0 0.0
      %1122 = vmatpush.msra.mxu0 0.0
      %1123 = vmatpush.msra.mxu0 0.0
      %1124 = vmatpush.msra.mxu0 0.0
      %1125 = vmatpush.msra.mxu0 0.0
      %1126 = vmatpush.msra.mxu0 0.0
      %1127 = vmatpush.msra.mxu0 0.0
      %1128 = vmatpush.msra.mxu0 0.0
      %1129 = vmatpush.msra.mxu0 0.0
      %v1130 = vand.u32 %v1110, 4294901760
      %1131 = vmatpush.msra.mxu0 %v1130
      %v1132 = vand.u32 %v1113, 4294901760
      %v1133 = vsub.f32 %v1113, %v1132
      %v1134 = vand.u32 %v1133, 4294901760
      %v1135 = vsub.f32 %v1133, %v1134
      %v1136 = vand.u32 %v1135, 4294901760
      %1137 = vmatmul.f32.gmra.mxu0 %v1136
      %v1138 = vpop.f32.mrf.mxu0
      %v1139 = vadd.f32 0.0, %v1138
      %1140 = vdwg.mxu0
      %1141 = vmatpush.msra.mxu0 0.0
      %1142 = vmatpush.msra.mxu0 0.0
      %1143 = vmatpush.msra.mxu0 0.0
      %1144 = vmatpush.msra.mxu0 0.0
      %1145 = vmatpush.msra.mxu0 0.0
      %1146 = vmatpush.msra.mxu0 0.0
      %1147 = vmatpush.msra.mxu0 0.0
      %1148 = vmatpush.msra.mxu0 0.0
      %1149 = vmatpush.msra.mxu0 0.0
      %1150 = vmatpush.msra.mxu0 0.0
      %1151 = vmatpush.msra.mxu0 0.0
      %1152 = vmatpush.msra.mxu0 0.0
      %1153 = vmatpush.msra.mxu0 0.0
      %1154 = vmatpush.msra.mxu0 0.0
      %1155 = vmatpush.msra.mxu0 0.0
      %v1156 = vand.u32 %v1110, 4294901760
      %v1157 = vsub.f32 %v1110, %v1156
      %v1158 = vand.u32 %v1157, 4294901760
      %v1159 = vsub.f32 %v1157, %v1158
      %v1160 = vand.u32 %v1159, 4294901760
      %1161 = vmatpush.msra.mxu0 %v1160
      %v1162 = vand.u32 %v1113, 4294901760
      %1163 = vmatmul.f32.gmra.mxu0 %v1162
      %v1164 = vpop.f32.mrf.mxu0
      %v1165 = vadd.f32 %v1139, %v1164
      %1166 = vdwg.mxu0
      %1167 = vmatpush.msra.mxu0 0.0
      %1168 = vmatpush.msra.mxu0 0.0
      %1169 = vmatpush.msra.mxu0 0.0
      %1170 = vmatpush.msra.mxu0 0.0
      %1171 = vmatpush.msra.mxu0 0.0
      %1172 = vmatpush.msra.mxu0 0.0
      %1173 = vmatpush.msra.mxu0 0.0
      %1174 = vmatpush.msra.mxu0 0.0
      %1175 = vmatpush.msra.mxu0 0.0
      %1176 = vmatpush.msra.mxu0 0.0
      %1177 = vmatpush.msra.mxu0 0.0
      %1178 = vmatpush.msra.mxu0 0.0
      %1179 = vmatpush.msra.mxu0 0.0
      %1180 = vmatpush.msra.mxu0 0.0
      %1181 = vmatpush.msra.mxu0 0.0
      %v1182 = vand.u32 %v1110, 4294901760
      %v1183 = vsub.f32 %v1110, %v1182
      %1184 = vmatpush.msra.mxu0 %v1183
      %v1185 = vand.u32 %v1113, 4294901760
      %v1186 = vsub.f32 %v1113, %v1185
      %1187 = vmatmul.f32.gmra.mxu0 %v1186
      %v1188 = vpop.f32.mrf.mxu0
      %v1189 = vadd.f32 %v1165, %v1188
      %1190 = vdwg.mxu0
      %1191 = vmatpush.msra.mxu0 0.0
      %1192 = vmatpush.msra.mxu0 0.0
      %1193 = vmatpush.msra.mxu0 0.0
      %1194 = vmatpush.msra.mxu0 0.0
      %1195 = vmatpush.msra.mxu0 0.0
      %1196 = vmatpush.msra.mxu0 0.0
      %1197 = vmatpush.msra.mxu0 0.0
      %1198 = vmatpush.msra.mxu0 0.0
      %1199 = vmatpush.msra.mxu0 0.0
      %1200 = vmatpush.msra.mxu0 0.0
      %1201 = vmatpush.msra.mxu0 0.0
      %1202 = vmatpush.msra.mxu0 0.0
      %1203 = vmatpush.msra.mxu0 0.0
      %1204 = vmatpush.msra.mxu0 0.0
      %1205 = vmatpush.msra.mxu0 0.0
      %v1206 = vand.u32 %v1110, 4294901760
      %1207 = vmatpush.msra.mxu0 %v1206
      %v1208 = vand.u32 %v1113, 4294901760
      %v1209 = vsub.f32 %v1113, %v1208
      %v1210 = vand.u32 %v1209, 4294901760
      %1211 = vmatmul.f32.gmra.mxu0 %v1210
      %v1212 = vpop.f32.mrf.mxu0
      %v1213 = vadd.f32 %v1189, %v1212
      %1214 = vdwg.mxu0
      %1215 = vmatpush.msra.mxu0 0.0
      %1216 = vmatpush.msra.mxu0 0.0
      %1217 = vmatpush.msra.mxu0 0.0
      %1218 = vmatpush.msra.mxu0 0.0
      %1219 = vmatpush.msra.mxu0 0.0
      %1220 = vmatpush.msra.mxu0 0.0
      %1221 = vmatpush.msra.mxu0 0.0
      %1222 = vmatpush.msra.mxu0 0.0
      %1223 = vmatpush.msra.mxu0 0.0
      %1224 = vmatpush.msra.mxu0 0.0
      %1225 = vmatpush.msra.mxu0 0.0
      %1226 = vmatpush.msra.mxu0 0.0
      %1227 = vmatpush.msra.mxu0 0.0
      %1228 = vmatpush.msra.mxu0 0.0
      %1229 = vmatpush.msra.mxu0 0.0
      %v1230 = vand.u32 %v1110, 4294901760
      %v1231 = vsub.f32 %v1110, %v1230
      %v1232 = vand.u32 %v1231, 4294901760
      %1233 = vmatpush.msra.mxu0 %v1232
      %v1234 = vand.u32 %v1113, 4294901760
      %1235 = vmatmul.f32.gmra.mxu0 %v1234
      %v1236 = vpop.f32.mrf.mxu0
      %v1237 = vadd.f32 %v1213, %v1236
      %1238 = vdwg.mxu0
      %1239 = vmatpush.msra.mxu0 0.0
      %1240 = vmatpush.msra.mxu0 0.0
      %1241 = vmatpush.msra.mxu0 0.0
      %1242 = vmatpush.msra.mxu0 0.0
      %1243 = vmatpush.msra.mxu0 0.0
      %1244 = vmatpush.msra.mxu0 0.0
      %1245 = vmatpush.msra.mxu0 0.0
      %1246 = vmatpush.msra.mxu0 0.0
      %1247 = vmatpush.msra.mxu0 0.0
      %1248 = vmatpush.msra.mxu0 0.0
      %1249 = vmatpush.msra.mxu0 0.0
      %1250 = vmatpush.msra.mxu0 0.0
      %1251 = vmatpush.msra.mxu0 0.0
      %1252 = vmatpush.msra.mxu0 0.0
      %1253 = vmatpush.msra.mxu0 0.0
      %v1254 = vand.u32 %v1110, 4294901760
      %1255 = vmatpush.msra.mxu0 %v1254
      %v1256 = vand.u32 %v1113, 4294901760
      %1257 = vmatmul.f32.gmra.mxu0 %v1256
      %v1258 = vpop.f32.mrf.mxu0
      %v1259 = vadd.f32 %v1237, %v1258
      %1260 = vdwg.mxu0
      %s1261 = scalar_lea.vmem [#allocation2], 48
      %1262 = vst [vmem:[%s1261] sm:$0xff] %v1259
      %s1263 = scalar_lea.vmem %s0, 56
      %v1264 = vld [vmem:[%s1263] sm:$0xff]
      %1265 = vrot.lane.b32.xlu0 %v169, 72
      %v1266 = vpop.permute.xlu0 %1265
      %v1267 = vsel %vm188, %v1266, 0
      %1269 = vmatpush.msra.mxu0 0.0
      %1270 = vmatpush.msra.mxu0 0.0
      %1271 = vmatpush.msra.mxu0 0.0
      %1272 = vmatpush.msra.mxu0 0.0
      %1273 = vmatpush.msra.mxu0 0.0
      %1274 = vmatpush.msra.mxu0 0.0
      %1275 = vmatpush.msra.mxu0 0.0
      %1276 = vmatpush.msra.mxu0 0.0
      %1277 = vmatpush.msra.mxu0 0.0
      %1278 = vmatpush.msra.mxu0 0.0
      %1279 = vmatpush.msra.mxu0 0.0
      %1280 = vmatpush.msra.mxu0 0.0
      %1281 = vmatpush.msra.mxu0 0.0
      %1282 = vmatpush.msra.mxu0 0.0
      %1283 = vmatpush.msra.mxu0 0.0
      %v1284 = vand.u32 %v1264, 4294901760
      %1285 = vmatpush.msra.mxu0 %v1284
      %v1286 = vand.u32 %v1267, 4294901760
      %v1287 = vsub.f32 %v1267, %v1286
      %v1288 = vand.u32 %v1287, 4294901760
      %v1289 = vsub.f32 %v1287, %v1288
      %v1290 = vand.u32 %v1289, 4294901760
      %1291 = vmatmul.f32.gmra.mxu0 %v1290
      %v1292 = vpop.f32.mrf.mxu0
      %v1293 = vadd.f32 0.0, %v1292
      %1294 = vdwg.mxu0
      %1295 = vmatpush.msra.mxu0 0.0
      %1296 = vmatpush.msra.mxu0 0.0
      %1297 = vmatpush.msra.mxu0 0.0
      %1298 = vmatpush.msra.mxu0 0.0
      %1299 = vmatpush.msra.mxu0 0.0
      %1300 = vmatpush.msra.mxu0 0.0
      %1301 = vmatpush.msra.mxu0 0.0
      %1302 = vmatpush.msra.mxu0 0.0
      %1303 = vmatpush.msra.mxu0 0.0
      %1304 = vmatpush.msra.mxu0 0.0
      %1305 = vmatpush.msra.mxu0 0.0
      %1306 = vmatpush.msra.mxu0 0.0
      %1307 = vmatpush.msra.mxu0 0.0
      %1308 = vmatpush.msra.mxu0 0.0
      %1309 = vmatpush.msra.mxu0 0.0
      %v1310 = vand.u32 %v1264, 4294901760
      %v1311 = vsub.f32 %v1264, %v1310
      %v1312 = vand.u32 %v1311, 4294901760
      %v1313 = vsub.f32 %v1311, %v1312
      %v1314 = vand.u32 %v1313, 4294901760
      %1315 = vmatpush.msra.mxu0 %v1314
      %v1316 = vand.u32 %v1267, 4294901760
      %1317 = vmatmul.f32.gmra.mxu0 %v1316
      %v1318 = vpop.f32.mrf.mxu0
      %v1319 = vadd.f32 %v1293, %v1318
      %1320 = vdwg.mxu0
      %1321 = vmatpush.msra.mxu0 0.0
      %1322 = vmatpush.msra.mxu0 0.0
      %1323 = vmatpush.msra.mxu0 0.0
      %1324 = vmatpush.msra.mxu0 0.0
      %1325 = vmatpush.msra.mxu0 0.0
      %1326 = vmatpush.msra.mxu0 0.0
      %1327 = vmatpush.msra.mxu0 0.0
      %1328 = vmatpush.msra.mxu0 0.0
      %1329 = vmatpush.msra.mxu0 0.0
      %1330 = vmatpush.msra.mxu0 0.0
      %1331 = vmatpush.msra.mxu0 0.0
      %1332 = vmatpush.msra.mxu0 0.0
      %1333 = vmatpush.msra.mxu0 0.0
      %1334 = vmatpush.msra.mxu0 0.0
      %1335 = vmatpush.msra.mxu0 0.0
      %v1336 = vand.u32 %v1264, 4294901760
      %v1337 = vsub.f32 %v1264, %v1336
      %1338 = vmatpush.msra.mxu0 %v1337
      %v1339 = vand.u32 %v1267, 4294901760
      %v1340 = vsub.f32 %v1267, %v1339
      %1341 = vmatmul.f32.gmra.mxu0 %v1340
      %v1342 = vpop.f32.mrf.mxu0
      %v1343 = vadd.f32 %v1319, %v1342
      %1344 = vdwg.mxu0
      %1345 = vmatpush.msra.mxu0 0.0
      %1346 = vmatpush.msra.mxu0 0.0
      %1347 = vmatpush.msra.mxu0 0.0
      %1348 = vmatpush.msra.mxu0 0.0
      %1349 = vmatpush.msra.mxu0 0.0
      %1350 = vmatpush.msra.mxu0 0.0
      %1351 = vmatpush.msra.mxu0 0.0
      %1352 = vmatpush.msra.mxu0 0.0
      %1353 = vmatpush.msra.mxu0 0.0
      %1354 = vmatpush.msra.mxu0 0.0
      %1355 = vmatpush.msra.mxu0 0.0
      %1356 = vmatpush.msra.mxu0 0.0
      %1357 = vmatpush.msra.mxu0 0.0
      %1358 = vmatpush.msra.mxu0 0.0
      %1359 = vmatpush.msra.mxu0 0.0
      %v1360 = vand.u32 %v1264, 4294901760
      %1361 = vmatpush.msra.mxu0 %v1360
      %v1362 = vand.u32 %v1267, 4294901760
      %v1363 = vsub.f32 %v1267, %v1362
      %v1364 = vand.u32 %v1363, 4294901760
      %1365 = vmatmul.f32.gmra.mxu0 %v1364
      %v1366 = vpop.f32.mrf.mxu0
      %v1367 = vadd.f32 %v1343, %v1366
      %1368 = vdwg.mxu0
      %1369 = vmatpush.msra.mxu0 0.0
      %1370 = vmatpush.msra.mxu0 0.0
      %1371 = vmatpush.msra.mxu0 0.0
      %1372 = vmatpush.msra.mxu0 0.0
      %1373 = vmatpush.msra.mxu0 0.0
      %1374 = vmatpush.msra.mxu0 0.0
      %1375 = vmatpush.msra.mxu0 0.0
      %1376 = vmatpush.msra.mxu0 0.0
      %1377 = vmatpush.msra.mxu0 0.0
      %1378 = vmatpush.msra.mxu0 0.0
      %1379 = vmatpush.msra.mxu0 0.0
      %1380 = vmatpush.msra.mxu0 0.0
      %1381 = vmatpush.msra.mxu0 0.0
      %1382 = vmatpush.msra.mxu0 0.0
      %1383 = vmatpush.msra.mxu0 0.0
      %v1384 = vand.u32 %v1264, 4294901760
      %v1385 = vsub.f32 %v1264, %v1384
      %v1386 = vand.u32 %v1385, 4294901760
      %1387 = vmatpush.msra.mxu0 %v1386
      %v1388 = vand.u32 %v1267, 4294901760
      %1389 = vmatmul.f32.gmra.mxu0 %v1388
      %v1390 = vpop.f32.mrf.mxu0
      %v1391 = vadd.f32 %v1367, %v1390
      %1392 = vdwg.mxu0
      %1393 = vmatpush.msra.mxu0 0.0
      %1394 = vmatpush.msra.mxu0 0.0
      %1395 = vmatpush.msra.mxu0 0.0
      %1396 = vmatpush.msra.mxu0 0.0
      %1397 = vmatpush.msra.mxu0 0.0
      %1398 = vmatpush.msra.mxu0 0.0
      %1399 = vmatpush.msra.mxu0 0.0
      %1400 = vmatpush.msra.mxu0 0.0
      %1401 = vmatpush.msra.mxu0 0.0
      %1402 = vmatpush.msra.mxu0 0.0
      %1403 = vmatpush.msra.mxu0 0.0
      %1404 = vmatpush.msra.mxu0 0.0
      %1405 = vmatpush.msra.mxu0 0.0
      %1406 = vmatpush.msra.mxu0 0.0
      %1407 = vmatpush.msra.mxu0 0.0
      %v1408 = vand.u32 %v1264, 4294901760
      %1409 = vmatpush.msra.mxu0 %v1408
      %v1410 = vand.u32 %v1267, 4294901760
      %1411 = vmatmul.f32.gmra.mxu0 %v1410
      %v1412 = vpop.f32.mrf.mxu0
      %v1413 = vadd.f32 %v1391, %v1412
      %1414 = vdwg.mxu0
      %s1415 = scalar_lea.vmem [#allocation2], 56
      %1416 = vst [vmem:[%s1415] sm:$0xff] %v1413
      %s1417 = scalar_lea.vmem %s0, 64
      %v1418 = vld [vmem:[%s1417] sm:$0xff]
      %1419 = vrot.lane.b32.xlu0 %v169, 64
      %v1420 = vpop.permute.xlu0 %1419
      %v1421 = vsel %vm188, %v1420, 0
      %1423 = vmatpush.msra.mxu0 0.0
      %1424 = vmatpush.msra.mxu0 0.0
      %1425 = vmatpush.msra.mxu0 0.0
      %1426 = vmatpush.msra.mxu0 0.0
      %1427 = vmatpush.msra.mxu0 0.0
      %1428 = vmatpush.msra.mxu0 0.0
      %1429 = vmatpush.msra.mxu0 0.0
      %1430 = vmatpush.msra.mxu0 0.0
      %1431 = vmatpush.msra.mxu0 0.0
      %1432 = vmatpush.msra.mxu0 0.0
      %1433 = vmatpush.msra.mxu0 0.0
      %1434 = vmatpush.msra.mxu0 0.0
      %1435 = vmatpush.msra.mxu0 0.0
      %1436 = vmatpush.msra.mxu0 0.0
      %1437 = vmatpush.msra.mxu0 0.0
      %v1438 = vand.u32 %v1418, 4294901760
      %1439 = vmatpush.msra.mxu0 %v1438
      %v1440 = vand.u32 %v1421, 4294901760
      %v1441 = vsub.f32 %v1421, %v1440
      %v1442 = vand.u32 %v1441, 4294901760
      %v1443 = vsub.f32 %v1441, %v1442
      %v1444 = vand.u32 %v1443, 4294901760
      %1445 = vmatmul.f32.gmra.mxu0 %v1444
      %v1446 = vpop.f32.mrf.mxu0
      %v1447 = vadd.f32 0.0, %v1446
      %1448 = vdwg.mxu0
      %1449 = vmatpush.msra.mxu0 0.0
      %1450 = vmatpush.msra.mxu0 0.0
      %1451 = vmatpush.msra.mxu0 0.0
      %1452 = vmatpush.msra.mxu0 0.0
      %1453 = vmatpush.msra.mxu0 0.0
      %1454 = vmatpush.msra.mxu0 0.0
      %1455 = vmatpush.msra.mxu0 0.0
      %1456 = vmatpush.msra.mxu0 0.0
      %1457 = vmatpush.msra.mxu0 0.0
      %1458 = vmatpush.msra.mxu0 0.0
      %1459 = vmatpush.msra.mxu0 0.0
      %1460 = vmatpush.msra.mxu0 0.0
      %1461 = vmatpush.msra.mxu0 0.0
      %1462 = vmatpush.msra.mxu0 0.0
      %1463 = vmatpush.msra.mxu0 0.0
      %v1464 = vand.u32 %v1418, 4294901760
      %v1465 = vsub.f32 %v1418, %v1464
      %v1466 = vand.u32 %v1465, 4294901760
      %v1467 = vsub.f32 %v1465, %v1466
      %v1468 = vand.u32 %v1467, 4294901760
      %1469 = vmatpush.msra.mxu0 %v1468
      %v1470 = vand.u32 %v1421, 4294901760
      %1471 = vmatmul.f32.gmra.mxu0 %v1470
      %v1472 = vpop.f32.mrf.mxu0
      %v1473 = vadd.f32 %v1447, %v1472
      %1474 = vdwg.mxu0
      %1475 = vmatpush.msra.mxu0 0.0
      %1476 = vmatpush.msra.mxu0 0.0
      %1477 = vmatpush.msra.mxu0 0.0
      %1478 = vmatpush.msra.mxu0 0.0
      %1479 = vmatpush.msra.mxu0 0.0
      %1480 = vmatpush.msra.mxu0 0.0
      %1481 = vmatpush.msra.mxu0 0.0
      %1482 = vmatpush.msra.mxu0 0.0
      %1483 = vmatpush.msra.mxu0 0.0
      %1484 = vmatpush.msra.mxu0 0.0
      %1485 = vmatpush.msra.mxu0 0.0
      %1486 = vmatpush.msra.mxu0 0.0
      %1487 = vmatpush.msra.mxu0 0.0
      %1488 = vmatpush.msra.mxu0 0.0
      %1489 = vmatpush.msra.mxu0 0.0
      %v1490 = vand.u32 %v1418, 4294901760
      %v1491 = vsub.f32 %v1418, %v1490
      %1492 = vmatpush.msra.mxu0 %v1491
      %v1493 = vand.u32 %v1421, 4294901760
      %v1494 = vsub.f32 %v1421, %v1493
      %1495 = vmatmul.f32.gmra.mxu0 %v1494
      %v1496 = vpop.f32.mrf.mxu0
      %v1497 = vadd.f32 %v1473, %v1496
      %1498 = vdwg.mxu0
      %1499 = vmatpush.msra.mxu0 0.0
      %1500 = vmatpush.msra.mxu0 0.0
      %1501 = vmatpush.msra.mxu0 0.0
      %1502 = vmatpush.msra.mxu0 0.0
      %1503 = vmatpush.msra.mxu0 0.0
      %1504 = vmatpush.msra.mxu0 0.0
      %1505 = vmatpush.msra.mxu0 0.0
      %1506 = vmatpush.msra.mxu0 0.0
      %1507 = vmatpush.msra.mxu0 0.0
      %1508 = vmatpush.msra.mxu0 0.0
      %1509 = vmatpush.msra.mxu0 0.0
      %1510 = vmatpush.msra.mxu0 0.0
      %1511 = vmatpush.msra.mxu0 0.0
      %1512 = vmatpush.msra.mxu0 0.0
      %1513 = vmatpush.msra.mxu0 0.0
      %v1514 = vand.u32 %v1418, 4294901760
      %1515 = vmatpush.msra.mxu0 %v1514
      %v1516 = vand.u32 %v1421, 4294901760
      %v1517 = vsub.f32 %v1421, %v1516
      %v1518 = vand.u32 %v1517, 4294901760
      %1519 = vmatmul.f32.gmra.mxu0 %v1518
      %v1520 = vpop.f32.mrf.mxu0
      %v1521 = vadd.f32 %v1497, %v1520
      %1522 = vdwg.mxu0
      %1523 = vmatpush.msra.mxu0 0.0
      %1524 = vmatpush.msra.mxu0 0.0
      %1525 = vmatpush.msra.mxu0 0.0
      %1526 = vmatpush.msra.mxu0 0.0
      %1527 = vmatpush.msra.mxu0 0.0
      %1528 = vmatpush.msra.mxu0 0.0
      %1529 = vmatpush.msra.mxu0 0.0
      %1530 = vmatpush.msra.mxu0 0.0
      %1531 = vmatpush.msra.mxu0 0.0
      %1532 = vmatpush.msra.mxu0 0.0
      %1533 = vmatpush.msra.mxu0 0.0
      %1534 = vmatpush.msra.mxu0 0.0
      %1535 = vmatpush.msra.mxu0 0.0
      %1536 = vmatpush.msra.mxu0 0.0
      %1537 = vmatpush.msra.mxu0 0.0
      %v1538 = vand.u32 %v1418, 4294901760
      %v1539 = vsub.f32 %v1418, %v1538
      %v1540 = vand.u32 %v1539, 4294901760
      %1541 = vmatpush.msra.mxu0 %v1540
      %v1542 = vand.u32 %v1421, 4294901760
      %1543 = vmatmul.f32.gmra.mxu0 %v1542
      %v1544 = vpop.f32.mrf.mxu0
      %v1545 = vadd.f32 %v1521, %v1544
      %1546 = vdwg.mxu0
      %1547 = vmatpush.msra.mxu0 0.0
      %1548 = vmatpush.msra.mxu0 0.0
      %1549 = vmatpush.msra.mxu0 0.0
      %1550 = vmatpush.msra.mxu0 0.0
      %1551 = vmatpush.msra.mxu0 0.0
      %1552 = vmatpush.msra.mxu0 0.0
      %1553 = vmatpush.msra.mxu0 0.0
      %1554 = vmatpush.msra.mxu0 0.0
      %1555 = vmatpush.msra.mxu0 0.0
      %1556 = vmatpush.msra.mxu0 0.0
      %1557 = vmatpush.msra.mxu0 0.0
      %1558 = vmatpush.msra.mxu0 0.0
      %1559 = vmatpush.msra.mxu0 0.0
      %1560 = vmatpush.msra.mxu0 0.0
      %1561 = vmatpush.msra.mxu0 0.0
      %v1562 = vand.u32 %v1418, 4294901760
      %1563 = vmatpush.msra.mxu0 %v1562
      %v1564 = vand.u32 %v1421, 4294901760
      %1565 = vmatmul.f32.gmra.mxu0 %v1564
      %v1566 = vpop.f32.mrf.mxu0
      %v1567 = vadd.f32 %v1545, %v1566
      %1568 = vdwg.mxu0
      %s1569 = scalar_lea.vmem [#allocation2], 64
      %1570 = vst [vmem:[%s1569] sm:$0xff] %v1567
      %s1571 = scalar_lea.vmem %s0, 72
      %v1572 = vld [vmem:[%s1571] sm:$0xff]
      %1573 = vrot.lane.b32.xlu0 %v169, 56
      %v1574 = vpop.permute.xlu0 %1573
      %v1575 = vsel %vm188, %v1574, 0
      %1577 = vmatpush.msra.mxu0 0.0
      %1578 = vmatpush.msra.mxu0 0.0
      %1579 = vmatpush.msra.mxu0 0.0
      %1580 = vmatpush.msra.mxu0 0.0
      %1581 = vmatpush.msra.mxu0 0.0
      %1582 = vmatpush.msra.mxu0 0.0
      %1583 = vmatpush.msra.mxu0 0.0
      %1584 = vmatpush.msra.mxu0 0.0
      %1585 = vmatpush.msra.mxu0 0.0
      %1586 = vmatpush.msra.mxu0 0.0
      %1587 = vmatpush.msra.mxu0 0.0
      %1588 = vmatpush.msra.mxu0 0.0
      %1589 = vmatpush.msra.mxu0 0.0
      %1590 = vmatpush.msra.mxu0 0.0
      %1591 = vmatpush.msra.mxu0 0.0
      %v1592 = vand.u32 %v1572, 4294901760
      %1593 = vmatpush.msra.mxu0 %v1592
      %v1594 = vand.u32 %v1575, 4294901760
      %v1595 = vsub.f32 %v1575, %v1594
      %v1596 = vand.u32 %v1595, 4294901760
      %v1597 = vsub.f32 %v1595, %v1596
      %v1598 = vand.u32 %v1597, 4294901760
      %1599 = vmatmul.f32.gmra.mxu0 %v1598
      %v1600 = vpop.f32.mrf.mxu0
      %v1601 = vadd.f32 0.0, %v1600
      %1602 = vdwg.mxu0
      %1603 = vmatpush.msra.mxu0 0.0
      %1604 = vmatpush.msra.mxu0 0.0
      %1605 = vmatpush.msra.mxu0 0.0
      %1606 = vmatpush.msra.mxu0 0.0
      %1607 = vmatpush.msra.mxu0 0.0
      %1608 = vmatpush.msra.mxu0 0.0
      %1609 = vmatpush.msra.mxu0 0.0
      %1610 = vmatpush.msra.mxu0 0.0
      %1611 = vmatpush.msra.mxu0 0.0
      %1612 = vmatpush.msra.mxu0 0.0
      %1613 = vmatpush.msra.mxu0 0.0
      %1614 = vmatpush.msra.mxu0 0.0
      %1615 = vmatpush.msra.mxu0 0.0
      %1616 = vmatpush.msra.mxu0 0.0
      %1617 = vmatpush.msra.mxu0 0.0
      %v1618 = vand.u32 %v1572, 4294901760
      %v1619 = vsub.f32 %v1572, %v1618
      %v1620 = vand.u32 %v1619, 4294901760
      %v1621 = vsub.f32 %v1619, %v1620
      %v1622 = vand.u32 %v1621, 4294901760
      %1623 = vmatpush.msra.mxu0 %v1622
      %v1624 = vand.u32 %v1575, 4294901760
      %1625 = vmatmul.f32.gmra.mxu0 %v1624
      %v1626 = vpop.f32.mrf.mxu0
      %v1627 = vadd.f32 %v1601, %v1626
      %1628 = vdwg.mxu0
      %1629 = vmatpush.msra.mxu0 0.0
      %1630 = vmatpush.msra.mxu0 0.0
      %1631 = vmatpush.msra.mxu0 0.0
      %1632 = vmatpush.msra.mxu0 0.0
      %1633 = vmatpush.msra.mxu0 0.0
      %1634 = vmatpush.msra.mxu0 0.0
      %1635 = vmatpush.msra.mxu0 0.0
      %1636 = vmatpush.msra.mxu0 0.0
      %1637 = vmatpush.msra.mxu0 0.0
      %1638 = vmatpush.msra.mxu0 0.0
      %1639 = vmatpush.msra.mxu0 0.0
      %1640 = vmatpush.msra.mxu0 0.0
      %1641 = vmatpush.msra.mxu0 0.0
      %1642 = vmatpush.msra.mxu0 0.0
      %1643 = vmatpush.msra.mxu0 0.0
      %v1644 = vand.u32 %v1572, 4294901760
      %v1645 = vsub.f32 %v1572, %v1644
      %1646 = vmatpush.msra.mxu0 %v1645
      %v1647 = vand.u32 %v1575, 4294901760
      %v1648 = vsub.f32 %v1575, %v1647
      %1649 = vmatmul.f32.gmra.mxu0 %v1648
      %v1650 = vpop.f32.mrf.mxu0
      %v1651 = vadd.f32 %v1627, %v1650
      %1652 = vdwg.mxu0
      %1653 = vmatpush.msra.mxu0 0.0
      %1654 = vmatpush.msra.mxu0 0.0
      %1655 = vmatpush.msra.mxu0 0.0
      %1656 = vmatpush.msra.mxu0 0.0
      %1657 = vmatpush.msra.mxu0 0.0
      %1658 = vmatpush.msra.mxu0 0.0
      %1659 = vmatpush.msra.mxu0 0.0
      %1660 = vmatpush.msra.mxu0 0.0
      %1661 = vmatpush.msra.mxu0 0.0
      %1662 = vmatpush.msra.mxu0 0.0
      %1663 = vmatpush.msra.mxu0 0.0
      %1664 = vmatpush.msra.mxu0 0.0
      %1665 = vmatpush.msra.mxu0 0.0
      %1666 = vmatpush.msra.mxu0 0.0
      %1667 = vmatpush.msra.mxu0 0.0
      %v1668 = vand.u32 %v1572, 4294901760
      %1669 = vmatpush.msra.mxu0 %v1668
      %v1670 = vand.u32 %v1575, 4294901760
      %v1671 = vsub.f32 %v1575, %v1670
      %v1672 = vand.u32 %v1671, 4294901760
      %1673 = vmatmul.f32.gmra.mxu0 %v1672
      %v1674 = vpop.f32.mrf.mxu0
      %v1675 = vadd.f32 %v1651, %v1674
      %1676 = vdwg.mxu0
      %1677 = vmatpush.msra.mxu0 0.0
      %1678 = vmatpush.msra.mxu0 0.0
      %1679 = vmatpush.msra.mxu0 0.0
      %1680 = vmatpush.msra.mxu0 0.0
      %1681 = vmatpush.msra.mxu0 0.0
      %1682 = vmatpush.msra.mxu0 0.0
      %1683 = vmatpush.msra.mxu0 0.0
      %1684 = vmatpush.msra.mxu0 0.0
      %1685 = vmatpush.msra.mxu0 0.0
      %1686 = vmatpush.msra.mxu0 0.0
      %1687 = vmatpush.msra.mxu0 0.0
      %1688 = vmatpush.msra.mxu0 0.0
      %1689 = vmatpush.msra.mxu0 0.0
      %1690 = vmatpush.msra.mxu0 0.0
      %1691 = vmatpush.msra.mxu0 0.0
      %v1692 = vand.u32 %v1572, 4294901760
      %v1693 = vsub.f32 %v1572, %v1692
      %v1694 = vand.u32 %v1693, 4294901760
      %1695 = vmatpush.msra.mxu0 %v1694
      %v1696 = vand.u32 %v1575, 4294901760
      %1697 = vmatmul.f32.gmra.mxu0 %v1696
      %v1698 = vpop.f32.mrf.mxu0
      %v1699 = vadd.f32 %v1675, %v1698
      %1700 = vdwg.mxu0
      %1701 = vmatpush.msra.mxu0 0.0
      %1702 = vmatpush.msra.mxu0 0.0
      %1703 = vmatpush.msra.mxu0 0.0
      %1704 = vmatpush.msra.mxu0 0.0
      %1705 = vmatpush.msra.mxu0 0.0
      %1706 = vmatpush.msra.mxu0 0.0
      %1707 = vmatpush.msra.mxu0 0.0
      %1708 = vmatpush.msra.mxu0 0.0
      %1709 = vmatpush.msra.mxu0 0.0
      %1710 = vmatpush.msra.mxu0 0.0
      %1711 = vmatpush.msra.mxu0 0.0
      %1712 = vmatpush.msra.mxu0 0.0
      %1713 = vmatpush.msra.mxu0 0.0
      %1714 = vmatpush.msra.mxu0 0.0
      %1715 = vmatpush.msra.mxu0 0.0
      %v1716 = vand.u32 %v1572, 4294901760
      %1717 = vmatpush.msra.mxu0 %v1716
      %v1718 = vand.u32 %v1575, 4294901760
      %1719 = vmatmul.f32.gmra.mxu0 %v1718
      %v1720 = vpop.f32.mrf.mxu0
      %v1721 = vadd.f32 %v1699, %v1720
      %1722 = vdwg.mxu0
      %s1723 = scalar_lea.vmem [#allocation2], 72
      %1724 = vst [vmem:[%s1723] sm:$0xff] %v1721
      %s1725 = scalar_lea.vmem %s0, 80
      %v1726 = vld [vmem:[%s1725] sm:$0xff]
      %1727 = vrot.lane.b32.xlu0 %v169, 48
      %v1728 = vpop.permute.xlu0 %1727
      %v1729 = vsel %vm188, %v1728, 0
      %1731 = vmatpush.msra.mxu0 0.0
      %1732 = vmatpush.msra.mxu0 0.0
      %1733 = vmatpush.msra.mxu0 0.0
      %1734 = vmatpush.msra.mxu0 0.0
      %1735 = vmatpush.msra.mxu0 0.0
      %1736 = vmatpush.msra.mxu0 0.0
      %1737 = vmatpush.msra.mxu0 0.0
      %1738 = vmatpush.msra.mxu0 0.0
      %1739 = vmatpush.msra.mxu0 0.0
      %1740 = vmatpush.msra.mxu0 0.0
      %1741 = vmatpush.msra.mxu0 0.0
      %1742 = vmatpush.msra.mxu0 0.0
      %1743 = vmatpush.msra.mxu0 0.0
      %1744 = vmatpush.msra.mxu0 0.0
      %1745 = vmatpush.msra.mxu0 0.0
      %v1746 = vand.u32 %v1726, 4294901760
      %1747 = vmatpush.msra.mxu0 %v1746
      %v1748 = vand.u32 %v1729, 4294901760
      %v1749 = vsub.f32 %v1729, %v1748
      %v1750 = vand.u32 %v1749, 4294901760
      %v1751 = vsub.f32 %v1749, %v1750
      %v1752 = vand.u32 %v1751, 4294901760
      %1753 = vmatmul.f32.gmra.mxu0 %v1752
      %v1754 = vpop.f32.mrf.mxu0
      %v1755 = vadd.f32 0.0, %v1754
      %1756 = vdwg.mxu0
      %1757 = vmatpush.msra.mxu0 0.0
      %1758 = vmatpush.msra.mxu0 0.0
      %1759 = vmatpush.msra.mxu0 0.0
      %1760 = vmatpush.msra.mxu0 0.0
      %1761 = vmatpush.msra.mxu0 0.0
      %1762 = vmatpush.msra.mxu0 0.0
      %1763 = vmatpush.msra.mxu0 0.0
      %1764 = vmatpush.msra.mxu0 0.0
      %1765 = vmatpush.msra.mxu0 0.0
      %1766 = vmatpush.msra.mxu0 0.0
      %1767 = vmatpush.msra.mxu0 0.0
      %1768 = vmatpush.msra.mxu0 0.0
      %1769 = vmatpush.msra.mxu0 0.0
      %1770 = vmatpush.msra.mxu0 0.0
      %1771 = vmatpush.msra.mxu0 0.0
      %v1772 = vand.u32 %v1726, 4294901760
      %v1773 = vsub.f32 %v1726, %v1772
      %v1774 = vand.u32 %v1773, 4294901760
      %v1775 = vsub.f32 %v1773, %v1774
      %v1776 = vand.u32 %v1775, 4294901760
      %1777 = vmatpush.msra.mxu0 %v1776
      %v1778 = vand.u32 %v1729, 4294901760
      %1779 = vmatmul.f32.gmra.mxu0 %v1778
      %v1780 = vpop.f32.mrf.mxu0
      %v1781 = vadd.f32 %v1755, %v1780
      %1782 = vdwg.mxu0
      %1783 = vmatpush.msra.mxu0 0.0
      %1784 = vmatpush.msra.mxu0 0.0
      %1785 = vmatpush.msra.mxu0 0.0
      %1786 = vmatpush.msra.mxu0 0.0
      %1787 = vmatpush.msra.mxu0 0.0
      %1788 = vmatpush.msra.mxu0 0.0
      %1789 = vmatpush.msra.mxu0 0.0
      %1790 = vmatpush.msra.mxu0 0.0
      %1791 = vmatpush.msra.mxu0 0.0
      %1792 = vmatpush.msra.mxu0 0.0
      %1793 = vmatpush.msra.mxu0 0.0
      %1794 = vmatpush.msra.mxu0 0.0
      %1795 = vmatpush.msra.mxu0 0.0
      %1796 = vmatpush.msra.mxu0 0.0
      %1797 = vmatpush.msra.mxu0 0.0
      %v1798 = vand.u32 %v1726, 4294901760
      %v1799 = vsub.f32 %v1726, %v1798
      %1800 = vmatpush.msra.mxu0 %v1799
      %v1801 = vand.u32 %v1729, 4294901760
      %v1802 = vsub.f32 %v1729, %v1801
      %1803 = vmatmul.f32.gmra.mxu0 %v1802
      %v1804 = vpop.f32.mrf.mxu0
      %v1805 = vadd.f32 %v1781, %v1804
      %1806 = vdwg.mxu0
      %1807 = vmatpush.msra.mxu0 0.0
      %1808 = vmatpush.msra.mxu0 0.0
      %1809 = vmatpush.msra.mxu0 0.0
      %1810 = vmatpush.msra.mxu0 0.0
      %1811 = vmatpush.msra.mxu0 0.0
      %1812 = vmatpush.msra.mxu0 0.0
      %1813 = vmatpush.msra.mxu0 0.0
      %1814 = vmatpush.msra.mxu0 0.0
      %1815 = vmatpush.msra.mxu0 0.0
      %1816 = vmatpush.msra.mxu0 0.0
      %1817 = vmatpush.msra.mxu0 0.0
      %1818 = vmatpush.msra.mxu0 0.0
      %1819 = vmatpush.msra.mxu0 0.0
      %1820 = vmatpush.msra.mxu0 0.0
      %1821 = vmatpush.msra.mxu0 0.0
      %v1822 = vand.u32 %v1726, 4294901760
      %1823 = vmatpush.msra.mxu0 %v1822
      %v1824 = vand.u32 %v1729, 4294901760
      %v1825 = vsub.f32 %v1729, %v1824
      %v1826 = vand.u32 %v1825, 4294901760
      %1827 = vmatmul.f32.gmra.mxu0 %v1826
      %v1828 = vpop.f32.mrf.mxu0
      %v1829 = vadd.f32 %v1805, %v1828
      %1830 = vdwg.mxu0
      %1831 = vmatpush.msra.mxu0 0.0
      %1832 = vmatpush.msra.mxu0 0.0
      %1833 = vmatpush.msra.mxu0 0.0
      %1834 = vmatpush.msra.mxu0 0.0
      %1835 = vmatpush.msra.mxu0 0.0
      %1836 = vmatpush.msra.mxu0 0.0
      %1837 = vmatpush.msra.mxu0 0.0
      %1838 = vmatpush.msra.mxu0 0.0
      %1839 = vmatpush.msra.mxu0 0.0
      %1840 = vmatpush.msra.mxu0 0.0
      %1841 = vmatpush.msra.mxu0 0.0
      %1842 = vmatpush.msra.mxu0 0.0
      %1843 = vmatpush.msra.mxu0 0.0
      %1844 = vmatpush.msra.mxu0 0.0
      %1845 = vmatpush.msra.mxu0 0.0
      %v1846 = vand.u32 %v1726, 4294901760
      %v1847 = vsub.f32 %v1726, %v1846
      %v1848 = vand.u32 %v1847, 4294901760
      %1849 = vmatpush.msra.mxu0 %v1848
      %v1850 = vand.u32 %v1729, 4294901760
      %1851 = vmatmul.f32.gmra.mxu0 %v1850
      %v1852 = vpop.f32.mrf.mxu0
      %v1853 = vadd.f32 %v1829, %v1852
      %1854 = vdwg.mxu0
      %1855 = vmatpush.msra.mxu0 0.0
      %1856 = vmatpush.msra.mxu0 0.0
      %1857 = vmatpush.msra.mxu0 0.0
      %1858 = vmatpush.msra.mxu0 0.0
      %1859 = vmatpush.msra.mxu0 0.0
      %1860 = vmatpush.msra.mxu0 0.0
      %1861 = vmatpush.msra.mxu0 0.0
      %1862 = vmatpush.msra.mxu0 0.0
      %1863 = vmatpush.msra.mxu0 0.0
      %1864 = vmatpush.msra.mxu0 0.0
      %1865 = vmatpush.msra.mxu0 0.0
      %1866 = vmatpush.msra.mxu0 0.0
      %1867 = vmatpush.msra.mxu0 0.0
      %1868 = vmatpush.msra.mxu0 0.0
      %1869 = vmatpush.msra.mxu0 0.0
      %v1870 = vand.u32 %v1726, 4294901760
      %1871 = vmatpush.msra.mxu0 %v1870
      %v1872 = vand.u32 %v1729, 4294901760
      %1873 = vmatmul.f32.gmra.mxu0 %v1872
      %v1874 = vpop.f32.mrf.mxu0
      %v1875 = vadd.f32 %v1853, %v1874
      %1876 = vdwg.mxu0
      %s1877 = scalar_lea.vmem [#allocation2], 80
      %1878 = vst [vmem:[%s1877] sm:$0xff] %v1875
      %s1879 = scalar_lea.vmem %s0, 88
      %v1880 = vld [vmem:[%s1879] sm:$0xff]
      %1881 = vrot.lane.b32.xlu0 %v169, 40
      %v1882 = vpop.permute.xlu0 %1881
      %v1883 = vsel %vm188, %v1882, 0
      %1885 = vmatpush.msra.mxu0 0.0
      %1886 = vmatpush.msra.mxu0 0.0
      %1887 = vmatpush.msra.mxu0 0.0
      %1888 = vmatpush.msra.mxu0 0.0
      %1889 = vmatpush.msra.mxu0 0.0
      %1890 = vmatpush.msra.mxu0 0.0
      %1891 = vmatpush.msra.mxu0 0.0
      %1892 = vmatpush.msra.mxu0 0.0
      %1893 = vmatpush.msra.mxu0 0.0
      %1894 = vmatpush.msra.mxu0 0.0
      %1895 = vmatpush.msra.mxu0 0.0
      %1896 = vmatpush.msra.mxu0 0.0
      %1897 = vmatpush.msra.mxu0 0.0
      %1898 = vmatpush.msra.mxu0 0.0
      %1899 = vmatpush.msra.mxu0 0.0
      %v1900 = vand.u32 %v1880, 4294901760
      %1901 = vmatpush.msra.mxu0 %v1900
      %v1902 = vand.u32 %v1883, 4294901760
      %v1903 = vsub.f32 %v1883, %v1902
      %v1904 = vand.u32 %v1903, 4294901760
      %v1905 = vsub.f32 %v1903, %v1904
      %v1906 = vand.u32 %v1905, 4294901760
      %1907 = vmatmul.f32.gmra.mxu0 %v1906
      %v1908 = vpop.f32.mrf.mxu0
      %v1909 = vadd.f32 0.0, %v1908
      %1910 = vdwg.mxu0
      %1911 = vmatpush.msra.mxu0 0.0
      %1912 = vmatpush.msra.mxu0 0.0
      %1913 = vmatpush.msra.mxu0 0.0
      %1914 = vmatpush.msra.mxu0 0.0
      %1915 = vmatpush.msra.mxu0 0.0
      %1916 = vmatpush.msra.mxu0 0.0
      %1917 = vmatpush.msra.mxu0 0.0
      %1918 = vmatpush.msra.mxu0 0.0
      %1919 = vmatpush.msra.mxu0 0.0
      %1920 = vmatpush.msra.mxu0 0.0
      %1921 = vmatpush.msra.mxu0 0.0
      %1922 = vmatpush.msra.mxu0 0.0
      %1923 = vmatpush.msra.mxu0 0.0
      %1924 = vmatpush.msra.mxu0 0.0
      %1925 = vmatpush.msra.mxu0 0.0
      %v1926 = vand.u32 %v1880, 4294901760
      %v1927 = vsub.f32 %v1880, %v1926
      %v1928 = vand.u32 %v1927, 4294901760
      %v1929 = vsub.f32 %v1927, %v1928
      %v1930 = vand.u32 %v1929, 4294901760
      %1931 = vmatpush.msra.mxu0 %v1930
      %v1932 = vand.u32 %v1883, 4294901760
      %1933 = vmatmul.f32.gmra.mxu0 %v1932
      %v1934 = vpop.f32.mrf.mxu0
      %v1935 = vadd.f32 %v1909, %v1934
      %1936 = vdwg.mxu0
      %1937 = vmatpush.msra.mxu0 0.0
      %1938 = vmatpush.msra.mxu0 0.0
      %1939 = vmatpush.msra.mxu0 0.0
      %1940 = vmatpush.msra.mxu0 0.0
      %1941 = vmatpush.msra.mxu0 0.0
      %1942 = vmatpush.msra.mxu0 0.0
      %1943 = vmatpush.msra.mxu0 0.0
      %1944 = vmatpush.msra.mxu0 0.0
      %1945 = vmatpush.msra.mxu0 0.0
      %1946 = vmatpush.msra.mxu0 0.0
      %1947 = vmatpush.msra.mxu0 0.0
      %1948 = vmatpush.msra.mxu0 0.0
      %1949 = vmatpush.msra.mxu0 0.0
      %1950 = vmatpush.msra.mxu0 0.0
      %1951 = vmatpush.msra.mxu0 0.0
      %v1952 = vand.u32 %v1880, 4294901760
      %v1953 = vsub.f32 %v1880, %v1952
      %1954 = vmatpush.msra.mxu0 %v1953
      %v1955 = vand.u32 %v1883, 4294901760
      %v1956 = vsub.f32 %v1883, %v1955
      %1957 = vmatmul.f32.gmra.mxu0 %v1956
      %v1958 = vpop.f32.mrf.mxu0
      %v1959 = vadd.f32 %v1935, %v1958
      %1960 = vdwg.mxu0
      %1961 = vmatpush.msra.mxu0 0.0
      %1962 = vmatpush.msra.mxu0 0.0
      %1963 = vmatpush.msra.mxu0 0.0
      %1964 = vmatpush.msra.mxu0 0.0
      %1965 = vmatpush.msra.mxu0 0.0
      %1966 = vmatpush.msra.mxu0 0.0
      %1967 = vmatpush.msra.mxu0 0.0
      %1968 = vmatpush.msra.mxu0 0.0
      %1969 = vmatpush.msra.mxu0 0.0
      %1970 = vmatpush.msra.mxu0 0.0
      %1971 = vmatpush.msra.mxu0 0.0
      %1972 = vmatpush.msra.mxu0 0.0
      %1973 = vmatpush.msra.mxu0 0.0
      %1974 = vmatpush.msra.mxu0 0.0
      %1975 = vmatpush.msra.mxu0 0.0
      %v1976 = vand.u32 %v1880, 4294901760
      %1977 = vmatpush.msra.mxu0 %v1976
      %v1978 = vand.u32 %v1883, 4294901760
      %v1979 = vsub.f32 %v1883, %v1978
      %v1980 = vand.u32 %v1979, 4294901760
      %1981 = vmatmul.f32.gmra.mxu0 %v1980
      %v1982 = vpop.f32.mrf.mxu0
      %v1983 = vadd.f32 %v1959, %v1982
      %1984 = vdwg.mxu0
      %1985 = vmatpush.msra.mxu0 0.0
      %1986 = vmatpush.msra.mxu0 0.0
      %1987 = vmatpush.msra.mxu0 0.0
      %1988 = vmatpush.msra.mxu0 0.0
      %1989 = vmatpush.msra.mxu0 0.0
      %1990 = vmatpush.msra.mxu0 0.0
      %1991 = vmatpush.msra.mxu0 0.0
      %1992 = vmatpush.msra.mxu0 0.0
      %1993 = vmatpush.msra.mxu0 0.0
      %1994 = vmatpush.msra.mxu0 0.0
      %1995 = vmatpush.msra.mxu0 0.0
      %1996 = vmatpush.msra.mxu0 0.0
      %1997 = vmatpush.msra.mxu0 0.0
      %1998 = vmatpush.msra.mxu0 0.0
      %1999 = vmatpush.msra.mxu0 0.0
      %v2000 = vand.u32 %v1880, 4294901760
      %v2001 = vsub.f32 %v1880, %v2000
      %v2002 = vand.u32 %v2001, 4294901760
      %2003 = vmatpush.msra.mxu0 %v2002
      %v2004 = vand.u32 %v1883, 4294901760
      %2005 = vmatmul.f32.gmra.mxu0 %v2004
      %v2006 = vpop.f32.mrf.mxu0
      %v2007 = vadd.f32 %v1983, %v2006
      %2008 = vdwg.mxu0
      %2009 = vmatpush.msra.mxu0 0.0
      %2010 = vmatpush.msra.mxu0 0.0
      %2011 = vmatpush.msra.mxu0 0.0
      %2012 = vmatpush.msra.mxu0 0.0
      %2013 = vmatpush.msra.mxu0 0.0
      %2014 = vmatpush.msra.mxu0 0.0
      %2015 = vmatpush.msra.mxu0 0.0
      %2016 = vmatpush.msra.mxu0 0.0
      %2017 = vmatpush.msra.mxu0 0.0
      %2018 = vmatpush.msra.mxu0 0.0
      %2019 = vmatpush.msra.mxu0 0.0
      %2020 = vmatpush.msra.mxu0 0.0
      %2021 = vmatpush.msra.mxu0 0.0
      %2022 = vmatpush.msra.mxu0 0.0
      %2023 = vmatpush.msra.mxu0 0.0
      %v2024 = vand.u32 %v1880, 4294901760
      %2025 = vmatpush.msra.mxu0 %v2024
      %v2026 = vand.u32 %v1883, 4294901760
      %2027 = vmatmul.f32.gmra.mxu0 %v2026
      %v2028 = vpop.f32.mrf.mxu0
      %v2029 = vadd.f32 %v2007, %v2028
      %2030 = vdwg.mxu0
      %s2031 = scalar_lea.vmem [#allocation2], 88
      %2032 = vst [vmem:[%s2031] sm:$0xff] %v2029
      %s2033 = scalar_lea.vmem %s0, 96
      %v2034 = vld [vmem:[%s2033] sm:$0xff]
      %2035 = vrot.lane.b32.xlu0 %v169, 32
      %v2036 = vpop.permute.xlu0 %2035
      %v2037 = vsel %vm188, %v2036, 0
      %2039 = vmatpush.msra.mxu0 0.0
      %2040 = vmatpush.msra.mxu0 0.0
      %2041 = vmatpush.msra.mxu0 0.0
      %2042 = vmatpush.msra.mxu0 0.0
      %2043 = vmatpush.msra.mxu0 0.0
      %2044 = vmatpush.msra.mxu0 0.0
      %2045 = vmatpush.msra.mxu0 0.0
      %2046 = vmatpush.msra.mxu0 0.0
      %2047 = vmatpush.msra.mxu0 0.0
      %2048 = vmatpush.msra.mxu0 0.0
      %2049 = vmatpush.msra.mxu0 0.0
      %2050 = vmatpush.msra.mxu0 0.0
      %2051 = vmatpush.msra.mxu0 0.0
      %2052 = vmatpush.msra.mxu0 0.0
      %2053 = vmatpush.msra.mxu0 0.0
      %v2054 = vand.u32 %v2034, 4294901760
      %2055 = vmatpush.msra.mxu0 %v2054
      %v2056 = vand.u32 %v2037, 4294901760
      %v2057 = vsub.f32 %v2037, %v2056
      %v2058 = vand.u32 %v2057, 4294901760
      %v2059 = vsub.f32 %v2057, %v2058
      %v2060 = vand.u32 %v2059, 4294901760
      %2061 = vmatmul.f32.gmra.mxu0 %v2060
      %v2062 = vpop.f32.mrf.mxu0
      %v2063 = vadd.f32 0.0, %v2062
      %2064 = vdwg.mxu0
      %2065 = vmatpush.msra.mxu0 0.0
      %2066 = vmatpush.msra.mxu0 0.0
      %2067 = vmatpush.msra.mxu0 0.0
      %2068 = vmatpush.msra.mxu0 0.0
      %2069 = vmatpush.msra.mxu0 0.0
      %2070 = vmatpush.msra.mxu0 0.0
      %2071 = vmatpush.msra.mxu0 0.0
      %2072 = vmatpush.msra.mxu0 0.0
      %2073 = vmatpush.msra.mxu0 0.0
      %2074 = vmatpush.msra.mxu0 0.0
      %2075 = vmatpush.msra.mxu0 0.0
      %2076 = vmatpush.msra.mxu0 0.0
      %2077 = vmatpush.msra.mxu0 0.0
      %2078 = vmatpush.msra.mxu0 0.0
      %2079 = vmatpush.msra.mxu0 0.0
      %v2080 = vand.u32 %v2034, 4294901760
      %v2081 = vsub.f32 %v2034, %v2080
      %v2082 = vand.u32 %v2081, 4294901760
      %v2083 = vsub.f32 %v2081, %v2082
      %v2084 = vand.u32 %v2083, 4294901760
      %2085 = vmatpush.msra.mxu0 %v2084
      %v2086 = vand.u32 %v2037, 4294901760
      %2087 = vmatmul.f32.gmra.mxu0 %v2086
      %v2088 = vpop.f32.mrf.mxu0
      %v2089 = vadd.f32 %v2063, %v2088
      %2090 = vdwg.mxu0
      %2091 = vmatpush.msra.mxu0 0.0
      %2092 = vmatpush.msra.mxu0 0.0
      %2093 = vmatpush.msra.mxu0 0.0
      %2094 = vmatpush.msra.mxu0 0.0
      %2095 = vmatpush.msra.mxu0 0.0
      %2096 = vmatpush.msra.mxu0 0.0
      %2097 = vmatpush.msra.mxu0 0.0
      %2098 = vmatpush.msra.mxu0 0.0
      %2099 = vmatpush.msra.mxu0 0.0
      %2100 = vmatpush.msra.mxu0 0.0
      %2101 = vmatpush.msra.mxu0 0.0
      %2102 = vmatpush.msra.mxu0 0.0
      %2103 = vmatpush.msra.mxu0 0.0
      %2104 = vmatpush.msra.mxu0 0.0
      %2105 = vmatpush.msra.mxu0 0.0
      %v2106 = vand.u32 %v2034, 4294901760
      %v2107 = vsub.f32 %v2034, %v2106
      %2108 = vmatpush.msra.mxu0 %v2107
      %v2109 = vand.u32 %v2037, 4294901760
      %v2110 = vsub.f32 %v2037, %v2109
      %2111 = vmatmul.f32.gmra.mxu0 %v2110
      %v2112 = vpop.f32.mrf.mxu0
      %v2113 = vadd.f32 %v2089, %v2112
      %2114 = vdwg.mxu0
      %2115 = vmatpush.msra.mxu0 0.0
      %2116 = vmatpush.msra.mxu0 0.0
      %2117 = vmatpush.msra.mxu0 0.0
      %2118 = vmatpush.msra.mxu0 0.0
      %2119 = vmatpush.msra.mxu0 0.0
      %2120 = vmatpush.msra.mxu0 0.0
      %2121 = vmatpush.msra.mxu0 0.0
      %2122 = vmatpush.msra.mxu0 0.0
      %2123 = vmatpush.msra.mxu0 0.0
      %2124 = vmatpush.msra.mxu0 0.0
      %2125 = vmatpush.msra.mxu0 0.0
      %2126 = vmatpush.msra.mxu0 0.0
      %2127 = vmatpush.msra.mxu0 0.0
      %2128 = vmatpush.msra.mxu0 0.0
      %2129 = vmatpush.msra.mxu0 0.0
      %v2130 = vand.u32 %v2034, 4294901760
      %2131 = vmatpush.msra.mxu0 %v2130
      %v2132 = vand.u32 %v2037, 4294901760
      %v2133 = vsub.f32 %v2037, %v2132
      %v2134 = vand.u32 %v2133, 4294901760
      %2135 = vmatmul.f32.gmra.mxu0 %v2134
      %v2136 = vpop.f32.mrf.mxu0
      %v2137 = vadd.f32 %v2113, %v2136
      %2138 = vdwg.mxu0
      %2139 = vmatpush.msra.mxu0 0.0
      %2140 = vmatpush.msra.mxu0 0.0
      %2141 = vmatpush.msra.mxu0 0.0
      %2142 = vmatpush.msra.mxu0 0.0
      %2143 = vmatpush.msra.mxu0 0.0
      %2144 = vmatpush.msra.mxu0 0.0
      %2145 = vmatpush.msra.mxu0 0.0
      %2146 = vmatpush.msra.mxu0 0.0
      %2147 = vmatpush.msra.mxu0 0.0
      %2148 = vmatpush.msra.mxu0 0.0
      %2149 = vmatpush.msra.mxu0 0.0
      %2150 = vmatpush.msra.mxu0 0.0
      %2151 = vmatpush.msra.mxu0 0.0
      %2152 = vmatpush.msra.mxu0 0.0
      %2153 = vmatpush.msra.mxu0 0.0
      %v2154 = vand.u32 %v2034, 4294901760
      %v2155 = vsub.f32 %v2034, %v2154
      %v2156 = vand.u32 %v2155, 4294901760
      %2157 = vmatpush.msra.mxu0 %v2156
      %v2158 = vand.u32 %v2037, 4294901760
      %2159 = vmatmul.f32.gmra.mxu0 %v2158
      %v2160 = vpop.f32.mrf.mxu0
      %v2161 = vadd.f32 %v2137, %v2160
      %2162 = vdwg.mxu0
      %2163 = vmatpush.msra.mxu0 0.0
      %2164 = vmatpush.msra.mxu0 0.0
      %2165 = vmatpush.msra.mxu0 0.0
      %2166 = vmatpush.msra.mxu0 0.0
      %2167 = vmatpush.msra.mxu0 0.0
      %2168 = vmatpush.msra.mxu0 0.0
      %2169 = vmatpush.msra.mxu0 0.0
      %2170 = vmatpush.msra.mxu0 0.0
      %2171 = vmatpush.msra.mxu0 0.0
      %2172 = vmatpush.msra.mxu0 0.0
      %2173 = vmatpush.msra.mxu0 0.0
      %2174 = vmatpush.msra.mxu0 0.0
      %2175 = vmatpush.msra.mxu0 0.0
      %2176 = vmatpush.msra.mxu0 0.0
      %2177 = vmatpush.msra.mxu0 0.0
      %v2178 = vand.u32 %v2034, 4294901760
      %2179 = vmatpush.msra.mxu0 %v2178
      %v2180 = vand.u32 %v2037, 4294901760
      %2181 = vmatmul.f32.gmra.mxu0 %v2180
      %v2182 = vpop.f32.mrf.mxu0
      %v2183 = vadd.f32 %v2161, %v2182
      %2184 = vdwg.mxu0
      %s2185 = scalar_lea.vmem [#allocation2], 96
      %2186 = vst [vmem:[%s2185] sm:$0xff] %v2183
      %s2187 = scalar_lea.vmem %s0, 104
      %v2188 = vld [vmem:[%s2187] sm:$0xff]
      %2189 = vrot.lane.b32.xlu0 %v169, 24
      %v2190 = vpop.permute.xlu0 %2189
      %v2191 = vsel %vm188, %v2190, 0
      %2193 = vmatpush.msra.mxu0 0.0
      %2194 = vmatpush.msra.mxu0 0.0
      %2195 = vmatpush.msra.mxu0 0.0
      %2196 = vmatpush.msra.mxu0 0.0
      %2197 = vmatpush.msra.mxu0 0.0
      %2198 = vmatpush.msra.mxu0 0.0
      %2199 = vmatpush.msra.mxu0 0.0
      %2200 = vmatpush.msra.mxu0 0.0
      %2201 = vmatpush.msra.mxu0 0.0
      %2202 = vmatpush.msra.mxu0 0.0
      %2203 = vmatpush.msra.mxu0 0.0
      %2204 = vmatpush.msra.mxu0 0.0
      %2205 = vmatpush.msra.mxu0 0.0
      %2206 = vmatpush.msra.mxu0 0.0
      %2207 = vmatpush.msra.mxu0 0.0
      %v2208 = vand.u32 %v2188, 4294901760
      %2209 = vmatpush.msra.mxu0 %v2208
      %v2210 = vand.u32 %v2191, 4294901760
      %v2211 = vsub.f32 %v2191, %v2210
      %v2212 = vand.u32 %v2211, 4294901760
      %v2213 = vsub.f32 %v2211, %v2212
      %v2214 = vand.u32 %v2213, 4294901760
      %2215 = vmatmul.f32.gmra.mxu0 %v2214
      %v2216 = vpop.f32.mrf.mxu0
      %v2217 = vadd.f32 0.0, %v2216
      %2218 = vdwg.mxu0
      %2219 = vmatpush.msra.mxu0 0.0
      %2220 = vmatpush.msra.mxu0 0.0
      %2221 = vmatpush.msra.mxu0 0.0
      %2222 = vmatpush.msra.mxu0 0.0
      %2223 = vmatpush.msra.mxu0 0.0
      %2224 = vmatpush.msra.mxu0 0.0
      %2225 = vmatpush.msra.mxu0 0.0
      %2226 = vmatpush.msra.mxu0 0.0
      %2227 = vmatpush.msra.mxu0 0.0
      %2228 = vmatpush.msra.mxu0 0.0
      %2229 = vmatpush.msra.mxu0 0.0
      %2230 = vmatpush.msra.mxu0 0.0
      %2231 = vmatpush.msra.mxu0 0.0
      %2232 = vmatpush.msra.mxu0 0.0
      %2233 = vmatpush.msra.mxu0 0.0
      %v2234 = vand.u32 %v2188, 4294901760
      %v2235 = vsub.f32 %v2188, %v2234
      %v2236 = vand.u32 %v2235, 4294901760
      %v2237 = vsub.f32 %v2235, %v2236
      %v2238 = vand.u32 %v2237, 4294901760
      %2239 = vmatpush.msra.mxu0 %v2238
      %v2240 = vand.u32 %v2191, 4294901760
      %2241 = vmatmul.f32.gmra.mxu0 %v2240
      %v2242 = vpop.f32.mrf.mxu0
      %v2243 = vadd.f32 %v2217, %v2242
      %2244 = vdwg.mxu0
      %2245 = vmatpush.msra.mxu0 0.0
      %2246 = vmatpush.msra.mxu0 0.0
      %2247 = vmatpush.msra.mxu0 0.0
      %2248 = vmatpush.msra.mxu0 0.0
      %2249 = vmatpush.msra.mxu0 0.0
      %2250 = vmatpush.msra.mxu0 0.0
      %2251 = vmatpush.msra.mxu0 0.0
      %2252 = vmatpush.msra.mxu0 0.0
      %2253 = vmatpush.msra.mxu0 0.0
      %2254 = vmatpush.msra.mxu0 0.0
      %2255 = vmatpush.msra.mxu0 0.0
      %2256 = vmatpush.msra.mxu0 0.0
      %2257 = vmatpush.msra.mxu0 0.0
      %2258 = vmatpush.msra.mxu0 0.0
      %2259 = vmatpush.msra.mxu0 0.0
      %v2260 = vand.u32 %v2188, 4294901760
      %v2261 = vsub.f32 %v2188, %v2260
      %2262 = vmatpush.msra.mxu0 %v2261
      %v2263 = vand.u32 %v2191, 4294901760
      %v2264 = vsub.f32 %v2191, %v2263
      %2265 = vmatmul.f32.gmra.mxu0 %v2264
      %v2266 = vpop.f32.mrf.mxu0
      %v2267 = vadd.f32 %v2243, %v2266
      %2268 = vdwg.mxu0
      %2269 = vmatpush.msra.mxu0 0.0
      %2270 = vmatpush.msra.mxu0 0.0
      %2271 = vmatpush.msra.mxu0 0.0
      %2272 = vmatpush.msra.mxu0 0.0
      %2273 = vmatpush.msra.mxu0 0.0
      %2274 = vmatpush.msra.mxu0 0.0
      %2275 = vmatpush.msra.mxu0 0.0
      %2276 = vmatpush.msra.mxu0 0.0
      %2277 = vmatpush.msra.mxu0 0.0
      %2278 = vmatpush.msra.mxu0 0.0
      %2279 = vmatpush.msra.mxu0 0.0
      %2280 = vmatpush.msra.mxu0 0.0
      %2281 = vmatpush.msra.mxu0 0.0
      %2282 = vmatpush.msra.mxu0 0.0
      %2283 = vmatpush.msra.mxu0 0.0
      %v2284 = vand.u32 %v2188, 4294901760
      %2285 = vmatpush.msra.mxu0 %v2284
      %v2286 = vand.u32 %v2191, 4294901760
      %v2287 = vsub.f32 %v2191, %v2286
      %v2288 = vand.u32 %v2287, 4294901760
      %2289 = vmatmul.f32.gmra.mxu0 %v2288
      %v2290 = vpop.f32.mrf.mxu0
      %v2291 = vadd.f32 %v2267, %v2290
      %2292 = vdwg.mxu0
      %2293 = vmatpush.msra.mxu0 0.0
      %2294 = vmatpush.msra.mxu0 0.0
      %2295 = vmatpush.msra.mxu0 0.0
      %2296 = vmatpush.msra.mxu0 0.0
      %2297 = vmatpush.msra.mxu0 0.0
      %2298 = vmatpush.msra.mxu0 0.0
      %2299 = vmatpush.msra.mxu0 0.0
      %2300 = vmatpush.msra.mxu0 0.0
      %2301 = vmatpush.msra.mxu0 0.0
      %2302 = vmatpush.msra.mxu0 0.0
      %2303 = vmatpush.msra.mxu0 0.0
      %2304 = vmatpush.msra.mxu0 0.0
      %2305 = vmatpush.msra.mxu0 0.0
      %2306 = vmatpush.msra.mxu0 0.0
      %2307 = vmatpush.msra.mxu0 0.0
      %v2308 = vand.u32 %v2188, 4294901760
      %v2309 = vsub.f32 %v2188, %v2308
      %v2310 = vand.u32 %v2309, 4294901760
      %2311 = vmatpush.msra.mxu0 %v2310
      %v2312 = vand.u32 %v2191, 4294901760
      %2313 = vmatmul.f32.gmra.mxu0 %v2312
      %v2314 = vpop.f32.mrf.mxu0
      %v2315 = vadd.f32 %v2291, %v2314
      %2316 = vdwg.mxu0
      %2317 = vmatpush.msra.mxu0 0.0
      %2318 = vmatpush.msra.mxu0 0.0
      %2319 = vmatpush.msra.mxu0 0.0
      %2320 = vmatpush.msra.mxu0 0.0
      %2321 = vmatpush.msra.mxu0 0.0
      %2322 = vmatpush.msra.mxu0 0.0
      %2323 = vmatpush.msra.mxu0 0.0
      %2324 = vmatpush.msra.mxu0 0.0
      %2325 = vmatpush.msra.mxu0 0.0
      %2326 = vmatpush.msra.mxu0 0.0
      %2327 = vmatpush.msra.mxu0 0.0
      %2328 = vmatpush.msra.mxu0 0.0
      %2329 = vmatpush.msra.mxu0 0.0
      %2330 = vmatpush.msra.mxu0 0.0
      %2331 = vmatpush.msra.mxu0 0.0
      %v2332 = vand.u32 %v2188, 4294901760
      %2333 = vmatpush.msra.mxu0 %v2332
      %v2334 = vand.u32 %v2191, 4294901760
      %2335 = vmatmul.f32.gmra.mxu0 %v2334
      %v2336 = vpop.f32.mrf.mxu0
      %v2337 = vadd.f32 %v2315, %v2336
      %2338 = vdwg.mxu0
      %s2339 = scalar_lea.vmem [#allocation2], 104
      %2340 = vst [vmem:[%s2339] sm:$0xff] %v2337
      %s2341 = scalar_lea.vmem %s0, 112
      %v2342 = vld [vmem:[%s2341] sm:$0xff]
      %2343 = vrot.lane.b32.xlu0 %v169, 16
      %v2344 = vpop.permute.xlu0 %2343
      %v2345 = vsel %vm188, %v2344, 0
      %2347 = vmatpush.msra.mxu0 0.0
      %2348 = vmatpush.msra.mxu0 0.0
      %2349 = vmatpush.msra.mxu0 0.0
      %2350 = vmatpush.msra.mxu0 0.0
      %2351 = vmatpush.msra.mxu0 0.0
      %2352 = vmatpush.msra.mxu0 0.0
      %2353 = vmatpush.msra.mxu0 0.0
      %2354 = vmatpush.msra.mxu0 0.0
      %2355 = vmatpush.msra.mxu0 0.0
      %2356 = vmatpush.msra.mxu0 0.0
      %2357 = vmatpush.msra.mxu0 0.0
      %2358 = vmatpush.msra.mxu0 0.0
      %2359 = vmatpush.msra.mxu0 0.0
      %2360 = vmatpush.msra.mxu0 0.0
      %2361 = vmatpush.msra.mxu0 0.0
      %v2362 = vand.u32 %v2342, 4294901760
      %2363 = vmatpush.msra.mxu0 %v2362
      %v2364 = vand.u32 %v2345, 4294901760
      %v2365 = vsub.f32 %v2345, %v2364
      %v2366 = vand.u32 %v2365, 4294901760
      %v2367 = vsub.f32 %v2365, %v2366
      %v2368 = vand.u32 %v2367, 4294901760
      %2369 = vmatmul.f32.gmra.mxu0 %v2368
      %v2370 = vpop.f32.mrf.mxu0
      %v2371 = vadd.f32 0.0, %v2370
      %2372 = vdwg.mxu0
      %2373 = vmatpush.msra.mxu0 0.0
      %2374 = vmatpush.msra.mxu0 0.0
      %2375 = vmatpush.msra.mxu0 0.0
      %2376 = vmatpush.msra.mxu0 0.0
      %2377 = vmatpush.msra.mxu0 0.0
      %2378 = vmatpush.msra.mxu0 0.0
      %2379 = vmatpush.msra.mxu0 0.0
      %2380 = vmatpush.msra.mxu0 0.0
      %2381 = vmatpush.msra.mxu0 0.0
      %2382 = vmatpush.msra.mxu0 0.0
      %2383 = vmatpush.msra.mxu0 0.0
      %2384 = vmatpush.msra.mxu0 0.0
      %2385 = vmatpush.msra.mxu0 0.0
      %2386 = vmatpush.msra.mxu0 0.0
      %2387 = vmatpush.msra.mxu0 0.0
      %v2388 = vand.u32 %v2342, 4294901760
      %v2389 = vsub.f32 %v2342, %v2388
      %v2390 = vand.u32 %v2389, 4294901760
      %v2391 = vsub.f32 %v2389, %v2390
      %v2392 = vand.u32 %v2391, 4294901760
      %2393 = vmatpush.msra.mxu0 %v2392
      %v2394 = vand.u32 %v2345, 4294901760
      %2395 = vmatmul.f32.gmra.mxu0 %v2394
      %v2396 = vpop.f32.mrf.mxu0
      %v2397 = vadd.f32 %v2371, %v2396
      %2398 = vdwg.mxu0
      %2399 = vmatpush.msra.mxu0 0.0
      %2400 = vmatpush.msra.mxu0 0.0
      %2401 = vmatpush.msra.mxu0 0.0
      %2402 = vmatpush.msra.mxu0 0.0
      %2403 = vmatpush.msra.mxu0 0.0
      %2404 = vmatpush.msra.mxu0 0.0
      %2405 = vmatpush.msra.mxu0 0.0
      %2406 = vmatpush.msra.mxu0 0.0
      %2407 = vmatpush.msra.mxu0 0.0
      %2408 = vmatpush.msra.mxu0 0.0
      %2409 = vmatpush.msra.mxu0 0.0
      %2410 = vmatpush.msra.mxu0 0.0
      %2411 = vmatpush.msra.mxu0 0.0
      %2412 = vmatpush.msra.mxu0 0.0
      %2413 = vmatpush.msra.mxu0 0.0
      %v2414 = vand.u32 %v2342, 4294901760
      %v2415 = vsub.f32 %v2342, %v2414
      %2416 = vmatpush.msra.mxu0 %v2415
      %v2417 = vand.u32 %v2345, 4294901760
      %v2418 = vsub.f32 %v2345, %v2417
      %2419 = vmatmul.f32.gmra.mxu0 %v2418
      %v2420 = vpop.f32.mrf.mxu0
      %v2421 = vadd.f32 %v2397, %v2420
      %2422 = vdwg.mxu0
      %2423 = vmatpush.msra.mxu0 0.0
      %2424 = vmatpush.msra.mxu0 0.0
      %2425 = vmatpush.msra.mxu0 0.0
      %2426 = vmatpush.msra.mxu0 0.0
      %2427 = vmatpush.msra.mxu0 0.0
      %2428 = vmatpush.msra.mxu0 0.0
      %2429 = vmatpush.msra.mxu0 0.0
      %2430 = vmatpush.msra.mxu0 0.0
      %2431 = vmatpush.msra.mxu0 0.0
      %2432 = vmatpush.msra.mxu0 0.0
      %2433 = vmatpush.msra.mxu0 0.0
      %2434 = vmatpush.msra.mxu0 0.0
      %2435 = vmatpush.msra.mxu0 0.0
      %2436 = vmatpush.msra.mxu0 0.0
      %2437 = vmatpush.msra.mxu0 0.0
      %v2438 = vand.u32 %v2342, 4294901760
      %2439 = vmatpush.msra.mxu0 %v2438
      %v2440 = vand.u32 %v2345, 4294901760
      %v2441 = vsub.f32 %v2345, %v2440
      %v2442 = vand.u32 %v2441, 4294901760
      %2443 = vmatmul.f32.gmra.mxu0 %v2442
      %v2444 = vpop.f32.mrf.mxu0
      %v2445 = vadd.f32 %v2421, %v2444
      %2446 = vdwg.mxu0
      %2447 = vmatpush.msra.mxu0 0.0
      %2448 = vmatpush.msra.mxu0 0.0
      %2449 = vmatpush.msra.mxu0 0.0
      %2450 = vmatpush.msra.mxu0 0.0
      %2451 = vmatpush.msra.mxu0 0.0
      %2452 = vmatpush.msra.mxu0 0.0
      %2453 = vmatpush.msra.mxu0 0.0
      %2454 = vmatpush.msra.mxu0 0.0
      %2455 = vmatpush.msra.mxu0 0.0
      %2456 = vmatpush.msra.mxu0 0.0
      %2457 = vmatpush.msra.mxu0 0.0
      %2458 = vmatpush.msra.mxu0 0.0
      %2459 = vmatpush.msra.mxu0 0.0
      %2460 = vmatpush.msra.mxu0 0.0
      %2461 = vmatpush.msra.mxu0 0.0
      %v2462 = vand.u32 %v2342, 4294901760
      %v2463 = vsub.f32 %v2342, %v2462
      %v2464 = vand.u32 %v2463, 4294901760
      %2465 = vmatpush.msra.mxu0 %v2464
      %v2466 = vand.u32 %v2345, 4294901760
      %2467 = vmatmul.f32.gmra.mxu0 %v2466
      %v2468 = vpop.f32.mrf.mxu0
      %v2469 = vadd.f32 %v2445, %v2468
      %2470 = vdwg.mxu0
      %2471 = vmatpush.msra.mxu0 0.0
      %2472 = vmatpush.msra.mxu0 0.0
      %2473 = vmatpush.msra.mxu0 0.0
      %2474 = vmatpush.msra.mxu0 0.0
      %2475 = vmatpush.msra.mxu0 0.0
      %2476 = vmatpush.msra.mxu0 0.0
      %2477 = vmatpush.msra.mxu0 0.0
      %2478 = vmatpush.msra.mxu0 0.0
      %2479 = vmatpush.msra.mxu0 0.0
      %2480 = vmatpush.msra.mxu0 0.0
      %2481 = vmatpush.msra.mxu0 0.0
      %2482 = vmatpush.msra.mxu0 0.0
      %2483 = vmatpush.msra.mxu0 0.0
      %2484 = vmatpush.msra.mxu0 0.0
      %2485 = vmatpush.msra.mxu0 0.0
      %v2486 = vand.u32 %v2342, 4294901760
      %2487 = vmatpush.msra.mxu0 %v2486
      %v2488 = vand.u32 %v2345, 4294901760
      %2489 = vmatmul.f32.gmra.mxu0 %v2488
      %v2490 = vpop.f32.mrf.mxu0
      %v2491 = vadd.f32 %v2469, %v2490
      %2492 = vdwg.mxu0
      %s2493 = scalar_lea.vmem [#allocation2], 112
      %2494 = vst [vmem:[%s2493] sm:$0xff] %v2491
      %s2495 = scalar_lea.vmem %s0, 120
      %v2496 = vld [vmem:[%s2495] sm:$0xff]
      %2497 = vrot.lane.b32.xlu0 %v169, 8
      %v2498 = vpop.permute.xlu0 %2497
      %v2499 = vsel %vm188, %v2498, 0
      %2501 = vmatpush.msra.mxu0 0.0
      %2502 = vmatpush.msra.mxu0 0.0
      %2503 = vmatpush.msra.mxu0 0.0
      %2504 = vmatpush.msra.mxu0 0.0
      %2505 = vmatpush.msra.mxu0 0.0
      %2506 = vmatpush.msra.mxu0 0.0
      %2507 = vmatpush.msra.mxu0 0.0
      %2508 = vmatpush.msra.mxu0 0.0
      %2509 = vmatpush.msra.mxu0 0.0
      %2510 = vmatpush.msra.mxu0 0.0
      %2511 = vmatpush.msra.mxu0 0.0
      %2512 = vmatpush.msra.mxu0 0.0
      %2513 = vmatpush.msra.mxu0 0.0
      %2514 = vmatpush.msra.mxu0 0.0
      %2515 = vmatpush.msra.mxu0 0.0
      %v2516 = vand.u32 %v2496, 4294901760
      %2517 = vmatpush.msra.mxu0 %v2516
      %v2518 = vand.u32 %v2499, 4294901760
      %v2519 = vsub.f32 %v2499, %v2518
      %v2520 = vand.u32 %v2519, 4294901760
      %v2521 = vsub.f32 %v2519, %v2520
      %v2522 = vand.u32 %v2521, 4294901760
      %2523 = vmatmul.f32.gmra.mxu0 %v2522
      %v2524 = vpop.f32.mrf.mxu0
      %v2525 = vadd.f32 0.0, %v2524
      %2526 = vdwg.mxu0
      %2527 = vmatpush.msra.mxu0 0.0
      %2528 = vmatpush.msra.mxu0 0.0
      %2529 = vmatpush.msra.mxu0 0.0
      %2530 = vmatpush.msra.mxu0 0.0
      %2531 = vmatpush.msra.mxu0 0.0
      %2532 = vmatpush.msra.mxu0 0.0
      %2533 = vmatpush.msra.mxu0 0.0
      %2534 = vmatpush.msra.mxu0 0.0
      %2535 = vmatpush.msra.mxu0 0.0
      %2536 = vmatpush.msra.mxu0 0.0
      %2537 = vmatpush.msra.mxu0 0.0
      %2538 = vmatpush.msra.mxu0 0.0
      %2539 = vmatpush.msra.mxu0 0.0
      %2540 = vmatpush.msra.mxu0 0.0
      %2541 = vmatpush.msra.mxu0 0.0
      %v2542 = vand.u32 %v2496, 4294901760
      %v2543 = vsub.f32 %v2496, %v2542
      %v2544 = vand.u32 %v2543, 4294901760
      %v2545 = vsub.f32 %v2543, %v2544
      %v2546 = vand.u32 %v2545, 4294901760
      %2547 = vmatpush.msra.mxu0 %v2546
      %v2548 = vand.u32 %v2499, 4294901760
      %2549 = vmatmul.f32.gmra.mxu0 %v2548
      %v2550 = vpop.f32.mrf.mxu0
      %v2551 = vadd.f32 %v2525, %v2550
      %2552 = vdwg.mxu0
      %2553 = vmatpush.msra.mxu0 0.0
      %2554 = vmatpush.msra.mxu0 0.0
      %2555 = vmatpush.msra.mxu0 0.0
      %2556 = vmatpush.msra.mxu0 0.0
      %2557 = vmatpush.msra.mxu0 0.0
      %2558 = vmatpush.msra.mxu0 0.0
      %2559 = vmatpush.msra.mxu0 0.0
      %2560 = vmatpush.msra.mxu0 0.0
      %2561 = vmatpush.msra.mxu0 0.0
      %2562 = vmatpush.msra.mxu0 0.0
      %2563 = vmatpush.msra.mxu0 0.0
      %2564 = vmatpush.msra.mxu0 0.0
      %2565 = vmatpush.msra.mxu0 0.0
      %2566 = vmatpush.msra.mxu0 0.0
      %2567 = vmatpush.msra.mxu0 0.0
      %v2568 = vand.u32 %v2496, 4294901760
      %v2569 = vsub.f32 %v2496, %v2568
      %2570 = vmatpush.msra.mxu0 %v2569
      %v2571 = vand.u32 %v2499, 4294901760
      %v2572 = vsub.f32 %v2499, %v2571
      %2573 = vmatmul.f32.gmra.mxu0 %v2572
      %v2574 = vpop.f32.mrf.mxu0
      %v2575 = vadd.f32 %v2551, %v2574
      %2576 = vdwg.mxu0
      %2577 = vmatpush.msra.mxu0 0.0
      %2578 = vmatpush.msra.mxu0 0.0
      %2579 = vmatpush.msra.mxu0 0.0
      %2580 = vmatpush.msra.mxu0 0.0
      %2581 = vmatpush.msra.mxu0 0.0
      %2582 = vmatpush.msra.mxu0 0.0
      %2583 = vmatpush.msra.mxu0 0.0
      %2584 = vmatpush.msra.mxu0 0.0
      %2585 = vmatpush.msra.mxu0 0.0
      %2586 = vmatpush.msra.mxu0 0.0
      %2587 = vmatpush.msra.mxu0 0.0
      %2588 = vmatpush.msra.mxu0 0.0
      %2589 = vmatpush.msra.mxu0 0.0
      %2590 = vmatpush.msra.mxu0 0.0
      %2591 = vmatpush.msra.mxu0 0.0
      %v2592 = vand.u32 %v2496, 4294901760
      %2593 = vmatpush.msra.mxu0 %v2592
      %v2594 = vand.u32 %v2499, 4294901760
      %v2595 = vsub.f32 %v2499, %v2594
      %v2596 = vand.u32 %v2595, 4294901760
      %2597 = vmatmul.f32.gmra.mxu0 %v2596
      %v2598 = vpop.f32.mrf.mxu0
      %v2599 = vadd.f32 %v2575, %v2598
      %2600 = vdwg.mxu0
      %2601 = vmatpush.msra.mxu0 0.0
      %2602 = vmatpush.msra.mxu0 0.0
      %2603 = vmatpush.msra.mxu0 0.0
      %2604 = vmatpush.msra.mxu0 0.0
      %2605 = vmatpush.msra.mxu0 0.0
      %2606 = vmatpush.msra.mxu0 0.0
      %2607 = vmatpush.msra.mxu0 0.0
      %2608 = vmatpush.msra.mxu0 0.0
      %2609 = vmatpush.msra.mxu0 0.0
      %2610 = vmatpush.msra.mxu0 0.0
      %2611 = vmatpush.msra.mxu0 0.0
      %2612 = vmatpush.msra.mxu0 0.0
      %2613 = vmatpush.msra.mxu0 0.0
      %2614 = vmatpush.msra.mxu0 0.0
      %2615 = vmatpush.msra.mxu0 0.0
      %v2616 = vand.u32 %v2496, 4294901760
      %v2617 = vsub.f32 %v2496, %v2616
      %v2618 = vand.u32 %v2617, 4294901760
      %2619 = vmatpush.msra.mxu0 %v2618
      %v2620 = vand.u32 %v2499, 4294901760
      %2621 = vmatmul.f32.gmra.mxu0 %v2620
      %v2622 = vpop.f32.mrf.mxu0
      %v2623 = vadd.f32 %v2599, %v2622
      %2624 = vdwg.mxu0
      %2625 = vmatpush.msra.mxu0 0.0
      %2626 = vmatpush.msra.mxu0 0.0
      %2627 = vmatpush.msra.mxu0 0.0
      %2628 = vmatpush.msra.mxu0 0.0
      %2629 = vmatpush.msra.mxu0 0.0
      %2630 = vmatpush.msra.mxu0 0.0
      %2631 = vmatpush.msra.mxu0 0.0
      %2632 = vmatpush.msra.mxu0 0.0
      %2633 = vmatpush.msra.mxu0 0.0
      %2634 = vmatpush.msra.mxu0 0.0
      %2635 = vmatpush.msra.mxu0 0.0
      %2636 = vmatpush.msra.mxu0 0.0
      %2637 = vmatpush.msra.mxu0 0.0
      %2638 = vmatpush.msra.mxu0 0.0
      %2639 = vmatpush.msra.mxu0 0.0
      %v2640 = vand.u32 %v2496, 4294901760
      %2641 = vmatpush.msra.mxu0 %v2640
      %v2642 = vand.u32 %v2499, 4294901760
      %2643 = vmatmul.f32.gmra.mxu0 %v2642
      %v2644 = vpop.f32.mrf.mxu0
      %v2645 = vadd.f32 %v2623, %v2644
      %2646 = vdwg.mxu0
      %s2647 = scalar_lea.vmem [#allocation2], 120
      %2648 = vst [vmem:[%s2647] sm:$0xff] %v2645
      %s2649 = scalar_lea.vmem %s0, 128
      %v2650 = vld [vmem:[%s2649] sm:$0xff]
      %v2652 = vsel %vm188, %v170, 0
      %2654 = vmatpush.msra.mxu0 0.0
      %2655 = vmatpush.msra.mxu0 0.0
      %2656 = vmatpush.msra.mxu0 0.0
      %2657 = vmatpush.msra.mxu0 0.0
      %2658 = vmatpush.msra.mxu0 0.0
      %2659 = vmatpush.msra.mxu0 0.0
      %2660 = vmatpush.msra.mxu0 0.0
      %2661 = vmatpush.msra.mxu0 0.0
      %2662 = vmatpush.msra.mxu0 0.0
      %2663 = vmatpush.msra.mxu0 0.0
      %2664 = vmatpush.msra.mxu0 0.0
      %2665 = vmatpush.msra.mxu0 0.0
      %2666 = vmatpush.msra.mxu0 0.0
      %2667 = vmatpush.msra.mxu0 0.0
      %2668 = vmatpush.msra.mxu0 0.0
      %v2669 = vand.u32 %v2650, 4294901760
      %2670 = vmatpush.msra.mxu0 %v2669
      %v2671 = vand.u32 %v2652, 4294901760
      %v2672 = vsub.f32 %v2652, %v2671
      %v2673 = vand.u32 %v2672, 4294901760
      %v2674 = vsub.f32 %v2672, %v2673
      %v2675 = vand.u32 %v2674, 4294901760
      %2676 = vmatmul.f32.gmra.mxu0 %v2675
      %v2677 = vpop.f32.mrf.mxu0
      %v2678 = vadd.f32 0.0, %v2677
      %2679 = vdwg.mxu0
      %2680 = vmatpush.msra.mxu0 0.0
      %2681 = vmatpush.msra.mxu0 0.0
      %2682 = vmatpush.msra.mxu0 0.0
      %2683 = vmatpush.msra.mxu0 0.0
      %2684 = vmatpush.msra.mxu0 0.0
      %2685 = vmatpush.msra.mxu0 0.0
      %2686 = vmatpush.msra.mxu0 0.0
      %2687 = vmatpush.msra.mxu0 0.0
      %2688 = vmatpush.msra.mxu0 0.0
      %2689 = vmatpush.msra.mxu0 0.0
      %2690 = vmatpush.msra.mxu0 0.0
      %2691 = vmatpush.msra.mxu0 0.0
      %2692 = vmatpush.msra.mxu0 0.0
      %2693 = vmatpush.msra.mxu0 0.0
      %2694 = vmatpush.msra.mxu0 0.0
      %v2695 = vand.u32 %v2650, 4294901760
      %v2696 = vsub.f32 %v2650, %v2695
      %v2697 = vand.u32 %v2696, 4294901760
      %v2698 = vsub.f32 %v2696, %v2697
      %v2699 = vand.u32 %v2698, 4294901760
      %2700 = vmatpush.msra.mxu0 %v2699
      %v2701 = vand.u32 %v2652, 4294901760
      %2702 = vmatmul.f32.gmra.mxu0 %v2701
      %v2703 = vpop.f32.mrf.mxu0
      %v2704 = vadd.f32 %v2678, %v2703
      %2705 = vdwg.mxu0
      %2706 = vmatpush.msra.mxu0 0.0
      %2707 = vmatpush.msra.mxu0 0.0
      %2708 = vmatpush.msra.mxu0 0.0
      %2709 = vmatpush.msra.mxu0 0.0
      %2710 = vmatpush.msra.mxu0 0.0
      %2711 = vmatpush.msra.mxu0 0.0
      %2712 = vmatpush.msra.mxu0 0.0
      %2713 = vmatpush.msra.mxu0 0.0
      %2714 = vmatpush.msra.mxu0 0.0
      %2715 = vmatpush.msra.mxu0 0.0
      %2716 = vmatpush.msra.mxu0 0.0
      %2717 = vmatpush.msra.mxu0 0.0
      %2718 = vmatpush.msra.mxu0 0.0
      %2719 = vmatpush.msra.mxu0 0.0
      %2720 = vmatpush.msra.mxu0 0.0
      %v2721 = vand.u32 %v2650, 4294901760
      %v2722 = vsub.f32 %v2650, %v2721
      %2723 = vmatpush.msra.mxu0 %v2722
      %v2724 = vand.u32 %v2652, 4294901760
      %v2725 = vsub.f32 %v2652, %v2724
      %2726 = vmatmul.f32.gmra.mxu0 %v2725
      %v2727 = vpop.f32.mrf.mxu0
      %v2728 = vadd.f32 %v2704, %v2727
      %2729 = vdwg.mxu0
      %2730 = vmatpush.msra.mxu0 0.0
      %2731 = vmatpush.msra.mxu0 0.0
      %2732 = vmatpush.msra.mxu0 0.0
      %2733 = vmatpush.msra.mxu0 0.0
      %2734 = vmatpush.msra.mxu0 0.0
      %2735 = vmatpush.msra.mxu0 0.0
      %2736 = vmatpush.msra.mxu0 0.0
      %2737 = vmatpush.msra.mxu0 0.0
      %2738 = vmatpush.msra.mxu0 0.0
      %2739 = vmatpush.msra.mxu0 0.0
      %2740 = vmatpush.msra.mxu0 0.0
      %2741 = vmatpush.msra.mxu0 0.0
      %2742 = vmatpush.msra.mxu0 0.0
      %2743 = vmatpush.msra.mxu0 0.0
      %2744 = vmatpush.msra.mxu0 0.0
      %v2745 = vand.u32 %v2650, 4294901760
      %2746 = vmatpush.msra.mxu0 %v2745
      %v2747 = vand.u32 %v2652, 4294901760
      %v2748 = vsub.f32 %v2652, %v2747
      %v2749 = vand.u32 %v2748, 4294901760
      %2750 = vmatmul.f32.gmra.mxu0 %v2749
      %v2751 = vpop.f32.mrf.mxu0
      %v2752 = vadd.f32 %v2728, %v2751
      %2753 = vdwg.mxu0
      %2754 = vmatpush.msra.mxu0 0.0
      %2755 = vmatpush.msra.mxu0 0.0
      %2756 = vmatpush.msra.mxu0 0.0
      %2757 = vmatpush.msra.mxu0 0.0
      %2758 = vmatpush.msra.mxu0 0.0
      %2759 = vmatpush.msra.mxu0 0.0
      %2760 = vmatpush.msra.mxu0 0.0
      %2761 = vmatpush.msra.mxu0 0.0
      %2762 = vmatpush.msra.mxu0 0.0
      %2763 = vmatpush.msra.mxu0 0.0
      %2764 = vmatpush.msra.mxu0 0.0
      %2765 = vmatpush.msra.mxu0 0.0
      %2766 = vmatpush.msra.mxu0 0.0
      %2767 = vmatpush.msra.mxu0 0.0
      %2768 = vmatpush.msra.mxu0 0.0
      %v2769 = vand.u32 %v2650, 4294901760
      %v2770 = vsub.f32 %v2650, %v2769
      %v2771 = vand.u32 %v2770, 4294901760
      %2772 = vmatpush.msra.mxu0 %v2771
      %v2773 = vand.u32 %v2652, 4294901760
      %2774 = vmatmul.f32.gmra.mxu0 %v2773
      %v2775 = vpop.f32.mrf.mxu0
      %v2776 = vadd.f32 %v2752, %v2775
      %2777 = vdwg.mxu0
      %2778 = vmatpush.msra.mxu0 0.0
      %2779 = vmatpush.msra.mxu0 0.0
      %2780 = vmatpush.msra.mxu0 0.0
      %2781 = vmatpush.msra.mxu0 0.0
      %2782 = vmatpush.msra.mxu0 0.0
      %2783 = vmatpush.msra.mxu0 0.0
      %2784 = vmatpush.msra.mxu0 0.0
      %2785 = vmatpush.msra.mxu0 0.0
      %2786 = vmatpush.msra.mxu0 0.0
      %2787 = vmatpush.msra.mxu0 0.0
      %2788 = vmatpush.msra.mxu0 0.0
      %2789 = vmatpush.msra.mxu0 0.0
      %2790 = vmatpush.msra.mxu0 0.0
      %2791 = vmatpush.msra.mxu0 0.0
      %2792 = vmatpush.msra.mxu0 0.0
      %v2793 = vand.u32 %v2650, 4294901760
      %2794 = vmatpush.msra.mxu0 %v2793
      %v2795 = vand.u32 %v2652, 4294901760
      %2796 = vmatmul.f32.gmra.mxu0 %v2795
      %v2797 = vpop.f32.mrf.mxu0
      %v2798 = vadd.f32 %v2776, %v2797
      %2799 = vdwg.mxu0
      %s2800 = scalar_lea.vmem [#allocation2], 128
      %2801 = vst [vmem:[%s2800] sm:$0xff] %v2798
      %s2802 = scalar_lea.vmem %s0, 136
      %v2803 = vld [vmem:[%s2802] sm:$0xff]
      %2804 = vrot.lane.b32.xlu0 %v170, 120
      %v2805 = vpop.permute.xlu0 %2804
      %v2806 = vsel %vm188, %v2805, 0
      %2808 = vmatpush.msra.mxu0 0.0
      %2809 = vmatpush.msra.mxu0 0.0
      %2810 = vmatpush.msra.mxu0 0.0
      %2811 = vmatpush.msra.mxu0 0.0
      %2812 = vmatpush.msra.mxu0 0.0
      %2813 = vmatpush.msra.mxu0 0.0
      %2814 = vmatpush.msra.mxu0 0.0
      %2815 = vmatpush.msra.mxu0 0.0
      %2816 = vmatpush.msra.mxu0 0.0
      %2817 = vmatpush.msra.mxu0 0.0
      %2818 = vmatpush.msra.mxu0 0.0
      %2819 = vmatpush.msra.mxu0 0.0
      %2820 = vmatpush.msra.mxu0 0.0
      %2821 = vmatpush.msra.mxu0 0.0
      %2822 = vmatpush.msra.mxu0 0.0
      %v2823 = vand.u32 %v2803, 4294901760
      %2824 = vmatpush.msra.mxu0 %v2823
      %v2825 = vand.u32 %v2806, 4294901760
      %v2826 = vsub.f32 %v2806, %v2825
      %v2827 = vand.u32 %v2826, 4294901760
      %v2828 = vsub.f32 %v2826, %v2827
      %v2829 = vand.u32 %v2828, 4294901760
      %2830 = vmatmul.f32.gmra.mxu0 %v2829
      %v2831 = vpop.f32.mrf.mxu0
      %v2832 = vadd.f32 0.0, %v2831
      %2833 = vdwg.mxu0
      %2834 = vmatpush.msra.mxu0 0.0
      %2835 = vmatpush.msra.mxu0 0.0
      %2836 = vmatpush.msra.mxu0 0.0
      %2837 = vmatpush.msra.mxu0 0.0
      %2838 = vmatpush.msra.mxu0 0.0
      %2839 = vmatpush.msra.mxu0 0.0
      %2840 = vmatpush.msra.mxu0 0.0
      %2841 = vmatpush.msra.mxu0 0.0
      %2842 = vmatpush.msra.mxu0 0.0
      %2843 = vmatpush.msra.mxu0 0.0
      %2844 = vmatpush.msra.mxu0 0.0
      %2845 = vmatpush.msra.mxu0 0.0
      %2846 = vmatpush.msra.mxu0 0.0
      %2847 = vmatpush.msra.mxu0 0.0
      %2848 = vmatpush.msra.mxu0 0.0
      %v2849 = vand.u32 %v2803, 4294901760
      %v2850 = vsub.f32 %v2803, %v2849
      %v2851 = vand.u32 %v2850, 4294901760
      %v2852 = vsub.f32 %v2850, %v2851
      %v2853 = vand.u32 %v2852, 4294901760
      %2854 = vmatpush.msra.mxu0 %v2853
      %v2855 = vand.u32 %v2806, 4294901760
      %2856 = vmatmul.f32.gmra.mxu0 %v2855
      %v2857 = vpop.f32.mrf.mxu0
      %v2858 = vadd.f32 %v2832, %v2857
      %2859 = vdwg.mxu0
      %2860 = vmatpush.msra.mxu0 0.0
      %2861 = vmatpush.msra.mxu0 0.0
      %2862 = vmatpush.msra.mxu0 0.0
      %2863 = vmatpush.msra.mxu0 0.0
      %2864 = vmatpush.msra.mxu0 0.0
      %2865 = vmatpush.msra.mxu0 0.0
      %2866 = vmatpush.msra.mxu0 0.0
      %2867 = vmatpush.msra.mxu0 0.0
      %2868 = vmatpush.msra.mxu0 0.0
      %2869 = vmatpush.msra.mxu0 0.0
      %2870 = vmatpush.msra.mxu0 0.0
      %2871 = vmatpush.msra.mxu0 0.0
      %2872 = vmatpush.msra.mxu0 0.0
      %2873 = vmatpush.msra.mxu0 0.0
      %2874 = vmatpush.msra.mxu0 0.0
      %v2875 = vand.u32 %v2803, 4294901760
      %v2876 = vsub.f32 %v2803, %v2875
      %2877 = vmatpush.msra.mxu0 %v2876
      %v2878 = vand.u32 %v2806, 4294901760
      %v2879 = vsub.f32 %v2806, %v2878
      %2880 = vmatmul.f32.gmra.mxu0 %v2879
      %v2881 = vpop.f32.mrf.mxu0
      %v2882 = vadd.f32 %v2858, %v2881
      %2883 = vdwg.mxu0
      %2884 = vmatpush.msra.mxu0 0.0
      %2885 = vmatpush.msra.mxu0 0.0
      %2886 = vmatpush.msra.mxu0 0.0
      %2887 = vmatpush.msra.mxu0 0.0
      %2888 = vmatpush.msra.mxu0 0.0
      %2889 = vmatpush.msra.mxu0 0.0
      %2890 = vmatpush.msra.mxu0 0.0
      %2891 = vmatpush.msra.mxu0 0.0
      %2892 = vmatpush.msra.mxu0 0.0
      %2893 = vmatpush.msra.mxu0 0.0
      %2894 = vmatpush.msra.mxu0 0.0
      %2895 = vmatpush.msra.mxu0 0.0
      %2896 = vmatpush.msra.mxu0 0.0
      %2897 = vmatpush.msra.mxu0 0.0
      %2898 = vmatpush.msra.mxu0 0.0
      %v2899 = vand.u32 %v2803, 4294901760
      %2900 = vmatpush.msra.mxu0 %v2899
      %v2901 = vand.u32 %v2806, 4294901760
      %v2902 = vsub.f32 %v2806, %v2901
      %v2903 = vand.u32 %v2902, 4294901760
      %2904 = vmatmul.f32.gmra.mxu0 %v2903
      %v2905 = vpop.f32.mrf.mxu0
      %v2906 = vadd.f32 %v2882, %v2905
      %2907 = vdwg.mxu0
      %2908 = vmatpush.msra.mxu0 0.0
      %2909 = vmatpush.msra.mxu0 0.0
      %2910 = vmatpush.msra.mxu0 0.0
      %2911 = vmatpush.msra.mxu0 0.0
      %2912 = vmatpush.msra.mxu0 0.0
      %2913 = vmatpush.msra.mxu0 0.0
      %2914 = vmatpush.msra.mxu0 0.0
      %2915 = vmatpush.msra.mxu0 0.0
      %2916 = vmatpush.msra.mxu0 0.0
      %2917 = vmatpush.msra.mxu0 0.0
      %2918 = vmatpush.msra.mxu0 0.0
      %2919 = vmatpush.msra.mxu0 0.0
      %2920 = vmatpush.msra.mxu0 0.0
      %2921 = vmatpush.msra.mxu0 0.0
      %2922 = vmatpush.msra.mxu0 0.0
      %v2923 = vand.u32 %v2803, 4294901760
      %v2924 = vsub.f32 %v2803, %v2923
      %v2925 = vand.u32 %v2924, 4294901760
      %2926 = vmatpush.msra.mxu0 %v2925
      %v2927 = vand.u32 %v2806, 4294901760
      %2928 = vmatmul.f32.gmra.mxu0 %v2927
      %v2929 = vpop.f32.mrf.mxu0
      %v2930 = vadd.f32 %v2906, %v2929
      %2931 = vdwg.mxu0
      %2932 = vmatpush.msra.mxu0 0.0
      %2933 = vmatpush.msra.mxu0 0.0
      %2934 = vmatpush.msra.mxu0 0.0
      %2935 = vmatpush.msra.mxu0 0.0
      %2936 = vmatpush.msra.mxu0 0.0
      %2937 = vmatpush.msra.mxu0 0.0
      %2938 = vmatpush.msra.mxu0 0.0
      %2939 = vmatpush.msra.mxu0 0.0
      %2940 = vmatpush.msra.mxu0 0.0
      %2941 = vmatpush.msra.mxu0 0.0
      %2942 = vmatpush.msra.mxu0 0.0
      %2943 = vmatpush.msra.mxu0 0.0
      %2944 = vmatpush.msra.mxu0 0.0
      %2945 = vmatpush.msra.mxu0 0.0
      %2946 = vmatpush.msra.mxu0 0.0
      %v2947 = vand.u32 %v2803, 4294901760
      %2948 = vmatpush.msra.mxu0 %v2947
      %v2949 = vand.u32 %v2806, 4294901760
      %2950 = vmatmul.f32.gmra.mxu0 %v2949
      %v2951 = vpop.f32.mrf.mxu0
      %v2952 = vadd.f32 %v2930, %v2951
      %2953 = vdwg.mxu0
      %s2954 = scalar_lea.vmem [#allocation2], 136
      %2955 = vst [vmem:[%s2954] sm:$0xff] %v2952
      %s2956 = scalar_lea.vmem %s0, 144
      %v2957 = vld [vmem:[%s2956] sm:$0xff]
      %2958 = vrot.lane.b32.xlu0 %v170, 112
      %v2959 = vpop.permute.xlu0 %2958
      %v2960 = vsel %vm188, %v2959, 0
      %2962 = vmatpush.msra.mxu0 0.0
      %2963 = vmatpush.msra.mxu0 0.0
      %2964 = vmatpush.msra.mxu0 0.0
      %2965 = vmatpush.msra.mxu0 0.0
      %2966 = vmatpush.msra.mxu0 0.0
      %2967 = vmatpush.msra.mxu0 0.0
      %2968 = vmatpush.msra.mxu0 0.0
      %2969 = vmatpush.msra.mxu0 0.0
      %2970 = vmatpush.msra.mxu0 0.0
      %2971 = vmatpush.msra.mxu0 0.0
      %2972 = vmatpush.msra.mxu0 0.0
      %2973 = vmatpush.msra.mxu0 0.0
      %2974 = vmatpush.msra.mxu0 0.0
      %2975 = vmatpush.msra.mxu0 0.0
      %2976 = vmatpush.msra.mxu0 0.0
      %v2977 = vand.u32 %v2957, 4294901760
      %2978 = vmatpush.msra.mxu0 %v2977
      %v2979 = vand.u32 %v2960, 4294901760
      %v2980 = vsub.f32 %v2960, %v2979
      %v2981 = vand.u32 %v2980, 4294901760
      %v2982 = vsub.f32 %v2980, %v2981
      %v2983 = vand.u32 %v2982, 4294901760
      %2984 = vmatmul.f32.gmra.mxu0 %v2983
      %v2985 = vpop.f32.mrf.mxu0
      %v2986 = vadd.f32 0.0, %v2985
      %2987 = vdwg.mxu0
      %2988 = vmatpush.msra.mxu0 0.0
      %2989 = vmatpush.msra.mxu0 0.0
      %2990 = vmatpush.msra.mxu0 0.0
      %2991 = vmatpush.msra.mxu0 0.0
      %2992 = vmatpush.msra.mxu0 0.0
      %2993 = vmatpush.msra.mxu0 0.0
      %2994 = vmatpush.msra.mxu0 0.0
      %2995 = vmatpush.msra.mxu0 0.0
      %2996 = vmatpush.msra.mxu0 0.0
      %2997 = vmatpush.msra.mxu0 0.0
      %2998 = vmatpush.msra.mxu0 0.0
      %2999 = vmatpush.msra.mxu0 0.0
      %3000 = vmatpush.msra.mxu0 0.0
      %3001 = vmatpush.msra.mxu0 0.0
      %3002 = vmatpush.msra.mxu0 0.0
      %v3003 = vand.u32 %v2957, 4294901760
      %v3004 = vsub.f32 %v2957, %v3003
      %v3005 = vand.u32 %v3004, 4294901760
      %v3006 = vsub.f32 %v3004, %v3005
      %v3007 = vand.u32 %v3006, 4294901760
      %3008 = vmatpush.msra.mxu0 %v3007
      %v3009 = vand.u32 %v2960, 4294901760
      %3010 = vmatmul.f32.gmra.mxu0 %v3009
      %v3011 = vpop.f32.mrf.mxu0
      %v3012 = vadd.f32 %v2986, %v3011
      %3013 = vdwg.mxu0
      %3014 = vmatpush.msra.mxu0 0.0
      %3015 = vmatpush.msra.mxu0 0.0
      %3016 = vmatpush.msra.mxu0 0.0
      %3017 = vmatpush.msra.mxu0 0.0
      %3018 = vmatpush.msra.mxu0 0.0
      %3019 = vmatpush.msra.mxu0 0.0
      %3020 = vmatpush.msra.mxu0 0.0
      %3021 = vmatpush.msra.mxu0 0.0
      %3022 = vmatpush.msra.mxu0 0.0
      %3023 = vmatpush.msra.mxu0 0.0
      %3024 = vmatpush.msra.mxu0 0.0
      %3025 = vmatpush.msra.mxu0 0.0
      %3026 = vmatpush.msra.mxu0 0.0
      %3027 = vmatpush.msra.mxu0 0.0
      %3028 = vmatpush.msra.mxu0 0.0
      %v3029 = vand.u32 %v2957, 4294901760
      %v3030 = vsub.f32 %v2957, %v3029
      %3031 = vmatpush.msra.mxu0 %v3030
      %v3032 = vand.u32 %v2960, 4294901760
      %v3033 = vsub.f32 %v2960, %v3032
      %3034 = vmatmul.f32.gmra.mxu0 %v3033
      %v3035 = vpop.f32.mrf.mxu0
      %v3036 = vadd.f32 %v3012, %v3035
      %3037 = vdwg.mxu0
      %3038 = vmatpush.msra.mxu0 0.0
      %3039 = vmatpush.msra.mxu0 0.0
      %3040 = vmatpush.msra.mxu0 0.0
      %3041 = vmatpush.msra.mxu0 0.0
      %3042 = vmatpush.msra.mxu0 0.0
      %3043 = vmatpush.msra.mxu0 0.0
      %3044 = vmatpush.msra.mxu0 0.0
      %3045 = vmatpush.msra.mxu0 0.0
      %3046 = vmatpush.msra.mxu0 0.0
      %3047 = vmatpush.msra.mxu0 0.0
      %3048 = vmatpush.msra.mxu0 0.0
      %3049 = vmatpush.msra.mxu0 0.0
      %3050 = vmatpush.msra.mxu0 0.0
      %3051 = vmatpush.msra.mxu0 0.0
      %3052 = vmatpush.msra.mxu0 0.0
      %v3053 = vand.u32 %v2957, 4294901760
      %3054 = vmatpush.msra.mxu0 %v3053
      %v3055 = vand.u32 %v2960, 4294901760
      %v3056 = vsub.f32 %v2960, %v3055
      %v3057 = vand.u32 %v3056, 4294901760
      %3058 = vmatmul.f32.gmra.mxu0 %v3057
      %v3059 = vpop.f32.mrf.mxu0
      %v3060 = vadd.f32 %v3036, %v3059
      %3061 = vdwg.mxu0
      %3062 = vmatpush.msra.mxu0 0.0
      %3063 = vmatpush.msra.mxu0 0.0
      %3064 = vmatpush.msra.mxu0 0.0
      %3065 = vmatpush.msra.mxu0 0.0
      %3066 = vmatpush.msra.mxu0 0.0
      %3067 = vmatpush.msra.mxu0 0.0
      %3068 = vmatpush.msra.mxu0 0.0
      %3069 = vmatpush.msra.mxu0 0.0
      %3070 = vmatpush.msra.mxu0 0.0
      %3071 = vmatpush.msra.mxu0 0.0
      %3072 = vmatpush.msra.mxu0 0.0
      %3073 = vmatpush.msra.mxu0 0.0
      %3074 = vmatpush.msra.mxu0 0.0
      %3075 = vmatpush.msra.mxu0 0.0
      %3076 = vmatpush.msra.mxu0 0.0
      %v3077 = vand.u32 %v2957, 4294901760
      %v3078 = vsub.f32 %v2957, %v3077
      %v3079 = vand.u32 %v3078, 4294901760
      %3080 = vmatpush.msra.mxu0 %v3079
      %v3081 = vand.u32 %v2960, 4294901760
      %3082 = vmatmul.f32.gmra.mxu0 %v3081
      %v3083 = vpop.f32.mrf.mxu0
      %v3084 = vadd.f32 %v3060, %v3083
      %3085 = vdwg.mxu0
      %3086 = vmatpush.msra.mxu0 0.0
      %3087 = vmatpush.msra.mxu0 0.0
      %3088 = vmatpush.msra.mxu0 0.0
      %3089 = vmatpush.msra.mxu0 0.0
      %3090 = vmatpush.msra.mxu0 0.0
      %3091 = vmatpush.msra.mxu0 0.0
      %3092 = vmatpush.msra.mxu0 0.0
      %3093 = vmatpush.msra.mxu0 0.0
      %3094 = vmatpush.msra.mxu0 0.0
      %3095 = vmatpush.msra.mxu0 0.0
      %3096 = vmatpush.msra.mxu0 0.0
      %3097 = vmatpush.msra.mxu0 0.0
      %3098 = vmatpush.msra.mxu0 0.0
      %3099 = vmatpush.msra.mxu0 0.0
      %3100 = vmatpush.msra.mxu0 0.0
      %v3101 = vand.u32 %v2957, 4294901760
      %3102 = vmatpush.msra.mxu0 %v3101
      %v3103 = vand.u32 %v2960, 4294901760
      %3104 = vmatmul.f32.gmra.mxu0 %v3103
      %v3105 = vpop.f32.mrf.mxu0
      %v3106 = vadd.f32 %v3084, %v3105
      %3107 = vdwg.mxu0
      %s3108 = scalar_lea.vmem [#allocation2], 144
      %3109 = vst [vmem:[%s3108] sm:$0xff] %v3106
      %s3110 = scalar_lea.vmem %s0, 152
      %v3111 = vld [vmem:[%s3110] sm:$0xff]
      %3112 = vrot.lane.b32.xlu0 %v170, 104
      %v3113 = vpop.permute.xlu0 %3112
      %v3114 = vsel %vm188, %v3113, 0
      %3116 = vmatpush.msra.mxu0 0.0
      %3117 = vmatpush.msra.mxu0 0.0
      %3118 = vmatpush.msra.mxu0 0.0
      %3119 = vmatpush.msra.mxu0 0.0
      %3120 = vmatpush.msra.mxu0 0.0
      %3121 = vmatpush.msra.mxu0 0.0
      %3122 = vmatpush.msra.mxu0 0.0
      %3123 = vmatpush.msra.mxu0 0.0
      %3124 = vmatpush.msra.mxu0 0.0
      %3125 = vmatpush.msra.mxu0 0.0
      %3126 = vmatpush.msra.mxu0 0.0
      %3127 = vmatpush.msra.mxu0 0.0
      %3128 = vmatpush.msra.mxu0 0.0
      %3129 = vmatpush.msra.mxu0 0.0
      %3130 = vmatpush.msra.mxu0 0.0
      %v3131 = vand.u32 %v3111, 4294901760
      %3132 = vmatpush.msra.mxu0 %v3131
      %v3133 = vand.u32 %v3114, 4294901760
      %v3134 = vsub.f32 %v3114, %v3133
      %v3135 = vand.u32 %v3134, 4294901760
      %v3136 = vsub.f32 %v3134, %v3135
      %v3137 = vand.u32 %v3136, 4294901760
      %3138 = vmatmul.f32.gmra.mxu0 %v3137
      %v3139 = vpop.f32.mrf.mxu0
      %v3140 = vadd.f32 0.0, %v3139
      %3141 = vdwg.mxu0
      %3142 = vmatpush.msra.mxu0 0.0
      %3143 = vmatpush.msra.mxu0 0.0
      %3144 = vmatpush.msra.mxu0 0.0
      %3145 = vmatpush.msra.mxu0 0.0
      %3146 = vmatpush.msra.mxu0 0.0
      %3147 = vmatpush.msra.mxu0 0.0
      %3148 = vmatpush.msra.mxu0 0.0
      %3149 = vmatpush.msra.mxu0 0.0
      %3150 = vmatpush.msra.mxu0 0.0
      %3151 = vmatpush.msra.mxu0 0.0
      %3152 = vmatpush.msra.mxu0 0.0
      %3153 = vmatpush.msra.mxu0 0.0
      %3154 = vmatpush.msra.mxu0 0.0
      %3155 = vmatpush.msra.mxu0 0.0
      %3156 = vmatpush.msra.mxu0 0.0
      %v3157 = vand.u32 %v3111, 4294901760
      %v3158 = vsub.f32 %v3111, %v3157
      %v3159 = vand.u32 %v3158, 4294901760
      %v3160 = vsub.f32 %v3158, %v3159
      %v3161 = vand.u32 %v3160, 4294901760
      %3162 = vmatpush.msra.mxu0 %v3161
      %v3163 = vand.u32 %v3114, 4294901760
      %3164 = vmatmul.f32.gmra.mxu0 %v3163
      %v3165 = vpop.f32.mrf.mxu0
      %v3166 = vadd.f32 %v3140, %v3165
      %3167 = vdwg.mxu0
      %3168 = vmatpush.msra.mxu0 0.0
      %3169 = vmatpush.msra.mxu0 0.0
      %3170 = vmatpush.msra.mxu0 0.0
      %3171 = vmatpush.msra.mxu0 0.0
      %3172 = vmatpush.msra.mxu0 0.0
      %3173 = vmatpush.msra.mxu0 0.0
      %3174 = vmatpush.msra.mxu0 0.0
      %3175 = vmatpush.msra.mxu0 0.0
      %3176 = vmatpush.msra.mxu0 0.0
      %3177 = vmatpush.msra.mxu0 0.0
      %3178 = vmatpush.msra.mxu0 0.0
      %3179 = vmatpush.msra.mxu0 0.0
      %3180 = vmatpush.msra.mxu0 0.0
      %3181 = vmatpush.msra.mxu0 0.0
      %3182 = vmatpush.msra.mxu0 0.0
      %v3183 = vand.u32 %v3111, 4294901760
      %v3184 = vsub.f32 %v3111, %v3183
      %3185 = vmatpush.msra.mxu0 %v3184
      %v3186 = vand.u32 %v3114, 4294901760
      %v3187 = vsub.f32 %v3114, %v3186
      %3188 = vmatmul.f32.gmra.mxu0 %v3187
      %v3189 = vpop.f32.mrf.mxu0
      %v3190 = vadd.f32 %v3166, %v3189
      %3191 = vdwg.mxu0
      %3192 = vmatpush.msra.mxu0 0.0
      %3193 = vmatpush.msra.mxu0 0.0
      %3194 = vmatpush.msra.mxu0 0.0
      %3195 = vmatpush.msra.mxu0 0.0
      %3196 = vmatpush.msra.mxu0 0.0
      %3197 = vmatpush.msra.mxu0 0.0
      %3198 = vmatpush.msra.mxu0 0.0
      %3199 = vmatpush.msra.mxu0 0.0
      %3200 = vmatpush.msra.mxu0 0.0
      %3201 = vmatpush.msra.mxu0 0.0
      %3202 = vmatpush.msra.mxu0 0.0
      %3203 = vmatpush.msra.mxu0 0.0
      %3204 = vmatpush.msra.mxu0 0.0
      %3205 = vmatpush.msra.mxu0 0.0
      %3206 = vmatpush.msra.mxu0 0.0
      %v3207 = vand.u32 %v3111, 4294901760
      %3208 = vmatpush.msra.mxu0 %v3207
      %v3209 = vand.u32 %v3114, 4294901760
      %v3210 = vsub.f32 %v3114, %v3209
      %v3211 = vand.u32 %v3210, 4294901760
      %3212 = vmatmul.f32.gmra.mxu0 %v3211
      %v3213 = vpop.f32.mrf.mxu0
      %v3214 = vadd.f32 %v3190, %v3213
      %3215 = vdwg.mxu0
      %3216 = vmatpush.msra.mxu0 0.0
      %3217 = vmatpush.msra.mxu0 0.0
      %3218 = vmatpush.msra.mxu0 0.0
      %3219 = vmatpush.msra.mxu0 0.0
      %3220 = vmatpush.msra.mxu0 0.0
      %3221 = vmatpush.msra.mxu0 0.0
      %3222 = vmatpush.msra.mxu0 0.0
      %3223 = vmatpush.msra.mxu0 0.0
      %3224 = vmatpush.msra.mxu0 0.0
      %3225 = vmatpush.msra.mxu0 0.0
      %3226 = vmatpush.msra.mxu0 0.0
      %3227 = vmatpush.msra.mxu0 0.0
      %3228 = vmatpush.msra.mxu0 0.0
      %3229 = vmatpush.msra.mxu0 0.0
      %3230 = vmatpush.msra.mxu0 0.0
      %v3231 = vand.u32 %v3111, 4294901760
      %v3232 = vsub.f32 %v3111, %v3231
      %v3233 = vand.u32 %v3232, 4294901760
      %3234 = vmatpush.msra.mxu0 %v3233
      %v3235 = vand.u32 %v3114, 4294901760
      %3236 = vmatmul.f32.gmra.mxu0 %v3235
      %v3237 = vpop.f32.mrf.mxu0
      %v3238 = vadd.f32 %v3214, %v3237
      %3239 = vdwg.mxu0
      %3240 = vmatpush.msra.mxu0 0.0
      %3241 = vmatpush.msra.mxu0 0.0
      %3242 = vmatpush.msra.mxu0 0.0
      %3243 = vmatpush.msra.mxu0 0.0
      %3244 = vmatpush.msra.mxu0 0.0
      %3245 = vmatpush.msra.mxu0 0.0
      %3246 = vmatpush.msra.mxu0 0.0
      %3247 = vmatpush.msra.mxu0 0.0
      %3248 = vmatpush.msra.mxu0 0.0
      %3249 = vmatpush.msra.mxu0 0.0
      %3250 = vmatpush.msra.mxu0 0.0
      %3251 = vmatpush.msra.mxu0 0.0
      %3252 = vmatpush.msra.mxu0 0.0
      %3253 = vmatpush.msra.mxu0 0.0
      %3254 = vmatpush.msra.mxu0 0.0
      %v3255 = vand.u32 %v3111, 4294901760
      %3256 = vmatpush.msra.mxu0 %v3255
      %v3257 = vand.u32 %v3114, 4294901760
      %3258 = vmatmul.f32.gmra.mxu0 %v3257
      %v3259 = vpop.f32.mrf.mxu0
      %v3260 = vadd.f32 %v3238, %v3259
      %3261 = vdwg.mxu0
      %s3262 = scalar_lea.vmem [#allocation2], 152
      %3263 = vst [vmem:[%s3262] sm:$0xff] %v3260
      %s3264 = scalar_lea.vmem %s0, 160
      %v3265 = vld [vmem:[%s3264] sm:$0xff]
      %3266 = vrot.lane.b32.xlu0 %v170, 96
      %v3267 = vpop.permute.xlu0 %3266
      %v3268 = vsel %vm188, %v3267, 0
      %3270 = vmatpush.msra.mxu0 0.0
      %3271 = vmatpush.msra.mxu0 0.0
      %3272 = vmatpush.msra.mxu0 0.0
      %3273 = vmatpush.msra.mxu0 0.0
      %3274 = vmatpush.msra.mxu0 0.0
      %3275 = vmatpush.msra.mxu0 0.0
      %3276 = vmatpush.msra.mxu0 0.0
      %3277 = vmatpush.msra.mxu0 0.0
      %3278 = vmatpush.msra.mxu0 0.0
      %3279 = vmatpush.msra.mxu0 0.0
      %3280 = vmatpush.msra.mxu0 0.0
      %3281 = vmatpush.msra.mxu0 0.0
      %3282 = vmatpush.msra.mxu0 0.0
      %3283 = vmatpush.msra.mxu0 0.0
      %3284 = vmatpush.msra.mxu0 0.0
      %v3285 = vand.u32 %v3265, 4294901760
      %3286 = vmatpush.msra.mxu0 %v3285
      %v3287 = vand.u32 %v3268, 4294901760
      %v3288 = vsub.f32 %v3268, %v3287
      %v3289 = vand.u32 %v3288, 4294901760
      %v3290 = vsub.f32 %v3288, %v3289
      %v3291 = vand.u32 %v3290, 4294901760
      %3292 = vmatmul.f32.gmra.mxu0 %v3291
      %v3293 = vpop.f32.mrf.mxu0
      %v3294 = vadd.f32 0.0, %v3293
      %3295 = vdwg.mxu0
      %3296 = vmatpush.msra.mxu0 0.0
      %3297 = vmatpush.msra.mxu0 0.0
      %3298 = vmatpush.msra.mxu0 0.0
      %3299 = vmatpush.msra.mxu0 0.0
      %3300 = vmatpush.msra.mxu0 0.0
      %3301 = vmatpush.msra.mxu0 0.0
      %3302 = vmatpush.msra.mxu0 0.0
      %3303 = vmatpush.msra.mxu0 0.0
      %3304 = vmatpush.msra.mxu0 0.0
      %3305 = vmatpush.msra.mxu0 0.0
      %3306 = vmatpush.msra.mxu0 0.0
      %3307 = vmatpush.msra.mxu0 0.0
      %3308 = vmatpush.msra.mxu0 0.0
      %3309 = vmatpush.msra.mxu0 0.0
      %3310 = vmatpush.msra.mxu0 0.0
      %v3311 = vand.u32 %v3265, 4294901760
      %v3312 = vsub.f32 %v3265, %v3311
      %v3313 = vand.u32 %v3312, 4294901760
      %v3314 = vsub.f32 %v3312, %v3313
      %v3315 = vand.u32 %v3314, 4294901760
      %3316 = vmatpush.msra.mxu0 %v3315
      %v3317 = vand.u32 %v3268, 4294901760
      %3318 = vmatmul.f32.gmra.mxu0 %v3317
      %v3319 = vpop.f32.mrf.mxu0
      %v3320 = vadd.f32 %v3294, %v3319
      %3321 = vdwg.mxu0
      %3322 = vmatpush.msra.mxu0 0.0
      %3323 = vmatpush.msra.mxu0 0.0
      %3324 = vmatpush.msra.mxu0 0.0
      %3325 = vmatpush.msra.mxu0 0.0
      %3326 = vmatpush.msra.mxu0 0.0
      %3327 = vmatpush.msra.mxu0 0.0
      %3328 = vmatpush.msra.mxu0 0.0
      %3329 = vmatpush.msra.mxu0 0.0
      %3330 = vmatpush.msra.mxu0 0.0
      %3331 = vmatpush.msra.mxu0 0.0
      %3332 = vmatpush.msra.mxu0 0.0
      %3333 = vmatpush.msra.mxu0 0.0
      %3334 = vmatpush.msra.mxu0 0.0
      %3335 = vmatpush.msra.mxu0 0.0
      %3336 = vmatpush.msra.mxu0 0.0
      %v3337 = vand.u32 %v3265, 4294901760
      %v3338 = vsub.f32 %v3265, %v3337
      %3339 = vmatpush.msra.mxu0 %v3338
      %v3340 = vand.u32 %v3268, 4294901760
      %v3341 = vsub.f32 %v3268, %v3340
      %3342 = vmatmul.f32.gmra.mxu0 %v3341
      %v3343 = vpop.f32.mrf.mxu0
      %v3344 = vadd.f32 %v3320, %v3343
      %3345 = vdwg.mxu0
      %3346 = vmatpush.msra.mxu0 0.0
      %3347 = vmatpush.msra.mxu0 0.0
      %3348 = vmatpush.msra.mxu0 0.0
      %3349 = vmatpush.msra.mxu0 0.0
      %3350 = vmatpush.msra.mxu0 0.0
      %3351 = vmatpush.msra.mxu0 0.0
      %3352 = vmatpush.msra.mxu0 0.0
      %3353 = vmatpush.msra.mxu0 0.0
      %3354 = vmatpush.msra.mxu0 0.0
      %3355 = vmatpush.msra.mxu0 0.0
      %3356 = vmatpush.msra.mxu0 0.0
      %3357 = vmatpush.msra.mxu0 0.0
      %3358 = vmatpush.msra.mxu0 0.0
      %3359 = vmatpush.msra.mxu0 0.0
      %3360 = vmatpush.msra.mxu0 0.0
      %v3361 = vand.u32 %v3265, 4294901760
      %3362 = vmatpush.msra.mxu0 %v3361
      %v3363 = vand.u32 %v3268, 4294901760
      %v3364 = vsub.f32 %v3268, %v3363
      %v3365 = vand.u32 %v3364, 4294901760
      %3366 = vmatmul.f32.gmra.mxu0 %v3365
      %v3367 = vpop.f32.mrf.mxu0
      %v3368 = vadd.f32 %v3344, %v3367
      %3369 = vdwg.mxu0
      %3370 = vmatpush.msra.mxu0 0.0
      %3371 = vmatpush.msra.mxu0 0.0
      %3372 = vmatpush.msra.mxu0 0.0
      %3373 = vmatpush.msra.mxu0 0.0
      %3374 = vmatpush.msra.mxu0 0.0
      %3375 = vmatpush.msra.mxu0 0.0
      %3376 = vmatpush.msra.mxu0 0.0
      %3377 = vmatpush.msra.mxu0 0.0
      %3378 = vmatpush.msra.mxu0 0.0
      %3379 = vmatpush.msra.mxu0 0.0
      %3380 = vmatpush.msra.mxu0 0.0
      %3381 = vmatpush.msra.mxu0 0.0
      %3382 = vmatpush.msra.mxu0 0.0
      %3383 = vmatpush.msra.mxu0 0.0
      %3384 = vmatpush.msra.mxu0 0.0
      %v3385 = vand.u32 %v3265, 4294901760
      %v3386 = vsub.f32 %v3265, %v3385
      %v3387 = vand.u32 %v3386, 4294901760
      %3388 = vmatpush.msra.mxu0 %v3387
      %v3389 = vand.u32 %v3268, 4294901760
      %3390 = vmatmul.f32.gmra.mxu0 %v3389
      %v3391 = vpop.f32.mrf.mxu0
      %v3392 = vadd.f32 %v3368, %v3391
      %3393 = vdwg.mxu0
      %3394 = vmatpush.msra.mxu0 0.0
      %3395 = vmatpush.msra.mxu0 0.0
      %3396 = vmatpush.msra.mxu0 0.0
      %3397 = vmatpush.msra.mxu0 0.0
      %3398 = vmatpush.msra.mxu0 0.0
      %3399 = vmatpush.msra.mxu0 0.0
      %3400 = vmatpush.msra.mxu0 0.0
      %3401 = vmatpush.msra.mxu0 0.0
      %3402 = vmatpush.msra.mxu0 0.0
      %3403 = vmatpush.msra.mxu0 0.0
      %3404 = vmatpush.msra.mxu0 0.0
      %3405 = vmatpush.msra.mxu0 0.0
      %3406 = vmatpush.msra.mxu0 0.0
      %3407 = vmatpush.msra.mxu0 0.0
      %3408 = vmatpush.msra.mxu0 0.0
      %v3409 = vand.u32 %v3265, 4294901760
      %3410 = vmatpush.msra.mxu0 %v3409
      %v3411 = vand.u32 %v3268, 4294901760
      %3412 = vmatmul.f32.gmra.mxu0 %v3411
      %v3413 = vpop.f32.mrf.mxu0
      %v3414 = vadd.f32 %v3392, %v3413
      %3415 = vdwg.mxu0
      %s3416 = scalar_lea.vmem [#allocation2], 160
      %3417 = vst [vmem:[%s3416] sm:$0xff] %v3414
      %s3418 = scalar_lea.vmem %s0, 168
      %v3419 = vld [vmem:[%s3418] sm:$0xff]
      %3420 = vrot.lane.b32.xlu0 %v170, 88
      %v3421 = vpop.permute.xlu0 %3420
      %v3422 = vsel %vm188, %v3421, 0
      %3424 = vmatpush.msra.mxu0 0.0
      %3425 = vmatpush.msra.mxu0 0.0
      %3426 = vmatpush.msra.mxu0 0.0
      %3427 = vmatpush.msra.mxu0 0.0
      %3428 = vmatpush.msra.mxu0 0.0
      %3429 = vmatpush.msra.mxu0 0.0
      %3430 = vmatpush.msra.mxu0 0.0
      %3431 = vmatpush.msra.mxu0 0.0
      %3432 = vmatpush.msra.mxu0 0.0
      %3433 = vmatpush.msra.mxu0 0.0
      %3434 = vmatpush.msra.mxu0 0.0
      %3435 = vmatpush.msra.mxu0 0.0
      %3436 = vmatpush.msra.mxu0 0.0
      %3437 = vmatpush.msra.mxu0 0.0
      %3438 = vmatpush.msra.mxu0 0.0
      %v3439 = vand.u32 %v3419, 4294901760
      %3440 = vmatpush.msra.mxu0 %v3439
      %v3441 = vand.u32 %v3422, 4294901760
      %v3442 = vsub.f32 %v3422, %v3441
      %v3443 = vand.u32 %v3442, 4294901760
      %v3444 = vsub.f32 %v3442, %v3443
      %v3445 = vand.u32 %v3444, 4294901760
      %3446 = vmatmul.f32.gmra.mxu0 %v3445
      %v3447 = vpop.f32.mrf.mxu0
      %v3448 = vadd.f32 0.0, %v3447
      %3449 = vdwg.mxu0
      %3450 = vmatpush.msra.mxu0 0.0
      %3451 = vmatpush.msra.mxu0 0.0
      %3452 = vmatpush.msra.mxu0 0.0
      %3453 = vmatpush.msra.mxu0 0.0
      %3454 = vmatpush.msra.mxu0 0.0
      %3455 = vmatpush.msra.mxu0 0.0
      %3456 = vmatpush.msra.mxu0 0.0
      %3457 = vmatpush.msra.mxu0 0.0
      %3458 = vmatpush.msra.mxu0 0.0
      %3459 = vmatpush.msra.mxu0 0.0
      %3460 = vmatpush.msra.mxu0 0.0
      %3461 = vmatpush.msra.mxu0 0.0
      %3462 = vmatpush.msra.mxu0 0.0
      %3463 = vmatpush.msra.mxu0 0.0
      %3464 = vmatpush.msra.mxu0 0.0
      %v3465 = vand.u32 %v3419, 4294901760
      %v3466 = vsub.f32 %v3419, %v3465
      %v3467 = vand.u32 %v3466, 4294901760
      %v3468 = vsub.f32 %v3466, %v3467
      %v3469 = vand.u32 %v3468, 4294901760
      %3470 = vmatpush.msra.mxu0 %v3469
      %v3471 = vand.u32 %v3422, 4294901760
      %3472 = vmatmul.f32.gmra.mxu0 %v3471
      %v3473 = vpop.f32.mrf.mxu0
      %v3474 = vadd.f32 %v3448, %v3473
      %3475 = vdwg.mxu0
      %3476 = vmatpush.msra.mxu0 0.0
      %3477 = vmatpush.msra.mxu0 0.0
      %3478 = vmatpush.msra.mxu0 0.0
      %3479 = vmatpush.msra.mxu0 0.0
      %3480 = vmatpush.msra.mxu0 0.0
      %3481 = vmatpush.msra.mxu0 0.0
      %3482 = vmatpush.msra.mxu0 0.0
      %3483 = vmatpush.msra.mxu0 0.0
      %3484 = vmatpush.msra.mxu0 0.0
      %3485 = vmatpush.msra.mxu0 0.0
      %3486 = vmatpush.msra.mxu0 0.0
      %3487 = vmatpush.msra.mxu0 0.0
      %3488 = vmatpush.msra.mxu0 0.0
      %3489 = vmatpush.msra.mxu0 0.0
      %3490 = vmatpush.msra.mxu0 0.0
      %v3491 = vand.u32 %v3419, 4294901760
      %v3492 = vsub.f32 %v3419, %v3491
      %3493 = vmatpush.msra.mxu0 %v3492
      %v3494 = vand.u32 %v3422, 4294901760
      %v3495 = vsub.f32 %v3422, %v3494
      %3496 = vmatmul.f32.gmra.mxu0 %v3495
      %v3497 = vpop.f32.mrf.mxu0
      %v3498 = vadd.f32 %v3474, %v3497
      %3499 = vdwg.mxu0
      %3500 = vmatpush.msra.mxu0 0.0
      %3501 = vmatpush.msra.mxu0 0.0
      %3502 = vmatpush.msra.mxu0 0.0
      %3503 = vmatpush.msra.mxu0 0.0
      %3504 = vmatpush.msra.mxu0 0.0
      %3505 = vmatpush.msra.mxu0 0.0
      %3506 = vmatpush.msra.mxu0 0.0
      %3507 = vmatpush.msra.mxu0 0.0
      %3508 = vmatpush.msra.mxu0 0.0
      %3509 = vmatpush.msra.mxu0 0.0
      %3510 = vmatpush.msra.mxu0 0.0
      %3511 = vmatpush.msra.mxu0 0.0
      %3512 = vmatpush.msra.mxu0 0.0
      %3513 = vmatpush.msra.mxu0 0.0
      %3514 = vmatpush.msra.mxu0 0.0
      %v3515 = vand.u32 %v3419, 4294901760
      %3516 = vmatpush.msra.mxu0 %v3515
      %v3517 = vand.u32 %v3422, 4294901760
      %v3518 = vsub.f32 %v3422, %v3517
      %v3519 = vand.u32 %v3518, 4294901760
      %3520 = vmatmul.f32.gmra.mxu0 %v3519
      %v3521 = vpop.f32.mrf.mxu0
      %v3522 = vadd.f32 %v3498, %v3521
      %3523 = vdwg.mxu0
      %3524 = vmatpush.msra.mxu0 0.0
      %3525 = vmatpush.msra.mxu0 0.0
      %3526 = vmatpush.msra.mxu0 0.0
      %3527 = vmatpush.msra.mxu0 0.0
      %3528 = vmatpush.msra.mxu0 0.0
      %3529 = vmatpush.msra.mxu0 0.0
      %3530 = vmatpush.msra.mxu0 0.0
      %3531 = vmatpush.msra.mxu0 0.0
      %3532 = vmatpush.msra.mxu0 0.0
      %3533 = vmatpush.msra.mxu0 0.0
      %3534 = vmatpush.msra.mxu0 0.0
      %3535 = vmatpush.msra.mxu0 0.0
      %3536 = vmatpush.msra.mxu0 0.0
      %3537 = vmatpush.msra.mxu0 0.0
      %3538 = vmatpush.msra.mxu0 0.0
      %v3539 = vand.u32 %v3419, 4294901760
      %v3540 = vsub.f32 %v3419, %v3539
      %v3541 = vand.u32 %v3540, 4294901760
      %3542 = vmatpush.msra.mxu0 %v3541
      %v3543 = vand.u32 %v3422, 4294901760
      %3544 = vmatmul.f32.gmra.mxu0 %v3543
      %v3545 = vpop.f32.mrf.mxu0
      %v3546 = vadd.f32 %v3522, %v3545
      %3547 = vdwg.mxu0
      %3548 = vmatpush.msra.mxu0 0.0
      %3549 = vmatpush.msra.mxu0 0.0
      %3550 = vmatpush.msra.mxu0 0.0
      %3551 = vmatpush.msra.mxu0 0.0
      %3552 = vmatpush.msra.mxu0 0.0
      %3553 = vmatpush.msra.mxu0 0.0
      %3554 = vmatpush.msra.mxu0 0.0
      %3555 = vmatpush.msra.mxu0 0.0
      %3556 = vmatpush.msra.mxu0 0.0
      %3557 = vmatpush.msra.mxu0 0.0
      %3558 = vmatpush.msra.mxu0 0.0
      %3559 = vmatpush.msra.mxu0 0.0
      %3560 = vmatpush.msra.mxu0 0.0
      %3561 = vmatpush.msra.mxu0 0.0
      %3562 = vmatpush.msra.mxu0 0.0
      %v3563 = vand.u32 %v3419, 4294901760
      %3564 = vmatpush.msra.mxu0 %v3563
      %v3565 = vand.u32 %v3422, 4294901760
      %3566 = vmatmul.f32.gmra.mxu0 %v3565
      %v3567 = vpop.f32.mrf.mxu0
      %v3568 = vadd.f32 %v3546, %v3567
      %3569 = vdwg.mxu0
      %s3570 = scalar_lea.vmem [#allocation2], 168
      %3571 = vst [vmem:[%s3570] sm:$0xff] %v3568
      %s3572 = scalar_lea.vmem %s0, 176
      %v3573 = vld [vmem:[%s3572] sm:$0xff]
      %3574 = vrot.lane.b32.xlu0 %v170, 80
      %v3575 = vpop.permute.xlu0 %3574
      %v3576 = vsel %vm188, %v3575, 0
      %3578 = vmatpush.msra.mxu0 0.0
      %3579 = vmatpush.msra.mxu0 0.0
      %3580 = vmatpush.msra.mxu0 0.0
      %3581 = vmatpush.msra.mxu0 0.0
      %3582 = vmatpush.msra.mxu0 0.0
      %3583 = vmatpush.msra.mxu0 0.0
      %3584 = vmatpush.msra.mxu0 0.0
      %3585 = vmatpush.msra.mxu0 0.0
      %3586 = vmatpush.msra.mxu0 0.0
      %3587 = vmatpush.msra.mxu0 0.0
      %3588 = vmatpush.msra.mxu0 0.0
      %3589 = vmatpush.msra.mxu0 0.0
      %3590 = vmatpush.msra.mxu0 0.0
      %3591 = vmatpush.msra.mxu0 0.0
      %3592 = vmatpush.msra.mxu0 0.0
      %v3593 = vand.u32 %v3573, 4294901760
      %3594 = vmatpush.msra.mxu0 %v3593
      %v3595 = vand.u32 %v3576, 4294901760
      %v3596 = vsub.f32 %v3576, %v3595
      %v3597 = vand.u32 %v3596, 4294901760
      %v3598 = vsub.f32 %v3596, %v3597
      %v3599 = vand.u32 %v3598, 4294901760
      %3600 = vmatmul.f32.gmra.mxu0 %v3599
      %v3601 = vpop.f32.mrf.mxu0
      %v3602 = vadd.f32 0.0, %v3601
      %3603 = vdwg.mxu0
      %3604 = vmatpush.msra.mxu0 0.0
      %3605 = vmatpush.msra.mxu0 0.0
      %3606 = vmatpush.msra.mxu0 0.0
      %3607 = vmatpush.msra.mxu0 0.0
      %3608 = vmatpush.msra.mxu0 0.0
      %3609 = vmatpush.msra.mxu0 0.0
      %3610 = vmatpush.msra.mxu0 0.0
      %3611 = vmatpush.msra.mxu0 0.0
      %3612 = vmatpush.msra.mxu0 0.0
      %3613 = vmatpush.msra.mxu0 0.0
      %3614 = vmatpush.msra.mxu0 0.0
      %3615 = vmatpush.msra.mxu0 0.0
      %3616 = vmatpush.msra.mxu0 0.0
      %3617 = vmatpush.msra.mxu0 0.0
      %3618 = vmatpush.msra.mxu0 0.0
      %v3619 = vand.u32 %v3573, 4294901760
      %v3620 = vsub.f32 %v3573, %v3619
      %v3621 = vand.u32 %v3620, 4294901760
      %v3622 = vsub.f32 %v3620, %v3621
      %v3623 = vand.u32 %v3622, 4294901760
      %3624 = vmatpush.msra.mxu0 %v3623
      %v3625 = vand.u32 %v3576, 4294901760
      %3626 = vmatmul.f32.gmra.mxu0 %v3625
      %v3627 = vpop.f32.mrf.mxu0
      %v3628 = vadd.f32 %v3602, %v3627
      %3629 = vdwg.mxu0
      %3630 = vmatpush.msra.mxu0 0.0
      %3631 = vmatpush.msra.mxu0 0.0
      %3632 = vmatpush.msra.mxu0 0.0
      %3633 = vmatpush.msra.mxu0 0.0
      %3634 = vmatpush.msra.mxu0 0.0
      %3635 = vmatpush.msra.mxu0 0.0
      %3636 = vmatpush.msra.mxu0 0.0
      %3637 = vmatpush.msra.mxu0 0.0
      %3638 = vmatpush.msra.mxu0 0.0
      %3639 = vmatpush.msra.mxu0 0.0
      %3640 = vmatpush.msra.mxu0 0.0
      %3641 = vmatpush.msra.mxu0 0.0
      %3642 = vmatpush.msra.mxu0 0.0
      %3643 = vmatpush.msra.mxu0 0.0
      %3644 = vmatpush.msra.mxu0 0.0
      %v3645 = vand.u32 %v3573, 4294901760
      %v3646 = vsub.f32 %v3573, %v3645
      %3647 = vmatpush.msra.mxu0 %v3646
      %v3648 = vand.u32 %v3576, 4294901760
      %v3649 = vsub.f32 %v3576, %v3648
      %3650 = vmatmul.f32.gmra.mxu0 %v3649
      %v3651 = vpop.f32.mrf.mxu0
      %v3652 = vadd.f32 %v3628, %v3651
      %3653 = vdwg.mxu0
      %3654 = vmatpush.msra.mxu0 0.0
      %3655 = vmatpush.msra.mxu0 0.0
      %3656 = vmatpush.msra.mxu0 0.0
      %3657 = vmatpush.msra.mxu0 0.0
      %3658 = vmatpush.msra.mxu0 0.0
      %3659 = vmatpush.msra.mxu0 0.0
      %3660 = vmatpush.msra.mxu0 0.0
      %3661 = vmatpush.msra.mxu0 0.0
      %3662 = vmatpush.msra.mxu0 0.0
      %3663 = vmatpush.msra.mxu0 0.0
      %3664 = vmatpush.msra.mxu0 0.0
      %3665 = vmatpush.msra.mxu0 0.0
      %3666 = vmatpush.msra.mxu0 0.0
      %3667 = vmatpush.msra.mxu0 0.0
      %3668 = vmatpush.msra.mxu0 0.0
      %v3669 = vand.u32 %v3573, 4294901760
      %3670 = vmatpush.msra.mxu0 %v3669
      %v3671 = vand.u32 %v3576, 4294901760
      %v3672 = vsub.f32 %v3576, %v3671
      %v3673 = vand.u32 %v3672, 4294901760
      %3674 = vmatmul.f32.gmra.mxu0 %v3673
      %v3675 = vpop.f32.mrf.mxu0
      %v3676 = vadd.f32 %v3652, %v3675
      %3677 = vdwg.mxu0
      %3678 = vmatpush.msra.mxu0 0.0
      %3679 = vmatpush.msra.mxu0 0.0
      %3680 = vmatpush.msra.mxu0 0.0
      %3681 = vmatpush.msra.mxu0 0.0
      %3682 = vmatpush.msra.mxu0 0.0
      %3683 = vmatpush.msra.mxu0 0.0
      %3684 = vmatpush.msra.mxu0 0.0
      %3685 = vmatpush.msra.mxu0 0.0
      %3686 = vmatpush.msra.mxu0 0.0
      %3687 = vmatpush.msra.mxu0 0.0
      %3688 = vmatpush.msra.mxu0 0.0
      %3689 = vmatpush.msra.mxu0 0.0
      %3690 = vmatpush.msra.mxu0 0.0
      %3691 = vmatpush.msra.mxu0 0.0
      %3692 = vmatpush.msra.mxu0 0.0
      %v3693 = vand.u32 %v3573, 4294901760
      %v3694 = vsub.f32 %v3573, %v3693
      %v3695 = vand.u32 %v3694, 4294901760
      %3696 = vmatpush.msra.mxu0 %v3695
      %v3697 = vand.u32 %v3576, 4294901760
      %3698 = vmatmul.f32.gmra.mxu0 %v3697
      %v3699 = vpop.f32.mrf.mxu0
      %v3700 = vadd.f32 %v3676, %v3699
      %3701 = vdwg.mxu0
      %3702 = vmatpush.msra.mxu0 0.0
      %3703 = vmatpush.msra.mxu0 0.0
      %3704 = vmatpush.msra.mxu0 0.0
      %3705 = vmatpush.msra.mxu0 0.0
      %3706 = vmatpush.msra.mxu0 0.0
      %3707 = vmatpush.msra.mxu0 0.0
      %3708 = vmatpush.msra.mxu0 0.0
      %3709 = vmatpush.msra.mxu0 0.0
      %3710 = vmatpush.msra.mxu0 0.0
      %3711 = vmatpush.msra.mxu0 0.0
      %3712 = vmatpush.msra.mxu0 0.0
      %3713 = vmatpush.msra.mxu0 0.0
      %3714 = vmatpush.msra.mxu0 0.0
      %3715 = vmatpush.msra.mxu0 0.0
      %3716 = vmatpush.msra.mxu0 0.0
      %v3717 = vand.u32 %v3573, 4294901760
      %3718 = vmatpush.msra.mxu0 %v3717
      %v3719 = vand.u32 %v3576, 4294901760
      %3720 = vmatmul.f32.gmra.mxu0 %v3719
      %v3721 = vpop.f32.mrf.mxu0
      %v3722 = vadd.f32 %v3700, %v3721
      %3723 = vdwg.mxu0
      %s3724 = scalar_lea.vmem [#allocation2], 176
      %3725 = vst [vmem:[%s3724] sm:$0xff] %v3722
      %s3726 = scalar_lea.vmem %s0, 184
      %v3727 = vld [vmem:[%s3726] sm:$0xff]
      %3728 = vrot.lane.b32.xlu0 %v170, 72
      %v3729 = vpop.permute.xlu0 %3728
      %v3730 = vsel %vm188, %v3729, 0
      %3732 = vmatpush.msra.mxu0 0.0
      %3733 = vmatpush.msra.mxu0 0.0
      %3734 = vmatpush.msra.mxu0 0.0
      %3735 = vmatpush.msra.mxu0 0.0
      %3736 = vmatpush.msra.mxu0 0.0
      %3737 = vmatpush.msra.mxu0 0.0
      %3738 = vmatpush.msra.mxu0 0.0
      %3739 = vmatpush.msra.mxu0 0.0
      %3740 = vmatpush.msra.mxu0 0.0
      %3741 = vmatpush.msra.mxu0 0.0
      %3742 = vmatpush.msra.mxu0 0.0
      %3743 = vmatpush.msra.mxu0 0.0
      %3744 = vmatpush.msra.mxu0 0.0
      %3745 = vmatpush.msra.mxu0 0.0
      %3746 = vmatpush.msra.mxu0 0.0
      %v3747 = vand.u32 %v3727, 4294901760
      %3748 = vmatpush.msra.mxu0 %v3747
      %v3749 = vand.u32 %v3730, 4294901760
      %v3750 = vsub.f32 %v3730, %v3749
      %v3751 = vand.u32 %v3750, 4294901760
      %v3752 = vsub.f32 %v3750, %v3751
      %v3753 = vand.u32 %v3752, 4294901760
      %3754 = vmatmul.f32.gmra.mxu0 %v3753
      %v3755 = vpop.f32.mrf.mxu0
      %v3756 = vadd.f32 0.0, %v3755
      %3757 = vdwg.mxu0
      %3758 = vmatpush.msra.mxu0 0.0
      %3759 = vmatpush.msra.mxu0 0.0
      %3760 = vmatpush.msra.mxu0 0.0
      %3761 = vmatpush.msra.mxu0 0.0
      %3762 = vmatpush.msra.mxu0 0.0
      %3763 = vmatpush.msra.mxu0 0.0
      %3764 = vmatpush.msra.mxu0 0.0
      %3765 = vmatpush.msra.mxu0 0.0
      %3766 = vmatpush.msra.mxu0 0.0
      %3767 = vmatpush.msra.mxu0 0.0
      %3768 = vmatpush.msra.mxu0 0.0
      %3769 = vmatpush.msra.mxu0 0.0
      %3770 = vmatpush.msra.mxu0 0.0
      %3771 = vmatpush.msra.mxu0 0.0
      %3772 = vmatpush.msra.mxu0 0.0
      %v3773 = vand.u32 %v3727, 4294901760
      %v3774 = vsub.f32 %v3727, %v3773
      %v3775 = vand.u32 %v3774, 4294901760
      %v3776 = vsub.f32 %v3774, %v3775
      %v3777 = vand.u32 %v3776, 4294901760
      %3778 = vmatpush.msra.mxu0 %v3777
      %v3779 = vand.u32 %v3730, 4294901760
      %3780 = vmatmul.f32.gmra.mxu0 %v3779
      %v3781 = vpop.f32.mrf.mxu0
      %v3782 = vadd.f32 %v3756, %v3781
      %3783 = vdwg.mxu0
      %3784 = vmatpush.msra.mxu0 0.0
      %3785 = vmatpush.msra.mxu0 0.0
      %3786 = vmatpush.msra.mxu0 0.0
      %3787 = vmatpush.msra.mxu0 0.0
      %3788 = vmatpush.msra.mxu0 0.0
      %3789 = vmatpush.msra.mxu0 0.0
      %3790 = vmatpush.msra.mxu0 0.0
      %3791 = vmatpush.msra.mxu0 0.0
      %3792 = vmatpush.msra.mxu0 0.0
      %3793 = vmatpush.msra.mxu0 0.0
      %3794 = vmatpush.msra.mxu0 0.0
      %3795 = vmatpush.msra.mxu0 0.0
      %3796 = vmatpush.msra.mxu0 0.0
      %3797 = vmatpush.msra.mxu0 0.0
      %3798 = vmatpush.msra.mxu0 0.0
      %v3799 = vand.u32 %v3727, 4294901760
      %v3800 = vsub.f32 %v3727, %v3799
      %3801 = vmatpush.msra.mxu0 %v3800
      %v3802 = vand.u32 %v3730, 4294901760
      %v3803 = vsub.f32 %v3730, %v3802
      %3804 = vmatmul.f32.gmra.mxu0 %v3803
      %v3805 = vpop.f32.mrf.mxu0
      %v3806 = vadd.f32 %v3782, %v3805
      %3807 = vdwg.mxu0
      %3808 = vmatpush.msra.mxu0 0.0
      %3809 = vmatpush.msra.mxu0 0.0
      %3810 = vmatpush.msra.mxu0 0.0
      %3811 = vmatpush.msra.mxu0 0.0
      %3812 = vmatpush.msra.mxu0 0.0
      %3813 = vmatpush.msra.mxu0 0.0
      %3814 = vmatpush.msra.mxu0 0.0
      %3815 = vmatpush.msra.mxu0 0.0
      %3816 = vmatpush.msra.mxu0 0.0
      %3817 = vmatpush.msra.mxu0 0.0
      %3818 = vmatpush.msra.mxu0 0.0
      %3819 = vmatpush.msra.mxu0 0.0
      %3820 = vmatpush.msra.mxu0 0.0
      %3821 = vmatpush.msra.mxu0 0.0
      %3822 = vmatpush.msra.mxu0 0.0
      %v3823 = vand.u32 %v3727, 4294901760
      %3824 = vmatpush.msra.mxu0 %v3823
      %v3825 = vand.u32 %v3730, 4294901760
      %v3826 = vsub.f32 %v3730, %v3825
      %v3827 = vand.u32 %v3826, 4294901760
      %3828 = vmatmul.f32.gmra.mxu0 %v3827
      %v3829 = vpop.f32.mrf.mxu0
      %v3830 = vadd.f32 %v3806, %v3829
      %3831 = vdwg.mxu0
      %3832 = vmatpush.msra.mxu0 0.0
      %3833 = vmatpush.msra.mxu0 0.0
      %3834 = vmatpush.msra.mxu0 0.0
      %3835 = vmatpush.msra.mxu0 0.0
      %3836 = vmatpush.msra.mxu0 0.0
      %3837 = vmatpush.msra.mxu0 0.0
      %3838 = vmatpush.msra.mxu0 0.0
      %3839 = vmatpush.msra.mxu0 0.0
      %3840 = vmatpush.msra.mxu0 0.0
      %3841 = vmatpush.msra.mxu0 0.0
      %3842 = vmatpush.msra.mxu0 0.0
      %3843 = vmatpush.msra.mxu0 0.0
      %3844 = vmatpush.msra.mxu0 0.0
      %3845 = vmatpush.msra.mxu0 0.0
      %3846 = vmatpush.msra.mxu0 0.0
      %v3847 = vand.u32 %v3727, 4294901760
      %v3848 = vsub.f32 %v3727, %v3847
      %v3849 = vand.u32 %v3848, 4294901760
      %3850 = vmatpush.msra.mxu0 %v3849
      %v3851 = vand.u32 %v3730, 4294901760
      %3852 = vmatmul.f32.gmra.mxu0 %v3851
      %v3853 = vpop.f32.mrf.mxu0
      %v3854 = vadd.f32 %v3830, %v3853
      %3855 = vdwg.mxu0
      %3856 = vmatpush.msra.mxu0 0.0
      %3857 = vmatpush.msra.mxu0 0.0
      %3858 = vmatpush.msra.mxu0 0.0
      %3859 = vmatpush.msra.mxu0 0.0
      %3860 = vmatpush.msra.mxu0 0.0
      %3861 = vmatpush.msra.mxu0 0.0
      %3862 = vmatpush.msra.mxu0 0.0
      %3863 = vmatpush.msra.mxu0 0.0
      %3864 = vmatpush.msra.mxu0 0.0
      %3865 = vmatpush.msra.mxu0 0.0
      %3866 = vmatpush.msra.mxu0 0.0
      %3867 = vmatpush.msra.mxu0 0.0
      %3868 = vmatpush.msra.mxu0 0.0
      %3869 = vmatpush.msra.mxu0 0.0
      %3870 = vmatpush.msra.mxu0 0.0
      %v3871 = vand.u32 %v3727, 4294901760
      %3872 = vmatpush.msra.mxu0 %v3871
      %v3873 = vand.u32 %v3730, 4294901760
      %3874 = vmatmul.f32.gmra.mxu0 %v3873
      %v3875 = vpop.f32.mrf.mxu0
      %v3876 = vadd.f32 %v3854, %v3875
      %3877 = vdwg.mxu0
      %s3878 = scalar_lea.vmem [#allocation2], 184
      %3879 = vst [vmem:[%s3878] sm:$0xff] %v3876
      %s3880 = scalar_lea.vmem %s0, 192
      %v3881 = vld [vmem:[%s3880] sm:$0xff]
      %3882 = vrot.lane.b32.xlu0 %v170, 64
      %v3883 = vpop.permute.xlu0 %3882
      %v3884 = vsel %vm188, %v3883, 0
      %3886 = vmatpush.msra.mxu0 0.0
      %3887 = vmatpush.msra.mxu0 0.0
      %3888 = vmatpush.msra.mxu0 0.0
      %3889 = vmatpush.msra.mxu0 0.0
      %3890 = vmatpush.msra.mxu0 0.0
      %3891 = vmatpush.msra.mxu0 0.0
      %3892 = vmatpush.msra.mxu0 0.0
      %3893 = vmatpush.msra.mxu0 0.0
      %3894 = vmatpush.msra.mxu0 0.0
      %3895 = vmatpush.msra.mxu0 0.0
      %3896 = vmatpush.msra.mxu0 0.0
      %3897 = vmatpush.msra.mxu0 0.0
      %3898 = vmatpush.msra.mxu0 0.0
      %3899 = vmatpush.msra.mxu0 0.0
      %3900 = vmatpush.msra.mxu0 0.0
      %v3901 = vand.u32 %v3881, 4294901760
      %3902 = vmatpush.msra.mxu0 %v3901
      %v3903 = vand.u32 %v3884, 4294901760
      %v3904 = vsub.f32 %v3884, %v3903
      %v3905 = vand.u32 %v3904, 4294901760
      %v3906 = vsub.f32 %v3904, %v3905
      %v3907 = vand.u32 %v3906, 4294901760
      %3908 = vmatmul.f32.gmra.mxu0 %v3907
      %v3909 = vpop.f32.mrf.mxu0
      %v3910 = vadd.f32 0.0, %v3909
      %3911 = vdwg.mxu0
      %3912 = vmatpush.msra.mxu0 0.0
      %3913 = vmatpush.msra.mxu0 0.0
      %3914 = vmatpush.msra.mxu0 0.0
      %3915 = vmatpush.msra.mxu0 0.0
      %3916 = vmatpush.msra.mxu0 0.0
      %3917 = vmatpush.msra.mxu0 0.0
      %3918 = vmatpush.msra.mxu0 0.0
      %3919 = vmatpush.msra.mxu0 0.0
      %3920 = vmatpush.msra.mxu0 0.0
      %3921 = vmatpush.msra.mxu0 0.0
      %3922 = vmatpush.msra.mxu0 0.0
      %3923 = vmatpush.msra.mxu0 0.0
      %3924 = vmatpush.msra.mxu0 0.0
      %3925 = vmatpush.msra.mxu0 0.0
      %3926 = vmatpush.msra.mxu0 0.0
      %v3927 = vand.u32 %v3881, 4294901760
      %v3928 = vsub.f32 %v3881, %v3927
      %v3929 = vand.u32 %v3928, 4294901760
      %v3930 = vsub.f32 %v3928, %v3929
      %v3931 = vand.u32 %v3930, 4294901760
      %3932 = vmatpush.msra.mxu0 %v3931
      %v3933 = vand.u32 %v3884, 4294901760
      %3934 = vmatmul.f32.gmra.mxu0 %v3933
      %v3935 = vpop.f32.mrf.mxu0
      %v3936 = vadd.f32 %v3910, %v3935
      %3937 = vdwg.mxu0
      %3938 = vmatpush.msra.mxu0 0.0
      %3939 = vmatpush.msra.mxu0 0.0
      %3940 = vmatpush.msra.mxu0 0.0
      %3941 = vmatpush.msra.mxu0 0.0
      %3942 = vmatpush.msra.mxu0 0.0
      %3943 = vmatpush.msra.mxu0 0.0
      %3944 = vmatpush.msra.mxu0 0.0
      %3945 = vmatpush.msra.mxu0 0.0
      %3946 = vmatpush.msra.mxu0 0.0
      %3947 = vmatpush.msra.mxu0 0.0
      %3948 = vmatpush.msra.mxu0 0.0
      %3949 = vmatpush.msra.mxu0 0.0
      %3950 = vmatpush.msra.mxu0 0.0
      %3951 = vmatpush.msra.mxu0 0.0
      %3952 = vmatpush.msra.mxu0 0.0
      %v3953 = vand.u32 %v3881, 4294901760
      %v3954 = vsub.f32 %v3881, %v3953
      %3955 = vmatpush.msra.mxu0 %v3954
      %v3956 = vand.u32 %v3884, 4294901760
      %v3957 = vsub.f32 %v3884, %v3956
      %3958 = vmatmul.f32.gmra.mxu0 %v3957
      %v3959 = vpop.f32.mrf.mxu0
      %v3960 = vadd.f32 %v3936, %v3959
      %3961 = vdwg.mxu0
      %3962 = vmatpush.msra.mxu0 0.0
      %3963 = vmatpush.msra.mxu0 0.0
      %3964 = vmatpush.msra.mxu0 0.0
      %3965 = vmatpush.msra.mxu0 0.0
      %3966 = vmatpush.msra.mxu0 0.0
      %3967 = vmatpush.msra.mxu0 0.0
      %3968 = vmatpush.msra.mxu0 0.0
      %3969 = vmatpush.msra.mxu0 0.0
      %3970 = vmatpush.msra.mxu0 0.0
      %3971 = vmatpush.msra.mxu0 0.0
      %3972 = vmatpush.msra.mxu0 0.0
      %3973 = vmatpush.msra.mxu0 0.0
      %3974 = vmatpush.msra.mxu0 0.0
      %3975 = vmatpush.msra.mxu0 0.0
      %3976 = vmatpush.msra.mxu0 0.0
      %v3977 = vand.u32 %v3881, 4294901760
      %3978 = vmatpush.msra.mxu0 %v3977
      %v3979 = vand.u32 %v3884, 4294901760
      %v3980 = vsub.f32 %v3884, %v3979
      %v3981 = vand.u32 %v3980, 4294901760
      %3982 = vmatmul.f32.gmra.mxu0 %v3981
      %v3983 = vpop.f32.mrf.mxu0
      %v3984 = vadd.f32 %v3960, %v3983
      %3985 = vdwg.mxu0
      %3986 = vmatpush.msra.mxu0 0.0
      %3987 = vmatpush.msra.mxu0 0.0
      %3988 = vmatpush.msra.mxu0 0.0
      %3989 = vmatpush.msra.mxu0 0.0
      %3990 = vmatpush.msra.mxu0 0.0
      %3991 = vmatpush.msra.mxu0 0.0
      %3992 = vmatpush.msra.mxu0 0.0
      %3993 = vmatpush.msra.mxu0 0.0
      %3994 = vmatpush.msra.mxu0 0.0
      %3995 = vmatpush.msra.mxu0 0.0
      %3996 = vmatpush.msra.mxu0 0.0
      %3997 = vmatpush.msra.mxu0 0.0
      %3998 = vmatpush.msra.mxu0 0.0
      %3999 = vmatpush.msra.mxu0 0.0
      %4000 = vmatpush.msra.mxu0 0.0
      %v4001 = vand.u32 %v3881, 4294901760
      %v4002 = vsub.f32 %v3881, %v4001
      %v4003 = vand.u32 %v4002, 4294901760
      %4004 = vmatpush.msra.mxu0 %v4003
      %v4005 = vand.u32 %v3884, 4294901760
      %4006 = vmatmul.f32.gmra.mxu0 %v4005
      %v4007 = vpop.f32.mrf.mxu0
      %v4008 = vadd.f32 %v3984, %v4007
      %4009 = vdwg.mxu0
      %4010 = vmatpush.msra.mxu0 0.0
      %4011 = vmatpush.msra.mxu0 0.0
      %4012 = vmatpush.msra.mxu0 0.0
      %4013 = vmatpush.msra.mxu0 0.0
      %4014 = vmatpush.msra.mxu0 0.0
      %4015 = vmatpush.msra.mxu0 0.0
      %4016 = vmatpush.msra.mxu0 0.0
      %4017 = vmatpush.msra.mxu0 0.0
      %4018 = vmatpush.msra.mxu0 0.0
      %4019 = vmatpush.msra.mxu0 0.0
      %4020 = vmatpush.msra.mxu0 0.0
      %4021 = vmatpush.msra.mxu0 0.0
      %4022 = vmatpush.msra.mxu0 0.0
      %4023 = vmatpush.msra.mxu0 0.0
      %4024 = vmatpush.msra.mxu0 0.0
      %v4025 = vand.u32 %v3881, 4294901760
      %4026 = vmatpush.msra.mxu0 %v4025
      %v4027 = vand.u32 %v3884, 4294901760
      %4028 = vmatmul.f32.gmra.mxu0 %v4027
      %v4029 = vpop.f32.mrf.mxu0
      %v4030 = vadd.f32 %v4008, %v4029
      %4031 = vdwg.mxu0
      %s4032 = scalar_lea.vmem [#allocation2], 192
      %4033 = vst [vmem:[%s4032] sm:$0xff] %v4030
      %s4034 = scalar_lea.vmem %s0, 200
      %v4035 = vld [vmem:[%s4034] sm:$0xff]
      %4036 = vrot.lane.b32.xlu0 %v170, 56
      %v4037 = vpop.permute.xlu0 %4036
      %v4038 = vsel %vm188, %v4037, 0
      %4040 = vmatpush.msra.mxu0 0.0
      %4041 = vmatpush.msra.mxu0 0.0
      %4042 = vmatpush.msra.mxu0 0.0
      %4043 = vmatpush.msra.mxu0 0.0
      %4044 = vmatpush.msra.mxu0 0.0
      %4045 = vmatpush.msra.mxu0 0.0
      %4046 = vmatpush.msra.mxu0 0.0
      %4047 = vmatpush.msra.mxu0 0.0
      %4048 = vmatpush.msra.mxu0 0.0
      %4049 = vmatpush.msra.mxu0 0.0
      %4050 = vmatpush.msra.mxu0 0.0
      %4051 = vmatpush.msra.mxu0 0.0
      %4052 = vmatpush.msra.mxu0 0.0
      %4053 = vmatpush.msra.mxu0 0.0
      %4054 = vmatpush.msra.mxu0 0.0
      %v4055 = vand.u32 %v4035, 4294901760
      %4056 = vmatpush.msra.mxu0 %v4055
      %v4057 = vand.u32 %v4038, 4294901760
      %v4058 = vsub.f32 %v4038, %v4057
      %v4059 = vand.u32 %v4058, 4294901760
      %v4060 = vsub.f32 %v4058, %v4059
      %v4061 = vand.u32 %v4060, 4294901760
      %4062 = vmatmul.f32.gmra.mxu0 %v4061
      %v4063 = vpop.f32.mrf.mxu0
      %v4064 = vadd.f32 0.0, %v4063
      %4065 = vdwg.mxu0
      %4066 = vmatpush.msra.mxu0 0.0
      %4067 = vmatpush.msra.mxu0 0.0
      %4068 = vmatpush.msra.mxu0 0.0
      %4069 = vmatpush.msra.mxu0 0.0
      %4070 = vmatpush.msra.mxu0 0.0
      %4071 = vmatpush.msra.mxu0 0.0
      %4072 = vmatpush.msra.mxu0 0.0
      %4073 = vmatpush.msra.mxu0 0.0
      %4074 = vmatpush.msra.mxu0 0.0
      %4075 = vmatpush.msra.mxu0 0.0
      %4076 = vmatpush.msra.mxu0 0.0
      %4077 = vmatpush.msra.mxu0 0.0
      %4078 = vmatpush.msra.mxu0 0.0
      %4079 = vmatpush.msra.mxu0 0.0
      %4080 = vmatpush.msra.mxu0 0.0
      %v4081 = vand.u32 %v4035, 4294901760
      %v4082 = vsub.f32 %v4035, %v4081
      %v4083 = vand.u32 %v4082, 4294901760
      %v4084 = vsub.f32 %v4082, %v4083
      %v4085 = vand.u32 %v4084, 4294901760
      %4086 = vmatpush.msra.mxu0 %v4085
      %v4087 = vand.u32 %v4038, 4294901760
      %4088 = vmatmul.f32.gmra.mxu0 %v4087
      %v4089 = vpop.f32.mrf.mxu0
      %v4090 = vadd.f32 %v4064, %v4089
      %4091 = vdwg.mxu0
      %4092 = vmatpush.msra.mxu0 0.0
      %4093 = vmatpush.msra.mxu0 0.0
      %4094 = vmatpush.msra.mxu0 0.0
      %4095 = vmatpush.msra.mxu0 0.0
      %4096 = vmatpush.msra.mxu0 0.0
      %4097 = vmatpush.msra.mxu0 0.0
      %4098 = vmatpush.msra.mxu0 0.0
      %4099 = vmatpush.msra.mxu0 0.0
      %4100 = vmatpush.msra.mxu0 0.0
      %4101 = vmatpush.msra.mxu0 0.0
      %4102 = vmatpush.msra.mxu0 0.0
      %4103 = vmatpush.msra.mxu0 0.0
      %4104 = vmatpush.msra.mxu0 0.0
      %4105 = vmatpush.msra.mxu0 0.0
      %4106 = vmatpush.msra.mxu0 0.0
      %v4107 = vand.u32 %v4035, 4294901760
      %v4108 = vsub.f32 %v4035, %v4107
      %4109 = vmatpush.msra.mxu0 %v4108
      %v4110 = vand.u32 %v4038, 4294901760
      %v4111 = vsub.f32 %v4038, %v4110
      %4112 = vmatmul.f32.gmra.mxu0 %v4111
      %v4113 = vpop.f32.mrf.mxu0
      %v4114 = vadd.f32 %v4090, %v4113
      %4115 = vdwg.mxu0
      %4116 = vmatpush.msra.mxu0 0.0
      %4117 = vmatpush.msra.mxu0 0.0
      %4118 = vmatpush.msra.mxu0 0.0
      %4119 = vmatpush.msra.mxu0 0.0
      %4120 = vmatpush.msra.mxu0 0.0
      %4121 = vmatpush.msra.mxu0 0.0
      %4122 = vmatpush.msra.mxu0 0.0
      %4123 = vmatpush.msra.mxu0 0.0
      %4124 = vmatpush.msra.mxu0 0.0
      %4125 = vmatpush.msra.mxu0 0.0
      %4126 = vmatpush.msra.mxu0 0.0
      %4127 = vmatpush.msra.mxu0 0.0
      %4128 = vmatpush.msra.mxu0 0.0
      %4129 = vmatpush.msra.mxu0 0.0
      %4130 = vmatpush.msra.mxu0 0.0
      %v4131 = vand.u32 %v4035, 4294901760
      %4132 = vmatpush.msra.mxu0 %v4131
      %v4133 = vand.u32 %v4038, 4294901760
      %v4134 = vsub.f32 %v4038, %v4133
      %v4135 = vand.u32 %v4134, 4294901760
      %4136 = vmatmul.f32.gmra.mxu0 %v4135
      %v4137 = vpop.f32.mrf.mxu0
      %v4138 = vadd.f32 %v4114, %v4137
      %4139 = vdwg.mxu0
      %4140 = vmatpush.msra.mxu0 0.0
      %4141 = vmatpush.msra.mxu0 0.0
      %4142 = vmatpush.msra.mxu0 0.0
      %4143 = vmatpush.msra.mxu0 0.0
      %4144 = vmatpush.msra.mxu0 0.0
      %4145 = vmatpush.msra.mxu0 0.0
      %4146 = vmatpush.msra.mxu0 0.0
      %4147 = vmatpush.msra.mxu0 0.0
      %4148 = vmatpush.msra.mxu0 0.0
      %4149 = vmatpush.msra.mxu0 0.0
      %4150 = vmatpush.msra.mxu0 0.0
      %4151 = vmatpush.msra.mxu0 0.0
      %4152 = vmatpush.msra.mxu0 0.0
      %4153 = vmatpush.msra.mxu0 0.0
      %4154 = vmatpush.msra.mxu0 0.0
      %v4155 = vand.u32 %v4035, 4294901760
      %v4156 = vsub.f32 %v4035, %v4155
      %v4157 = vand.u32 %v4156, 4294901760
      %4158 = vmatpush.msra.mxu0 %v4157
      %v4159 = vand.u32 %v4038, 4294901760
      %4160 = vmatmul.f32.gmra.mxu0 %v4159
      %v4161 = vpop.f32.mrf.mxu0
      %v4162 = vadd.f32 %v4138, %v4161
      %4163 = vdwg.mxu0
      %4164 = vmatpush.msra.mxu0 0.0
      %4165 = vmatpush.msra.mxu0 0.0
      %4166 = vmatpush.msra.mxu0 0.0
      %4167 = vmatpush.msra.mxu0 0.0
      %4168 = vmatpush.msra.mxu0 0.0
      %4169 = vmatpush.msra.mxu0 0.0
      %4170 = vmatpush.msra.mxu0 0.0
      %4171 = vmatpush.msra.mxu0 0.0
      %4172 = vmatpush.msra.mxu0 0.0
      %4173 = vmatpush.msra.mxu0 0.0
      %4174 = vmatpush.msra.mxu0 0.0
      %4175 = vmatpush.msra.mxu0 0.0
      %4176 = vmatpush.msra.mxu0 0.0
      %4177 = vmatpush.msra.mxu0 0.0
      %4178 = vmatpush.msra.mxu0 0.0
      %v4179 = vand.u32 %v4035, 4294901760
      %4180 = vmatpush.msra.mxu0 %v4179
      %v4181 = vand.u32 %v4038, 4294901760
      %4182 = vmatmul.f32.gmra.mxu0 %v4181
      %v4183 = vpop.f32.mrf.mxu0
      %v4184 = vadd.f32 %v4162, %v4183
      %4185 = vdwg.mxu0
      %s4186 = scalar_lea.vmem [#allocation2], 200
      %4187 = vst [vmem:[%s4186] sm:$0xff] %v4184
      %s4188 = scalar_lea.vmem %s0, 208
      %v4189 = vld [vmem:[%s4188] sm:$0xff]
      %4190 = vrot.lane.b32.xlu0 %v170, 48
      %v4191 = vpop.permute.xlu0 %4190
      %v4192 = vsel %vm188, %v4191, 0
      %4194 = vmatpush.msra.mxu0 0.0
      %4195 = vmatpush.msra.mxu0 0.0
      %4196 = vmatpush.msra.mxu0 0.0
      %4197 = vmatpush.msra.mxu0 0.0
      %4198 = vmatpush.msra.mxu0 0.0
      %4199 = vmatpush.msra.mxu0 0.0
      %4200 = vmatpush.msra.mxu0 0.0
      %4201 = vmatpush.msra.mxu0 0.0
      %4202 = vmatpush.msra.mxu0 0.0
      %4203 = vmatpush.msra.mxu0 0.0
      %4204 = vmatpush.msra.mxu0 0.0
      %4205 = vmatpush.msra.mxu0 0.0
      %4206 = vmatpush.msra.mxu0 0.0
      %4207 = vmatpush.msra.mxu0 0.0
      %4208 = vmatpush.msra.mxu0 0.0
      %v4209 = vand.u32 %v4189, 4294901760
      %4210 = vmatpush.msra.mxu0 %v4209
      %v4211 = vand.u32 %v4192, 4294901760
      %v4212 = vsub.f32 %v4192, %v4211
      %v4213 = vand.u32 %v4212, 4294901760
      %v4214 = vsub.f32 %v4212, %v4213
      %v4215 = vand.u32 %v4214, 4294901760
      %4216 = vmatmul.f32.gmra.mxu0 %v4215
      %v4217 = vpop.f32.mrf.mxu0
      %v4218 = vadd.f32 0.0, %v4217
      %4219 = vdwg.mxu0
      %4220 = vmatpush.msra.mxu0 0.0
      %4221 = vmatpush.msra.mxu0 0.0
      %4222 = vmatpush.msra.mxu0 0.0
      %4223 = vmatpush.msra.mxu0 0.0
      %4224 = vmatpush.msra.mxu0 0.0
      %4225 = vmatpush.msra.mxu0 0.0
      %4226 = vmatpush.msra.mxu0 0.0
      %4227 = vmatpush.msra.mxu0 0.0
      %4228 = vmatpush.msra.mxu0 0.0
      %4229 = vmatpush.msra.mxu0 0.0
      %4230 = vmatpush.msra.mxu0 0.0
      %4231 = vmatpush.msra.mxu0 0.0
      %4232 = vmatpush.msra.mxu0 0.0
      %4233 = vmatpush.msra.mxu0 0.0
      %4234 = vmatpush.msra.mxu0 0.0
      %v4235 = vand.u32 %v4189, 4294901760
      %v4236 = vsub.f32 %v4189, %v4235
      %v4237 = vand.u32 %v4236, 4294901760
      %v4238 = vsub.f32 %v4236, %v4237
      %v4239 = vand.u32 %v4238, 4294901760
      %4240 = vmatpush.msra.mxu0 %v4239
      %v4241 = vand.u32 %v4192, 4294901760
      %4242 = vmatmul.f32.gmra.mxu0 %v4241
      %v4243 = vpop.f32.mrf.mxu0
      %v4244 = vadd.f32 %v4218, %v4243
      %4245 = vdwg.mxu0
      %4246 = vmatpush.msra.mxu0 0.0
      %4247 = vmatpush.msra.mxu0 0.0
      %4248 = vmatpush.msra.mxu0 0.0
      %4249 = vmatpush.msra.mxu0 0.0
      %4250 = vmatpush.msra.mxu0 0.0
      %4251 = vmatpush.msra.mxu0 0.0
      %4252 = vmatpush.msra.mxu0 0.0
      %4253 = vmatpush.msra.mxu0 0.0
      %4254 = vmatpush.msra.mxu0 0.0
      %4255 = vmatpush.msra.mxu0 0.0
      %4256 = vmatpush.msra.mxu0 0.0
      %4257 = vmatpush.msra.mxu0 0.0
      %4258 = vmatpush.msra.mxu0 0.0
      %4259 = vmatpush.msra.mxu0 0.0
      %4260 = vmatpush.msra.mxu0 0.0
      %v4261 = vand.u32 %v4189, 4294901760
      %v4262 = vsub.f32 %v4189, %v4261
      %4263 = vmatpush.msra.mxu0 %v4262
      %v4264 = vand.u32 %v4192, 4294901760
      %v4265 = vsub.f32 %v4192, %v4264
      %4266 = vmatmul.f32.gmra.mxu0 %v4265
      %v4267 = vpop.f32.mrf.mxu0
      %v4268 = vadd.f32 %v4244, %v4267
      %4269 = vdwg.mxu0
      %4270 = vmatpush.msra.mxu0 0.0
      %4271 = vmatpush.msra.mxu0 0.0
      %4272 = vmatpush.msra.mxu0 0.0
      %4273 = vmatpush.msra.mxu0 0.0
      %4274 = vmatpush.msra.mxu0 0.0
      %4275 = vmatpush.msra.mxu0 0.0
      %4276 = vmatpush.msra.mxu0 0.0
      %4277 = vmatpush.msra.mxu0 0.0
      %4278 = vmatpush.msra.mxu0 0.0
      %4279 = vmatpush.msra.mxu0 0.0
      %4280 = vmatpush.msra.mxu0 0.0
      %4281 = vmatpush.msra.mxu0 0.0
      %4282 = vmatpush.msra.mxu0 0.0
      %4283 = vmatpush.msra.mxu0 0.0
      %4284 = vmatpush.msra.mxu0 0.0
      %v4285 = vand.u32 %v4189, 4294901760
      %4286 = vmatpush.msra.mxu0 %v4285
      %v4287 = vand.u32 %v4192, 4294901760
      %v4288 = vsub.f32 %v4192, %v4287
      %v4289 = vand.u32 %v4288, 4294901760
      %4290 = vmatmul.f32.gmra.mxu0 %v4289
      %v4291 = vpop.f32.mrf.mxu0
      %v4292 = vadd.f32 %v4268, %v4291
      %4293 = vdwg.mxu0
      %4294 = vmatpush.msra.mxu0 0.0
      %4295 = vmatpush.msra.mxu0 0.0
      %4296 = vmatpush.msra.mxu0 0.0
      %4297 = vmatpush.msra.mxu0 0.0
      %4298 = vmatpush.msra.mxu0 0.0
      %4299 = vmatpush.msra.mxu0 0.0
      %4300 = vmatpush.msra.mxu0 0.0
      %4301 = vmatpush.msra.mxu0 0.0
      %4302 = vmatpush.msra.mxu0 0.0
      %4303 = vmatpush.msra.mxu0 0.0
      %4304 = vmatpush.msra.mxu0 0.0
      %4305 = vmatpush.msra.mxu0 0.0
      %4306 = vmatpush.msra.mxu0 0.0
      %4307 = vmatpush.msra.mxu0 0.0
      %4308 = vmatpush.msra.mxu0 0.0
      %v4309 = vand.u32 %v4189, 4294901760
      %v4310 = vsub.f32 %v4189, %v4309
      %v4311 = vand.u32 %v4310, 4294901760
      %4312 = vmatpush.msra.mxu0 %v4311
      %v4313 = vand.u32 %v4192, 4294901760
      %4314 = vmatmul.f32.gmra.mxu0 %v4313
      %v4315 = vpop.f32.mrf.mxu0
      %v4316 = vadd.f32 %v4292, %v4315
      %4317 = vdwg.mxu0
      %4318 = vmatpush.msra.mxu0 0.0
      %4319 = vmatpush.msra.mxu0 0.0
      %4320 = vmatpush.msra.mxu0 0.0
      %4321 = vmatpush.msra.mxu0 0.0
      %4322 = vmatpush.msra.mxu0 0.0
      %4323 = vmatpush.msra.mxu0 0.0
      %4324 = vmatpush.msra.mxu0 0.0
      %4325 = vmatpush.msra.mxu0 0.0
      %4326 = vmatpush.msra.mxu0 0.0
      %4327 = vmatpush.msra.mxu0 0.0
      %4328 = vmatpush.msra.mxu0 0.0
      %4329 = vmatpush.msra.mxu0 0.0
      %4330 = vmatpush.msra.mxu0 0.0
      %4331 = vmatpush.msra.mxu0 0.0
      %4332 = vmatpush.msra.mxu0 0.0
      %v4333 = vand.u32 %v4189, 4294901760
      %4334 = vmatpush.msra.mxu0 %v4333
      %v4335 = vand.u32 %v4192, 4294901760
      %4336 = vmatmul.f32.gmra.mxu0 %v4335
      %v4337 = vpop.f32.mrf.mxu0
      %v4338 = vadd.f32 %v4316, %v4337
      %4339 = vdwg.mxu0
      %s4340 = scalar_lea.vmem [#allocation2], 208
      %4341 = vst [vmem:[%s4340] sm:$0xff] %v4338
      %s4342 = scalar_lea.vmem %s0, 216
      %v4343 = vld [vmem:[%s4342] sm:$0xff]
      %4344 = vrot.lane.b32.xlu0 %v170, 40
      %v4345 = vpop.permute.xlu0 %4344
      %v4346 = vsel %vm188, %v4345, 0
      %4348 = vmatpush.msra.mxu0 0.0
      %4349 = vmatpush.msra.mxu0 0.0
      %4350 = vmatpush.msra.mxu0 0.0
      %4351 = vmatpush.msra.mxu0 0.0
      %4352 = vmatpush.msra.mxu0 0.0
      %4353 = vmatpush.msra.mxu0 0.0
      %4354 = vmatpush.msra.mxu0 0.0
      %4355 = vmatpush.msra.mxu0 0.0
      %4356 = vmatpush.msra.mxu0 0.0
      %4357 = vmatpush.msra.mxu0 0.0
      %4358 = vmatpush.msra.mxu0 0.0
      %4359 = vmatpush.msra.mxu0 0.0
      %4360 = vmatpush.msra.mxu0 0.0
      %4361 = vmatpush.msra.mxu0 0.0
      %4362 = vmatpush.msra.mxu0 0.0
      %v4363 = vand.u32 %v4343, 4294901760
      %4364 = vmatpush.msra.mxu0 %v4363
      %v4365 = vand.u32 %v4346, 4294901760
      %v4366 = vsub.f32 %v4346, %v4365
      %v4367 = vand.u32 %v4366, 4294901760
      %v4368 = vsub.f32 %v4366, %v4367
      %v4369 = vand.u32 %v4368, 4294901760
      %4370 = vmatmul.f32.gmra.mxu0 %v4369
      %v4371 = vpop.f32.mrf.mxu0
      %v4372 = vadd.f32 0.0, %v4371
      %4373 = vdwg.mxu0
      %4374 = vmatpush.msra.mxu0 0.0
      %4375 = vmatpush.msra.mxu0 0.0
      %4376 = vmatpush.msra.mxu0 0.0
      %4377 = vmatpush.msra.mxu0 0.0
      %4378 = vmatpush.msra.mxu0 0.0
      %4379 = vmatpush.msra.mxu0 0.0
      %4380 = vmatpush.msra.mxu0 0.0
      %4381 = vmatpush.msra.mxu0 0.0
      %4382 = vmatpush.msra.mxu0 0.0
      %4383 = vmatpush.msra.mxu0 0.0
      %4384 = vmatpush.msra.mxu0 0.0
      %4385 = vmatpush.msra.mxu0 0.0
      %4386 = vmatpush.msra.mxu0 0.0
      %4387 = vmatpush.msra.mxu0 0.0
      %4388 = vmatpush.msra.mxu0 0.0
      %v4389 = vand.u32 %v4343, 4294901760
      %v4390 = vsub.f32 %v4343, %v4389
      %v4391 = vand.u32 %v4390, 4294901760
      %v4392 = vsub.f32 %v4390, %v4391
      %v4393 = vand.u32 %v4392, 4294901760
      %4394 = vmatpush.msra.mxu0 %v4393
      %v4395 = vand.u32 %v4346, 4294901760
      %4396 = vmatmul.f32.gmra.mxu0 %v4395
      %v4397 = vpop.f32.mrf.mxu0
      %v4398 = vadd.f32 %v4372, %v4397
      %4399 = vdwg.mxu0
      %4400 = vmatpush.msra.mxu0 0.0
      %4401 = vmatpush.msra.mxu0 0.0
      %4402 = vmatpush.msra.mxu0 0.0
      %4403 = vmatpush.msra.mxu0 0.0
      %4404 = vmatpush.msra.mxu0 0.0
      %4405 = vmatpush.msra.mxu0 0.0
      %4406 = vmatpush.msra.mxu0 0.0
      %4407 = vmatpush.msra.mxu0 0.0
      %4408 = vmatpush.msra.mxu0 0.0
      %4409 = vmatpush.msra.mxu0 0.0
      %4410 = vmatpush.msra.mxu0 0.0
      %4411 = vmatpush.msra.mxu0 0.0
      %4412 = vmatpush.msra.mxu0 0.0
      %4413 = vmatpush.msra.mxu0 0.0
      %4414 = vmatpush.msra.mxu0 0.0
      %v4415 = vand.u32 %v4343, 4294901760
      %v4416 = vsub.f32 %v4343, %v4415
      %4417 = vmatpush.msra.mxu0 %v4416
      %v4418 = vand.u32 %v4346, 4294901760
      %v4419 = vsub.f32 %v4346, %v4418
      %4420 = vmatmul.f32.gmra.mxu0 %v4419
      %v4421 = vpop.f32.mrf.mxu0
      %v4422 = vadd.f32 %v4398, %v4421
      %4423 = vdwg.mxu0
      %4424 = vmatpush.msra.mxu0 0.0
      %4425 = vmatpush.msra.mxu0 0.0
      %4426 = vmatpush.msra.mxu0 0.0
      %4427 = vmatpush.msra.mxu0 0.0
      %4428 = vmatpush.msra.mxu0 0.0
      %4429 = vmatpush.msra.mxu0 0.0
      %4430 = vmatpush.msra.mxu0 0.0
      %4431 = vmatpush.msra.mxu0 0.0
      %4432 = vmatpush.msra.mxu0 0.0
      %4433 = vmatpush.msra.mxu0 0.0
      %4434 = vmatpush.msra.mxu0 0.0
      %4435 = vmatpush.msra.mxu0 0.0
      %4436 = vmatpush.msra.mxu0 0.0
      %4437 = vmatpush.msra.mxu0 0.0
      %4438 = vmatpush.msra.mxu0 0.0
      %v4439 = vand.u32 %v4343, 4294901760
      %4440 = vmatpush.msra.mxu0 %v4439
      %v4441 = vand.u32 %v4346, 4294901760
      %v4442 = vsub.f32 %v4346, %v4441
      %v4443 = vand.u32 %v4442, 4294901760
      %4444 = vmatmul.f32.gmra.mxu0 %v4443
      %v4445 = vpop.f32.mrf.mxu0
      %v4446 = vadd.f32 %v4422, %v4445
      %4447 = vdwg.mxu0
      %4448 = vmatpush.msra.mxu0 0.0
      %4449 = vmatpush.msra.mxu0 0.0
      %4450 = vmatpush.msra.mxu0 0.0
      %4451 = vmatpush.msra.mxu0 0.0
      %4452 = vmatpush.msra.mxu0 0.0
      %4453 = vmatpush.msra.mxu0 0.0
      %4454 = vmatpush.msra.mxu0 0.0
      %4455 = vmatpush.msra.mxu0 0.0
      %4456 = vmatpush.msra.mxu0 0.0
      %4457 = vmatpush.msra.mxu0 0.0
      %4458 = vmatpush.msra.mxu0 0.0
      %4459 = vmatpush.msra.mxu0 0.0
      %4460 = vmatpush.msra.mxu0 0.0
      %4461 = vmatpush.msra.mxu0 0.0
      %4462 = vmatpush.msra.mxu0 0.0
      %v4463 = vand.u32 %v4343, 4294901760
      %v4464 = vsub.f32 %v4343, %v4463
      %v4465 = vand.u32 %v4464, 4294901760
      %4466 = vmatpush.msra.mxu0 %v4465
      %v4467 = vand.u32 %v4346, 4294901760
      %4468 = vmatmul.f32.gmra.mxu0 %v4467
      %v4469 = vpop.f32.mrf.mxu0
      %v4470 = vadd.f32 %v4446, %v4469
      %4471 = vdwg.mxu0
      %4472 = vmatpush.msra.mxu0 0.0
      %4473 = vmatpush.msra.mxu0 0.0
      %4474 = vmatpush.msra.mxu0 0.0
      %4475 = vmatpush.msra.mxu0 0.0
      %4476 = vmatpush.msra.mxu0 0.0
      %4477 = vmatpush.msra.mxu0 0.0
      %4478 = vmatpush.msra.mxu0 0.0
      %4479 = vmatpush.msra.mxu0 0.0
      %4480 = vmatpush.msra.mxu0 0.0
      %4481 = vmatpush.msra.mxu0 0.0
      %4482 = vmatpush.msra.mxu0 0.0
      %4483 = vmatpush.msra.mxu0 0.0
      %4484 = vmatpush.msra.mxu0 0.0
      %4485 = vmatpush.msra.mxu0 0.0
      %4486 = vmatpush.msra.mxu0 0.0
      %v4487 = vand.u32 %v4343, 4294901760
      %4488 = vmatpush.msra.mxu0 %v4487
      %v4489 = vand.u32 %v4346, 4294901760
      %4490 = vmatmul.f32.gmra.mxu0 %v4489
      %v4491 = vpop.f32.mrf.mxu0
      %v4492 = vadd.f32 %v4470, %v4491
      %4493 = vdwg.mxu0
      %s4494 = scalar_lea.vmem [#allocation2], 216
      %4495 = vst [vmem:[%s4494] sm:$0xff] %v4492
      %s4496 = scalar_lea.vmem %s0, 224
      %v4497 = vld [vmem:[%s4496] sm:$0xff]
      %4498 = vrot.lane.b32.xlu0 %v170, 32
      %v4499 = vpop.permute.xlu0 %4498
      %v4500 = vsel %vm188, %v4499, 0
      %4502 = vmatpush.msra.mxu0 0.0
      %4503 = vmatpush.msra.mxu0 0.0
      %4504 = vmatpush.msra.mxu0 0.0
      %4505 = vmatpush.msra.mxu0 0.0
      %4506 = vmatpush.msra.mxu0 0.0
      %4507 = vmatpush.msra.mxu0 0.0
      %4508 = vmatpush.msra.mxu0 0.0
      %4509 = vmatpush.msra.mxu0 0.0
      %4510 = vmatpush.msra.mxu0 0.0
      %4511 = vmatpush.msra.mxu0 0.0
      %4512 = vmatpush.msra.mxu0 0.0
      %4513 = vmatpush.msra.mxu0 0.0
      %4514 = vmatpush.msra.mxu0 0.0
      %4515 = vmatpush.msra.mxu0 0.0
      %4516 = vmatpush.msra.mxu0 0.0
      %v4517 = vand.u32 %v4497, 4294901760
      %4518 = vmatpush.msra.mxu0 %v4517
      %v4519 = vand.u32 %v4500, 4294901760
      %v4520 = vsub.f32 %v4500, %v4519
      %v4521 = vand.u32 %v4520, 4294901760
      %v4522 = vsub.f32 %v4520, %v4521
      %v4523 = vand.u32 %v4522, 4294901760
      %4524 = vmatmul.f32.gmra.mxu0 %v4523
      %v4525 = vpop.f32.mrf.mxu0
      %v4526 = vadd.f32 0.0, %v4525
      %4527 = vdwg.mxu0
      %4528 = vmatpush.msra.mxu0 0.0
      %4529 = vmatpush.msra.mxu0 0.0
      %4530 = vmatpush.msra.mxu0 0.0
      %4531 = vmatpush.msra.mxu0 0.0
      %4532 = vmatpush.msra.mxu0 0.0
      %4533 = vmatpush.msra.mxu0 0.0
      %4534 = vmatpush.msra.mxu0 0.0
      %4535 = vmatpush.msra.mxu0 0.0
      %4536 = vmatpush.msra.mxu0 0.0
      %4537 = vmatpush.msra.mxu0 0.0
      %4538 = vmatpush.msra.mxu0 0.0
      %4539 = vmatpush.msra.mxu0 0.0
      %4540 = vmatpush.msra.mxu0 0.0
      %4541 = vmatpush.msra.mxu0 0.0
      %4542 = vmatpush.msra.mxu0 0.0
      %v4543 = vand.u32 %v4497, 4294901760
      %v4544 = vsub.f32 %v4497, %v4543
      %v4545 = vand.u32 %v4544, 4294901760
      %v4546 = vsub.f32 %v4544, %v4545
      %v4547 = vand.u32 %v4546, 4294901760
      %4548 = vmatpush.msra.mxu0 %v4547
      %v4549 = vand.u32 %v4500, 4294901760
      %4550 = vmatmul.f32.gmra.mxu0 %v4549
      %v4551 = vpop.f32.mrf.mxu0
      %v4552 = vadd.f32 %v4526, %v4551
      %4553 = vdwg.mxu0
      %4554 = vmatpush.msra.mxu0 0.0
      %4555 = vmatpush.msra.mxu0 0.0
      %4556 = vmatpush.msra.mxu0 0.0
      %4557 = vmatpush.msra.mxu0 0.0
      %4558 = vmatpush.msra.mxu0 0.0
      %4559 = vmatpush.msra.mxu0 0.0
      %4560 = vmatpush.msra.mxu0 0.0
      %4561 = vmatpush.msra.mxu0 0.0
      %4562 = vmatpush.msra.mxu0 0.0
      %4563 = vmatpush.msra.mxu0 0.0
      %4564 = vmatpush.msra.mxu0 0.0
      %4565 = vmatpush.msra.mxu0 0.0
      %4566 = vmatpush.msra.mxu0 0.0
      %4567 = vmatpush.msra.mxu0 0.0
      %4568 = vmatpush.msra.mxu0 0.0
      %v4569 = vand.u32 %v4497, 4294901760
      %v4570 = vsub.f32 %v4497, %v4569
      %4571 = vmatpush.msra.mxu0 %v4570
      %v4572 = vand.u32 %v4500, 4294901760
      %v4573 = vsub.f32 %v4500, %v4572
      %4574 = vmatmul.f32.gmra.mxu0 %v4573
      %v4575 = vpop.f32.mrf.mxu0
      %v4576 = vadd.f32 %v4552, %v4575
      %4577 = vdwg.mxu0
      %4578 = vmatpush.msra.mxu0 0.0
      %4579 = vmatpush.msra.mxu0 0.0
      %4580 = vmatpush.msra.mxu0 0.0
      %4581 = vmatpush.msra.mxu0 0.0
      %4582 = vmatpush.msra.mxu0 0.0
      %4583 = vmatpush.msra.mxu0 0.0
      %4584 = vmatpush.msra.mxu0 0.0
      %4585 = vmatpush.msra.mxu0 0.0
      %4586 = vmatpush.msra.mxu0 0.0
      %4587 = vmatpush.msra.mxu0 0.0
      %4588 = vmatpush.msra.mxu0 0.0
      %4589 = vmatpush.msra.mxu0 0.0
      %4590 = vmatpush.msra.mxu0 0.0
      %4591 = vmatpush.msra.mxu0 0.0
      %4592 = vmatpush.msra.mxu0 0.0
      %v4593 = vand.u32 %v4497, 4294901760
      %4594 = vmatpush.msra.mxu0 %v4593
      %v4595 = vand.u32 %v4500, 4294901760
      %v4596 = vsub.f32 %v4500, %v4595
      %v4597 = vand.u32 %v4596, 4294901760
      %4598 = vmatmul.f32.gmra.mxu0 %v4597
      %v4599 = vpop.f32.mrf.mxu0
      %v4600 = vadd.f32 %v4576, %v4599
      %4601 = vdwg.mxu0
      %4602 = vmatpush.msra.mxu0 0.0
      %4603 = vmatpush.msra.mxu0 0.0
      %4604 = vmatpush.msra.mxu0 0.0
      %4605 = vmatpush.msra.mxu0 0.0
      %4606 = vmatpush.msra.mxu0 0.0
      %4607 = vmatpush.msra.mxu0 0.0
      %4608 = vmatpush.msra.mxu0 0.0
      %4609 = vmatpush.msra.mxu0 0.0
      %4610 = vmatpush.msra.mxu0 0.0
      %4611 = vmatpush.msra.mxu0 0.0
      %4612 = vmatpush.msra.mxu0 0.0
      %4613 = vmatpush.msra.mxu0 0.0
      %4614 = vmatpush.msra.mxu0 0.0
      %4615 = vmatpush.msra.mxu0 0.0
      %4616 = vmatpush.msra.mxu0 0.0
      %v4617 = vand.u32 %v4497, 4294901760
      %v4618 = vsub.f32 %v4497, %v4617
      %v4619 = vand.u32 %v4618, 4294901760
      %4620 = vmatpush.msra.mxu0 %v4619
      %v4621 = vand.u32 %v4500, 4294901760
      %4622 = vmatmul.f32.gmra.mxu0 %v4621
      %v4623 = vpop.f32.mrf.mxu0
      %v4624 = vadd.f32 %v4600, %v4623
      %4625 = vdwg.mxu0
      %4626 = vmatpush.msra.mxu0 0.0
      %4627 = vmatpush.msra.mxu0 0.0
      %4628 = vmatpush.msra.mxu0 0.0
      %4629 = vmatpush.msra.mxu0 0.0
      %4630 = vmatpush.msra.mxu0 0.0
      %4631 = vmatpush.msra.mxu0 0.0
      %4632 = vmatpush.msra.mxu0 0.0
      %4633 = vmatpush.msra.mxu0 0.0
      %4634 = vmatpush.msra.mxu0 0.0
      %4635 = vmatpush.msra.mxu0 0.0
      %4636 = vmatpush.msra.mxu0 0.0
      %4637 = vmatpush.msra.mxu0 0.0
      %4638 = vmatpush.msra.mxu0 0.0
      %4639 = vmatpush.msra.mxu0 0.0
      %4640 = vmatpush.msra.mxu0 0.0
      %v4641 = vand.u32 %v4497, 4294901760
      %4642 = vmatpush.msra.mxu0 %v4641
      %v4643 = vand.u32 %v4500, 4294901760
      %4644 = vmatmul.f32.gmra.mxu0 %v4643
      %v4645 = vpop.f32.mrf.mxu0
      %v4646 = vadd.f32 %v4624, %v4645
      %4647 = vdwg.mxu0
      %s4648 = scalar_lea.vmem [#allocation2], 224
      %4649 = vst [vmem:[%s4648] sm:$0xff] %v4646
      %s4650 = scalar_lea.vmem %s0, 232
      %v4651 = vld [vmem:[%s4650] sm:$0xff]
      %4652 = vrot.lane.b32.xlu0 %v170, 24
      %v4653 = vpop.permute.xlu0 %4652
      %v4654 = vsel %vm188, %v4653, 0
      %4656 = vmatpush.msra.mxu0 0.0
      %4657 = vmatpush.msra.mxu0 0.0
      %4658 = vmatpush.msra.mxu0 0.0
      %4659 = vmatpush.msra.mxu0 0.0
      %4660 = vmatpush.msra.mxu0 0.0
      %4661 = vmatpush.msra.mxu0 0.0
      %4662 = vmatpush.msra.mxu0 0.0
      %4663 = vmatpush.msra.mxu0 0.0
      %4664 = vmatpush.msra.mxu0 0.0
      %4665 = vmatpush.msra.mxu0 0.0
      %4666 = vmatpush.msra.mxu0 0.0
      %4667 = vmatpush.msra.mxu0 0.0
      %4668 = vmatpush.msra.mxu0 0.0
      %4669 = vmatpush.msra.mxu0 0.0
      %4670 = vmatpush.msra.mxu0 0.0
      %v4671 = vand.u32 %v4651, 4294901760
      %4672 = vmatpush.msra.mxu0 %v4671
      %v4673 = vand.u32 %v4654, 4294901760
      %v4674 = vsub.f32 %v4654, %v4673
      %v4675 = vand.u32 %v4674, 4294901760
      %v4676 = vsub.f32 %v4674, %v4675
      %v4677 = vand.u32 %v4676, 4294901760
      %4678 = vmatmul.f32.gmra.mxu0 %v4677
      %v4679 = vpop.f32.mrf.mxu0
      %v4680 = vadd.f32 0.0, %v4679
      %4681 = vdwg.mxu0
      %4682 = vmatpush.msra.mxu0 0.0
      %4683 = vmatpush.msra.mxu0 0.0
      %4684 = vmatpush.msra.mxu0 0.0
      %4685 = vmatpush.msra.mxu0 0.0
      %4686 = vmatpush.msra.mxu0 0.0
      %4687 = vmatpush.msra.mxu0 0.0
      %4688 = vmatpush.msra.mxu0 0.0
      %4689 = vmatpush.msra.mxu0 0.0
      %4690 = vmatpush.msra.mxu0 0.0
      %4691 = vmatpush.msra.mxu0 0.0
      %4692 = vmatpush.msra.mxu0 0.0
      %4693 = vmatpush.msra.mxu0 0.0
      %4694 = vmatpush.msra.mxu0 0.0
      %4695 = vmatpush.msra.mxu0 0.0
      %4696 = vmatpush.msra.mxu0 0.0
      %v4697 = vand.u32 %v4651, 4294901760
      %v4698 = vsub.f32 %v4651, %v4697
      %v4699 = vand.u32 %v4698, 4294901760
      %v4700 = vsub.f32 %v4698, %v4699
      %v4701 = vand.u32 %v4700, 4294901760
      %4702 = vmatpush.msra.mxu0 %v4701
      %v4703 = vand.u32 %v4654, 4294901760
      %4704 = vmatmul.f32.gmra.mxu0 %v4703
      %v4705 = vpop.f32.mrf.mxu0
      %v4706 = vadd.f32 %v4680, %v4705
      %4707 = vdwg.mxu0
      %4708 = vmatpush.msra.mxu0 0.0
      %4709 = vmatpush.msra.mxu0 0.0
      %4710 = vmatpush.msra.mxu0 0.0
      %4711 = vmatpush.msra.mxu0 0.0
      %4712 = vmatpush.msra.mxu0 0.0
      %4713 = vmatpush.msra.mxu0 0.0
      %4714 = vmatpush.msra.mxu0 0.0
      %4715 = vmatpush.msra.mxu0 0.0
      %4716 = vmatpush.msra.mxu0 0.0
      %4717 = vmatpush.msra.mxu0 0.0
      %4718 = vmatpush.msra.mxu0 0.0
      %4719 = vmatpush.msra.mxu0 0.0
      %4720 = vmatpush.msra.mxu0 0.0
      %4721 = vmatpush.msra.mxu0 0.0
      %4722 = vmatpush.msra.mxu0 0.0
      %v4723 = vand.u32 %v4651, 4294901760
      %v4724 = vsub.f32 %v4651, %v4723
      %4725 = vmatpush.msra.mxu0 %v4724
      %v4726 = vand.u32 %v4654, 4294901760
      %v4727 = vsub.f32 %v4654, %v4726
      %4728 = vmatmul.f32.gmra.mxu0 %v4727
      %v4729 = vpop.f32.mrf.mxu0
      %v4730 = vadd.f32 %v4706, %v4729
      %4731 = vdwg.mxu0
      %4732 = vmatpush.msra.mxu0 0.0
      %4733 = vmatpush.msra.mxu0 0.0
      %4734 = vmatpush.msra.mxu0 0.0
      %4735 = vmatpush.msra.mxu0 0.0
      %4736 = vmatpush.msra.mxu0 0.0
      %4737 = vmatpush.msra.mxu0 0.0
      %4738 = vmatpush.msra.mxu0 0.0
      %4739 = vmatpush.msra.mxu0 0.0
      %4740 = vmatpush.msra.mxu0 0.0
      %4741 = vmatpush.msra.mxu0 0.0
      %4742 = vmatpush.msra.mxu0 0.0
      %4743 = vmatpush.msra.mxu0 0.0
      %4744 = vmatpush.msra.mxu0 0.0
      %4745 = vmatpush.msra.mxu0 0.0
      %4746 = vmatpush.msra.mxu0 0.0
      %v4747 = vand.u32 %v4651, 4294901760
      %4748 = vmatpush.msra.mxu0 %v4747
      %v4749 = vand.u32 %v4654, 4294901760
      %v4750 = vsub.f32 %v4654, %v4749
      %v4751 = vand.u32 %v4750, 4294901760
      %4752 = vmatmul.f32.gmra.mxu0 %v4751
      %v4753 = vpop.f32.mrf.mxu0
      %v4754 = vadd.f32 %v4730, %v4753
      %4755 = vdwg.mxu0
      %4756 = vmatpush.msra.mxu0 0.0
      %4757 = vmatpush.msra.mxu0 0.0
      %4758 = vmatpush.msra.mxu0 0.0
      %4759 = vmatpush.msra.mxu0 0.0
      %4760 = vmatpush.msra.mxu0 0.0
      %4761 = vmatpush.msra.mxu0 0.0
      %4762 = vmatpush.msra.mxu0 0.0
      %4763 = vmatpush.msra.mxu0 0.0
      %4764 = vmatpush.msra.mxu0 0.0
      %4765 = vmatpush.msra.mxu0 0.0
      %4766 = vmatpush.msra.mxu0 0.0
      %4767 = vmatpush.msra.mxu0 0.0
      %4768 = vmatpush.msra.mxu0 0.0
      %4769 = vmatpush.msra.mxu0 0.0
      %4770 = vmatpush.msra.mxu0 0.0
      %v4771 = vand.u32 %v4651, 4294901760
      %v4772 = vsub.f32 %v4651, %v4771
      %v4773 = vand.u32 %v4772, 4294901760
      %4774 = vmatpush.msra.mxu0 %v4773
      %v4775 = vand.u32 %v4654, 4294901760
      %4776 = vmatmul.f32.gmra.mxu0 %v4775
      %v4777 = vpop.f32.mrf.mxu0
      %v4778 = vadd.f32 %v4754, %v4777
      %4779 = vdwg.mxu0
      %4780 = vmatpush.msra.mxu0 0.0
      %4781 = vmatpush.msra.mxu0 0.0
      %4782 = vmatpush.msra.mxu0 0.0
      %4783 = vmatpush.msra.mxu0 0.0
      %4784 = vmatpush.msra.mxu0 0.0
      %4785 = vmatpush.msra.mxu0 0.0
      %4786 = vmatpush.msra.mxu0 0.0
      %4787 = vmatpush.msra.mxu0 0.0
      %4788 = vmatpush.msra.mxu0 0.0
      %4789 = vmatpush.msra.mxu0 0.0
      %4790 = vmatpush.msra.mxu0 0.0
      %4791 = vmatpush.msra.mxu0 0.0
      %4792 = vmatpush.msra.mxu0 0.0
      %4793 = vmatpush.msra.mxu0 0.0
      %4794 = vmatpush.msra.mxu0 0.0
      %v4795 = vand.u32 %v4651, 4294901760
      %4796 = vmatpush.msra.mxu0 %v4795
      %v4797 = vand.u32 %v4654, 4294901760
      %4798 = vmatmul.f32.gmra.mxu0 %v4797
      %v4799 = vpop.f32.mrf.mxu0
      %v4800 = vadd.f32 %v4778, %v4799
      %4801 = vdwg.mxu0
      %s4802 = scalar_lea.vmem [#allocation2], 232
      %4803 = vst [vmem:[%s4802] sm:$0xff] %v4800
      %s4804 = scalar_lea.vmem %s0, 240
      %v4805 = vld [vmem:[%s4804] sm:$0xff]
      %4806 = vrot.lane.b32.xlu0 %v170, 16
      %v4807 = vpop.permute.xlu0 %4806
      %v4808 = vsel %vm188, %v4807, 0
      %4810 = vmatpush.msra.mxu0 0.0
      %4811 = vmatpush.msra.mxu0 0.0
      %4812 = vmatpush.msra.mxu0 0.0
      %4813 = vmatpush.msra.mxu0 0.0
      %4814 = vmatpush.msra.mxu0 0.0
      %4815 = vmatpush.msra.mxu0 0.0
      %4816 = vmatpush.msra.mxu0 0.0
      %4817 = vmatpush.msra.mxu0 0.0
      %4818 = vmatpush.msra.mxu0 0.0
      %4819 = vmatpush.msra.mxu0 0.0
      %4820 = vmatpush.msra.mxu0 0.0
      %4821 = vmatpush.msra.mxu0 0.0
      %4822 = vmatpush.msra.mxu0 0.0
      %4823 = vmatpush.msra.mxu0 0.0
      %4824 = vmatpush.msra.mxu0 0.0
      %v4825 = vand.u32 %v4805, 4294901760
      %4826 = vmatpush.msra.mxu0 %v4825
      %v4827 = vand.u32 %v4808, 4294901760
      %v4828 = vsub.f32 %v4808, %v4827
      %v4829 = vand.u32 %v4828, 4294901760
      %v4830 = vsub.f32 %v4828, %v4829
      %v4831 = vand.u32 %v4830, 4294901760
      %4832 = vmatmul.f32.gmra.mxu0 %v4831
      %v4833 = vpop.f32.mrf.mxu0
      %v4834 = vadd.f32 0.0, %v4833
      %4835 = vdwg.mxu0
      %4836 = vmatpush.msra.mxu0 0.0
      %4837 = vmatpush.msra.mxu0 0.0
      %4838 = vmatpush.msra.mxu0 0.0
      %4839 = vmatpush.msra.mxu0 0.0
      %4840 = vmatpush.msra.mxu0 0.0
      %4841 = vmatpush.msra.mxu0 0.0
      %4842 = vmatpush.msra.mxu0 0.0
      %4843 = vmatpush.msra.mxu0 0.0
      %4844 = vmatpush.msra.mxu0 0.0
      %4845 = vmatpush.msra.mxu0 0.0
      %4846 = vmatpush.msra.mxu0 0.0
      %4847 = vmatpush.msra.mxu0 0.0
      %4848 = vmatpush.msra.mxu0 0.0
      %4849 = vmatpush.msra.mxu0 0.0
      %4850 = vmatpush.msra.mxu0 0.0
      %v4851 = vand.u32 %v4805, 4294901760
      %v4852 = vsub.f32 %v4805, %v4851
      %v4853 = vand.u32 %v4852, 4294901760
      %v4854 = vsub.f32 %v4852, %v4853
      %v4855 = vand.u32 %v4854, 4294901760
      %4856 = vmatpush.msra.mxu0 %v4855
      %v4857 = vand.u32 %v4808, 4294901760
      %4858 = vmatmul.f32.gmra.mxu0 %v4857
      %v4859 = vpop.f32.mrf.mxu0
      %v4860 = vadd.f32 %v4834, %v4859
      %4861 = vdwg.mxu0
      %4862 = vmatpush.msra.mxu0 0.0
      %4863 = vmatpush.msra.mxu0 0.0
      %4864 = vmatpush.msra.mxu0 0.0
      %4865 = vmatpush.msra.mxu0 0.0
      %4866 = vmatpush.msra.mxu0 0.0
      %4867 = vmatpush.msra.mxu0 0.0
      %4868 = vmatpush.msra.mxu0 0.0
      %4869 = vmatpush.msra.mxu0 0.0
      %4870 = vmatpush.msra.mxu0 0.0
      %4871 = vmatpush.msra.mxu0 0.0
      %4872 = vmatpush.msra.mxu0 0.0
      %4873 = vmatpush.msra.mxu0 0.0
      %4874 = vmatpush.msra.mxu0 0.0
      %4875 = vmatpush.msra.mxu0 0.0
      %4876 = vmatpush.msra.mxu0 0.0
      %v4877 = vand.u32 %v4805, 4294901760
      %v4878 = vsub.f32 %v4805, %v4877
      %4879 = vmatpush.msra.mxu0 %v4878
      %v4880 = vand.u32 %v4808, 4294901760
      %v4881 = vsub.f32 %v4808, %v4880
      %4882 = vmatmul.f32.gmra.mxu0 %v4881
      %v4883 = vpop.f32.mrf.mxu0
      %v4884 = vadd.f32 %v4860, %v4883
      %4885 = vdwg.mxu0
      %4886 = vmatpush.msra.mxu0 0.0
      %4887 = vmatpush.msra.mxu0 0.0
      %4888 = vmatpush.msra.mxu0 0.0
      %4889 = vmatpush.msra.mxu0 0.0
      %4890 = vmatpush.msra.mxu0 0.0
      %4891 = vmatpush.msra.mxu0 0.0
      %4892 = vmatpush.msra.mxu0 0.0
      %4893 = vmatpush.msra.mxu0 0.0
      %4894 = vmatpush.msra.mxu0 0.0
      %4895 = vmatpush.msra.mxu0 0.0
      %4896 = vmatpush.msra.mxu0 0.0
      %4897 = vmatpush.msra.mxu0 0.0
      %4898 = vmatpush.msra.mxu0 0.0
      %4899 = vmatpush.msra.mxu0 0.0
      %4900 = vmatpush.msra.mxu0 0.0
      %v4901 = vand.u32 %v4805, 4294901760
      %4902 = vmatpush.msra.mxu0 %v4901
      %v4903 = vand.u32 %v4808, 4294901760
      %v4904 = vsub.f32 %v4808, %v4903
      %v4905 = vand.u32 %v4904, 4294901760
      %4906 = vmatmul.f32.gmra.mxu0 %v4905
      %v4907 = vpop.f32.mrf.mxu0
      %v4908 = vadd.f32 %v4884, %v4907
      %4909 = vdwg.mxu0
      %4910 = vmatpush.msra.mxu0 0.0
      %4911 = vmatpush.msra.mxu0 0.0
      %4912 = vmatpush.msra.mxu0 0.0
      %4913 = vmatpush.msra.mxu0 0.0
      %4914 = vmatpush.msra.mxu0 0.0
      %4915 = vmatpush.msra.mxu0 0.0
      %4916 = vmatpush.msra.mxu0 0.0
      %4917 = vmatpush.msra.mxu0 0.0
      %4918 = vmatpush.msra.mxu0 0.0
      %4919 = vmatpush.msra.mxu0 0.0
      %4920 = vmatpush.msra.mxu0 0.0
      %4921 = vmatpush.msra.mxu0 0.0
      %4922 = vmatpush.msra.mxu0 0.0
      %4923 = vmatpush.msra.mxu0 0.0
      %4924 = vmatpush.msra.mxu0 0.0
      %v4925 = vand.u32 %v4805, 4294901760
      %v4926 = vsub.f32 %v4805, %v4925
      %v4927 = vand.u32 %v4926, 4294901760
      %4928 = vmatpush.msra.mxu0 %v4927
      %v4929 = vand.u32 %v4808, 4294901760
      %4930 = vmatmul.f32.gmra.mxu0 %v4929
      %v4931 = vpop.f32.mrf.mxu0
      %v4932 = vadd.f32 %v4908, %v4931
      %4933 = vdwg.mxu0
      %4934 = vmatpush.msra.mxu0 0.0
      %4935 = vmatpush.msra.mxu0 0.0
      %4936 = vmatpush.msra.mxu0 0.0
      %4937 = vmatpush.msra.mxu0 0.0
      %4938 = vmatpush.msra.mxu0 0.0
      %4939 = vmatpush.msra.mxu0 0.0
      %4940 = vmatpush.msra.mxu0 0.0
      %4941 = vmatpush.msra.mxu0 0.0
      %4942 = vmatpush.msra.mxu0 0.0
      %4943 = vmatpush.msra.mxu0 0.0
      %4944 = vmatpush.msra.mxu0 0.0
      %4945 = vmatpush.msra.mxu0 0.0
      %4946 = vmatpush.msra.mxu0 0.0
      %4947 = vmatpush.msra.mxu0 0.0
      %4948 = vmatpush.msra.mxu0 0.0
      %v4949 = vand.u32 %v4805, 4294901760
      %4950 = vmatpush.msra.mxu0 %v4949
      %v4951 = vand.u32 %v4808, 4294901760
      %4952 = vmatmul.f32.gmra.mxu0 %v4951
      %v4953 = vpop.f32.mrf.mxu0
      %v4954 = vadd.f32 %v4932, %v4953
      %4955 = vdwg.mxu0
      %s4956 = scalar_lea.vmem [#allocation2], 240
      %4957 = vst [vmem:[%s4956] sm:$0xff] %v4954
      %s4958 = scalar_lea.vmem %s0, 248
      %v4959 = vld [vmem:[%s4958] sm:$0xff]
      %4960 = vrot.lane.b32.xlu0 %v170, 8
      %v4961 = vpop.permute.xlu0 %4960
      %v4962 = vsel %vm188, %v4961, 0
      %4964 = vmatpush.msra.mxu0 0.0
      %4965 = vmatpush.msra.mxu0 0.0
      %4966 = vmatpush.msra.mxu0 0.0
      %4967 = vmatpush.msra.mxu0 0.0
      %4968 = vmatpush.msra.mxu0 0.0
      %4969 = vmatpush.msra.mxu0 0.0
      %4970 = vmatpush.msra.mxu0 0.0
      %4971 = vmatpush.msra.mxu0 0.0
      %4972 = vmatpush.msra.mxu0 0.0
      %4973 = vmatpush.msra.mxu0 0.0
      %4974 = vmatpush.msra.mxu0 0.0
      %4975 = vmatpush.msra.mxu0 0.0
      %4976 = vmatpush.msra.mxu0 0.0
      %4977 = vmatpush.msra.mxu0 0.0
      %4978 = vmatpush.msra.mxu0 0.0
      %v4979 = vand.u32 %v4959, 4294901760
      %4980 = vmatpush.msra.mxu0 %v4979
      %v4981 = vand.u32 %v4962, 4294901760
      %v4982 = vsub.f32 %v4962, %v4981
      %v4983 = vand.u32 %v4982, 4294901760
      %v4984 = vsub.f32 %v4982, %v4983
      %v4985 = vand.u32 %v4984, 4294901760
      %4986 = vmatmul.f32.gmra.mxu0 %v4985
      %v4987 = vpop.f32.mrf.mxu0
      %v4988 = vadd.f32 0.0, %v4987
      %4989 = vdwg.mxu0
      %4990 = vmatpush.msra.mxu0 0.0
      %4991 = vmatpush.msra.mxu0 0.0
      %4992 = vmatpush.msra.mxu0 0.0
      %4993 = vmatpush.msra.mxu0 0.0
      %4994 = vmatpush.msra.mxu0 0.0
      %4995 = vmatpush.msra.mxu0 0.0
      %4996 = vmatpush.msra.mxu0 0.0
      %4997 = vmatpush.msra.mxu0 0.0
      %4998 = vmatpush.msra.mxu0 0.0
      %4999 = vmatpush.msra.mxu0 0.0
      %5000 = vmatpush.msra.mxu0 0.0
      %5001 = vmatpush.msra.mxu0 0.0
      %5002 = vmatpush.msra.mxu0 0.0
      %5003 = vmatpush.msra.mxu0 0.0
      %5004 = vmatpush.msra.mxu0 0.0
      %v5005 = vand.u32 %v4959, 4294901760
      %v5006 = vsub.f32 %v4959, %v5005
      %v5007 = vand.u32 %v5006, 4294901760
      %v5008 = vsub.f32 %v5006, %v5007
      %v5009 = vand.u32 %v5008, 4294901760
      %5010 = vmatpush.msra.mxu0 %v5009
      %v5011 = vand.u32 %v4962, 4294901760
      %5012 = vmatmul.f32.gmra.mxu0 %v5011
      %v5013 = vpop.f32.mrf.mxu0
      %v5014 = vadd.f32 %v4988, %v5013
      %5015 = vdwg.mxu0
      %5016 = vmatpush.msra.mxu0 0.0
      %5017 = vmatpush.msra.mxu0 0.0
      %5018 = vmatpush.msra.mxu0 0.0
      %5019 = vmatpush.msra.mxu0 0.0
      %5020 = vmatpush.msra.mxu0 0.0
      %5021 = vmatpush.msra.mxu0 0.0
      %5022 = vmatpush.msra.mxu0 0.0
      %5023 = vmatpush.msra.mxu0 0.0
      %5024 = vmatpush.msra.mxu0 0.0
      %5025 = vmatpush.msra.mxu0 0.0
      %5026 = vmatpush.msra.mxu0 0.0
      %5027 = vmatpush.msra.mxu0 0.0
      %5028 = vmatpush.msra.mxu0 0.0
      %5029 = vmatpush.msra.mxu0 0.0
      %5030 = vmatpush.msra.mxu0 0.0
      %v5031 = vand.u32 %v4959, 4294901760
      %v5032 = vsub.f32 %v4959, %v5031
      %5033 = vmatpush.msra.mxu0 %v5032
      %v5034 = vand.u32 %v4962, 4294901760
      %v5035 = vsub.f32 %v4962, %v5034
      %5036 = vmatmul.f32.gmra.mxu0 %v5035
      %v5037 = vpop.f32.mrf.mxu0
      %v5038 = vadd.f32 %v5014, %v5037
      %5039 = vdwg.mxu0
      %5040 = vmatpush.msra.mxu0 0.0
      %5041 = vmatpush.msra.mxu0 0.0
      %5042 = vmatpush.msra.mxu0 0.0
      %5043 = vmatpush.msra.mxu0 0.0
      %5044 = vmatpush.msra.mxu0 0.0
      %5045 = vmatpush.msra.mxu0 0.0
      %5046 = vmatpush.msra.mxu0 0.0
      %5047 = vmatpush.msra.mxu0 0.0
      %5048 = vmatpush.msra.mxu0 0.0
      %5049 = vmatpush.msra.mxu0 0.0
      %5050 = vmatpush.msra.mxu0 0.0
      %5051 = vmatpush.msra.mxu0 0.0
      %5052 = vmatpush.msra.mxu0 0.0
      %5053 = vmatpush.msra.mxu0 0.0
      %5054 = vmatpush.msra.mxu0 0.0
      %v5055 = vand.u32 %v4959, 4294901760
      %5056 = vmatpush.msra.mxu0 %v5055
      %v5057 = vand.u32 %v4962, 4294901760
      %v5058 = vsub.f32 %v4962, %v5057
      %v5059 = vand.u32 %v5058, 4294901760
      %5060 = vmatmul.f32.gmra.mxu0 %v5059
      %v5061 = vpop.f32.mrf.mxu0
      %v5062 = vadd.f32 %v5038, %v5061
      %5063 = vdwg.mxu0
      %5064 = vmatpush.msra.mxu0 0.0
      %5065 = vmatpush.msra.mxu0 0.0
      %5066 = vmatpush.msra.mxu0 0.0
      %5067 = vmatpush.msra.mxu0 0.0
      %5068 = vmatpush.msra.mxu0 0.0
      %5069 = vmatpush.msra.mxu0 0.0
      %5070 = vmatpush.msra.mxu0 0.0
      %5071 = vmatpush.msra.mxu0 0.0
      %5072 = vmatpush.msra.mxu0 0.0
      %5073 = vmatpush.msra.mxu0 0.0
      %5074 = vmatpush.msra.mxu0 0.0
      %5075 = vmatpush.msra.mxu0 0.0
      %5076 = vmatpush.msra.mxu0 0.0
      %5077 = vmatpush.msra.mxu0 0.0
      %5078 = vmatpush.msra.mxu0 0.0
      %v5079 = vand.u32 %v4959, 4294901760
      %v5080 = vsub.f32 %v4959, %v5079
      %v5081 = vand.u32 %v5080, 4294901760
      %5082 = vmatpush.msra.mxu0 %v5081
      %v5083 = vand.u32 %v4962, 4294901760
      %5084 = vmatmul.f32.gmra.mxu0 %v5083
      %v5085 = vpop.f32.mrf.mxu0
      %v5086 = vadd.f32 %v5062, %v5085
      %5087 = vdwg.mxu0
      %5088 = vmatpush.msra.mxu0 0.0
      %5089 = vmatpush.msra.mxu0 0.0
      %5090 = vmatpush.msra.mxu0 0.0
      %5091 = vmatpush.msra.mxu0 0.0
      %5092 = vmatpush.msra.mxu0 0.0
      %5093 = vmatpush.msra.mxu0 0.0
      %5094 = vmatpush.msra.mxu0 0.0
      %5095 = vmatpush.msra.mxu0 0.0
      %5096 = vmatpush.msra.mxu0 0.0
      %5097 = vmatpush.msra.mxu0 0.0
      %5098 = vmatpush.msra.mxu0 0.0
      %5099 = vmatpush.msra.mxu0 0.0
      %5100 = vmatpush.msra.mxu0 0.0
      %5101 = vmatpush.msra.mxu0 0.0
      %5102 = vmatpush.msra.mxu0 0.0
      %v5103 = vand.u32 %v4959, 4294901760
      %5104 = vmatpush.msra.mxu0 %v5103
      %v5105 = vand.u32 %v4962, 4294901760
      %5106 = vmatmul.f32.gmra.mxu0 %v5105
      %v5107 = vpop.f32.mrf.mxu0
      %v5108 = vadd.f32 %v5086, %v5107
      %5109 = vdwg.mxu0
      %s5110 = scalar_lea.vmem [#allocation2], 248
      %5111 = vst [vmem:[%s5110] sm:$0xff] %v5108
      %v5112 = vld [vmem:[#allocation2] sm:$0xff]
      %v5113 = vld [vmem:[#allocation2 + $0x8] sm:$0xff]
      %v5114 = vld [vmem:[#allocation2 + $0x10] sm:$0xff]
      %v5115 = vld [vmem:[#allocation2 + $0x18] sm:$0xff]
      %v5116 = vld [vmem:[#allocation2 + $0x20] sm:$0xff]
      %v5117 = vld [vmem:[#allocation2 + $0x28] sm:$0xff]
      %v5118 = vld [vmem:[#allocation2 + $0x30] sm:$0xff]
      %v5119 = vld [vmem:[#allocation2 + $0x38] sm:$0xff]
      %v5120 = vld [vmem:[#allocation2 + $0x40] sm:$0xff]
      %v5121 = vld [vmem:[#allocation2 + $0x48] sm:$0xff]
      %v5122 = vld [vmem:[#allocation2 + $0x50] sm:$0xff]
      %v5123 = vld [vmem:[#allocation2 + $0x58] sm:$0xff]
      %v5124 = vld [vmem:[#allocation2 + $0x60] sm:$0xff]
      %v5125 = vld [vmem:[#allocation2 + $0x68] sm:$0xff]
      %v5126 = vld [vmem:[#allocation2 + $0x70] sm:$0xff]
      %v5127 = vld [vmem:[#allocation2 + $0x78] sm:$0xff]
      %v5128 = vld [vmem:[#allocation2 + $0x80] sm:$0xff]
      %v5129 = vld [vmem:[#allocation2 + $0x88] sm:$0xff]
      %v5130 = vld [vmem:[#allocation2 + $0x90] sm:$0xff]
      %v5131 = vld [vmem:[#allocation2 + $0x98] sm:$0xff]
      %v5132 = vld [vmem:[#allocation2 + $0xa0] sm:$0xff]
      %v5133 = vld [vmem:[#allocation2 + $0xa8] sm:$0xff]
      %v5134 = vld [vmem:[#allocation2 + $0xb0] sm:$0xff]
      %v5135 = vld [vmem:[#allocation2 + $0xb8] sm:$0xff]
      %v5136 = vld [vmem:[#allocation2 + $0xc0] sm:$0xff]
      %v5137 = vld [vmem:[#allocation2 + $0xc8] sm:$0xff]
      %v5138 = vld [vmem:[#allocation2 + $0xd0] sm:$0xff]
      %v5139 = vld [vmem:[#allocation2 + $0xd8] sm:$0xff]
      %v5140 = vld [vmem:[#allocation2 + $0xe0] sm:$0xff]
      %v5141 = vld [vmem:[#allocation2 + $0xe8] sm:$0xff]
      %v5142 = vld [vmem:[#allocation2 + $0xf0] sm:$0xff]
      %v5143 = vld [vmem:[#allocation2 + $0xf8] sm:$0xff]
      %v5144 = vadd.f32 %v5112, %v5113
      %v5145 = vadd.f32 %v5144, %v5114
      %v5146 = vadd.f32 %v5145, %v5115
      %v5147 = vadd.f32 %v5146, %v5116
      %v5148 = vadd.f32 %v5147, %v5117
      %v5149 = vadd.f32 %v5148, %v5118
      %v5150 = vadd.f32 %v5149, %v5119
      %v5151 = vadd.f32 %v5150, %v5120
      %v5152 = vadd.f32 %v5151, %v5121
      %v5153 = vadd.f32 %v5152, %v5122
      %v5154 = vadd.f32 %v5153, %v5123
      %v5155 = vadd.f32 %v5154, %v5124
      %v5156 = vadd.f32 %v5155, %v5125
      %v5157 = vadd.f32 %v5156, %v5126
      %v5158 = vadd.f32 %v5157, %v5127
      %v5159 = vadd.f32 %v5158, %v5128
      %v5160 = vadd.f32 %v5159, %v5129
      %v5161 = vadd.f32 %v5160, %v5130
      %v5162 = vadd.f32 %v5161, %v5131
      %v5163 = vadd.f32 %v5162, %v5132
      %v5164 = vadd.f32 %v5163, %v5133
      %v5165 = vadd.f32 %v5164, %v5134
      %v5166 = vadd.f32 %v5165, %v5135
      %v5167 = vadd.f32 %v5166, %v5136
      %v5168 = vadd.f32 %v5167, %v5137
      %v5169 = vadd.f32 %v5168, %v5138
      %v5170 = vadd.f32 %v5169, %v5139
      %v5171 = vadd.f32 %v5170, %v5140
      %v5172 = vadd.f32 %v5171, %v5141
      %v5173 = vadd.f32 %v5172, %v5142
      %v5174 = vadd.f32 %v5173, %v5143
      %v5175 = vmul.f32 %v5174, 0.03125
      %v5176 = vmul.f32 %v5175, %v5175
      %v5177 = vand.u32 %v186, 4294901760
      %5178 = vmatpush.msra.mxu0 %v5177
      %v5179 = vand.u32 %v185, 4294901760
      %5180 = vmatpush.msra.mxu0 %v5179
      %v5181 = vand.u32 %v184, 4294901760
      %5182 = vmatpush.msra.mxu0 %v5181
      %v5183 = vand.u32 %v183, 4294901760
      %5184 = vmatpush.msra.mxu0 %v5183
      %v5185 = vand.u32 %v182, 4294901760
      %5186 = vmatpush.msra.mxu0 %v5185
      %v5187 = vand.u32 %v181, 4294901760
      %5188 = vmatpush.msra.mxu0 %v5187
      %v5189 = vand.u32 %v180, 4294901760
      %5190 = vmatpush.msra.mxu0 %v5189
      %v5191 = vand.u32 %v179, 4294901760
      %5192 = vmatpush.msra.mxu0 %v5191
      %v5193 = vand.u32 %v178, 4294901760
      %5194 = vmatpush.msra.mxu0 %v5193
      %v5195 = vand.u32 %v177, 4294901760
      %5196 = vmatpush.msra.mxu0 %v5195
      %v5197 = vand.u32 %v176, 4294901760
      %5198 = vmatpush.msra.mxu0 %v5197
      %v5199 = vand.u32 %v175, 4294901760
      %5200 = vmatpush.msra.mxu0 %v5199
      %v5201 = vand.u32 %v174, 4294901760
      %5202 = vmatpush.msra.mxu0 %v5201
      %v5203 = vand.u32 %v173, 4294901760
      %5204 = vmatpush.msra.mxu0 %v5203
      %v5205 = vand.u32 %v172, 4294901760
      %5206 = vmatpush.msra.mxu0 %v5205
      %v5207 = vand.u32 %v171, 4294901760
      %5208 = vmatpush.msra.mxu0 %v5207
      %v5209 = vand.u32 %v5176, 4294901760
      %v5210 = vsub.f32 %v5176, %v5209
      %v5211 = vand.u32 %v5210, 4294901760
      %v5212 = vsub.f32 %v5210, %v5211
      %v5213 = vand.u32 %v5212, 4294901760
      %5214 = vmatmul.f32.gmra.mxu0 %v5213
      %v5215 = vpop.f32.mrf.mxu0
      %v5216 = vadd.f32 0.0, %v5215
      %5217 = vdwg.mxu0
      %v5218 = vand.u32 %v186, 4294901760
      %v5219 = vsub.f32 %v186, %v5218
      %v5220 = vand.u32 %v5219, 4294901760
      %v5221 = vsub.f32 %v5219, %v5220
      %v5222 = vand.u32 %v5221, 4294901760
      %5223 = vmatpush.msra.mxu0 %v5222
      %v5224 = vand.u32 %v185, 4294901760
      %v5225 = vsub.f32 %v185, %v5224
      %v5226 = vand.u32 %v5225, 4294901760
      %v5227 = vsub.f32 %v5225, %v5226
      %v5228 = vand.u32 %v5227, 4294901760
      %5229 = vmatpush.msra.mxu0 %v5228
      %v5230 = vand.u32 %v184, 4294901760
      %v5231 = vsub.f32 %v184, %v5230
      %v5232 = vand.u32 %v5231, 4294901760
      %v5233 = vsub.f32 %v5231, %v5232
      %v5234 = vand.u32 %v5233, 4294901760
      %5235 = vmatpush.msra.mxu0 %v5234
      %v5236 = vand.u32 %v183, 4294901760
      %v5237 = vsub.f32 %v183, %v5236
      %v5238 = vand.u32 %v5237, 4294901760
      %v5239 = vsub.f32 %v5237, %v5238
      %v5240 = vand.u32 %v5239, 4294901760
      %5241 = vmatpush.msra.mxu0 %v5240
      %v5242 = vand.u32 %v182, 4294901760
      %v5243 = vsub.f32 %v182, %v5242
      %v5244 = vand.u32 %v5243, 4294901760
      %v5245 = vsub.f32 %v5243, %v5244
      %v5246 = vand.u32 %v5245, 4294901760
      %5247 = vmatpush.msra.mxu0 %v5246
      %v5248 = vand.u32 %v181, 4294901760
      %v5249 = vsub.f32 %v181, %v5248
      %v5250 = vand.u32 %v5249, 4294901760
      %v5251 = vsub.f32 %v5249, %v5250
      %v5252 = vand.u32 %v5251, 4294901760
      %5253 = vmatpush.msra.mxu0 %v5252
      %v5254 = vand.u32 %v180, 4294901760
      %v5255 = vsub.f32 %v180, %v5254
      %v5256 = vand.u32 %v5255, 4294901760
      %v5257 = vsub.f32 %v5255, %v5256
      %v5258 = vand.u32 %v5257, 4294901760
      %5259 = vmatpush.msra.mxu0 %v5258
      %v5260 = vand.u32 %v179, 4294901760
      %v5261 = vsub.f32 %v179, %v5260
      %v5262 = vand.u32 %v5261, 4294901760
      %v5263 = vsub.f32 %v5261, %v5262
      %v5264 = vand.u32 %v5263, 4294901760
      %5265 = vmatpush.msra.mxu0 %v5264
      %v5266 = vand.u32 %v178, 4294901760
      %v5267 = vsub.f32 %v178, %v5266
      %v5268 = vand.u32 %v5267, 4294901760
      %v5269 = vsub.f32 %v5267, %v5268
      %v5270 = vand.u32 %v5269, 4294901760
      %5271 = vmatpush.msra.mxu0 %v5270
      %v5272 = vand.u32 %v177, 4294901760
      %v5273 = vsub.f32 %v177, %v5272
      %v5274 = vand.u32 %v5273, 4294901760
      %v5275 = vsub.f32 %v5273, %v5274
      %v5276 = vand.u32 %v5275, 4294901760
      %5277 = vmatpush.msra.mxu0 %v5276
      %v5278 = vand.u32 %v176, 4294901760
      %v5279 = vsub.f32 %v176, %v5278
      %v5280 = vand.u32 %v5279, 4294901760
      %v5281 = vsub.f32 %v5279, %v5280
      %v5282 = vand.u32 %v5281, 4294901760
      %5283 = vmatpush.msra.mxu0 %v5282
      %v5284 = vand.u32 %v175, 4294901760
      %v5285 = vsub.f32 %v175, %v5284
      %v5286 = vand.u32 %v5285, 4294901760
      %v5287 = vsub.f32 %v5285, %v5286
      %v5288 = vand.u32 %v5287, 4294901760
      %5289 = vmatpush.msra.mxu0 %v5288
      %v5290 = vand.u32 %v174, 4294901760
      %v5291 = vsub.f32 %v174, %v5290
      %v5292 = vand.u32 %v5291, 4294901760
      %v5293 = vsub.f32 %v5291, %v5292
      %v5294 = vand.u32 %v5293, 4294901760
      %5295 = vmatpush.msra.mxu0 %v5294
      %v5296 = vand.u32 %v173, 4294901760
      %v5297 = vsub.f32 %v173, %v5296
      %v5298 = vand.u32 %v5297, 4294901760
      %v5299 = vsub.f32 %v5297, %v5298
      %v5300 = vand.u32 %v5299, 4294901760
      %5301 = vmatpush.msra.mxu0 %v5300
      %v5302 = vand.u32 %v172, 4294901760
      %v5303 = vsub.f32 %v172, %v5302
      %v5304 = vand.u32 %v5303, 4294901760
      %v5305 = vsub.f32 %v5303, %v5304
      %v5306 = vand.u32 %v5305, 4294901760
      %5307 = vmatpush.msra.mxu0 %v5306
      %v5308 = vand.u32 %v171, 4294901760
      %v5309 = vsub.f32 %v171, %v5308
      %v5310 = vand.u32 %v5309, 4294901760
      %v5311 = vsub.f32 %v5309, %v5310
      %v5312 = vand.u32 %v5311, 4294901760
      %5313 = vmatpush.msra.mxu0 %v5312
      %v5314 = vand.u32 %v5176, 4294901760
      %5315 = vmatmul.f32.gmra.mxu0 %v5314
      %v5316 = vpop.f32.mrf.mxu0
      %v5317 = vadd.f32 %v5216, %v5316
      %5318 = vdwg.mxu0
      %v5319 = vand.u32 %v186, 4294901760
      %v5320 = vsub.f32 %v186, %v5319
      %5321 = vmatpush.msra.mxu0 %v5320
      %v5322 = vand.u32 %v185, 4294901760
      %v5323 = vsub.f32 %v185, %v5322
      %5324 = vmatpush.msra.mxu0 %v5323
      %v5325 = vand.u32 %v184, 4294901760
      %v5326 = vsub.f32 %v184, %v5325
      %5327 = vmatpush.msra.mxu0 %v5326
      %v5328 = vand.u32 %v183, 4294901760
      %v5329 = vsub.f32 %v183, %v5328
      %5330 = vmatpush.msra.mxu0 %v5329
      %v5331 = vand.u32 %v182, 4294901760
      %v5332 = vsub.f32 %v182, %v5331
      %5333 = vmatpush.msra.mxu0 %v5332
      %v5334 = vand.u32 %v181, 4294901760
      %v5335 = vsub.f32 %v181, %v5334
      %5336 = vmatpush.msra.mxu0 %v5335
      %v5337 = vand.u32 %v180, 4294901760
      %v5338 = vsub.f32 %v180, %v5337
      %5339 = vmatpush.msra.mxu0 %v5338
      %v5340 = vand.u32 %v179, 4294901760
      %v5341 = vsub.f32 %v179, %v5340
      %5342 = vmatpush.msra.mxu0 %v5341
      %v5343 = vand.u32 %v178, 4294901760
      %v5344 = vsub.f32 %v178, %v5343
      %5345 = vmatpush.msra.mxu0 %v5344
      %v5346 = vand.u32 %v177, 4294901760
      %v5347 = vsub.f32 %v177, %v5346
      %5348 = vmatpush.msra.mxu0 %v5347
      %v5349 = vand.u32 %v176, 4294901760
      %v5350 = vsub.f32 %v176, %v5349
      %5351 = vmatpush.msra.mxu0 %v5350
      %v5352 = vand.u32 %v175, 4294901760
      %v5353 = vsub.f32 %v175, %v5352
      %5354 = vmatpush.msra.mxu0 %v5353
      %v5355 = vand.u32 %v174, 4294901760
      %v5356 = vsub.f32 %v174, %v5355
      %5357 = vmatpush.msra.mxu0 %v5356
      %v5358 = vand.u32 %v173, 4294901760
      %v5359 = vsub.f32 %v173, %v5358
      %5360 = vmatpush.msra.mxu0 %v5359
      %v5361 = vand.u32 %v172, 4294901760
      %v5362 = vsub.f32 %v172, %v5361
      %5363 = vmatpush.msra.mxu0 %v5362
      %v5364 = vand.u32 %v171, 4294901760
      %v5365 = vsub.f32 %v171, %v5364
      %5366 = vmatpush.msra.mxu0 %v5365
      %v5367 = vand.u32 %v5176, 4294901760
      %v5368 = vsub.f32 %v5176, %v5367
      %5369 = vmatmul.f32.gmra.mxu0 %v5368
      %v5370 = vpop.f32.mrf.mxu0
      %v5371 = vadd.f32 %v5317, %v5370
      %5372 = vdwg.mxu0
      %v5373 = vand.u32 %v186, 4294901760
      %5374 = vmatpush.msra.mxu0 %v5373
      %v5375 = vand.u32 %v185, 4294901760
      %5376 = vmatpush.msra.mxu0 %v5375
      %v5377 = vand.u32 %v184, 4294901760
      %5378 = vmatpush.msra.mxu0 %v5377
      %v5379 = vand.u32 %v183, 4294901760
      %5380 = vmatpush.msra.mxu0 %v5379
      %v5381 = vand.u32 %v182, 4294901760
      %5382 = vmatpush.msra.mxu0 %v5381
      %v5383 = vand.u32 %v181, 4294901760
      %5384 = vmatpush.msra.mxu0 %v5383
      %v5385 = vand.u32 %v180, 4294901760
      %5386 = vmatpush.msra.mxu0 %v5385
      %v5387 = vand.u32 %v179, 4294901760
      %5388 = vmatpush.msra.mxu0 %v5387
      %v5389 = vand.u32 %v178, 4294901760
      %5390 = vmatpush.msra.mxu0 %v5389
      %v5391 = vand.u32 %v177, 4294901760
      %5392 = vmatpush.msra.mxu0 %v5391
      %v5393 = vand.u32 %v176, 4294901760
      %5394 = vmatpush.msra.mxu0 %v5393
      %v5395 = vand.u32 %v175, 4294901760
      %5396 = vmatpush.msra.mxu0 %v5395
      %v5397 = vand.u32 %v174, 4294901760
      %5398 = vmatpush.msra.mxu0 %v5397
      %v5399 = vand.u32 %v173, 4294901760
      %5400 = vmatpush.msra.mxu0 %v5399
      %v5401 = vand.u32 %v172, 4294901760
      %5402 = vmatpush.msra.mxu0 %v5401
      %v5403 = vand.u32 %v171, 4294901760
      %5404 = vmatpush.msra.mxu0 %v5403
      %v5405 = vand.u32 %v5176, 4294901760
      %v5406 = vsub.f32 %v5176, %v5405
      %v5407 = vand.u32 %v5406, 4294901760
      %5408 = vmatmul.f32.gmra.mxu0 %v5407
      %v5409 = vpop.f32.mrf.mxu0
      %v5410 = vadd.f32 %v5371, %v5409
      %5411 = vdwg.mxu0
      %v5412 = vand.u32 %v186, 4294901760
      %v5413 = vsub.f32 %v186, %v5412
      %v5414 = vand.u32 %v5413, 4294901760
      %5415 = vmatpush.msra.mxu0 %v5414
      %v5416 = vand.u32 %v185, 4294901760
      %v5417 = vsub.f32 %v185, %v5416
      %v5418 = vand.u32 %v5417, 4294901760
      %5419 = vmatpush.msra.mxu0 %v5418
      %v5420 = vand.u32 %v184, 4294901760
      %v5421 = vsub.f32 %v184, %v5420
      %v5422 = vand.u32 %v5421, 4294901760
      %5423 = vmatpush.msra.mxu0 %v5422
      %v5424 = vand.u32 %v183, 4294901760
      %v5425 = vsub.f32 %v183, %v5424
      %v5426 = vand.u32 %v5425, 4294901760
      %5427 = vmatpush.msra.mxu0 %v5426
      %v5428 = vand.u32 %v182, 4294901760
      %v5429 = vsub.f32 %v182, %v5428
      %v5430 = vand.u32 %v5429, 4294901760
      %5431 = vmatpush.msra.mxu0 %v5430
      %v5432 = vand.u32 %v181, 4294901760
      %v5433 = vsub.f32 %v181, %v5432
      %v5434 = vand.u32 %v5433, 4294901760
      %5435 = vmatpush.msra.mxu0 %v5434
      %v5436 = vand.u32 %v180, 4294901760
      %v5437 = vsub.f32 %v180, %v5436
      %v5438 = vand.u32 %v5437, 4294901760
      %5439 = vmatpush.msra.mxu0 %v5438
      %v5440 = vand.u32 %v179, 4294901760
      %v5441 = vsub.f32 %v179, %v5440
      %v5442 = vand.u32 %v5441, 4294901760
      %5443 = vmatpush.msra.mxu0 %v5442
      %v5444 = vand.u32 %v178, 4294901760
      %v5445 = vsub.f32 %v178, %v5444
      %v5446 = vand.u32 %v5445, 4294901760
      %5447 = vmatpush.msra.mxu0 %v5446
      %v5448 = vand.u32 %v177, 4294901760
      %v5449 = vsub.f32 %v177, %v5448
      %v5450 = vand.u32 %v5449, 4294901760
      %5451 = vmatpush.msra.mxu0 %v5450
      %v5452 = vand.u32 %v176, 4294901760
      %v5453 = vsub.f32 %v176, %v5452
      %v5454 = vand.u32 %v5453, 4294901760
      %5455 = vmatpush.msra.mxu0 %v5454
      %v5456 = vand.u32 %v175, 4294901760
      %v5457 = vsub.f32 %v175, %v5456
      %v5458 = vand.u32 %v5457, 4294901760
      %5459 = vmatpush.msra.mxu0 %v5458
      %v5460 = vand.u32 %v174, 4294901760
      %v5461 = vsub.f32 %v174, %v5460
      %v5462 = vand.u32 %v5461, 4294901760
      %5463 = vmatpush.msra.mxu0 %v5462
      %v5464 = vand.u32 %v173, 4294901760
      %v5465 = vsub.f32 %v173, %v5464
      %v5466 = vand.u32 %v5465, 4294901760
      %5467 = vmatpush.msra.mxu0 %v5466
      %v5468 = vand.u32 %v172, 4294901760
      %v5469 = vsub.f32 %v172, %v5468
      %v5470 = vand.u32 %v5469, 4294901760
      %5471 = vmatpush.msra.mxu0 %v5470
      %v5472 = vand.u32 %v171, 4294901760
      %v5473 = vsub.f32 %v171, %v5472
      %v5474 = vand.u32 %v5473, 4294901760
      %5475 = vmatpush.msra.mxu0 %v5474
      %v5476 = vand.u32 %v5176, 4294901760
      %5477 = vmatmul.f32.gmra.mxu0 %v5476
      %v5478 = vpop.f32.mrf.mxu0
      %v5479 = vadd.f32 %v5410, %v5478
      %5480 = vdwg.mxu0
      %v5481 = vand.u32 %v186, 4294901760
      %5482 = vmatpush.msra.mxu0 %v5481
      %v5483 = vand.u32 %v185, 4294901760
      %5484 = vmatpush.msra.mxu0 %v5483
      %v5485 = vand.u32 %v184, 4294901760
      %5486 = vmatpush.msra.mxu0 %v5485
      %v5487 = vand.u32 %v183, 4294901760
      %5488 = vmatpush.msra.mxu0 %v5487
      %v5489 = vand.u32 %v182, 4294901760
      %5490 = vmatpush.msra.mxu0 %v5489
      %v5491 = vand.u32 %v181, 4294901760
      %5492 = vmatpush.msra.mxu0 %v5491
      %v5493 = vand.u32 %v180, 4294901760
      %5494 = vmatpush.msra.mxu0 %v5493
      %v5495 = vand.u32 %v179, 4294901760
      %5496 = vmatpush.msra.mxu0 %v5495
      %v5497 = vand.u32 %v178, 4294901760
      %5498 = vmatpush.msra.mxu0 %v5497
      %v5499 = vand.u32 %v177, 4294901760
      %5500 = vmatpush.msra.mxu0 %v5499
      %v5501 = vand.u32 %v176, 4294901760
      %5502 = vmatpush.msra.mxu0 %v5501
      %v5503 = vand.u32 %v175, 4294901760
      %5504 = vmatpush.msra.mxu0 %v5503
      %v5505 = vand.u32 %v174, 4294901760
      %5506 = vmatpush.msra.mxu0 %v5505
      %v5507 = vand.u32 %v173, 4294901760
      %5508 = vmatpush.msra.mxu0 %v5507
      %v5509 = vand.u32 %v172, 4294901760
      %5510 = vmatpush.msra.mxu0 %v5509
      %v5511 = vand.u32 %v171, 4294901760
      %5512 = vmatpush.msra.mxu0 %v5511
      %v5513 = vand.u32 %v5176, 4294901760
      %5514 = vmatmul.f32.gmra.mxu0 %v5513
      %v5515 = vpop.f32.mrf.mxu0
      %v5516 = vadd.f32 %v5479, %v5515
      %5517 = vdwg.mxu0
      %v5518 = vadd.f32 %v5516, 1.0
      %v5519 = vrcp.pop %v5518
      %v5520 = vmul.f32 %v5516, %v5519
      %v5521 = vadd.f32 %v5516, 1e-07
      %v5522 = vrsqrt.pop %v5521
      %v5523 = vmul.f32 %v5522, %v5521
      %v5524 = vmul.f32 %v5523, %v5522
      %v5525 = vmul.f32 0.5, %v5524
      %v5526 = vsub.f32 1.5, %v5525
      %v5527 = vmul.f32 %v5522, %v5526
      %vm5528 = vweird.f32 %v5521
      %vm5529 = vweird.f32 %v5522
      %vm5530 = vmor %vm5528, %vm5529
      %v5531 = vsel %vm5530, %v5522, %v5527
      %v5532 = vmul.f32 %v5520, %v5531
      %v5533 = vmul.f32 %v5175, %v5532
      %v5534 = vmul.f32 %v5112, %v5533
      %v5535 = vmul.f32 %v5113, %v5533
      %v5536 = vmul.f32 %v5114, %v5533
      %v5537 = vmul.f32 %v5115, %v5533
      %v5538 = vmul.f32 %v5116, %v5533
      %v5539 = vmul.f32 %v5117, %v5533
      %v5540 = vmul.f32 %v5118, %v5533
      %v5541 = vmul.f32 %v5119, %v5533
      %v5542 = vmul.f32 %v5120, %v5533
      %v5543 = vmul.f32 %v5121, %v5533
      %v5544 = vmul.f32 %v5122, %v5533
      %v5545 = vmul.f32 %v5123, %v5533
      %v5546 = vmul.f32 %v5124, %v5533
      %v5547 = vmul.f32 %v5125, %v5533
      %v5548 = vmul.f32 %v5126, %v5533
      %v5549 = vmul.f32 %v5127, %v5533
      %v5550 = vmul.f32 %v5128, %v5533
      %v5551 = vmul.f32 %v5129, %v5533
      %v5552 = vmul.f32 %v5130, %v5533
      %v5553 = vmul.f32 %v5131, %v5533
      %v5554 = vmul.f32 %v5132, %v5533
      %v5555 = vmul.f32 %v5133, %v5533
      %v5556 = vmul.f32 %v5134, %v5533
      %v5557 = vmul.f32 %v5135, %v5533
      %v5558 = vmul.f32 %v5136, %v5533
      %v5559 = vmul.f32 %v5137, %v5533
      %v5560 = vmul.f32 %v5138, %v5533
      %v5561 = vmul.f32 %v5139, %v5533
      %v5562 = vmul.f32 %v5140, %v5533
      %v5563 = vmul.f32 %v5141, %v5533
      %v5564 = vmul.f32 %v5142, %v5533
      %v5565 = vmul.f32 %v5143, %v5533
      %v5566 = vand.u32 %v186, 4294901760
      %5567 = vmatpush.msra.mxu0 %v5566
      %v5568 = vand.u32 %v185, 4294901760
      %5569 = vmatpush.msra.mxu0 %v5568
      %v5570 = vand.u32 %v184, 4294901760
      %5571 = vmatpush.msra.mxu0 %v5570
      %v5572 = vand.u32 %v183, 4294901760
      %5573 = vmatpush.msra.mxu0 %v5572
      %v5574 = vand.u32 %v182, 4294901760
      %5575 = vmatpush.msra.mxu0 %v5574
      %v5576 = vand.u32 %v181, 4294901760
      %5577 = vmatpush.msra.mxu0 %v5576
      %v5578 = vand.u32 %v180, 4294901760
      %5579 = vmatpush.msra.mxu0 %v5578
      %v5580 = vand.u32 %v179, 4294901760
      %5581 = vmatpush.msra.mxu0 %v5580
      %v5582 = vand.u32 %v178, 4294901760
      %5583 = vmatpush.msra.mxu0 %v5582
      %v5584 = vand.u32 %v177, 4294901760
      %5585 = vmatpush.msra.mxu0 %v5584
      %v5586 = vand.u32 %v176, 4294901760
      %5587 = vmatpush.msra.mxu0 %v5586
      %v5588 = vand.u32 %v175, 4294901760
      %5589 = vmatpush.msra.mxu0 %v5588
      %v5590 = vand.u32 %v174, 4294901760
      %5591 = vmatpush.msra.mxu0 %v5590
      %v5592 = vand.u32 %v173, 4294901760
      %5593 = vmatpush.msra.mxu0 %v5592
      %v5594 = vand.u32 %v172, 4294901760
      %5595 = vmatpush.msra.mxu0 %v5594
      %v5596 = vand.u32 %v171, 4294901760
      %5597 = vmatpush.msra.mxu0 %v5596
      %v5598 = vand.u32 %v5534, 4294901760
      %v5599 = vsub.f32 %v5534, %v5598
      %v5600 = vand.u32 %v5599, 4294901760
      %v5601 = vsub.f32 %v5599, %v5600
      %v5602 = vand.u32 %v5601, 4294901760
      %5603 = vmatmul.f32.gmra.mxu0 %v5602
      %v5604 = vpop.f32.mrf.mxu0
      %v5605 = vadd.f32 0.0, %v5604
      %v5606 = vand.u32 %v5535, 4294901760
      %v5607 = vsub.f32 %v5535, %v5606
      %v5608 = vand.u32 %v5607, 4294901760
      %v5609 = vsub.f32 %v5607, %v5608
      %v5610 = vand.u32 %v5609, 4294901760
      %5611 = vmatmul.f32.gmra.mxu0 %v5610
      %v5612 = vpop.f32.mrf.mxu0
      %v5613 = vadd.f32 0.0, %v5612
      %v5614 = vand.u32 %v5536, 4294901760
      %v5615 = vsub.f32 %v5536, %v5614
      %v5616 = vand.u32 %v5615, 4294901760
      %v5617 = vsub.f32 %v5615, %v5616
      %v5618 = vand.u32 %v5617, 4294901760
      %5619 = vmatmul.f32.gmra.mxu0 %v5618
      %v5620 = vpop.f32.mrf.mxu0
      %v5621 = vadd.f32 0.0, %v5620
      %v5622 = vand.u32 %v5537, 4294901760
      %v5623 = vsub.f32 %v5537, %v5622
      %v5624 = vand.u32 %v5623, 4294901760
      %v5625 = vsub.f32 %v5623, %v5624
      %v5626 = vand.u32 %v5625, 4294901760
      %5627 = vmatmul.f32.gmra.mxu0 %v5626
      %v5628 = vpop.f32.mrf.mxu0
      %v5629 = vadd.f32 0.0, %v5628
      %v5630 = vand.u32 %v5538, 4294901760
      %v5631 = vsub.f32 %v5538, %v5630
      %v5632 = vand.u32 %v5631, 4294901760
      %v5633 = vsub.f32 %v5631, %v5632
      %v5634 = vand.u32 %v5633, 4294901760
      %5635 = vmatmul.f32.gmra.mxu0 %v5634
      %v5636 = vpop.f32.mrf.mxu0
      %v5637 = vadd.f32 0.0, %v5636
      %v5638 = vand.u32 %v5539, 4294901760
      %v5639 = vsub.f32 %v5539, %v5638
      %v5640 = vand.u32 %v5639, 4294901760
      %v5641 = vsub.f32 %v5639, %v5640
      %v5642 = vand.u32 %v5641, 4294901760
      %5643 = vmatmul.f32.gmra.mxu0 %v5642
      %v5644 = vpop.f32.mrf.mxu0
      %v5645 = vadd.f32 0.0, %v5644
      %v5646 = vand.u32 %v5540, 4294901760
      %v5647 = vsub.f32 %v5540, %v5646
      %v5648 = vand.u32 %v5647, 4294901760
      %v5649 = vsub.f32 %v5647, %v5648
      %v5650 = vand.u32 %v5649, 4294901760
      %5651 = vmatmul.f32.gmra.mxu0 %v5650
      %v5652 = vpop.f32.mrf.mxu0
      %v5653 = vadd.f32 0.0, %v5652
      %v5654 = vand.u32 %v5541, 4294901760
      %v5655 = vsub.f32 %v5541, %v5654
      %v5656 = vand.u32 %v5655, 4294901760
      %v5657 = vsub.f32 %v5655, %v5656
      %v5658 = vand.u32 %v5657, 4294901760
      %5659 = vmatmul.f32.gmra.mxu0 %v5658
      %v5660 = vpop.f32.mrf.mxu0
      %v5661 = vadd.f32 0.0, %v5660
      %v5662 = vand.u32 %v5542, 4294901760
      %v5663 = vsub.f32 %v5542, %v5662
      %v5664 = vand.u32 %v5663, 4294901760
      %v5665 = vsub.f32 %v5663, %v5664
      %v5666 = vand.u32 %v5665, 4294901760
      %5667 = vmatmul.f32.gmra.mxu0 %v5666
      %v5668 = vpop.f32.mrf.mxu0
      %v5669 = vadd.f32 0.0, %v5668
      %v5670 = vand.u32 %v5543, 4294901760
      %v5671 = vsub.f32 %v5543, %v5670
      %v5672 = vand.u32 %v5671, 4294901760
      %v5673 = vsub.f32 %v5671, %v5672
      %v5674 = vand.u32 %v5673, 4294901760
      %5675 = vmatmul.f32.gmra.mxu0 %v5674
      %v5676 = vpop.f32.mrf.mxu0
      %v5677 = vadd.f32 0.0, %v5676
      %v5678 = vand.u32 %v5544, 4294901760
      %v5679 = vsub.f32 %v5544, %v5678
      %v5680 = vand.u32 %v5679, 4294901760
      %v5681 = vsub.f32 %v5679, %v5680
      %v5682 = vand.u32 %v5681, 4294901760
      %5683 = vmatmul.f32.gmra.mxu0 %v5682
      %v5684 = vpop.f32.mrf.mxu0
      %v5685 = vadd.f32 0.0, %v5684
      %v5686 = vand.u32 %v5545, 4294901760
      %v5687 = vsub.f32 %v5545, %v5686
      %v5688 = vand.u32 %v5687, 4294901760
      %v5689 = vsub.f32 %v5687, %v5688
      %v5690 = vand.u32 %v5689, 4294901760
      %5691 = vmatmul.f32.gmra.mxu0 %v5690
      %v5692 = vpop.f32.mrf.mxu0
      %v5693 = vadd.f32 0.0, %v5692
      %v5694 = vand.u32 %v5546, 4294901760
      %v5695 = vsub.f32 %v5546, %v5694
      %v5696 = vand.u32 %v5695, 4294901760
      %v5697 = vsub.f32 %v5695, %v5696
      %v5698 = vand.u32 %v5697, 4294901760
      %5699 = vmatmul.f32.gmra.mxu0 %v5698
      %v5700 = vpop.f32.mrf.mxu0
      %v5701 = vadd.f32 0.0, %v5700
      %v5702 = vand.u32 %v5547, 4294901760
      %v5703 = vsub.f32 %v5547, %v5702
      %v5704 = vand.u32 %v5703, 4294901760
      %v5705 = vsub.f32 %v5703, %v5704
      %v5706 = vand.u32 %v5705, 4294901760
      %5707 = vmatmul.f32.gmra.mxu0 %v5706
      %v5708 = vpop.f32.mrf.mxu0
      %v5709 = vadd.f32 0.0, %v5708
      %v5710 = vand.u32 %v5548, 4294901760
      %v5711 = vsub.f32 %v5548, %v5710
      %v5712 = vand.u32 %v5711, 4294901760
      %v5713 = vsub.f32 %v5711, %v5712
      %v5714 = vand.u32 %v5713, 4294901760
      %5715 = vmatmul.f32.gmra.mxu0 %v5714
      %v5716 = vpop.f32.mrf.mxu0
      %v5717 = vadd.f32 0.0, %v5716
      %v5718 = vand.u32 %v5549, 4294901760
      %v5719 = vsub.f32 %v5549, %v5718
      %v5720 = vand.u32 %v5719, 4294901760
      %v5721 = vsub.f32 %v5719, %v5720
      %v5722 = vand.u32 %v5721, 4294901760
      %5723 = vmatmul.f32.gmra.mxu0 %v5722
      %v5724 = vpop.f32.mrf.mxu0
      %v5725 = vadd.f32 0.0, %v5724
      %v5726 = vand.u32 %v5550, 4294901760
      %v5727 = vsub.f32 %v5550, %v5726
      %v5728 = vand.u32 %v5727, 4294901760
      %v5729 = vsub.f32 %v5727, %v5728
      %v5730 = vand.u32 %v5729, 4294901760
      %5731 = vmatmul.f32.gmra.mxu0 %v5730
      %v5732 = vpop.f32.mrf.mxu0
      %v5733 = vadd.f32 0.0, %v5732
      %v5734 = vand.u32 %v5551, 4294901760
      %v5735 = vsub.f32 %v5551, %v5734
      %v5736 = vand.u32 %v5735, 4294901760
      %v5737 = vsub.f32 %v5735, %v5736
      %v5738 = vand.u32 %v5737, 4294901760
      %5739 = vmatmul.f32.gmra.mxu0 %v5738
      %v5740 = vpop.f32.mrf.mxu0
      %v5741 = vadd.f32 0.0, %v5740
      %v5742 = vand.u32 %v5552, 4294901760
      %v5743 = vsub.f32 %v5552, %v5742
      %v5744 = vand.u32 %v5743, 4294901760
      %v5745 = vsub.f32 %v5743, %v5744
      %v5746 = vand.u32 %v5745, 4294901760
      %5747 = vmatmul.f32.gmra.mxu0 %v5746
      %v5748 = vpop.f32.mrf.mxu0
      %v5749 = vadd.f32 0.0, %v5748
      %v5750 = vand.u32 %v5553, 4294901760
      %v5751 = vsub.f32 %v5553, %v5750
      %v5752 = vand.u32 %v5751, 4294901760
      %v5753 = vsub.f32 %v5751, %v5752
      %v5754 = vand.u32 %v5753, 4294901760
      %5755 = vmatmul.f32.gmra.mxu0 %v5754
      %v5756 = vpop.f32.mrf.mxu0
      %v5757 = vadd.f32 0.0, %v5756
      %v5758 = vand.u32 %v5554, 4294901760
      %v5759 = vsub.f32 %v5554, %v5758
      %v5760 = vand.u32 %v5759, 4294901760
      %v5761 = vsub.f32 %v5759, %v5760
      %v5762 = vand.u32 %v5761, 4294901760
      %5763 = vmatmul.f32.gmra.mxu0 %v5762
      %v5764 = vpop.f32.mrf.mxu0
      %v5765 = vadd.f32 0.0, %v5764
      %v5766 = vand.u32 %v5555, 4294901760
      %v5767 = vsub.f32 %v5555, %v5766
      %v5768 = vand.u32 %v5767, 4294901760
      %v5769 = vsub.f32 %v5767, %v5768
      %v5770 = vand.u32 %v5769, 4294901760
      %5771 = vmatmul.f32.gmra.mxu0 %v5770
      %v5772 = vpop.f32.mrf.mxu0
      %v5773 = vadd.f32 0.0, %v5772
      %v5774 = vand.u32 %v5556, 4294901760
      %v5775 = vsub.f32 %v5556, %v5774
      %v5776 = vand.u32 %v5775, 4294901760
      %v5777 = vsub.f32 %v5775, %v5776
      %v5778 = vand.u32 %v5777, 4294901760
      %5779 = vmatmul.f32.gmra.mxu0 %v5778
      %v5780 = vpop.f32.mrf.mxu0
      %v5781 = vadd.f32 0.0, %v5780
      %v5782 = vand.u32 %v5557, 4294901760
      %v5783 = vsub.f32 %v5557, %v5782
      %v5784 = vand.u32 %v5783, 4294901760
      %v5785 = vsub.f32 %v5783, %v5784
      %v5786 = vand.u32 %v5785, 4294901760
      %5787 = vmatmul.f32.gmra.mxu0 %v5786
      %v5788 = vpop.f32.mrf.mxu0
      %v5789 = vadd.f32 0.0, %v5788
      %v5790 = vand.u32 %v5558, 4294901760
      %v5791 = vsub.f32 %v5558, %v5790
      %v5792 = vand.u32 %v5791, 4294901760
      %v5793 = vsub.f32 %v5791, %v5792
      %v5794 = vand.u32 %v5793, 4294901760
      %5795 = vmatmul.f32.gmra.mxu0 %v5794
      %v5796 = vpop.f32.mrf.mxu0
      %v5797 = vadd.f32 0.0, %v5796
      %v5798 = vand.u32 %v5559, 4294901760
      %v5799 = vsub.f32 %v5559, %v5798
      %v5800 = vand.u32 %v5799, 4294901760
      %v5801 = vsub.f32 %v5799, %v5800
      %v5802 = vand.u32 %v5801, 4294901760
      %5803 = vmatmul.f32.gmra.mxu0 %v5802
      %v5804 = vpop.f32.mrf.mxu0
      %v5805 = vadd.f32 0.0, %v5804
      %v5806 = vand.u32 %v5560, 4294901760
      %v5807 = vsub.f32 %v5560, %v5806
      %v5808 = vand.u32 %v5807, 4294901760
      %v5809 = vsub.f32 %v5807, %v5808
      %v5810 = vand.u32 %v5809, 4294901760
      %5811 = vmatmul.f32.gmra.mxu0 %v5810
      %v5812 = vpop.f32.mrf.mxu0
      %v5813 = vadd.f32 0.0, %v5812
      %v5814 = vand.u32 %v5561, 4294901760
      %v5815 = vsub.f32 %v5561, %v5814
      %v5816 = vand.u32 %v5815, 4294901760
      %v5817 = vsub.f32 %v5815, %v5816
      %v5818 = vand.u32 %v5817, 4294901760
      %5819 = vmatmul.f32.gmra.mxu0 %v5818
      %v5820 = vpop.f32.mrf.mxu0
      %v5821 = vadd.f32 0.0, %v5820
      %v5822 = vand.u32 %v5562, 4294901760
      %v5823 = vsub.f32 %v5562, %v5822
      %v5824 = vand.u32 %v5823, 4294901760
      %v5825 = vsub.f32 %v5823, %v5824
      %v5826 = vand.u32 %v5825, 4294901760
      %5827 = vmatmul.f32.gmra.mxu0 %v5826
      %v5828 = vpop.f32.mrf.mxu0
      %v5829 = vadd.f32 0.0, %v5828
      %v5830 = vand.u32 %v5563, 4294901760
      %v5831 = vsub.f32 %v5563, %v5830
      %v5832 = vand.u32 %v5831, 4294901760
      %v5833 = vsub.f32 %v5831, %v5832
      %v5834 = vand.u32 %v5833, 4294901760
      %5835 = vmatmul.f32.gmra.mxu0 %v5834
      %v5836 = vpop.f32.mrf.mxu0
      %v5837 = vadd.f32 0.0, %v5836
      %v5838 = vand.u32 %v5564, 4294901760
      %v5839 = vsub.f32 %v5564, %v5838
      %v5840 = vand.u32 %v5839, 4294901760
      %v5841 = vsub.f32 %v5839, %v5840
      %v5842 = vand.u32 %v5841, 4294901760
      %5843 = vmatmul.f32.gmra.mxu0 %v5842
      %v5844 = vpop.f32.mrf.mxu0
      %v5845 = vadd.f32 0.0, %v5844
      %v5846 = vand.u32 %v5565, 4294901760
      %v5847 = vsub.f32 %v5565, %v5846
      %v5848 = vand.u32 %v5847, 4294901760
      %v5849 = vsub.f32 %v5847, %v5848
      %v5850 = vand.u32 %v5849, 4294901760
      %5851 = vmatmul.f32.gmra.mxu0 %v5850
      %v5852 = vpop.f32.mrf.mxu0
      %v5853 = vadd.f32 0.0, %v5852
      %5854 = vdwg.mxu0
      %v5855 = vand.u32 %v186, 4294901760
      %v5856 = vsub.f32 %v186, %v5855
      %v5857 = vand.u32 %v5856, 4294901760
      %v5858 = vsub.f32 %v5856, %v5857
      %v5859 = vand.u32 %v5858, 4294901760
      %5860 = vmatpush.msra.mxu0 %v5859
      %v5861 = vand.u32 %v185, 4294901760
      %v5862 = vsub.f32 %v185, %v5861
      %v5863 = vand.u32 %v5862, 4294901760
      %v5864 = vsub.f32 %v5862, %v5863
      %v5865 = vand.u32 %v5864, 4294901760
      %5866 = vmatpush.msra.mxu0 %v5865
      %v5867 = vand.u32 %v184, 4294901760
      %v5868 = vsub.f32 %v184, %v5867
      %v5869 = vand.u32 %v5868, 4294901760
      %v5870 = vsub.f32 %v5868, %v5869
      %v5871 = vand.u32 %v5870, 4294901760
      %5872 = vmatpush.msra.mxu0 %v5871
      %v5873 = vand.u32 %v183, 4294901760
      %v5874 = vsub.f32 %v183, %v5873
      %v5875 = vand.u32 %v5874, 4294901760
      %v5876 = vsub.f32 %v5874, %v5875
      %v5877 = vand.u32 %v5876, 4294901760
      %5878 = vmatpush.msra.mxu0 %v5877
      %v5879 = vand.u32 %v182, 4294901760
      %v5880 = vsub.f32 %v182, %v5879
      %v5881 = vand.u32 %v5880, 4294901760
      %v5882 = vsub.f32 %v5880, %v5881
      %v5883 = vand.u32 %v5882, 4294901760
      %5884 = vmatpush.msra.mxu0 %v5883
      %v5885 = vand.u32 %v181, 4294901760
      %v5886 = vsub.f32 %v181, %v5885
      %v5887 = vand.u32 %v5886, 4294901760
      %v5888 = vsub.f32 %v5886, %v5887
      %v5889 = vand.u32 %v5888, 4294901760
      %5890 = vmatpush.msra.mxu0 %v5889
      %v5891 = vand.u32 %v180, 4294901760
      %v5892 = vsub.f32 %v180, %v5891
      %v5893 = vand.u32 %v5892, 4294901760
      %v5894 = vsub.f32 %v5892, %v5893
      %v5895 = vand.u32 %v5894, 4294901760
      %5896 = vmatpush.msra.mxu0 %v5895
      %v5897 = vand.u32 %v179, 4294901760
      %v5898 = vsub.f32 %v179, %v5897
      %v5899 = vand.u32 %v5898, 4294901760
      %v5900 = vsub.f32 %v5898, %v5899
      %v5901 = vand.u32 %v5900, 4294901760
      %5902 = vmatpush.msra.mxu0 %v5901
      %v5903 = vand.u32 %v178, 4294901760
      %v5904 = vsub.f32 %v178, %v5903
      %v5905 = vand.u32 %v5904, 4294901760
      %v5906 = vsub.f32 %v5904, %v5905
      %v5907 = vand.u32 %v5906, 4294901760
      %5908 = vmatpush.msra.mxu0 %v5907
      %v5909 = vand.u32 %v177, 4294901760
      %v5910 = vsub.f32 %v177, %v5909
      %v5911 = vand.u32 %v5910, 4294901760
      %v5912 = vsub.f32 %v5910, %v5911
      %v5913 = vand.u32 %v5912, 4294901760
      %5914 = vmatpush.msra.mxu0 %v5913
      %v5915 = vand.u32 %v176, 4294901760
      %v5916 = vsub.f32 %v176, %v5915
      %v5917 = vand.u32 %v5916, 4294901760
      %v5918 = vsub.f32 %v5916, %v5917
      %v5919 = vand.u32 %v5918, 4294901760
      %5920 = vmatpush.msra.mxu0 %v5919
      %v5921 = vand.u32 %v175, 4294901760
      %v5922 = vsub.f32 %v175, %v5921
      %v5923 = vand.u32 %v5922, 4294901760
      %v5924 = vsub.f32 %v5922, %v5923
      %v5925 = vand.u32 %v5924, 4294901760
      %5926 = vmatpush.msra.mxu0 %v5925
      %v5927 = vand.u32 %v174, 4294901760
      %v5928 = vsub.f32 %v174, %v5927
      %v5929 = vand.u32 %v5928, 4294901760
      %v5930 = vsub.f32 %v5928, %v5929
      %v5931 = vand.u32 %v5930, 4294901760
      %5932 = vmatpush.msra.mxu0 %v5931
      %v5933 = vand.u32 %v173, 4294901760
      %v5934 = vsub.f32 %v173, %v5933
      %v5935 = vand.u32 %v5934, 4294901760
      %v5936 = vsub.f32 %v5934, %v5935
      %v5937 = vand.u32 %v5936, 4294901760
      %5938 = vmatpush.msra.mxu0 %v5937
      %v5939 = vand.u32 %v172, 4294901760
      %v5940 = vsub.f32 %v172, %v5939
      %v5941 = vand.u32 %v5940, 4294901760
      %v5942 = vsub.f32 %v5940, %v5941
      %v5943 = vand.u32 %v5942, 4294901760
      %5944 = vmatpush.msra.mxu0 %v5943
      %v5945 = vand.u32 %v171, 4294901760
      %v5946 = vsub.f32 %v171, %v5945
      %v5947 = vand.u32 %v5946, 4294901760
      %v5948 = vsub.f32 %v5946, %v5947
      %v5949 = vand.u32 %v5948, 4294901760
      %5950 = vmatpush.msra.mxu0 %v5949
      %v5951 = vand.u32 %v5534, 4294901760
      %5952 = vmatmul.f32.gmra.mxu0 %v5951
      %v5953 = vpop.f32.mrf.mxu0
      %v5954 = vadd.f32 %v5605, %v5953
      %v5955 = vand.u32 %v5535, 4294901760
      %5956 = vmatmul.f32.gmra.mxu0 %v5955
      %v5957 = vpop.f32.mrf.mxu0
      %v5958 = vadd.f32 %v5613, %v5957
      %v5959 = vand.u32 %v5536, 4294901760
      %5960 = vmatmul.f32.gmra.mxu0 %v5959
      %v5961 = vpop.f32.mrf.mxu0
      %v5962 = vadd.f32 %v5621, %v5961
      %v5963 = vand.u32 %v5537, 4294901760
      %5964 = vmatmul.f32.gmra.mxu0 %v5963
      %v5965 = vpop.f32.mrf.mxu0
      %v5966 = vadd.f32 %v5629, %v5965
      %v5967 = vand.u32 %v5538, 4294901760
      %5968 = vmatmul.f32.gmra.mxu0 %v5967
      %v5969 = vpop.f32.mrf.mxu0
      %v5970 = vadd.f32 %v5637, %v5969
      %v5971 = vand.u32 %v5539, 4294901760
      %5972 = vmatmul.f32.gmra.mxu0 %v5971
      %v5973 = vpop.f32.mrf.mxu0
      %v5974 = vadd.f32 %v5645, %v5973
      %v5975 = vand.u32 %v5540, 4294901760
      %5976 = vmatmul.f32.gmra.mxu0 %v5975
      %v5977 = vpop.f32.mrf.mxu0
      %v5978 = vadd.f32 %v5653, %v5977
      %v5979 = vand.u32 %v5541, 4294901760
      %5980 = vmatmul.f32.gmra.mxu0 %v5979
      %v5981 = vpop.f32.mrf.mxu0
      %v5982 = vadd.f32 %v5661, %v5981
      %v5983 = vand.u32 %v5542, 4294901760
      %5984 = vmatmul.f32.gmra.mxu0 %v5983
      %v5985 = vpop.f32.mrf.mxu0
      %v5986 = vadd.f32 %v5669, %v5985
      %v5987 = vand.u32 %v5543, 4294901760
      %5988 = vmatmul.f32.gmra.mxu0 %v5987
      %v5989 = vpop.f32.mrf.mxu0
      %v5990 = vadd.f32 %v5677, %v5989
      %v5991 = vand.u32 %v5544, 4294901760
      %5992 = vmatmul.f32.gmra.mxu0 %v5991
      %v5993 = vpop.f32.mrf.mxu0
      %v5994 = vadd.f32 %v5685, %v5993
      %v5995 = vand.u32 %v5545, 4294901760
      %5996 = vmatmul.f32.gmra.mxu0 %v5995
      %v5997 = vpop.f32.mrf.mxu0
      %v5998 = vadd.f32 %v5693, %v5997
      %v5999 = vand.u32 %v5546, 4294901760
      %6000 = vmatmul.f32.gmra.mxu0 %v5999
      %v6001 = vpop.f32.mrf.mxu0
      %v6002 = vadd.f32 %v5701, %v6001
      %v6003 = vand.u32 %v5547, 4294901760
      %6004 = vmatmul.f32.gmra.mxu0 %v6003
      %v6005 = vpop.f32.mrf.mxu0
      %v6006 = vadd.f32 %v5709, %v6005
      %v6007 = vand.u32 %v5548, 4294901760
      %6008 = vmatmul.f32.gmra.mxu0 %v6007
      %v6009 = vpop.f32.mrf.mxu0
      %v6010 = vadd.f32 %v5717, %v6009
      %v6011 = vand.u32 %v5549, 4294901760
      %6012 = vmatmul.f32.gmra.mxu0 %v6011
      %v6013 = vpop.f32.mrf.mxu0
      %v6014 = vadd.f32 %v5725, %v6013
      %v6015 = vand.u32 %v5550, 4294901760
      %6016 = vmatmul.f32.gmra.mxu0 %v6015
      %v6017 = vpop.f32.mrf.mxu0
      %v6018 = vadd.f32 %v5733, %v6017
      %v6019 = vand.u32 %v5551, 4294901760
      %6020 = vmatmul.f32.gmra.mxu0 %v6019
      %v6021 = vpop.f32.mrf.mxu0
      %v6022 = vadd.f32 %v5741, %v6021
      %v6023 = vand.u32 %v5552, 4294901760
      %6024 = vmatmul.f32.gmra.mxu0 %v6023
      %v6025 = vpop.f32.mrf.mxu0
      %v6026 = vadd.f32 %v5749, %v6025
      %v6027 = vand.u32 %v5553, 4294901760
      %6028 = vmatmul.f32.gmra.mxu0 %v6027
      %v6029 = vpop.f32.mrf.mxu0
      %v6030 = vadd.f32 %v5757, %v6029
      %v6031 = vand.u32 %v5554, 4294901760
      %6032 = vmatmul.f32.gmra.mxu0 %v6031
      %v6033 = vpop.f32.mrf.mxu0
      %v6034 = vadd.f32 %v5765, %v6033
      %v6035 = vand.u32 %v5555, 4294901760
      %6036 = vmatmul.f32.gmra.mxu0 %v6035
      %v6037 = vpop.f32.mrf.mxu0
      %v6038 = vadd.f32 %v5773, %v6037
      %v6039 = vand.u32 %v5556, 4294901760
      %6040 = vmatmul.f32.gmra.mxu0 %v6039
      %v6041 = vpop.f32.mrf.mxu0
      %v6042 = vadd.f32 %v5781, %v6041
      %v6043 = vand.u32 %v5557, 4294901760
      %6044 = vmatmul.f32.gmra.mxu0 %v6043
      %v6045 = vpop.f32.mrf.mxu0
      %v6046 = vadd.f32 %v5789, %v6045
      %v6047 = vand.u32 %v5558, 4294901760
      %6048 = vmatmul.f32.gmra.mxu0 %v6047
      %v6049 = vpop.f32.mrf.mxu0
      %v6050 = vadd.f32 %v5797, %v6049
      %v6051 = vand.u32 %v5559, 4294901760
      %6052 = vmatmul.f32.gmra.mxu0 %v6051
      %v6053 = vpop.f32.mrf.mxu0
      %v6054 = vadd.f32 %v5805, %v6053
      %v6055 = vand.u32 %v5560, 4294901760
      %6056 = vmatmul.f32.gmra.mxu0 %v6055
      %v6057 = vpop.f32.mrf.mxu0
      %v6058 = vadd.f32 %v5813, %v6057
      %v6059 = vand.u32 %v5561, 4294901760
      %6060 = vmatmul.f32.gmra.mxu0 %v6059
      %v6061 = vpop.f32.mrf.mxu0
      %v6062 = vadd.f32 %v5821, %v6061
      %v6063 = vand.u32 %v5562, 4294901760
      %6064 = vmatmul.f32.gmra.mxu0 %v6063
      %v6065 = vpop.f32.mrf.mxu0
      %v6066 = vadd.f32 %v5829, %v6065
      %v6067 = vand.u32 %v5563, 4294901760
      %6068 = vmatmul.f32.gmra.mxu0 %v6067
      %v6069 = vpop.f32.mrf.mxu0
      %v6070 = vadd.f32 %v5837, %v6069
      %v6071 = vand.u32 %v5564, 4294901760
      %6072 = vmatmul.f32.gmra.mxu0 %v6071
      %v6073 = vpop.f32.mrf.mxu0
      %v6074 = vadd.f32 %v5845, %v6073
      %v6075 = vand.u32 %v5565, 4294901760
      %6076 = vmatmul.f32.gmra.mxu0 %v6075
      %v6077 = vpop.f32.mrf.mxu0
      %v6078 = vadd.f32 %v5853, %v6077
      %6079 = vdwg.mxu0
      %v6080 = vand.u32 %v186, 4294901760
      %v6081 = vsub.f32 %v186, %v6080
      %6082 = vmatpush.msra.mxu0 %v6081
      %v6083 = vand.u32 %v185, 4294901760
      %v6084 = vsub.f32 %v185, %v6083
      %6085 = vmatpush.msra.mxu0 %v6084
      %v6086 = vand.u32 %v184, 4294901760
      %v6087 = vsub.f32 %v184, %v6086
      %6088 = vmatpush.msra.mxu0 %v6087
      %v6089 = vand.u32 %v183, 4294901760
      %v6090 = vsub.f32 %v183, %v6089
      %6091 = vmatpush.msra.mxu0 %v6090
      %v6092 = vand.u32 %v182, 4294901760
      %v6093 = vsub.f32 %v182, %v6092
      %6094 = vmatpush.msra.mxu0 %v6093
      %v6095 = vand.u32 %v181, 4294901760
      %v6096 = vsub.f32 %v181, %v6095
      %6097 = vmatpush.msra.mxu0 %v6096
      %v6098 = vand.u32 %v180, 4294901760
      %v6099 = vsub.f32 %v180, %v6098
      %6100 = vmatpush.msra.mxu0 %v6099
      %v6101 = vand.u32 %v179, 4294901760
      %v6102 = vsub.f32 %v179, %v6101
      %6103 = vmatpush.msra.mxu0 %v6102
      %v6104 = vand.u32 %v178, 4294901760
      %v6105 = vsub.f32 %v178, %v6104
      %6106 = vmatpush.msra.mxu0 %v6105
      %v6107 = vand.u32 %v177, 4294901760
      %v6108 = vsub.f32 %v177, %v6107
      %6109 = vmatpush.msra.mxu0 %v6108
      %v6110 = vand.u32 %v176, 4294901760
      %v6111 = vsub.f32 %v176, %v6110
      %6112 = vmatpush.msra.mxu0 %v6111
      %v6113 = vand.u32 %v175, 4294901760
      %v6114 = vsub.f32 %v175, %v6113
      %6115 = vmatpush.msra.mxu0 %v6114
      %v6116 = vand.u32 %v174, 4294901760
      %v6117 = vsub.f32 %v174, %v6116
      %6118 = vmatpush.msra.mxu0 %v6117
      %v6119 = vand.u32 %v173, 4294901760
      %v6120 = vsub.f32 %v173, %v6119
      %6121 = vmatpush.msra.mxu0 %v6120
      %v6122 = vand.u32 %v172, 4294901760
      %v6123 = vsub.f32 %v172, %v6122
      %6124 = vmatpush.msra.mxu0 %v6123
      %v6125 = vand.u32 %v171, 4294901760
      %v6126 = vsub.f32 %v171, %v6125
      %6127 = vmatpush.msra.mxu0 %v6126
      %v6128 = vand.u32 %v5534, 4294901760
      %v6129 = vsub.f32 %v5534, %v6128
      %6130 = vmatmul.f32.gmra.mxu0 %v6129
      %v6131 = vpop.f32.mrf.mxu0
      %v6132 = vadd.f32 %v5954, %v6131
      %v6133 = vand.u32 %v5535, 4294901760
      %v6134 = vsub.f32 %v5535, %v6133
      %6135 = vmatmul.f32.gmra.mxu0 %v6134
      %v6136 = vpop.f32.mrf.mxu0
      %v6137 = vadd.f32 %v5958, %v6136
      %v6138 = vand.u32 %v5536, 4294901760
      %v6139 = vsub.f32 %v5536, %v6138
      %6140 = vmatmul.f32.gmra.mxu0 %v6139
      %v6141 = vpop.f32.mrf.mxu0
      %v6142 = vadd.f32 %v5962, %v6141
      %v6143 = vand.u32 %v5537, 4294901760
      %v6144 = vsub.f32 %v5537, %v6143
      %6145 = vmatmul.f32.gmra.mxu0 %v6144
      %v6146 = vpop.f32.mrf.mxu0
      %v6147 = vadd.f32 %v5966, %v6146
      %v6148 = vand.u32 %v5538, 4294901760
      %v6149 = vsub.f32 %v5538, %v6148
      %6150 = vmatmul.f32.gmra.mxu0 %v6149
      %v6151 = vpop.f32.mrf.mxu0
      %v6152 = vadd.f32 %v5970, %v6151
      %v6153 = vand.u32 %v5539, 4294901760
      %v6154 = vsub.f32 %v5539, %v6153
      %6155 = vmatmul.f32.gmra.mxu0 %v6154
      %v6156 = vpop.f32.mrf.mxu0
      %v6157 = vadd.f32 %v5974, %v6156
      %v6158 = vand.u32 %v5540, 4294901760
      %v6159 = vsub.f32 %v5540, %v6158
      %6160 = vmatmul.f32.gmra.mxu0 %v6159
      %v6161 = vpop.f32.mrf.mxu0
      %v6162 = vadd.f32 %v5978, %v6161
      %v6163 = vand.u32 %v5541, 4294901760
      %v6164 = vsub.f32 %v5541, %v6163
      %6165 = vmatmul.f32.gmra.mxu0 %v6164
      %v6166 = vpop.f32.mrf.mxu0
      %v6167 = vadd.f32 %v5982, %v6166
      %v6168 = vand.u32 %v5542, 4294901760
      %v6169 = vsub.f32 %v5542, %v6168
      %6170 = vmatmul.f32.gmra.mxu0 %v6169
      %v6171 = vpop.f32.mrf.mxu0
      %v6172 = vadd.f32 %v5986, %v6171
      %v6173 = vand.u32 %v5543, 4294901760
      %v6174 = vsub.f32 %v5543, %v6173
      %6175 = vmatmul.f32.gmra.mxu0 %v6174
      %v6176 = vpop.f32.mrf.mxu0
      %v6177 = vadd.f32 %v5990, %v6176
      %v6178 = vand.u32 %v5544, 4294901760
      %v6179 = vsub.f32 %v5544, %v6178
      %6180 = vmatmul.f32.gmra.mxu0 %v6179
      %v6181 = vpop.f32.mrf.mxu0
      %v6182 = vadd.f32 %v5994, %v6181
      %v6183 = vand.u32 %v5545, 4294901760
      %v6184 = vsub.f32 %v5545, %v6183
      %6185 = vmatmul.f32.gmra.mxu0 %v6184
      %v6186 = vpop.f32.mrf.mxu0
      %v6187 = vadd.f32 %v5998, %v6186
      %v6188 = vand.u32 %v5546, 4294901760
      %v6189 = vsub.f32 %v5546, %v6188
      %6190 = vmatmul.f32.gmra.mxu0 %v6189
      %v6191 = vpop.f32.mrf.mxu0
      %v6192 = vadd.f32 %v6002, %v6191
      %v6193 = vand.u32 %v5547, 4294901760
      %v6194 = vsub.f32 %v5547, %v6193
      %6195 = vmatmul.f32.gmra.mxu0 %v6194
      %v6196 = vpop.f32.mrf.mxu0
      %v6197 = vadd.f32 %v6006, %v6196
      %v6198 = vand.u32 %v5548, 4294901760
      %v6199 = vsub.f32 %v5548, %v6198
      %6200 = vmatmul.f32.gmra.mxu0 %v6199
      %v6201 = vpop.f32.mrf.mxu0
      %v6202 = vadd.f32 %v6010, %v6201
      %v6203 = vand.u32 %v5549, 4294901760
      %v6204 = vsub.f32 %v5549, %v6203
      %6205 = vmatmul.f32.gmra.mxu0 %v6204
      %v6206 = vpop.f32.mrf.mxu0
      %v6207 = vadd.f32 %v6014, %v6206
      %v6208 = vand.u32 %v5550, 4294901760
      %v6209 = vsub.f32 %v5550, %v6208
      %6210 = vmatmul.f32.gmra.mxu0 %v6209
      %v6211 = vpop.f32.mrf.mxu0
      %v6212 = vadd.f32 %v6018, %v6211
      %v6213 = vand.u32 %v5551, 4294901760
      %v6214 = vsub.f32 %v5551, %v6213
      %6215 = vmatmul.f32.gmra.mxu0 %v6214
      %v6216 = vpop.f32.mrf.mxu0
      %v6217 = vadd.f32 %v6022, %v6216
      %v6218 = vand.u32 %v5552, 4294901760
      %v6219 = vsub.f32 %v5552, %v6218
      %6220 = vmatmul.f32.gmra.mxu0 %v6219
      %v6221 = vpop.f32.mrf.mxu0
      %v6222 = vadd.f32 %v6026, %v6221
      %v6223 = vand.u32 %v5553, 4294901760
      %v6224 = vsub.f32 %v5553, %v6223
      %6225 = vmatmul.f32.gmra.mxu0 %v6224
      %v6226 = vpop.f32.mrf.mxu0
      %v6227 = vadd.f32 %v6030, %v6226
      %v6228 = vand.u32 %v5554, 4294901760
      %v6229 = vsub.f32 %v5554, %v6228
      %6230 = vmatmul.f32.gmra.mxu0 %v6229
      %v6231 = vpop.f32.mrf.mxu0
      %v6232 = vadd.f32 %v6034, %v6231
      %v6233 = vand.u32 %v5555, 4294901760
      %v6234 = vsub.f32 %v5555, %v6233
      %6235 = vmatmul.f32.gmra.mxu0 %v6234
      %v6236 = vpop.f32.mrf.mxu0
      %v6237 = vadd.f32 %v6038, %v6236
      %v6238 = vand.u32 %v5556, 4294901760
      %v6239 = vsub.f32 %v5556, %v6238
      %6240 = vmatmul.f32.gmra.mxu0 %v6239
      %v6241 = vpop.f32.mrf.mxu0
      %v6242 = vadd.f32 %v6042, %v6241
      %v6243 = vand.u32 %v5557, 4294901760
      %v6244 = vsub.f32 %v5557, %v6243
      %6245 = vmatmul.f32.gmra.mxu0 %v6244
      %v6246 = vpop.f32.mrf.mxu0
      %v6247 = vadd.f32 %v6046, %v6246
      %v6248 = vand.u32 %v5558, 4294901760
      %v6249 = vsub.f32 %v5558, %v6248
      %6250 = vmatmul.f32.gmra.mxu0 %v6249
      %v6251 = vpop.f32.mrf.mxu0
      %v6252 = vadd.f32 %v6050, %v6251
      %v6253 = vand.u32 %v5559, 4294901760
      %v6254 = vsub.f32 %v5559, %v6253
      %6255 = vmatmul.f32.gmra.mxu0 %v6254
      %v6256 = vpop.f32.mrf.mxu0
      %v6257 = vadd.f32 %v6054, %v6256
      %v6258 = vand.u32 %v5560, 4294901760
      %v6259 = vsub.f32 %v5560, %v6258
      %6260 = vmatmul.f32.gmra.mxu0 %v6259
      %v6261 = vpop.f32.mrf.mxu0
      %v6262 = vadd.f32 %v6058, %v6261
      %v6263 = vand.u32 %v5561, 4294901760
      %v6264 = vsub.f32 %v5561, %v6263
      %6265 = vmatmul.f32.gmra.mxu0 %v6264
      %v6266 = vpop.f32.mrf.mxu0
      %v6267 = vadd.f32 %v6062, %v6266
      %v6268 = vand.u32 %v5562, 4294901760
      %v6269 = vsub.f32 %v5562, %v6268
      %6270 = vmatmul.f32.gmra.mxu0 %v6269
      %v6271 = vpop.f32.mrf.mxu0
      %v6272 = vadd.f32 %v6066, %v6271
      %v6273 = vand.u32 %v5563, 4294901760
      %v6274 = vsub.f32 %v5563, %v6273
      %6275 = vmatmul.f32.gmra.mxu0 %v6274
      %v6276 = vpop.f32.mrf.mxu0
      %v6277 = vadd.f32 %v6070, %v6276
      %v6278 = vand.u32 %v5564, 4294901760
      %v6279 = vsub.f32 %v5564, %v6278
      %6280 = vmatmul.f32.gmra.mxu0 %v6279
      %v6281 = vpop.f32.mrf.mxu0
      %v6282 = vadd.f32 %v6074, %v6281
      %v6283 = vand.u32 %v5565, 4294901760
      %v6284 = vsub.f32 %v5565, %v6283
      %6285 = vmatmul.f32.gmra.mxu0 %v6284
      %v6286 = vpop.f32.mrf.mxu0
      %v6287 = vadd.f32 %v6078, %v6286
      %6288 = vdwg.mxu0
      %v6289 = vand.u32 %v186, 4294901760
      %6290 = vmatpush.msra.mxu0 %v6289
      %v6291 = vand.u32 %v185, 4294901760
      %6292 = vmatpush.msra.mxu0 %v6291
      %v6293 = vand.u32 %v184, 4294901760
      %6294 = vmatpush.msra.mxu0 %v6293
      %v6295 = vand.u32 %v183, 4294901760
      %6296 = vmatpush.msra.mxu0 %v6295
      %v6297 = vand.u32 %v182, 4294901760
      %6298 = vmatpush.msra.mxu0 %v6297
      %v6299 = vand.u32 %v181, 4294901760
      %6300 = vmatpush.msra.mxu0 %v6299
      %v6301 = vand.u32 %v180, 4294901760
      %6302 = vmatpush.msra.mxu0 %v6301
      %v6303 = vand.u32 %v179, 4294901760
      %6304 = vmatpush.msra.mxu0 %v6303
      %v6305 = vand.u32 %v178, 4294901760
      %6306 = vmatpush.msra.mxu0 %v6305
      %v6307 = vand.u32 %v177, 4294901760
      %6308 = vmatpush.msra.mxu0 %v6307
      %v6309 = vand.u32 %v176, 4294901760
      %6310 = vmatpush.msra.mxu0 %v6309
      %v6311 = vand.u32 %v175, 4294901760
      %6312 = vmatpush.msra.mxu0 %v6311
      %v6313 = vand.u32 %v174, 4294901760
      %6314 = vmatpush.msra.mxu0 %v6313
      %v6315 = vand.u32 %v173, 4294901760
      %6316 = vmatpush.msra.mxu0 %v6315
      %v6317 = vand.u32 %v172, 4294901760
      %6318 = vmatpush.msra.mxu0 %v6317
      %v6319 = vand.u32 %v171, 4294901760
      %6320 = vmatpush.msra.mxu0 %v6319
      %v6321 = vand.u32 %v5534, 4294901760
      %v6322 = vsub.f32 %v5534, %v6321
      %v6323 = vand.u32 %v6322, 4294901760
      %6324 = vmatmul.f32.gmra.mxu0 %v6323
      %v6325 = vpop.f32.mrf.mxu0
      %v6326 = vadd.f32 %v6132, %v6325
      %v6327 = vand.u32 %v5535, 4294901760
      %v6328 = vsub.f32 %v5535, %v6327
      %v6329 = vand.u32 %v6328, 4294901760
      %6330 = vmatmul.f32.gmra.mxu0 %v6329
      %v6331 = vpop.f32.mrf.mxu0
      %v6332 = vadd.f32 %v6137, %v6331
      %v6333 = vand.u32 %v5536, 4294901760
      %v6334 = vsub.f32 %v5536, %v6333
      %v6335 = vand.u32 %v6334, 4294901760
      %6336 = vmatmul.f32.gmra.mxu0 %v6335
      %v6337 = vpop.f32.mrf.mxu0
      %v6338 = vadd.f32 %v6142, %v6337
      %v6339 = vand.u32 %v5537, 4294901760
      %v6340 = vsub.f32 %v5537, %v6339
      %v6341 = vand.u32 %v6340, 4294901760
      %6342 = vmatmul.f32.gmra.mxu0 %v6341
      %v6343 = vpop.f32.mrf.mxu0
      %v6344 = vadd.f32 %v6147, %v6343
      %v6345 = vand.u32 %v5538, 4294901760
      %v6346 = vsub.f32 %v5538, %v6345
      %v6347 = vand.u32 %v6346, 4294901760
      %6348 = vmatmul.f32.gmra.mxu0 %v6347
      %v6349 = vpop.f32.mrf.mxu0
      %v6350 = vadd.f32 %v6152, %v6349
      %v6351 = vand.u32 %v5539, 4294901760
      %v6352 = vsub.f32 %v5539, %v6351
      %v6353 = vand.u32 %v6352, 4294901760
      %6354 = vmatmul.f32.gmra.mxu0 %v6353
      %v6355 = vpop.f32.mrf.mxu0
      %v6356 = vadd.f32 %v6157, %v6355
      %v6357 = vand.u32 %v5540, 4294901760
      %v6358 = vsub.f32 %v5540, %v6357
      %v6359 = vand.u32 %v6358, 4294901760
      %6360 = vmatmul.f32.gmra.mxu0 %v6359
      %v6361 = vpop.f32.mrf.mxu0
      %v6362 = vadd.f32 %v6162, %v6361
      %v6363 = vand.u32 %v5541, 4294901760
      %v6364 = vsub.f32 %v5541, %v6363
      %v6365 = vand.u32 %v6364, 4294901760
      %6366 = vmatmul.f32.gmra.mxu0 %v6365
      %v6367 = vpop.f32.mrf.mxu0
      %v6368 = vadd.f32 %v6167, %v6367
      %v6369 = vand.u32 %v5542, 4294901760
      %v6370 = vsub.f32 %v5542, %v6369
      %v6371 = vand.u32 %v6370, 4294901760
      %6372 = vmatmul.f32.gmra.mxu0 %v6371
      %v6373 = vpop.f32.mrf.mxu0
      %v6374 = vadd.f32 %v6172, %v6373
      %v6375 = vand.u32 %v5543, 4294901760
      %v6376 = vsub.f32 %v5543, %v6375
      %v6377 = vand.u32 %v6376, 4294901760
      %6378 = vmatmul.f32.gmra.mxu0 %v6377
      %v6379 = vpop.f32.mrf.mxu0
      %v6380 = vadd.f32 %v6177, %v6379
      %v6381 = vand.u32 %v5544, 4294901760
      %v6382 = vsub.f32 %v5544, %v6381
      %v6383 = vand.u32 %v6382, 4294901760
      %6384 = vmatmul.f32.gmra.mxu0 %v6383
      %v6385 = vpop.f32.mrf.mxu0
      %v6386 = vadd.f32 %v6182, %v6385
      %v6387 = vand.u32 %v5545, 4294901760
      %v6388 = vsub.f32 %v5545, %v6387
      %v6389 = vand.u32 %v6388, 4294901760
      %6390 = vmatmul.f32.gmra.mxu0 %v6389
      %v6391 = vpop.f32.mrf.mxu0
      %v6392 = vadd.f32 %v6187, %v6391
      %v6393 = vand.u32 %v5546, 4294901760
      %v6394 = vsub.f32 %v5546, %v6393
      %v6395 = vand.u32 %v6394, 4294901760
      %6396 = vmatmul.f32.gmra.mxu0 %v6395
      %v6397 = vpop.f32.mrf.mxu0
      %v6398 = vadd.f32 %v6192, %v6397
      %v6399 = vand.u32 %v5547, 4294901760
      %v6400 = vsub.f32 %v5547, %v6399
      %v6401 = vand.u32 %v6400, 4294901760
      %6402 = vmatmul.f32.gmra.mxu0 %v6401
      %v6403 = vpop.f32.mrf.mxu0
      %v6404 = vadd.f32 %v6197, %v6403
      %v6405 = vand.u32 %v5548, 4294901760
      %v6406 = vsub.f32 %v5548, %v6405
      %v6407 = vand.u32 %v6406, 4294901760
      %6408 = vmatmul.f32.gmra.mxu0 %v6407
      %v6409 = vpop.f32.mrf.mxu0
      %v6410 = vadd.f32 %v6202, %v6409
      %v6411 = vand.u32 %v5549, 4294901760
      %v6412 = vsub.f32 %v5549, %v6411
      %v6413 = vand.u32 %v6412, 4294901760
      %6414 = vmatmul.f32.gmra.mxu0 %v6413
      %v6415 = vpop.f32.mrf.mxu0
      %v6416 = vadd.f32 %v6207, %v6415
      %v6417 = vand.u32 %v5550, 4294901760
      %v6418 = vsub.f32 %v5550, %v6417
      %v6419 = vand.u32 %v6418, 4294901760
      %6420 = vmatmul.f32.gmra.mxu0 %v6419
      %v6421 = vpop.f32.mrf.mxu0
      %v6422 = vadd.f32 %v6212, %v6421
      %v6423 = vand.u32 %v5551, 4294901760
      %v6424 = vsub.f32 %v5551, %v6423
      %v6425 = vand.u32 %v6424, 4294901760
      %6426 = vmatmul.f32.gmra.mxu0 %v6425
      %v6427 = vpop.f32.mrf.mxu0
      %v6428 = vadd.f32 %v6217, %v6427
      %v6429 = vand.u32 %v5552, 4294901760
      %v6430 = vsub.f32 %v5552, %v6429
      %v6431 = vand.u32 %v6430, 4294901760
      %6432 = vmatmul.f32.gmra.mxu0 %v6431
      %v6433 = vpop.f32.mrf.mxu0
      %v6434 = vadd.f32 %v6222, %v6433
      %v6435 = vand.u32 %v5553, 4294901760
      %v6436 = vsub.f32 %v5553, %v6435
      %v6437 = vand.u32 %v6436, 4294901760
      %6438 = vmatmul.f32.gmra.mxu0 %v6437
      %v6439 = vpop.f32.mrf.mxu0
      %v6440 = vadd.f32 %v6227, %v6439
      %v6441 = vand.u32 %v5554, 4294901760
      %v6442 = vsub.f32 %v5554, %v6441
      %v6443 = vand.u32 %v6442, 4294901760
      %6444 = vmatmul.f32.gmra.mxu0 %v6443
      %v6445 = vpop.f32.mrf.mxu0
      %v6446 = vadd.f32 %v6232, %v6445
      %v6447 = vand.u32 %v5555, 4294901760
      %v6448 = vsub.f32 %v5555, %v6447
      %v6449 = vand.u32 %v6448, 4294901760
      %6450 = vmatmul.f32.gmra.mxu0 %v6449
      %v6451 = vpop.f32.mrf.mxu0
      %v6452 = vadd.f32 %v6237, %v6451
      %v6453 = vand.u32 %v5556, 4294901760
      %v6454 = vsub.f32 %v5556, %v6453
      %v6455 = vand.u32 %v6454, 4294901760
      %6456 = vmatmul.f32.gmra.mxu0 %v6455
      %v6457 = vpop.f32.mrf.mxu0
      %v6458 = vadd.f32 %v6242, %v6457
      %v6459 = vand.u32 %v5557, 4294901760
      %v6460 = vsub.f32 %v5557, %v6459
      %v6461 = vand.u32 %v6460, 4294901760
      %6462 = vmatmul.f32.gmra.mxu0 %v6461
      %v6463 = vpop.f32.mrf.mxu0
      %v6464 = vadd.f32 %v6247, %v6463
      %v6465 = vand.u32 %v5558, 4294901760
      %v6466 = vsub.f32 %v5558, %v6465
      %v6467 = vand.u32 %v6466, 4294901760
      %6468 = vmatmul.f32.gmra.mxu0 %v6467
      %v6469 = vpop.f32.mrf.mxu0
      %v6470 = vadd.f32 %v6252, %v6469
      %v6471 = vand.u32 %v5559, 4294901760
      %v6472 = vsub.f32 %v5559, %v6471
      %v6473 = vand.u32 %v6472, 4294901760
      %6474 = vmatmul.f32.gmra.mxu0 %v6473
      %v6475 = vpop.f32.mrf.mxu0
      %v6476 = vadd.f32 %v6257, %v6475
      %v6477 = vand.u32 %v5560, 4294901760
      %v6478 = vsub.f32 %v5560, %v6477
      %v6479 = vand.u32 %v6478, 4294901760
      %6480 = vmatmul.f32.gmra.mxu0 %v6479
      %v6481 = vpop.f32.mrf.mxu0
      %v6482 = vadd.f32 %v6262, %v6481
      %v6483 = vand.u32 %v5561, 4294901760
      %v6484 = vsub.f32 %v5561, %v6483
      %v6485 = vand.u32 %v6484, 4294901760
      %6486 = vmatmul.f32.gmra.mxu0 %v6485
      %v6487 = vpop.f32.mrf.mxu0
      %v6488 = vadd.f32 %v6267, %v6487
      %v6489 = vand.u32 %v5562, 4294901760
      %v6490 = vsub.f32 %v5562, %v6489
      %v6491 = vand.u32 %v6490, 4294901760
      %6492 = vmatmul.f32.gmra.mxu0 %v6491
      %v6493 = vpop.f32.mrf.mxu0
      %v6494 = vadd.f32 %v6272, %v6493
      %v6495 = vand.u32 %v5563, 4294901760
      %v6496 = vsub.f32 %v5563, %v6495
      %v6497 = vand.u32 %v6496, 4294901760
      %6498 = vmatmul.f32.gmra.mxu0 %v6497
      %v6499 = vpop.f32.mrf.mxu0
      %v6500 = vadd.f32 %v6277, %v6499
      %v6501 = vand.u32 %v5564, 4294901760
      %v6502 = vsub.f32 %v5564, %v6501
      %v6503 = vand.u32 %v6502, 4294901760
      %6504 = vmatmul.f32.gmra.mxu0 %v6503
      %v6505 = vpop.f32.mrf.mxu0
      %v6506 = vadd.f32 %v6282, %v6505
      %v6507 = vand.u32 %v5565, 4294901760
      %v6508 = vsub.f32 %v5565, %v6507
      %v6509 = vand.u32 %v6508, 4294901760
      %6510 = vmatmul.f32.gmra.mxu0 %v6509
      %v6511 = vpop.f32.mrf.mxu0
      %v6512 = vadd.f32 %v6287, %v6511
      %6513 = vdwg.mxu0
      %v6514 = vand.u32 %v186, 4294901760
      %v6515 = vsub.f32 %v186, %v6514
      %v6516 = vand.u32 %v6515, 4294901760
      %6517 = vmatpush.msra.mxu0 %v6516
      %v6518 = vand.u32 %v185, 4294901760
      %v6519 = vsub.f32 %v185, %v6518
      %v6520 = vand.u32 %v6519, 4294901760
      %6521 = vmatpush.msra.mxu0 %v6520
      %v6522 = vand.u32 %v184, 4294901760
      %v6523 = vsub.f32 %v184, %v6522
      %v6524 = vand.u32 %v6523, 4294901760
      %6525 = vmatpush.msra.mxu0 %v6524
      %v6526 = vand.u32 %v183, 4294901760
      %v6527 = vsub.f32 %v183, %v6526
      %v6528 = vand.u32 %v6527, 4294901760
      %6529 = vmatpush.msra.mxu0 %v6528
      %v6530 = vand.u32 %v182, 4294901760
      %v6531 = vsub.f32 %v182, %v6530
      %v6532 = vand.u32 %v6531, 4294901760
      %6533 = vmatpush.msra.mxu0 %v6532
      %v6534 = vand.u32 %v181, 4294901760
      %v6535 = vsub.f32 %v181, %v6534
      %v6536 = vand.u32 %v6535, 4294901760
      %6537 = vmatpush.msra.mxu0 %v6536
      %v6538 = vand.u32 %v180, 4294901760
      %v6539 = vsub.f32 %v180, %v6538
      %v6540 = vand.u32 %v6539, 4294901760
      %6541 = vmatpush.msra.mxu0 %v6540
      %v6542 = vand.u32 %v179, 4294901760
      %v6543 = vsub.f32 %v179, %v6542
      %v6544 = vand.u32 %v6543, 4294901760
      %6545 = vmatpush.msra.mxu0 %v6544
      %v6546 = vand.u32 %v178, 4294901760
      %v6547 = vsub.f32 %v178, %v6546
      %v6548 = vand.u32 %v6547, 4294901760
      %6549 = vmatpush.msra.mxu0 %v6548
      %v6550 = vand.u32 %v177, 4294901760
      %v6551 = vsub.f32 %v177, %v6550
      %v6552 = vand.u32 %v6551, 4294901760
      %6553 = vmatpush.msra.mxu0 %v6552
      %v6554 = vand.u32 %v176, 4294901760
      %v6555 = vsub.f32 %v176, %v6554
      %v6556 = vand.u32 %v6555, 4294901760
      %6557 = vmatpush.msra.mxu0 %v6556
      %v6558 = vand.u32 %v175, 4294901760
      %v6559 = vsub.f32 %v175, %v6558
      %v6560 = vand.u32 %v6559, 4294901760
      %6561 = vmatpush.msra.mxu0 %v6560
      %v6562 = vand.u32 %v174, 4294901760
      %v6563 = vsub.f32 %v174, %v6562
      %v6564 = vand.u32 %v6563, 4294901760
      %6565 = vmatpush.msra.mxu0 %v6564
      %v6566 = vand.u32 %v173, 4294901760
      %v6567 = vsub.f32 %v173, %v6566
      %v6568 = vand.u32 %v6567, 4294901760
      %6569 = vmatpush.msra.mxu0 %v6568
      %v6570 = vand.u32 %v172, 4294901760
      %v6571 = vsub.f32 %v172, %v6570
      %v6572 = vand.u32 %v6571, 4294901760
      %6573 = vmatpush.msra.mxu0 %v6572
      %v6574 = vand.u32 %v171, 4294901760
      %v6575 = vsub.f32 %v171, %v6574
      %v6576 = vand.u32 %v6575, 4294901760
      %6577 = vmatpush.msra.mxu0 %v6576
      %v6578 = vand.u32 %v5534, 4294901760
      %6579 = vmatmul.f32.gmra.mxu0 %v6578
      %v6580 = vpop.f32.mrf.mxu0
      %v6581 = vadd.f32 %v6326, %v6580
      %v6582 = vand.u32 %v5535, 4294901760
      %6583 = vmatmul.f32.gmra.mxu0 %v6582
      %v6584 = vpop.f32.mrf.mxu0
      %v6585 = vadd.f32 %v6332, %v6584
      %v6586 = vand.u32 %v5536, 4294901760
      %6587 = vmatmul.f32.gmra.mxu0 %v6586
      %v6588 = vpop.f32.mrf.mxu0
      %v6589 = vadd.f32 %v6338, %v6588
      %v6590 = vand.u32 %v5537, 4294901760
      %6591 = vmatmul.f32.gmra.mxu0 %v6590
      %v6592 = vpop.f32.mrf.mxu0
      %v6593 = vadd.f32 %v6344, %v6592
      %v6594 = vand.u32 %v5538, 4294901760
      %6595 = vmatmul.f32.gmra.mxu0 %v6594
      %v6596 = vpop.f32.mrf.mxu0
      %v6597 = vadd.f32 %v6350, %v6596
      %v6598 = vand.u32 %v5539, 4294901760
      %6599 = vmatmul.f32.gmra.mxu0 %v6598
      %v6600 = vpop.f32.mrf.mxu0
      %v6601 = vadd.f32 %v6356, %v6600
      %v6602 = vand.u32 %v5540, 4294901760
      %6603 = vmatmul.f32.gmra.mxu0 %v6602
      %v6604 = vpop.f32.mrf.mxu0
      %v6605 = vadd.f32 %v6362, %v6604
      %v6606 = vand.u32 %v5541, 4294901760
      %6607 = vmatmul.f32.gmra.mxu0 %v6606
      %v6608 = vpop.f32.mrf.mxu0
      %v6609 = vadd.f32 %v6368, %v6608
      %v6610 = vand.u32 %v5542, 4294901760
      %6611 = vmatmul.f32.gmra.mxu0 %v6610
      %v6612 = vpop.f32.mrf.mxu0
      %v6613 = vadd.f32 %v6374, %v6612
      %v6614 = vand.u32 %v5543, 4294901760
      %6615 = vmatmul.f32.gmra.mxu0 %v6614
      %v6616 = vpop.f32.mrf.mxu0
      %v6617 = vadd.f32 %v6380, %v6616
      %v6618 = vand.u32 %v5544, 4294901760
      %6619 = vmatmul.f32.gmra.mxu0 %v6618
      %v6620 = vpop.f32.mrf.mxu0
      %v6621 = vadd.f32 %v6386, %v6620
      %v6622 = vand.u32 %v5545, 4294901760
      %6623 = vmatmul.f32.gmra.mxu0 %v6622
      %v6624 = vpop.f32.mrf.mxu0
      %v6625 = vadd.f32 %v6392, %v6624
      %v6626 = vand.u32 %v5546, 4294901760
      %6627 = vmatmul.f32.gmra.mxu0 %v6626
      %v6628 = vpop.f32.mrf.mxu0
      %v6629 = vadd.f32 %v6398, %v6628
      %v6630 = vand.u32 %v5547, 4294901760
      %6631 = vmatmul.f32.gmra.mxu0 %v6630
      %v6632 = vpop.f32.mrf.mxu0
      %v6633 = vadd.f32 %v6404, %v6632
      %v6634 = vand.u32 %v5548, 4294901760
      %6635 = vmatmul.f32.gmra.mxu0 %v6634
      %v6636 = vpop.f32.mrf.mxu0
      %v6637 = vadd.f32 %v6410, %v6636
      %v6638 = vand.u32 %v5549, 4294901760
      %6639 = vmatmul.f32.gmra.mxu0 %v6638
      %v6640 = vpop.f32.mrf.mxu0
      %v6641 = vadd.f32 %v6416, %v6640
      %v6642 = vand.u32 %v5550, 4294901760
      %6643 = vmatmul.f32.gmra.mxu0 %v6642
      %v6644 = vpop.f32.mrf.mxu0
      %v6645 = vadd.f32 %v6422, %v6644
      %v6646 = vand.u32 %v5551, 4294901760
      %6647 = vmatmul.f32.gmra.mxu0 %v6646
      %v6648 = vpop.f32.mrf.mxu0
      %v6649 = vadd.f32 %v6428, %v6648
      %v6650 = vand.u32 %v5552, 4294901760
      %6651 = vmatmul.f32.gmra.mxu0 %v6650
      %v6652 = vpop.f32.mrf.mxu0
      %v6653 = vadd.f32 %v6434, %v6652
      %v6654 = vand.u32 %v5553, 4294901760
      %6655 = vmatmul.f32.gmra.mxu0 %v6654
      %v6656 = vpop.f32.mrf.mxu0
      %v6657 = vadd.f32 %v6440, %v6656
      %v6658 = vand.u32 %v5554, 4294901760
      %6659 = vmatmul.f32.gmra.mxu0 %v6658
      %v6660 = vpop.f32.mrf.mxu0
      %v6661 = vadd.f32 %v6446, %v6660
      %v6662 = vand.u32 %v5555, 4294901760
      %6663 = vmatmul.f32.gmra.mxu0 %v6662
      %v6664 = vpop.f32.mrf.mxu0
      %v6665 = vadd.f32 %v6452, %v6664
      %v6666 = vand.u32 %v5556, 4294901760
      %6667 = vmatmul.f32.gmra.mxu0 %v6666
      %v6668 = vpop.f32.mrf.mxu0
      %v6669 = vadd.f32 %v6458, %v6668
      %v6670 = vand.u32 %v5557, 4294901760
      %6671 = vmatmul.f32.gmra.mxu0 %v6670
      %v6672 = vpop.f32.mrf.mxu0
      %v6673 = vadd.f32 %v6464, %v6672
      %v6674 = vand.u32 %v5558, 4294901760
      %6675 = vmatmul.f32.gmra.mxu0 %v6674
      %v6676 = vpop.f32.mrf.mxu0
      %v6677 = vadd.f32 %v6470, %v6676
      %v6678 = vand.u32 %v5559, 4294901760
      %6679 = vmatmul.f32.gmra.mxu0 %v6678
      %v6680 = vpop.f32.mrf.mxu0
      %v6681 = vadd.f32 %v6476, %v6680
      %v6682 = vand.u32 %v5560, 4294901760
      %6683 = vmatmul.f32.gmra.mxu0 %v6682
      %v6684 = vpop.f32.mrf.mxu0
      %v6685 = vadd.f32 %v6482, %v6684
      %v6686 = vand.u32 %v5561, 4294901760
      %6687 = vmatmul.f32.gmra.mxu0 %v6686
      %v6688 = vpop.f32.mrf.mxu0
      %v6689 = vadd.f32 %v6488, %v6688
      %v6690 = vand.u32 %v5562, 4294901760
      %6691 = vmatmul.f32.gmra.mxu0 %v6690
      %v6692 = vpop.f32.mrf.mxu0
      %v6693 = vadd.f32 %v6494, %v6692
      %v6694 = vand.u32 %v5563, 4294901760
      %6695 = vmatmul.f32.gmra.mxu0 %v6694
      %v6696 = vpop.f32.mrf.mxu0
      %v6697 = vadd.f32 %v6500, %v6696
      %v6698 = vand.u32 %v5564, 4294901760
      %6699 = vmatmul.f32.gmra.mxu0 %v6698
      %v6700 = vpop.f32.mrf.mxu0
      %v6701 = vadd.f32 %v6506, %v6700
      %v6702 = vand.u32 %v5565, 4294901760
      %6703 = vmatmul.f32.gmra.mxu0 %v6702
      %v6704 = vpop.f32.mrf.mxu0
      %v6705 = vadd.f32 %v6512, %v6704
      %6706 = vdwg.mxu0
      %v6707 = vand.u32 %v186, 4294901760
      %6708 = vmatpush.msra.mxu0 %v6707
      %v6709 = vand.u32 %v185, 4294901760
      %6710 = vmatpush.msra.mxu0 %v6709
      %v6711 = vand.u32 %v184, 4294901760
      %6712 = vmatpush.msra.mxu0 %v6711
      %v6713 = vand.u32 %v183, 4294901760
      %6714 = vmatpush.msra.mxu0 %v6713
      %v6715 = vand.u32 %v182, 4294901760
      %6716 = vmatpush.msra.mxu0 %v6715
      %v6717 = vand.u32 %v181, 4294901760
      %6718 = vmatpush.msra.mxu0 %v6717
      %v6719 = vand.u32 %v180, 4294901760
      %6720 = vmatpush.msra.mxu0 %v6719
      %v6721 = vand.u32 %v179, 4294901760
      %6722 = vmatpush.msra.mxu0 %v6721
      %v6723 = vand.u32 %v178, 4294901760
      %6724 = vmatpush.msra.mxu0 %v6723
      %v6725 = vand.u32 %v177, 4294901760
      %6726 = vmatpush.msra.mxu0 %v6725
      %v6727 = vand.u32 %v176, 4294901760
      %6728 = vmatpush.msra.mxu0 %v6727
      %v6729 = vand.u32 %v175, 4294901760
      %6730 = vmatpush.msra.mxu0 %v6729
      %v6731 = vand.u32 %v174, 4294901760
      %6732 = vmatpush.msra.mxu0 %v6731
      %v6733 = vand.u32 %v173, 4294901760
      %6734 = vmatpush.msra.mxu0 %v6733
      %v6735 = vand.u32 %v172, 4294901760
      %6736 = vmatpush.msra.mxu0 %v6735
      %v6737 = vand.u32 %v171, 4294901760
      %6738 = vmatpush.msra.mxu0 %v6737
      %v6739 = vand.u32 %v5534, 4294901760
      %6740 = vmatmul.f32.gmra.mxu0 %v6739
      %v6741 = vpop.f32.mrf.mxu0
      %v6742 = vadd.f32 %v6581, %v6741
      %v6743 = vand.u32 %v5535, 4294901760
      %6744 = vmatmul.f32.gmra.mxu0 %v6743
      %v6745 = vpop.f32.mrf.mxu0
      %v6746 = vadd.f32 %v6585, %v6745
      %v6747 = vand.u32 %v5536, 4294901760
      %6748 = vmatmul.f32.gmra.mxu0 %v6747
      %v6749 = vpop.f32.mrf.mxu0
      %v6750 = vadd.f32 %v6589, %v6749
      %v6751 = vand.u32 %v5537, 4294901760
      %6752 = vmatmul.f32.gmra.mxu0 %v6751
      %v6753 = vpop.f32.mrf.mxu0
      %v6754 = vadd.f32 %v6593, %v6753
      %v6755 = vand.u32 %v5538, 4294901760
      %6756 = vmatmul.f32.gmra.mxu0 %v6755
      %v6757 = vpop.f32.mrf.mxu0
      %v6758 = vadd.f32 %v6597, %v6757
      %v6759 = vand.u32 %v5539, 4294901760
      %6760 = vmatmul.f32.gmra.mxu0 %v6759
      %v6761 = vpop.f32.mrf.mxu0
      %v6762 = vadd.f32 %v6601, %v6761
      %v6763 = vand.u32 %v5540, 4294901760
      %6764 = vmatmul.f32.gmra.mxu0 %v6763
      %v6765 = vpop.f32.mrf.mxu0
      %v6766 = vadd.f32 %v6605, %v6765
      %v6767 = vand.u32 %v5541, 4294901760
      %6768 = vmatmul.f32.gmra.mxu0 %v6767
      %v6769 = vpop.f32.mrf.mxu0
      %v6770 = vadd.f32 %v6609, %v6769
      %v6771 = vand.u32 %v5542, 4294901760
      %6772 = vmatmul.f32.gmra.mxu0 %v6771
      %v6773 = vpop.f32.mrf.mxu0
      %v6774 = vadd.f32 %v6613, %v6773
      %v6775 = vand.u32 %v5543, 4294901760
      %6776 = vmatmul.f32.gmra.mxu0 %v6775
      %v6777 = vpop.f32.mrf.mxu0
      %v6778 = vadd.f32 %v6617, %v6777
      %v6779 = vand.u32 %v5544, 4294901760
      %6780 = vmatmul.f32.gmra.mxu0 %v6779
      %v6781 = vpop.f32.mrf.mxu0
      %v6782 = vadd.f32 %v6621, %v6781
      %v6783 = vand.u32 %v5545, 4294901760
      %6784 = vmatmul.f32.gmra.mxu0 %v6783
      %v6785 = vpop.f32.mrf.mxu0
      %v6786 = vadd.f32 %v6625, %v6785
      %v6787 = vand.u32 %v5546, 4294901760
      %6788 = vmatmul.f32.gmra.mxu0 %v6787
      %v6789 = vpop.f32.mrf.mxu0
      %v6790 = vadd.f32 %v6629, %v6789
      %v6791 = vand.u32 %v5547, 4294901760
      %6792 = vmatmul.f32.gmra.mxu0 %v6791
      %v6793 = vpop.f32.mrf.mxu0
      %v6794 = vadd.f32 %v6633, %v6793
      %v6795 = vand.u32 %v5548, 4294901760
      %6796 = vmatmul.f32.gmra.mxu0 %v6795
      %v6797 = vpop.f32.mrf.mxu0
      %v6798 = vadd.f32 %v6637, %v6797
      %v6799 = vand.u32 %v5549, 4294901760
      %6800 = vmatmul.f32.gmra.mxu0 %v6799
      %v6801 = vpop.f32.mrf.mxu0
      %v6802 = vadd.f32 %v6641, %v6801
      %v6803 = vand.u32 %v5550, 4294901760
      %6804 = vmatmul.f32.gmra.mxu0 %v6803
      %v6805 = vpop.f32.mrf.mxu0
      %v6806 = vadd.f32 %v6645, %v6805
      %v6807 = vand.u32 %v5551, 4294901760
      %6808 = vmatmul.f32.gmra.mxu0 %v6807
      %v6809 = vpop.f32.mrf.mxu0
      %v6810 = vadd.f32 %v6649, %v6809
      %v6811 = vand.u32 %v5552, 4294901760
      %6812 = vmatmul.f32.gmra.mxu0 %v6811
      %v6813 = vpop.f32.mrf.mxu0
      %v6814 = vadd.f32 %v6653, %v6813
      %v6815 = vand.u32 %v5553, 4294901760
      %6816 = vmatmul.f32.gmra.mxu0 %v6815
      %v6817 = vpop.f32.mrf.mxu0
      %v6818 = vadd.f32 %v6657, %v6817
      %v6819 = vand.u32 %v5554, 4294901760
      %6820 = vmatmul.f32.gmra.mxu0 %v6819
      %v6821 = vpop.f32.mrf.mxu0
      %v6822 = vadd.f32 %v6661, %v6821
      %v6823 = vand.u32 %v5555, 4294901760
      %6824 = vmatmul.f32.gmra.mxu0 %v6823
      %v6825 = vpop.f32.mrf.mxu0
      %v6826 = vadd.f32 %v6665, %v6825
      %v6827 = vand.u32 %v5556, 4294901760
      %6828 = vmatmul.f32.gmra.mxu0 %v6827
      %v6829 = vpop.f32.mrf.mxu0
      %v6830 = vadd.f32 %v6669, %v6829
      %v6831 = vand.u32 %v5557, 4294901760
      %6832 = vmatmul.f32.gmra.mxu0 %v6831
      %v6833 = vpop.f32.mrf.mxu0
      %v6834 = vadd.f32 %v6673, %v6833
      %v6835 = vand.u32 %v5558, 4294901760
      %6836 = vmatmul.f32.gmra.mxu0 %v6835
      %v6837 = vpop.f32.mrf.mxu0
      %v6838 = vadd.f32 %v6677, %v6837
      %v6839 = vand.u32 %v5559, 4294901760
      %6840 = vmatmul.f32.gmra.mxu0 %v6839
      %v6841 = vpop.f32.mrf.mxu0
      %v6842 = vadd.f32 %v6681, %v6841
      %v6843 = vand.u32 %v5560, 4294901760
      %6844 = vmatmul.f32.gmra.mxu0 %v6843
      %v6845 = vpop.f32.mrf.mxu0
      %v6846 = vadd.f32 %v6685, %v6845
      %v6847 = vand.u32 %v5561, 4294901760
      %6848 = vmatmul.f32.gmra.mxu0 %v6847
      %v6849 = vpop.f32.mrf.mxu0
      %v6850 = vadd.f32 %v6689, %v6849
      %v6851 = vand.u32 %v5562, 4294901760
      %6852 = vmatmul.f32.gmra.mxu0 %v6851
      %v6853 = vpop.f32.mrf.mxu0
      %v6854 = vadd.f32 %v6693, %v6853
      %v6855 = vand.u32 %v5563, 4294901760
      %6856 = vmatmul.f32.gmra.mxu0 %v6855
      %v6857 = vpop.f32.mrf.mxu0
      %v6858 = vadd.f32 %v6697, %v6857
      %v6859 = vand.u32 %v5564, 4294901760
      %6860 = vmatmul.f32.gmra.mxu0 %v6859
      %v6861 = vpop.f32.mrf.mxu0
      %v6862 = vadd.f32 %v6701, %v6861
      %v6863 = vand.u32 %v5565, 4294901760
      %6864 = vmatmul.f32.gmra.mxu0 %v6863
      %v6865 = vpop.f32.mrf.mxu0
      %v6866 = vadd.f32 %v6705, %v6865
      %6867 = vdwg.mxu0
      %v6868 = vmax.f32 %v6742, %v6758
      %v6869 = vmax.f32 %v6746, %v6762
      %v6870 = vmax.f32 %v6750, %v6766
      %v6871 = vmax.f32 %v6754, %v6770
      %v6872 = vmax.f32 %v6868, %v6774
      %v6873 = vmax.f32 %v6869, %v6778
      %v6874 = vmax.f32 %v6870, %v6782
      %v6875 = vmax.f32 %v6871, %v6786
      %v6876 = vmax.f32 %v6872, %v6790
      %v6877 = vmax.f32 %v6873, %v6794
      %v6878 = vmax.f32 %v6874, %v6798
      %v6879 = vmax.f32 %v6875, %v6802
      %v6880 = vmax.f32 %v6876, %v6806
      %v6881 = vmax.f32 %v6877, %v6810
      %v6882 = vmax.f32 %v6878, %v6814
      %v6883 = vmax.f32 %v6879, %v6818
      %v6884 = vmax.f32 %v6880, %v6822
      %v6885 = vmax.f32 %v6881, %v6826
      %v6886 = vmax.f32 %v6882, %v6830
      %v6887 = vmax.f32 %v6883, %v6834
      %v6888 = vmax.f32 %v6884, %v6838
      %v6889 = vmax.f32 %v6885, %v6842
      %v6890 = vmax.f32 %v6886, %v6846
      %v6891 = vmax.f32 %v6887, %v6850
      %v6892 = vmax.f32 %v6888, %v6854
      %v6893 = vmax.f32 %v6889, %v6858
      %v6894 = vmax.f32 %v6890, %v6862
      %v6895 = vmax.f32 %v6891, %v6866
      %v6896 = vmax.f32 %v6892, %v6893
      %v6897 = vmax.f32 %v6894, %v6895
      %v6898 = vmax.f32 %v6896, %v6897
      %v6899 = vsub.f32 %v6742, %v6898
      %v6900 = vsub.f32 %v6746, %v6898
      %v6901 = vsub.f32 %v6750, %v6898
      %v6902 = vsub.f32 %v6754, %v6898
      %v6903 = vsub.f32 %v6758, %v6898
      %v6904 = vsub.f32 %v6762, %v6898
      %v6905 = vsub.f32 %v6766, %v6898
      %v6906 = vsub.f32 %v6770, %v6898
      %v6907 = vsub.f32 %v6774, %v6898
      %v6908 = vsub.f32 %v6778, %v6898
      %v6909 = vsub.f32 %v6782, %v6898
      %v6910 = vsub.f32 %v6786, %v6898
      %v6911 = vsub.f32 %v6790, %v6898
      %v6912 = vsub.f32 %v6794, %v6898
      %v6913 = vsub.f32 %v6798, %v6898
      %v6914 = vsub.f32 %v6802, %v6898
      %v6915 = vsub.f32 %v6806, %v6898
      %v6916 = vsub.f32 %v6810, %v6898
      %v6917 = vsub.f32 %v6814, %v6898
      %v6918 = vsub.f32 %v6818, %v6898
      %v6919 = vsub.f32 %v6822, %v6898
      %v6920 = vsub.f32 %v6826, %v6898
      %v6921 = vsub.f32 %v6830, %v6898
      %v6922 = vsub.f32 %v6834, %v6898
      %v6923 = vsub.f32 %v6838, %v6898
      %v6924 = vsub.f32 %v6842, %v6898
      %v6925 = vsub.f32 %v6846, %v6898
      %v6926 = vsub.f32 %v6850, %v6898
      %v6927 = vsub.f32 %v6854, %v6898
      %v6928 = vsub.f32 %v6858, %v6898
      %v6929 = vsub.f32 %v6862, %v6898
      %v6930 = vsub.f32 %v6866, %v6898
      %v6931 = vmul.f32 %v6899, 1.442695
      %v6932 = vpow.pop %v6931
      %v6933 = vmul.f32 %v6900, 1.442695
      %v6934 = vpow.pop %v6933
      %v6935 = vmul.f32 %v6901, 1.442695
      %v6936 = vpow.pop %v6935
      %v6937 = vmul.f32 %v6902, 1.442695
      %v6938 = vpow.pop %v6937
      %v6939 = vmul.f32 %v6903, 1.442695
      %v6940 = vpow.pop %v6939
      %v6941 = vmul.f32 %v6904, 1.442695
      %v6942 = vpow.pop %v6941
      %v6943 = vmul.f32 %v6905, 1.442695
      %v6944 = vpow.pop %v6943
      %v6945 = vmul.f32 %v6906, 1.442695
      %v6946 = vpow.pop %v6945
      %v6947 = vmul.f32 %v6907, 1.442695
      %v6948 = vpow.pop %v6947
      %v6949 = vmul.f32 %v6908, 1.442695
      %v6950 = vpow.pop %v6949
      %v6951 = vmul.f32 %v6909, 1.442695
      %v6952 = vpow.pop %v6951
      %v6953 = vmul.f32 %v6910, 1.442695
      %v6954 = vpow.pop %v6953
      %v6955 = vmul.f32 %v6911, 1.442695
      %v6956 = vpow.pop %v6955
      %v6957 = vmul.f32 %v6912, 1.442695
      %v6958 = vpow.pop %v6957
      %v6959 = vmul.f32 %v6913, 1.442695
      %v6960 = vpow.pop %v6959
      %v6961 = vmul.f32 %v6914, 1.442695
      %v6962 = vpow.pop %v6961
      %v6963 = vmul.f32 %v6915, 1.442695
      %v6964 = vpow.pop %v6963
      %v6965 = vmul.f32 %v6916, 1.442695
      %v6966 = vpow.pop %v6965
      %v6967 = vmul.f32 %v6917, 1.442695
      %v6968 = vpow.pop %v6967
      %v6969 = vmul.f32 %v6918, 1.442695
      %v6970 = vpow.pop %v6969
      %v6971 = vmul.f32 %v6919, 1.442695
      %v6972 = vpow.pop %v6971
      %v6973 = vmul.f32 %v6920, 1.442695
      %v6974 = vpow.pop %v6973
      %v6975 = vmul.f32 %v6921, 1.442695
      %v6976 = vpow.pop %v6975
      %v6977 = vmul.f32 %v6922, 1.442695
      %v6978 = vpow.pop %v6977
      %v6979 = vmul.f32 %v6923, 1.442695
      %v6980 = vpow.pop %v6979
      %v6981 = vmul.f32 %v6924, 1.442695
      %v6982 = vpow.pop %v6981
      %v6983 = vmul.f32 %v6925, 1.442695
      %v6984 = vpow.pop %v6983
      %v6985 = vmul.f32 %v6926, 1.442695
      %v6986 = vpow.pop %v6985
      %v6987 = vmul.f32 %v6927, 1.442695
      %v6988 = vpow.pop %v6987
      %v6989 = vmul.f32 %v6928, 1.442695
      %v6990 = vpow.pop %v6989
      %v6991 = vmul.f32 %v6929, 1.442695
      %v6992 = vpow.pop %v6991
      %v6993 = vmul.f32 %v6930, 1.442695
      %v6994 = vpow.pop %v6993
      %v6995 = vadd.f32 %v6932, %v6934
      %v6996 = vadd.f32 %v6995, %v6936
      %v6997 = vadd.f32 %v6996, %v6938
      %v6998 = vadd.f32 %v6997, %v6940
      %v6999 = vadd.f32 %v6998, %v6942
      %v7000 = vadd.f32 %v6999, %v6944
      %v7001 = vadd.f32 %v7000, %v6946
      %v7002 = vadd.f32 %v7001, %v6948
      %v7003 = vadd.f32 %v7002, %v6950
      %v7004 = vadd.f32 %v7003, %v6952
      %v7005 = vadd.f32 %v7004, %v6954
      %v7006 = vadd.f32 %v7005, %v6956
      %v7007 = vadd.f32 %v7006, %v6958
      %v7008 = vadd.f32 %v7007, %v6960
      %v7009 = vadd.f32 %v7008, %v6962
      %v7010 = vadd.f32 %v7009, %v6964
      %v7011 = vadd.f32 %v7010, %v6966
      %v7012 = vadd.f32 %v7011, %v6968
      %v7013 = vadd.f32 %v7012, %v6970
      %v7014 = vadd.f32 %v7013, %v6972
      %v7015 = vadd.f32 %v7014, %v6974
      %v7016 = vadd.f32 %v7015, %v6976
      %v7017 = vadd.f32 %v7016, %v6978
      %v7018 = vadd.f32 %v7017, %v6980
      %v7019 = vadd.f32 %v7018, %v6982
      %v7020 = vadd.f32 %v7019, %v6984
      %v7021 = vadd.f32 %v7020, %v6986
      %v7022 = vadd.f32 %v7021, %v6988
      %v7023 = vadd.f32 %v7022, %v6990
      %v7024 = vadd.f32 %v7023, %v6992
      %v7025 = vadd.f32 %v7024, %v6994
      %v7026 = vmul.f32 %v6932, %v5112
      %v7027 = vmul.f32 %v6934, %v5113
      %v7028 = vmul.f32 %v6936, %v5114
      %v7029 = vmul.f32 %v6938, %v5115
      %v7030 = vmul.f32 %v6940, %v5116
      %v7031 = vmul.f32 %v6942, %v5117
      %v7032 = vmul.f32 %v6944, %v5118
      %v7033 = vmul.f32 %v6946, %v5119
      %v7034 = vmul.f32 %v6948, %v5120
      %v7035 = vmul.f32 %v6950, %v5121
      %v7036 = vmul.f32 %v6952, %v5122
      %v7037 = vmul.f32 %v6954, %v5123
      %v7038 = vmul.f32 %v6956, %v5124
      %v7039 = vmul.f32 %v6958, %v5125
      %v7040 = vmul.f32 %v6960, %v5126
      %v7041 = vmul.f32 %v6962, %v5127
      %v7042 = vmul.f32 %v6964, %v5128
      %v7043 = vmul.f32 %v6966, %v5129
      %v7044 = vmul.f32 %v6968, %v5130
      %v7045 = vmul.f32 %v6970, %v5131
      %v7046 = vmul.f32 %v6972, %v5132
      %v7047 = vmul.f32 %v6974, %v5133
      %v7048 = vmul.f32 %v6976, %v5134
      %v7049 = vmul.f32 %v6978, %v5135
      %v7050 = vmul.f32 %v6980, %v5136
      %v7051 = vmul.f32 %v6982, %v5137
      %v7052 = vmul.f32 %v6984, %v5138
      %v7053 = vmul.f32 %v6986, %v5139
      %v7054 = vmul.f32 %v6988, %v5140
      %v7055 = vmul.f32 %v6990, %v5141
      %v7056 = vmul.f32 %v6992, %v5142
      %v7057 = vmul.f32 %v6994, %v5143
      %v7058 = vadd.f32 %v7026, %v7027
      %v7059 = vadd.f32 %v7058, %v7028
      %v7060 = vadd.f32 %v7059, %v7029
      %v7061 = vadd.f32 %v7060, %v7030
      %v7062 = vadd.f32 %v7061, %v7031
      %v7063 = vadd.f32 %v7062, %v7032
      %v7064 = vadd.f32 %v7063, %v7033
      %v7065 = vadd.f32 %v7064, %v7034
      %v7066 = vadd.f32 %v7065, %v7035
      %v7067 = vadd.f32 %v7066, %v7036
      %v7068 = vadd.f32 %v7067, %v7037
      %v7069 = vadd.f32 %v7068, %v7038
      %v7070 = vadd.f32 %v7069, %v7039
      %v7071 = vadd.f32 %v7070, %v7040
      %v7072 = vadd.f32 %v7071, %v7041
      %v7073 = vadd.f32 %v7072, %v7042
      %v7074 = vadd.f32 %v7073, %v7043
      %v7075 = vadd.f32 %v7074, %v7044
      %v7076 = vadd.f32 %v7075, %v7045
      %v7077 = vadd.f32 %v7076, %v7046
      %v7078 = vadd.f32 %v7077, %v7047
      %v7079 = vadd.f32 %v7078, %v7048
      %v7080 = vadd.f32 %v7079, %v7049
      %v7081 = vadd.f32 %v7080, %v7050
      %v7082 = vadd.f32 %v7081, %v7051
      %v7083 = vadd.f32 %v7082, %v7052
      %v7084 = vadd.f32 %v7083, %v7053
      %v7085 = vadd.f32 %v7084, %v7054
      %v7086 = vadd.f32 %v7085, %v7055
      %v7087 = vadd.f32 %v7086, %v7056
      %v7088 = vadd.f32 %v7087, %v7057
      %v7089 = vrcp.pop %v7025
      %v7090 = vmul.f32 %v7088, %v7089
      %v7091 = vmul.f32 %v7090, %v7090
      %v7092 = vand.u32 %v186, 4294901760
      %7093 = vmatpush.msra.mxu0 %v7092
      %v7094 = vand.u32 %v185, 4294901760
      %7095 = vmatpush.msra.mxu0 %v7094
      %v7096 = vand.u32 %v184, 4294901760
      %7097 = vmatpush.msra.mxu0 %v7096
      %v7098 = vand.u32 %v183, 4294901760
      %7099 = vmatpush.msra.mxu0 %v7098
      %v7100 = vand.u32 %v182, 4294901760
      %7101 = vmatpush.msra.mxu0 %v7100
      %v7102 = vand.u32 %v181, 4294901760
      %7103 = vmatpush.msra.mxu0 %v7102
      %v7104 = vand.u32 %v180, 4294901760
      %7105 = vmatpush.msra.mxu0 %v7104
      %v7106 = vand.u32 %v179, 4294901760
      %7107 = vmatpush.msra.mxu0 %v7106
      %v7108 = vand.u32 %v178, 4294901760
      %7109 = vmatpush.msra.mxu0 %v7108
      %v7110 = vand.u32 %v177, 4294901760
      %7111 = vmatpush.msra.mxu0 %v7110
      %v7112 = vand.u32 %v176, 4294901760
      %7113 = vmatpush.msra.mxu0 %v7112
      %v7114 = vand.u32 %v175, 4294901760
      %7115 = vmatpush.msra.mxu0 %v7114
      %v7116 = vand.u32 %v174, 4294901760
      %7117 = vmatpush.msra.mxu0 %v7116
      %v7118 = vand.u32 %v173, 4294901760
      %7119 = vmatpush.msra.mxu0 %v7118
      %v7120 = vand.u32 %v172, 4294901760
      %7121 = vmatpush.msra.mxu0 %v7120
      %v7122 = vand.u32 %v171, 4294901760
      %7123 = vmatpush.msra.mxu0 %v7122
      %v7124 = vand.u32 %v7091, 4294901760
      %v7125 = vsub.f32 %v7091, %v7124
      %v7126 = vand.u32 %v7125, 4294901760
      %v7127 = vsub.f32 %v7125, %v7126
      %v7128 = vand.u32 %v7127, 4294901760
      %7129 = vmatmul.f32.gmra.mxu0 %v7128
      %v7130 = vpop.f32.mrf.mxu0
      %v7131 = vadd.f32 0.0, %v7130
      %7132 = vdwg.mxu0
      %v7133 = vand.u32 %v186, 4294901760
      %v7134 = vsub.f32 %v186, %v7133
      %v7135 = vand.u32 %v7134, 4294901760
      %v7136 = vsub.f32 %v7134, %v7135
      %v7137 = vand.u32 %v7136, 4294901760
      %7138 = vmatpush.msra.mxu0 %v7137
      %v7139 = vand.u32 %v185, 4294901760
      %v7140 = vsub.f32 %v185, %v7139
      %v7141 = vand.u32 %v7140, 4294901760
      %v7142 = vsub.f32 %v7140, %v7141
      %v7143 = vand.u32 %v7142, 4294901760
      %7144 = vmatpush.msra.mxu0 %v7143
      %v7145 = vand.u32 %v184, 4294901760
      %v7146 = vsub.f32 %v184, %v7145
      %v7147 = vand.u32 %v7146, 4294901760
      %v7148 = vsub.f32 %v7146, %v7147
      %v7149 = vand.u32 %v7148, 4294901760
      %7150 = vmatpush.msra.mxu0 %v7149
      %v7151 = vand.u32 %v183, 4294901760
      %v7152 = vsub.f32 %v183, %v7151
      %v7153 = vand.u32 %v7152, 4294901760
      %v7154 = vsub.f32 %v7152, %v7153
      %v7155 = vand.u32 %v7154, 4294901760
      %7156 = vmatpush.msra.mxu0 %v7155
      %v7157 = vand.u32 %v182, 4294901760
      %v7158 = vsub.f32 %v182, %v7157
      %v7159 = vand.u32 %v7158, 4294901760
      %v7160 = vsub.f32 %v7158, %v7159
      %v7161 = vand.u32 %v7160, 4294901760
      %7162 = vmatpush.msra.mxu0 %v7161
      %v7163 = vand.u32 %v181, 4294901760
      %v7164 = vsub.f32 %v181, %v7163
      %v7165 = vand.u32 %v7164, 4294901760
      %v7166 = vsub.f32 %v7164, %v7165
      %v7167 = vand.u32 %v7166, 4294901760
      %7168 = vmatpush.msra.mxu0 %v7167
      %v7169 = vand.u32 %v180, 4294901760
      %v7170 = vsub.f32 %v180, %v7169
      %v7171 = vand.u32 %v7170, 4294901760
      %v7172 = vsub.f32 %v7170, %v7171
      %v7173 = vand.u32 %v7172, 4294901760
      %7174 = vmatpush.msra.mxu0 %v7173
      %v7175 = vand.u32 %v179, 4294901760
      %v7176 = vsub.f32 %v179, %v7175
      %v7177 = vand.u32 %v7176, 4294901760
      %v7178 = vsub.f32 %v7176, %v7177
      %v7179 = vand.u32 %v7178, 4294901760
      %7180 = vmatpush.msra.mxu0 %v7179
      %v7181 = vand.u32 %v178, 4294901760
      %v7182 = vsub.f32 %v178, %v7181
      %v7183 = vand.u32 %v7182, 4294901760
      %v7184 = vsub.f32 %v7182, %v7183
      %v7185 = vand.u32 %v7184, 4294901760
      %7186 = vmatpush.msra.mxu0 %v7185
      %v7187 = vand.u32 %v177, 4294901760
      %v7188 = vsub.f32 %v177, %v7187
      %v7189 = vand.u32 %v7188, 4294901760
      %v7190 = vsub.f32 %v7188, %v7189
      %v7191 = vand.u32 %v7190, 4294901760
      %7192 = vmatpush.msra.mxu0 %v7191
      %v7193 = vand.u32 %v176, 4294901760
      %v7194 = vsub.f32 %v176, %v7193
      %v7195 = vand.u32 %v7194, 4294901760
      %v7196 = vsub.f32 %v7194, %v7195
      %v7197 = vand.u32 %v7196, 4294901760
      %7198 = vmatpush.msra.mxu0 %v7197
      %v7199 = vand.u32 %v175, 4294901760
      %v7200 = vsub.f32 %v175, %v7199
      %v7201 = vand.u32 %v7200, 4294901760
      %v7202 = vsub.f32 %v7200, %v7201
      %v7203 = vand.u32 %v7202, 4294901760
      %7204 = vmatpush.msra.mxu0 %v7203
      %v7205 = vand.u32 %v174, 4294901760
      %v7206 = vsub.f32 %v174, %v7205
      %v7207 = vand.u32 %v7206, 4294901760
      %v7208 = vsub.f32 %v7206, %v7207
      %v7209 = vand.u32 %v7208, 4294901760
      %7210 = vmatpush.msra.mxu0 %v7209
      %v7211 = vand.u32 %v173, 4294901760
      %v7212 = vsub.f32 %v173, %v7211
      %v7213 = vand.u32 %v7212, 4294901760
      %v7214 = vsub.f32 %v7212, %v7213
      %v7215 = vand.u32 %v7214, 4294901760
      %7216 = vmatpush.msra.mxu0 %v7215
      %v7217 = vand.u32 %v172, 4294901760
      %v7218 = vsub.f32 %v172, %v7217
      %v7219 = vand.u32 %v7218, 4294901760
      %v7220 = vsub.f32 %v7218, %v7219
      %v7221 = vand.u32 %v7220, 4294901760
      %7222 = vmatpush.msra.mxu0 %v7221
      %v7223 = vand.u32 %v171, 4294901760
      %v7224 = vsub.f32 %v171, %v7223
      %v7225 = vand.u32 %v7224, 4294901760
      %v7226 = vsub.f32 %v7224, %v7225
      %v7227 = vand.u32 %v7226, 4294901760
      %7228 = vmatpush.msra.mxu0 %v7227
      %v7229 = vand.u32 %v7091, 4294901760
      %7230 = vmatmul.f32.gmra.mxu0 %v7229
      %v7231 = vpop.f32.mrf.mxu0
      %v7232 = vadd.f32 %v7131, %v7231
      %7233 = vdwg.mxu0
      %v7234 = vand.u32 %v186, 4294901760
      %v7235 = vsub.f32 %v186, %v7234
      %7236 = vmatpush.msra.mxu0 %v7235
      %v7237 = vand.u32 %v185, 4294901760
      %v7238 = vsub.f32 %v185, %v7237
      %7239 = vmatpush.msra.mxu0 %v7238
      %v7240 = vand.u32 %v184, 4294901760
      %v7241 = vsub.f32 %v184, %v7240
      %7242 = vmatpush.msra.mxu0 %v7241
      %v7243 = vand.u32 %v183, 4294901760
      %v7244 = vsub.f32 %v183, %v7243
      %7245 = vmatpush.msra.mxu0 %v7244
      %v7246 = vand.u32 %v182, 4294901760
      %v7247 = vsub.f32 %v182, %v7246
      %7248 = vmatpush.msra.mxu0 %v7247
      %v7249 = vand.u32 %v181, 4294901760
      %v7250 = vsub.f32 %v181, %v7249
      %7251 = vmatpush.msra.mxu0 %v7250
      %v7252 = vand.u32 %v180, 4294901760
      %v7253 = vsub.f32 %v180, %v7252
      %7254 = vmatpush.msra.mxu0 %v7253
      %v7255 = vand.u32 %v179, 4294901760
      %v7256 = vsub.f32 %v179, %v7255
      %7257 = vmatpush.msra.mxu0 %v7256
      %v7258 = vand.u32 %v178, 4294901760
      %v7259 = vsub.f32 %v178, %v7258
      %7260 = vmatpush.msra.mxu0 %v7259
      %v7261 = vand.u32 %v177, 4294901760
      %v7262 = vsub.f32 %v177, %v7261
      %7263 = vmatpush.msra.mxu0 %v7262
      %v7264 = vand.u32 %v176, 4294901760
      %v7265 = vsub.f32 %v176, %v7264
      %7266 = vmatpush.msra.mxu0 %v7265
      %v7267 = vand.u32 %v175, 4294901760
      %v7268 = vsub.f32 %v175, %v7267
      %7269 = vmatpush.msra.mxu0 %v7268
      %v7270 = vand.u32 %v174, 4294901760
      %v7271 = vsub.f32 %v174, %v7270
      %7272 = vmatpush.msra.mxu0 %v7271
      %v7273 = vand.u32 %v173, 4294901760
      %v7274 = vsub.f32 %v173, %v7273
      %7275 = vmatpush.msra.mxu0 %v7274
      %v7276 = vand.u32 %v172, 4294901760
      %v7277 = vsub.f32 %v172, %v7276
      %7278 = vmatpush.msra.mxu0 %v7277
      %v7279 = vand.u32 %v171, 4294901760
      %v7280 = vsub.f32 %v171, %v7279
      %7281 = vmatpush.msra.mxu0 %v7280
      %v7282 = vand.u32 %v7091, 4294901760
      %v7283 = vsub.f32 %v7091, %v7282
      %7284 = vmatmul.f32.gmra.mxu0 %v7283
      %v7285 = vpop.f32.mrf.mxu0
      %v7286 = vadd.f32 %v7232, %v7285
      %7287 = vdwg.mxu0
      %v7288 = vand.u32 %v186, 4294901760
      %7289 = vmatpush.msra.mxu0 %v7288
      %v7290 = vand.u32 %v185, 4294901760
      %7291 = vmatpush.msra.mxu0 %v7290
      %v7292 = vand.u32 %v184, 4294901760
      %7293 = vmatpush.msra.mxu0 %v7292
      %v7294 = vand.u32 %v183, 4294901760
      %7295 = vmatpush.msra.mxu0 %v7294
      %v7296 = vand.u32 %v182, 4294901760
      %7297 = vmatpush.msra.mxu0 %v7296
      %v7298 = vand.u32 %v181, 4294901760
      %7299 = vmatpush.msra.mxu0 %v7298
      %v7300 = vand.u32 %v180, 4294901760
      %7301 = vmatpush.msra.mxu0 %v7300
      %v7302 = vand.u32 %v179, 4294901760
      %7303 = vmatpush.msra.mxu0 %v7302
      %v7304 = vand.u32 %v178, 4294901760
      %7305 = vmatpush.msra.mxu0 %v7304
      %v7306 = vand.u32 %v177, 4294901760
      %7307 = vmatpush.msra.mxu0 %v7306
      %v7308 = vand.u32 %v176, 4294901760
      %7309 = vmatpush.msra.mxu0 %v7308
      %v7310 = vand.u32 %v175, 4294901760
      %7311 = vmatpush.msra.mxu0 %v7310
      %v7312 = vand.u32 %v174, 4294901760
      %7313 = vmatpush.msra.mxu0 %v7312
      %v7314 = vand.u32 %v173, 4294901760
      %7315 = vmatpush.msra.mxu0 %v7314
      %v7316 = vand.u32 %v172, 4294901760
      %7317 = vmatpush.msra.mxu0 %v7316
      %v7318 = vand.u32 %v171, 4294901760
      %7319 = vmatpush.msra.mxu0 %v7318
      %v7320 = vand.u32 %v7091, 4294901760
      %v7321 = vsub.f32 %v7091, %v7320
      %v7322 = vand.u32 %v7321, 4294901760
      %7323 = vmatmul.f32.gmra.mxu0 %v7322
      %v7324 = vpop.f32.mrf.mxu0
      %v7325 = vadd.f32 %v7286, %v7324
      %7326 = vdwg.mxu0
      %v7327 = vand.u32 %v186, 4294901760
      %v7328 = vsub.f32 %v186, %v7327
      %v7329 = vand.u32 %v7328, 4294901760
      %7330 = vmatpush.msra.mxu0 %v7329
      %v7331 = vand.u32 %v185, 4294901760
      %v7332 = vsub.f32 %v185, %v7331
      %v7333 = vand.u32 %v7332, 4294901760
      %7334 = vmatpush.msra.mxu0 %v7333
      %v7335 = vand.u32 %v184, 4294901760
      %v7336 = vsub.f32 %v184, %v7335
      %v7337 = vand.u32 %v7336, 4294901760
      %7338 = vmatpush.msra.mxu0 %v7337
      %v7339 = vand.u32 %v183, 4294901760
      %v7340 = vsub.f32 %v183, %v7339
      %v7341 = vand.u32 %v7340, 4294901760
      %7342 = vmatpush.msra.mxu0 %v7341
      %v7343 = vand.u32 %v182, 4294901760
      %v7344 = vsub.f32 %v182, %v7343
      %v7345 = vand.u32 %v7344, 4294901760
      %7346 = vmatpush.msra.mxu0 %v7345
      %v7347 = vand.u32 %v181, 4294901760
      %v7348 = vsub.f32 %v181, %v7347
      %v7349 = vand.u32 %v7348, 4294901760
      %7350 = vmatpush.msra.mxu0 %v7349
      %v7351 = vand.u32 %v180, 4294901760
      %v7352 = vsub.f32 %v180, %v7351
      %v7353 = vand.u32 %v7352, 4294901760
      %7354 = vmatpush.msra.mxu0 %v7353
      %v7355 = vand.u32 %v179, 4294901760
      %v7356 = vsub.f32 %v179, %v7355
      %v7357 = vand.u32 %v7356, 4294901760
      %7358 = vmatpush.msra.mxu0 %v7357
      %v7359 = vand.u32 %v178, 4294901760
      %v7360 = vsub.f32 %v178, %v7359
      %v7361 = vand.u32 %v7360, 4294901760
      %7362 = vmatpush.msra.mxu0 %v7361
      %v7363 = vand.u32 %v177, 4294901760
      %v7364 = vsub.f32 %v177, %v7363
      %v7365 = vand.u32 %v7364, 4294901760
      %7366 = vmatpush.msra.mxu0 %v7365
      %v7367 = vand.u32 %v176, 4294901760
      %v7368 = vsub.f32 %v176, %v7367
      %v7369 = vand.u32 %v7368, 4294901760
      %7370 = vmatpush.msra.mxu0 %v7369
      %v7371 = vand.u32 %v175, 4294901760
      %v7372 = vsub.f32 %v175, %v7371
      %v7373 = vand.u32 %v7372, 4294901760
      %7374 = vmatpush.msra.mxu0 %v7373
      %v7375 = vand.u32 %v174, 4294901760
      %v7376 = vsub.f32 %v174, %v7375
      %v7377 = vand.u32 %v7376, 4294901760
      %7378 = vmatpush.msra.mxu0 %v7377
      %v7379 = vand.u32 %v173, 4294901760
      %v7380 = vsub.f32 %v173, %v7379
      %v7381 = vand.u32 %v7380, 4294901760
      %7382 = vmatpush.msra.mxu0 %v7381
      %v7383 = vand.u32 %v172, 4294901760
      %v7384 = vsub.f32 %v172, %v7383
      %v7385 = vand.u32 %v7384, 4294901760
      %7386 = vmatpush.msra.mxu0 %v7385
      %v7387 = vand.u32 %v171, 4294901760
      %v7388 = vsub.f32 %v171, %v7387
      %v7389 = vand.u32 %v7388, 4294901760
      %7390 = vmatpush.msra.mxu0 %v7389
      %v7391 = vand.u32 %v7091, 4294901760
      %7392 = vmatmul.f32.gmra.mxu0 %v7391
      %v7393 = vpop.f32.mrf.mxu0
      %v7394 = vadd.f32 %v7325, %v7393
      %7395 = vdwg.mxu0
      %v7396 = vand.u32 %v186, 4294901760
      %7397 = vmatpush.msra.mxu0 %v7396
      %v7398 = vand.u32 %v185, 4294901760
      %7399 = vmatpush.msra.mxu0 %v7398
      %v7400 = vand.u32 %v184, 4294901760
      %7401 = vmatpush.msra.mxu0 %v7400
      %v7402 = vand.u32 %v183, 4294901760
      %7403 = vmatpush.msra.mxu0 %v7402
      %v7404 = vand.u32 %v182, 4294901760
      %7405 = vmatpush.msra.mxu0 %v7404
      %v7406 = vand.u32 %v181, 4294901760
      %7407 = vmatpush.msra.mxu0 %v7406
      %v7408 = vand.u32 %v180, 4294901760
      %7409 = vmatpush.msra.mxu0 %v7408
      %v7410 = vand.u32 %v179, 4294901760
      %7411 = vmatpush.msra.mxu0 %v7410
      %v7412 = vand.u32 %v178, 4294901760
      %7413 = vmatpush.msra.mxu0 %v7412
      %v7414 = vand.u32 %v177, 4294901760
      %7415 = vmatpush.msra.mxu0 %v7414
      %v7416 = vand.u32 %v176, 4294901760
      %7417 = vmatpush.msra.mxu0 %v7416
      %v7418 = vand.u32 %v175, 4294901760
      %7419 = vmatpush.msra.mxu0 %v7418
      %v7420 = vand.u32 %v174, 4294901760
      %7421 = vmatpush.msra.mxu0 %v7420
      %v7422 = vand.u32 %v173, 4294901760
      %7423 = vmatpush.msra.mxu0 %v7422
      %v7424 = vand.u32 %v172, 4294901760
      %7425 = vmatpush.msra.mxu0 %v7424
      %v7426 = vand.u32 %v171, 4294901760
      %7427 = vmatpush.msra.mxu0 %v7426
      %v7428 = vand.u32 %v7091, 4294901760
      %7429 = vmatmul.f32.gmra.mxu0 %v7428
      %v7430 = vpop.f32.mrf.mxu0
      %v7431 = vadd.f32 %v7394, %v7430
      %7432 = vdwg.mxu0
      %v7433 = vadd.f32 %v7431, 1.0
      %v7434 = vrcp.pop %v7433
      %v7435 = vmul.f32 %v7431, %v7434
      %v7436 = vadd.f32 %v7431, 1e-07
      %v7437 = vrsqrt.pop %v7436
      %v7438 = vmul.f32 %v7437, %v7436
      %v7439 = vmul.f32 %v7438, %v7437
      %v7440 = vmul.f32 0.5, %v7439
      %v7441 = vsub.f32 1.5, %v7440
      %v7442 = vmul.f32 %v7437, %v7441
      %vm7443 = vweird.f32 %v7436
      %vm7444 = vweird.f32 %v7437
      %vm7445 = vmor %vm7443, %vm7444
      %v7446 = vsel %vm7445, %v7437, %v7442
      %v7447 = vmul.f32 %v7435, %v7446
      %v7448 = vmul.f32 %v7090, %v7447
      %v7449 = vmul.f32 %v5112, %v7448
      %v7450 = vmul.f32 %v5113, %v7448
      %v7451 = vmul.f32 %v5114, %v7448
      %v7452 = vmul.f32 %v5115, %v7448
      %v7453 = vmul.f32 %v5116, %v7448
      %v7454 = vmul.f32 %v5117, %v7448
      %v7455 = vmul.f32 %v5118, %v7448
      %v7456 = vmul.f32 %v5119, %v7448
      %v7457 = vmul.f32 %v5120, %v7448
      %v7458 = vmul.f32 %v5121, %v7448
      %v7459 = vmul.f32 %v5122, %v7448
      %v7460 = vmul.f32 %v5123, %v7448
      %v7461 = vmul.f32 %v5124, %v7448
      %v7462 = vmul.f32 %v5125, %v7448
      %v7463 = vmul.f32 %v5126, %v7448
      %v7464 = vmul.f32 %v5127, %v7448
      %v7465 = vmul.f32 %v5128, %v7448
      %v7466 = vmul.f32 %v5129, %v7448
      %v7467 = vmul.f32 %v5130, %v7448
      %v7468 = vmul.f32 %v5131, %v7448
      %v7469 = vmul.f32 %v5132, %v7448
      %v7470 = vmul.f32 %v5133, %v7448
      %v7471 = vmul.f32 %v5134, %v7448
      %v7472 = vmul.f32 %v5135, %v7448
      %v7473 = vmul.f32 %v5136, %v7448
      %v7474 = vmul.f32 %v5137, %v7448
      %v7475 = vmul.f32 %v5138, %v7448
      %v7476 = vmul.f32 %v5139, %v7448
      %v7477 = vmul.f32 %v5140, %v7448
      %v7478 = vmul.f32 %v5141, %v7448
      %v7479 = vmul.f32 %v5142, %v7448
      %v7480 = vmul.f32 %v5143, %v7448
      %v7481 = vand.u32 %v186, 4294901760
      %7482 = vmatpush.msra.mxu0 %v7481
      %v7483 = vand.u32 %v185, 4294901760
      %7484 = vmatpush.msra.mxu0 %v7483
      %v7485 = vand.u32 %v184, 4294901760
      %7486 = vmatpush.msra.mxu0 %v7485
      %v7487 = vand.u32 %v183, 4294901760
      %7488 = vmatpush.msra.mxu0 %v7487
      %v7489 = vand.u32 %v182, 4294901760
      %7490 = vmatpush.msra.mxu0 %v7489
      %v7491 = vand.u32 %v181, 4294901760
      %7492 = vmatpush.msra.mxu0 %v7491
      %v7493 = vand.u32 %v180, 4294901760
      %7494 = vmatpush.msra.mxu0 %v7493
      %v7495 = vand.u32 %v179, 4294901760
      %7496 = vmatpush.msra.mxu0 %v7495
      %v7497 = vand.u32 %v178, 4294901760
      %7498 = vmatpush.msra.mxu0 %v7497
      %v7499 = vand.u32 %v177, 4294901760
      %7500 = vmatpush.msra.mxu0 %v7499
      %v7501 = vand.u32 %v176, 4294901760
      %7502 = vmatpush.msra.mxu0 %v7501
      %v7503 = vand.u32 %v175, 4294901760
      %7504 = vmatpush.msra.mxu0 %v7503
      %v7505 = vand.u32 %v174, 4294901760
      %7506 = vmatpush.msra.mxu0 %v7505
      %v7507 = vand.u32 %v173, 4294901760
      %7508 = vmatpush.msra.mxu0 %v7507
      %v7509 = vand.u32 %v172, 4294901760
      %7510 = vmatpush.msra.mxu0 %v7509
      %v7511 = vand.u32 %v171, 4294901760
      %7512 = vmatpush.msra.mxu0 %v7511
      %v7513 = vand.u32 %v7449, 4294901760
      %v7514 = vsub.f32 %v7449, %v7513
      %v7515 = vand.u32 %v7514, 4294901760
      %v7516 = vsub.f32 %v7514, %v7515
      %v7517 = vand.u32 %v7516, 4294901760
      %7518 = vmatmul.f32.gmra.mxu0 %v7517
      %v7519 = vpop.f32.mrf.mxu0
      %v7520 = vadd.f32 0.0, %v7519
      %v7521 = vand.u32 %v7450, 4294901760
      %v7522 = vsub.f32 %v7450, %v7521
      %v7523 = vand.u32 %v7522, 4294901760
      %v7524 = vsub.f32 %v7522, %v7523
      %v7525 = vand.u32 %v7524, 4294901760
      %7526 = vmatmul.f32.gmra.mxu0 %v7525
      %v7527 = vpop.f32.mrf.mxu0
      %v7528 = vadd.f32 0.0, %v7527
      %v7529 = vand.u32 %v7451, 4294901760
      %v7530 = vsub.f32 %v7451, %v7529
      %v7531 = vand.u32 %v7530, 4294901760
      %v7532 = vsub.f32 %v7530, %v7531
      %v7533 = vand.u32 %v7532, 4294901760
      %7534 = vmatmul.f32.gmra.mxu0 %v7533
      %v7535 = vpop.f32.mrf.mxu0
      %v7536 = vadd.f32 0.0, %v7535
      %v7537 = vand.u32 %v7452, 4294901760
      %v7538 = vsub.f32 %v7452, %v7537
      %v7539 = vand.u32 %v7538, 4294901760
      %v7540 = vsub.f32 %v7538, %v7539
      %v7541 = vand.u32 %v7540, 4294901760
      %7542 = vmatmul.f32.gmra.mxu0 %v7541
      %v7543 = vpop.f32.mrf.mxu0
      %v7544 = vadd.f32 0.0, %v7543
      %v7545 = vand.u32 %v7453, 4294901760
      %v7546 = vsub.f32 %v7453, %v7545
      %v7547 = vand.u32 %v7546, 4294901760
      %v7548 = vsub.f32 %v7546, %v7547
      %v7549 = vand.u32 %v7548, 4294901760
      %7550 = vmatmul.f32.gmra.mxu0 %v7549
      %v7551 = vpop.f32.mrf.mxu0
      %v7552 = vadd.f32 0.0, %v7551
      %v7553 = vand.u32 %v7454, 4294901760
      %v7554 = vsub.f32 %v7454, %v7553
      %v7555 = vand.u32 %v7554, 4294901760
      %v7556 = vsub.f32 %v7554, %v7555
      %v7557 = vand.u32 %v7556, 4294901760
      %7558 = vmatmul.f32.gmra.mxu0 %v7557
      %v7559 = vpop.f32.mrf.mxu0
      %v7560 = vadd.f32 0.0, %v7559
      %v7561 = vand.u32 %v7455, 4294901760
      %v7562 = vsub.f32 %v7455, %v7561
      %v7563 = vand.u32 %v7562, 4294901760
      %v7564 = vsub.f32 %v7562, %v7563
      %v7565 = vand.u32 %v7564, 4294901760
      %7566 = vmatmul.f32.gmra.mxu0 %v7565
      %v7567 = vpop.f32.mrf.mxu0
      %v7568 = vadd.f32 0.0, %v7567
      %v7569 = vand.u32 %v7456, 4294901760
      %v7570 = vsub.f32 %v7456, %v7569
      %v7571 = vand.u32 %v7570, 4294901760
      %v7572 = vsub.f32 %v7570, %v7571
      %v7573 = vand.u32 %v7572, 4294901760
      %7574 = vmatmul.f32.gmra.mxu0 %v7573
      %v7575 = vpop.f32.mrf.mxu0
      %v7576 = vadd.f32 0.0, %v7575
      %v7577 = vand.u32 %v7457, 4294901760
      %v7578 = vsub.f32 %v7457, %v7577
      %v7579 = vand.u32 %v7578, 4294901760
      %v7580 = vsub.f32 %v7578, %v7579
      %v7581 = vand.u32 %v7580, 4294901760
      %7582 = vmatmul.f32.gmra.mxu0 %v7581
      %v7583 = vpop.f32.mrf.mxu0
      %v7584 = vadd.f32 0.0, %v7583
      %v7585 = vand.u32 %v7458, 4294901760
      %v7586 = vsub.f32 %v7458, %v7585
      %v7587 = vand.u32 %v7586, 4294901760
      %v7588 = vsub.f32 %v7586, %v7587
      %v7589 = vand.u32 %v7588, 4294901760
      %7590 = vmatmul.f32.gmra.mxu0 %v7589
      %v7591 = vpop.f32.mrf.mxu0
      %v7592 = vadd.f32 0.0, %v7591
      %v7593 = vand.u32 %v7459, 4294901760
      %v7594 = vsub.f32 %v7459, %v7593
      %v7595 = vand.u32 %v7594, 4294901760
      %v7596 = vsub.f32 %v7594, %v7595
      %v7597 = vand.u32 %v7596, 4294901760
      %7598 = vmatmul.f32.gmra.mxu0 %v7597
      %v7599 = vpop.f32.mrf.mxu0
      %v7600 = vadd.f32 0.0, %v7599
      %v7601 = vand.u32 %v7460, 4294901760
      %v7602 = vsub.f32 %v7460, %v7601
      %v7603 = vand.u32 %v7602, 4294901760
      %v7604 = vsub.f32 %v7602, %v7603
      %v7605 = vand.u32 %v7604, 4294901760
      %7606 = vmatmul.f32.gmra.mxu0 %v7605
      %v7607 = vpop.f32.mrf.mxu0
      %v7608 = vadd.f32 0.0, %v7607
      %v7609 = vand.u32 %v7461, 4294901760
      %v7610 = vsub.f32 %v7461, %v7609
      %v7611 = vand.u32 %v7610, 4294901760
      %v7612 = vsub.f32 %v7610, %v7611
      %v7613 = vand.u32 %v7612, 4294901760
      %7614 = vmatmul.f32.gmra.mxu0 %v7613
      %v7615 = vpop.f32.mrf.mxu0
      %v7616 = vadd.f32 0.0, %v7615
      %v7617 = vand.u32 %v7462, 4294901760
      %v7618 = vsub.f32 %v7462, %v7617
      %v7619 = vand.u32 %v7618, 4294901760
      %v7620 = vsub.f32 %v7618, %v7619
      %v7621 = vand.u32 %v7620, 4294901760
      %7622 = vmatmul.f32.gmra.mxu0 %v7621
      %v7623 = vpop.f32.mrf.mxu0
      %v7624 = vadd.f32 0.0, %v7623
      %v7625 = vand.u32 %v7463, 4294901760
      %v7626 = vsub.f32 %v7463, %v7625
      %v7627 = vand.u32 %v7626, 4294901760
      %v7628 = vsub.f32 %v7626, %v7627
      %v7629 = vand.u32 %v7628, 4294901760
      %7630 = vmatmul.f32.gmra.mxu0 %v7629
      %v7631 = vpop.f32.mrf.mxu0
      %v7632 = vadd.f32 0.0, %v7631
      %v7633 = vand.u32 %v7464, 4294901760
      %v7634 = vsub.f32 %v7464, %v7633
      %v7635 = vand.u32 %v7634, 4294901760
      %v7636 = vsub.f32 %v7634, %v7635
      %v7637 = vand.u32 %v7636, 4294901760
      %7638 = vmatmul.f32.gmra.mxu0 %v7637
      %v7639 = vpop.f32.mrf.mxu0
      %v7640 = vadd.f32 0.0, %v7639
      %v7641 = vand.u32 %v7465, 4294901760
      %v7642 = vsub.f32 %v7465, %v7641
      %v7643 = vand.u32 %v7642, 4294901760
      %v7644 = vsub.f32 %v7642, %v7643
      %v7645 = vand.u32 %v7644, 4294901760
      %7646 = vmatmul.f32.gmra.mxu0 %v7645
      %v7647 = vpop.f32.mrf.mxu0
      %v7648 = vadd.f32 0.0, %v7647
      %v7649 = vand.u32 %v7466, 4294901760
      %v7650 = vsub.f32 %v7466, %v7649
      %v7651 = vand.u32 %v7650, 4294901760
      %v7652 = vsub.f32 %v7650, %v7651
      %v7653 = vand.u32 %v7652, 4294901760
      %7654 = vmatmul.f32.gmra.mxu0 %v7653
      %v7655 = vpop.f32.mrf.mxu0
      %v7656 = vadd.f32 0.0, %v7655
      %v7657 = vand.u32 %v7467, 4294901760
      %v7658 = vsub.f32 %v7467, %v7657
      %v7659 = vand.u32 %v7658, 4294901760
      %v7660 = vsub.f32 %v7658, %v7659
      %v7661 = vand.u32 %v7660, 4294901760
      %7662 = vmatmul.f32.gmra.mxu0 %v7661
      %v7663 = vpop.f32.mrf.mxu0
      %v7664 = vadd.f32 0.0, %v7663
      %v7665 = vand.u32 %v7468, 4294901760
      %v7666 = vsub.f32 %v7468, %v7665
      %v7667 = vand.u32 %v7666, 4294901760
      %v7668 = vsub.f32 %v7666, %v7667
      %v7669 = vand.u32 %v7668, 4294901760
      %7670 = vmatmul.f32.gmra.mxu0 %v7669
      %v7671 = vpop.f32.mrf.mxu0
      %v7672 = vadd.f32 0.0, %v7671
      %v7673 = vand.u32 %v7469, 4294901760
      %v7674 = vsub.f32 %v7469, %v7673
      %v7675 = vand.u32 %v7674, 4294901760
      %v7676 = vsub.f32 %v7674, %v7675
      %v7677 = vand.u32 %v7676, 4294901760
      %7678 = vmatmul.f32.gmra.mxu0 %v7677
      %v7679 = vpop.f32.mrf.mxu0
      %v7680 = vadd.f32 0.0, %v7679
      %v7681 = vand.u32 %v7470, 4294901760
      %v7682 = vsub.f32 %v7470, %v7681
      %v7683 = vand.u32 %v7682, 4294901760
      %v7684 = vsub.f32 %v7682, %v7683
      %v7685 = vand.u32 %v7684, 4294901760
      %7686 = vmatmul.f32.gmra.mxu0 %v7685
      %v7687 = vpop.f32.mrf.mxu0
      %v7688 = vadd.f32 0.0, %v7687
      %v7689 = vand.u32 %v7471, 4294901760
      %v7690 = vsub.f32 %v7471, %v7689
      %v7691 = vand.u32 %v7690, 4294901760
      %v7692 = vsub.f32 %v7690, %v7691
      %v7693 = vand.u32 %v7692, 4294901760
      %7694 = vmatmul.f32.gmra.mxu0 %v7693
      %v7695 = vpop.f32.mrf.mxu0
      %v7696 = vadd.f32 0.0, %v7695
      %v7697 = vand.u32 %v7472, 4294901760
      %v7698 = vsub.f32 %v7472, %v7697
      %v7699 = vand.u32 %v7698, 4294901760
      %v7700 = vsub.f32 %v7698, %v7699
      %v7701 = vand.u32 %v7700, 4294901760
      %7702 = vmatmul.f32.gmra.mxu0 %v7701
      %v7703 = vpop.f32.mrf.mxu0
      %v7704 = vadd.f32 0.0, %v7703
      %v7705 = vand.u32 %v7473, 4294901760
      %v7706 = vsub.f32 %v7473, %v7705
      %v7707 = vand.u32 %v7706, 4294901760
      %v7708 = vsub.f32 %v7706, %v7707
      %v7709 = vand.u32 %v7708, 4294901760
      %7710 = vmatmul.f32.gmra.mxu0 %v7709
      %v7711 = vpop.f32.mrf.mxu0
      %v7712 = vadd.f32 0.0, %v7711
      %v7713 = vand.u32 %v7474, 4294901760
      %v7714 = vsub.f32 %v7474, %v7713
      %v7715 = vand.u32 %v7714, 4294901760
      %v7716 = vsub.f32 %v7714, %v7715
      %v7717 = vand.u32 %v7716, 4294901760
      %7718 = vmatmul.f32.gmra.mxu0 %v7717
      %v7719 = vpop.f32.mrf.mxu0
      %v7720 = vadd.f32 0.0, %v7719
      %v7721 = vand.u32 %v7475, 4294901760
      %v7722 = vsub.f32 %v7475, %v7721
      %v7723 = vand.u32 %v7722, 4294901760
      %v7724 = vsub.f32 %v7722, %v7723
      %v7725 = vand.u32 %v7724, 4294901760
      %7726 = vmatmul.f32.gmra.mxu0 %v7725
      %v7727 = vpop.f32.mrf.mxu0
      %v7728 = vadd.f32 0.0, %v7727
      %v7729 = vand.u32 %v7476, 4294901760
      %v7730 = vsub.f32 %v7476, %v7729
      %v7731 = vand.u32 %v7730, 4294901760
      %v7732 = vsub.f32 %v7730, %v7731
      %v7733 = vand.u32 %v7732, 4294901760
      %7734 = vmatmul.f32.gmra.mxu0 %v7733
      %v7735 = vpop.f32.mrf.mxu0
      %v7736 = vadd.f32 0.0, %v7735
      %v7737 = vand.u32 %v7477, 4294901760
      %v7738 = vsub.f32 %v7477, %v7737
      %v7739 = vand.u32 %v7738, 4294901760
      %v7740 = vsub.f32 %v7738, %v7739
      %v7741 = vand.u32 %v7740, 4294901760
      %7742 = vmatmul.f32.gmra.mxu0 %v7741
      %v7743 = vpop.f32.mrf.mxu0
      %v7744 = vadd.f32 0.0, %v7743
      %v7745 = vand.u32 %v7478, 4294901760
      %v7746 = vsub.f32 %v7478, %v7745
      %v7747 = vand.u32 %v7746, 4294901760
      %v7748 = vsub.f32 %v7746, %v7747
      %v7749 = vand.u32 %v7748, 4294901760
      %7750 = vmatmul.f32.gmra.mxu0 %v7749
      %v7751 = vpop.f32.mrf.mxu0
      %v7752 = vadd.f32 0.0, %v7751
      %v7753 = vand.u32 %v7479, 4294901760
      %v7754 = vsub.f32 %v7479, %v7753
      %v7755 = vand.u32 %v7754, 4294901760
      %v7756 = vsub.f32 %v7754, %v7755
      %v7757 = vand.u32 %v7756, 4294901760
      %7758 = vmatmul.f32.gmra.mxu0 %v7757
      %v7759 = vpop.f32.mrf.mxu0
      %v7760 = vadd.f32 0.0, %v7759
      %v7761 = vand.u32 %v7480, 4294901760
      %v7762 = vsub.f32 %v7480, %v7761
      %v7763 = vand.u32 %v7762, 4294901760
      %v7764 = vsub.f32 %v7762, %v7763
      %v7765 = vand.u32 %v7764, 4294901760
      %7766 = vmatmul.f32.gmra.mxu0 %v7765
      %v7767 = vpop.f32.mrf.mxu0
      %v7768 = vadd.f32 0.0, %v7767
      %7769 = vdwg.mxu0
      %v7770 = vand.u32 %v186, 4294901760
      %v7771 = vsub.f32 %v186, %v7770
      %v7772 = vand.u32 %v7771, 4294901760
      %v7773 = vsub.f32 %v7771, %v7772
      %v7774 = vand.u32 %v7773, 4294901760
      %7775 = vmatpush.msra.mxu0 %v7774
      %v7776 = vand.u32 %v185, 4294901760
      %v7777 = vsub.f32 %v185, %v7776
      %v7778 = vand.u32 %v7777, 4294901760
      %v7779 = vsub.f32 %v7777, %v7778
      %v7780 = vand.u32 %v7779, 4294901760
      %7781 = vmatpush.msra.mxu0 %v7780
      %v7782 = vand.u32 %v184, 4294901760
      %v7783 = vsub.f32 %v184, %v7782
      %v7784 = vand.u32 %v7783, 4294901760
      %v7785 = vsub.f32 %v7783, %v7784
      %v7786 = vand.u32 %v7785, 4294901760
      %7787 = vmatpush.msra.mxu0 %v7786
      %v7788 = vand.u32 %v183, 4294901760
      %v7789 = vsub.f32 %v183, %v7788
      %v7790 = vand.u32 %v7789, 4294901760
      %v7791 = vsub.f32 %v7789, %v7790
      %v7792 = vand.u32 %v7791, 4294901760
      %7793 = vmatpush.msra.mxu0 %v7792
      %v7794 = vand.u32 %v182, 4294901760
      %v7795 = vsub.f32 %v182, %v7794
      %v7796 = vand.u32 %v7795, 4294901760
      %v7797 = vsub.f32 %v7795, %v7796
      %v7798 = vand.u32 %v7797, 4294901760
      %7799 = vmatpush.msra.mxu0 %v7798
      %v7800 = vand.u32 %v181, 4294901760
      %v7801 = vsub.f32 %v181, %v7800
      %v7802 = vand.u32 %v7801, 4294901760
      %v7803 = vsub.f32 %v7801, %v7802
      %v7804 = vand.u32 %v7803, 4294901760
      %7805 = vmatpush.msra.mxu0 %v7804
      %v7806 = vand.u32 %v180, 4294901760
      %v7807 = vsub.f32 %v180, %v7806
      %v7808 = vand.u32 %v7807, 4294901760
      %v7809 = vsub.f32 %v7807, %v7808
      %v7810 = vand.u32 %v7809, 4294901760
      %7811 = vmatpush.msra.mxu0 %v7810
      %v7812 = vand.u32 %v179, 4294901760
      %v7813 = vsub.f32 %v179, %v7812
      %v7814 = vand.u32 %v7813, 4294901760
      %v7815 = vsub.f32 %v7813, %v7814
      %v7816 = vand.u32 %v7815, 4294901760
      %7817 = vmatpush.msra.mxu0 %v7816
      %v7818 = vand.u32 %v178, 4294901760
      %v7819 = vsub.f32 %v178, %v7818
      %v7820 = vand.u32 %v7819, 4294901760
      %v7821 = vsub.f32 %v7819, %v7820
      %v7822 = vand.u32 %v7821, 4294901760
      %7823 = vmatpush.msra.mxu0 %v7822
      %v7824 = vand.u32 %v177, 4294901760
      %v7825 = vsub.f32 %v177, %v7824
      %v7826 = vand.u32 %v7825, 4294901760
      %v7827 = vsub.f32 %v7825, %v7826
      %v7828 = vand.u32 %v7827, 4294901760
      %7829 = vmatpush.msra.mxu0 %v7828
      %v7830 = vand.u32 %v176, 4294901760
      %v7831 = vsub.f32 %v176, %v7830
      %v7832 = vand.u32 %v7831, 4294901760
      %v7833 = vsub.f32 %v7831, %v7832
      %v7834 = vand.u32 %v7833, 4294901760
      %7835 = vmatpush.msra.mxu0 %v7834
      %v7836 = vand.u32 %v175, 4294901760
      %v7837 = vsub.f32 %v175, %v7836
      %v7838 = vand.u32 %v7837, 4294901760
      %v7839 = vsub.f32 %v7837, %v7838
      %v7840 = vand.u32 %v7839, 4294901760
      %7841 = vmatpush.msra.mxu0 %v7840
      %v7842 = vand.u32 %v174, 4294901760
      %v7843 = vsub.f32 %v174, %v7842
      %v7844 = vand.u32 %v7843, 4294901760
      %v7845 = vsub.f32 %v7843, %v7844
      %v7846 = vand.u32 %v7845, 4294901760
      %7847 = vmatpush.msra.mxu0 %v7846
      %v7848 = vand.u32 %v173, 4294901760
      %v7849 = vsub.f32 %v173, %v7848
      %v7850 = vand.u32 %v7849, 4294901760
      %v7851 = vsub.f32 %v7849, %v7850
      %v7852 = vand.u32 %v7851, 4294901760
      %7853 = vmatpush.msra.mxu0 %v7852
      %v7854 = vand.u32 %v172, 4294901760
      %v7855 = vsub.f32 %v172, %v7854
      %v7856 = vand.u32 %v7855, 4294901760
      %v7857 = vsub.f32 %v7855, %v7856
      %v7858 = vand.u32 %v7857, 4294901760
      %7859 = vmatpush.msra.mxu0 %v7858
      %v7860 = vand.u32 %v171, 4294901760
      %v7861 = vsub.f32 %v171, %v7860
      %v7862 = vand.u32 %v7861, 4294901760
      %v7863 = vsub.f32 %v7861, %v7862
      %v7864 = vand.u32 %v7863, 4294901760
      %7865 = vmatpush.msra.mxu0 %v7864
      %v7866 = vand.u32 %v7449, 4294901760
      %7867 = vmatmul.f32.gmra.mxu0 %v7866
      %v7868 = vpop.f32.mrf.mxu0
      %v7869 = vadd.f32 %v7520, %v7868
      %v7870 = vand.u32 %v7450, 4294901760
      %7871 = vmatmul.f32.gmra.mxu0 %v7870
      %v7872 = vpop.f32.mrf.mxu0
      %v7873 = vadd.f32 %v7528, %v7872
      %v7874 = vand.u32 %v7451, 4294901760
      %7875 = vmatmul.f32.gmra.mxu0 %v7874
      %v7876 = vpop.f32.mrf.mxu0
      %v7877 = vadd.f32 %v7536, %v7876
      %v7878 = vand.u32 %v7452, 4294901760
      %7879 = vmatmul.f32.gmra.mxu0 %v7878
      %v7880 = vpop.f32.mrf.mxu0
      %v7881 = vadd.f32 %v7544, %v7880
      %v7882 = vand.u32 %v7453, 4294901760
      %7883 = vmatmul.f32.gmra.mxu0 %v7882
      %v7884 = vpop.f32.mrf.mxu0
      %v7885 = vadd.f32 %v7552, %v7884
      %v7886 = vand.u32 %v7454, 4294901760
      %7887 = vmatmul.f32.gmra.mxu0 %v7886
      %v7888 = vpop.f32.mrf.mxu0
      %v7889 = vadd.f32 %v7560, %v7888
      %v7890 = vand.u32 %v7455, 4294901760
      %7891 = vmatmul.f32.gmra.mxu0 %v7890
      %v7892 = vpop.f32.mrf.mxu0
      %v7893 = vadd.f32 %v7568, %v7892
      %v7894 = vand.u32 %v7456, 4294901760
      %7895 = vmatmul.f32.gmra.mxu0 %v7894
      %v7896 = vpop.f32.mrf.mxu0
      %v7897 = vadd.f32 %v7576, %v7896
      %v7898 = vand.u32 %v7457, 4294901760
      %7899 = vmatmul.f32.gmra.mxu0 %v7898
      %v7900 = vpop.f32.mrf.mxu0
      %v7901 = vadd.f32 %v7584, %v7900
      %v7902 = vand.u32 %v7458, 4294901760
      %7903 = vmatmul.f32.gmra.mxu0 %v7902
      %v7904 = vpop.f32.mrf.mxu0
      %v7905 = vadd.f32 %v7592, %v7904
      %v7906 = vand.u32 %v7459, 4294901760
      %7907 = vmatmul.f32.gmra.mxu0 %v7906
      %v7908 = vpop.f32.mrf.mxu0
      %v7909 = vadd.f32 %v7600, %v7908
      %v7910 = vand.u32 %v7460, 4294901760
      %7911 = vmatmul.f32.gmra.mxu0 %v7910
      %v7912 = vpop.f32.mrf.mxu0
      %v7913 = vadd.f32 %v7608, %v7912
      %v7914 = vand.u32 %v7461, 4294901760
      %7915 = vmatmul.f32.gmra.mxu0 %v7914
      %v7916 = vpop.f32.mrf.mxu0
      %v7917 = vadd.f32 %v7616, %v7916
      %v7918 = vand.u32 %v7462, 4294901760
      %7919 = vmatmul.f32.gmra.mxu0 %v7918
      %v7920 = vpop.f32.mrf.mxu0
      %v7921 = vadd.f32 %v7624, %v7920
      %v7922 = vand.u32 %v7463, 4294901760
      %7923 = vmatmul.f32.gmra.mxu0 %v7922
      %v7924 = vpop.f32.mrf.mxu0
      %v7925 = vadd.f32 %v7632, %v7924
      %v7926 = vand.u32 %v7464, 4294901760
      %7927 = vmatmul.f32.gmra.mxu0 %v7926
      %v7928 = vpop.f32.mrf.mxu0
      %v7929 = vadd.f32 %v7640, %v7928
      %v7930 = vand.u32 %v7465, 4294901760
      %7931 = vmatmul.f32.gmra.mxu0 %v7930
      %v7932 = vpop.f32.mrf.mxu0
      %v7933 = vadd.f32 %v7648, %v7932
      %v7934 = vand.u32 %v7466, 4294901760
      %7935 = vmatmul.f32.gmra.mxu0 %v7934
      %v7936 = vpop.f32.mrf.mxu0
      %v7937 = vadd.f32 %v7656, %v7936
      %v7938 = vand.u32 %v7467, 4294901760
      %7939 = vmatmul.f32.gmra.mxu0 %v7938
      %v7940 = vpop.f32.mrf.mxu0
      %v7941 = vadd.f32 %v7664, %v7940
      %v7942 = vand.u32 %v7468, 4294901760
      %7943 = vmatmul.f32.gmra.mxu0 %v7942
      %v7944 = vpop.f32.mrf.mxu0
      %v7945 = vadd.f32 %v7672, %v7944
      %v7946 = vand.u32 %v7469, 4294901760
      %7947 = vmatmul.f32.gmra.mxu0 %v7946
      %v7948 = vpop.f32.mrf.mxu0
      %v7949 = vadd.f32 %v7680, %v7948
      %v7950 = vand.u32 %v7470, 4294901760
      %7951 = vmatmul.f32.gmra.mxu0 %v7950
      %v7952 = vpop.f32.mrf.mxu0
      %v7953 = vadd.f32 %v7688, %v7952
      %v7954 = vand.u32 %v7471, 4294901760
      %7955 = vmatmul.f32.gmra.mxu0 %v7954
      %v7956 = vpop.f32.mrf.mxu0
      %v7957 = vadd.f32 %v7696, %v7956
      %v7958 = vand.u32 %v7472, 4294901760
      %7959 = vmatmul.f32.gmra.mxu0 %v7958
      %v7960 = vpop.f32.mrf.mxu0
      %v7961 = vadd.f32 %v7704, %v7960
      %v7962 = vand.u32 %v7473, 4294901760
      %7963 = vmatmul.f32.gmra.mxu0 %v7962
      %v7964 = vpop.f32.mrf.mxu0
      %v7965 = vadd.f32 %v7712, %v7964
      %v7966 = vand.u32 %v7474, 4294901760
      %7967 = vmatmul.f32.gmra.mxu0 %v7966
      %v7968 = vpop.f32.mrf.mxu0
      %v7969 = vadd.f32 %v7720, %v7968
      %v7970 = vand.u32 %v7475, 4294901760
      %7971 = vmatmul.f32.gmra.mxu0 %v7970
      %v7972 = vpop.f32.mrf.mxu0
      %v7973 = vadd.f32 %v7728, %v7972
      %v7974 = vand.u32 %v7476, 4294901760
      %7975 = vmatmul.f32.gmra.mxu0 %v7974
      %v7976 = vpop.f32.mrf.mxu0
      %v7977 = vadd.f32 %v7736, %v7976
      %v7978 = vand.u32 %v7477, 4294901760
      %7979 = vmatmul.f32.gmra.mxu0 %v7978
      %v7980 = vpop.f32.mrf.mxu0
      %v7981 = vadd.f32 %v7744, %v7980
      %v7982 = vand.u32 %v7478, 4294901760
      %7983 = vmatmul.f32.gmra.mxu0 %v7982
      %v7984 = vpop.f32.mrf.mxu0
      %v7985 = vadd.f32 %v7752, %v7984
      %v7986 = vand.u32 %v7479, 4294901760
      %7987 = vmatmul.f32.gmra.mxu0 %v7986
      %v7988 = vpop.f32.mrf.mxu0
      %v7989 = vadd.f32 %v7760, %v7988
      %v7990 = vand.u32 %v7480, 4294901760
      %7991 = vmatmul.f32.gmra.mxu0 %v7990
      %v7992 = vpop.f32.mrf.mxu0
      %v7993 = vadd.f32 %v7768, %v7992
      %7994 = vdwg.mxu0
      %v7995 = vand.u32 %v186, 4294901760
      %v7996 = vsub.f32 %v186, %v7995
      %7997 = vmatpush.msra.mxu0 %v7996
      %v7998 = vand.u32 %v185, 4294901760
      %v7999 = vsub.f32 %v185, %v7998
      %8000 = vmatpush.msra.mxu0 %v7999
      %v8001 = vand.u32 %v184, 4294901760
      %v8002 = vsub.f32 %v184, %v8001
      %8003 = vmatpush.msra.mxu0 %v8002
      %v8004 = vand.u32 %v183, 4294901760
      %v8005 = vsub.f32 %v183, %v8004
      %8006 = vmatpush.msra.mxu0 %v8005
      %v8007 = vand.u32 %v182, 4294901760
      %v8008 = vsub.f32 %v182, %v8007
      %8009 = vmatpush.msra.mxu0 %v8008
      %v8010 = vand.u32 %v181, 4294901760
      %v8011 = vsub.f32 %v181, %v8010
      %8012 = vmatpush.msra.mxu0 %v8011
      %v8013 = vand.u32 %v180, 4294901760
      %v8014 = vsub.f32 %v180, %v8013
      %8015 = vmatpush.msra.mxu0 %v8014
      %v8016 = vand.u32 %v179, 4294901760
      %v8017 = vsub.f32 %v179, %v8016
      %8018 = vmatpush.msra.mxu0 %v8017
      %v8019 = vand.u32 %v178, 4294901760
      %v8020 = vsub.f32 %v178, %v8019
      %8021 = vmatpush.msra.mxu0 %v8020
      %v8022 = vand.u32 %v177, 4294901760
      %v8023 = vsub.f32 %v177, %v8022
      %8024 = vmatpush.msra.mxu0 %v8023
      %v8025 = vand.u32 %v176, 4294901760
      %v8026 = vsub.f32 %v176, %v8025
      %8027 = vmatpush.msra.mxu0 %v8026
      %v8028 = vand.u32 %v175, 4294901760
      %v8029 = vsub.f32 %v175, %v8028
      %8030 = vmatpush.msra.mxu0 %v8029
      %v8031 = vand.u32 %v174, 4294901760
      %v8032 = vsub.f32 %v174, %v8031
      %8033 = vmatpush.msra.mxu0 %v8032
      %v8034 = vand.u32 %v173, 4294901760
      %v8035 = vsub.f32 %v173, %v8034
      %8036 = vmatpush.msra.mxu0 %v8035
      %v8037 = vand.u32 %v172, 4294901760
      %v8038 = vsub.f32 %v172, %v8037
      %8039 = vmatpush.msra.mxu0 %v8038
      %v8040 = vand.u32 %v171, 4294901760
      %v8041 = vsub.f32 %v171, %v8040
      %8042 = vmatpush.msra.mxu0 %v8041
      %v8043 = vand.u32 %v7449, 4294901760
      %v8044 = vsub.f32 %v7449, %v8043
      %8045 = vmatmul.f32.gmra.mxu0 %v8044
      %v8046 = vpop.f32.mrf.mxu0
      %v8047 = vadd.f32 %v7869, %v8046
      %v8048 = vand.u32 %v7450, 4294901760
      %v8049 = vsub.f32 %v7450, %v8048
      %8050 = vmatmul.f32.gmra.mxu0 %v8049
      %v8051 = vpop.f32.mrf.mxu0
      %v8052 = vadd.f32 %v7873, %v8051
      %v8053 = vand.u32 %v7451, 4294901760
      %v8054 = vsub.f32 %v7451, %v8053
      %8055 = vmatmul.f32.gmra.mxu0 %v8054
      %v8056 = vpop.f32.mrf.mxu0
      %v8057 = vadd.f32 %v7877, %v8056
      %v8058 = vand.u32 %v7452, 4294901760
      %v8059 = vsub.f32 %v7452, %v8058
      %8060 = vmatmul.f32.gmra.mxu0 %v8059
      %v8061 = vpop.f32.mrf.mxu0
      %v8062 = vadd.f32 %v7881, %v8061
      %v8063 = vand.u32 %v7453, 4294901760
      %v8064 = vsub.f32 %v7453, %v8063
      %8065 = vmatmul.f32.gmra.mxu0 %v8064
      %v8066 = vpop.f32.mrf.mxu0
      %v8067 = vadd.f32 %v7885, %v8066
      %v8068 = vand.u32 %v7454, 4294901760
      %v8069 = vsub.f32 %v7454, %v8068
      %8070 = vmatmul.f32.gmra.mxu0 %v8069
      %v8071 = vpop.f32.mrf.mxu0
      %v8072 = vadd.f32 %v7889, %v8071
      %v8073 = vand.u32 %v7455, 4294901760
      %v8074 = vsub.f32 %v7455, %v8073
      %8075 = vmatmul.f32.gmra.mxu0 %v8074
      %v8076 = vpop.f32.mrf.mxu0
      %v8077 = vadd.f32 %v7893, %v8076
      %v8078 = vand.u32 %v7456, 4294901760
      %v8079 = vsub.f32 %v7456, %v8078
      %8080 = vmatmul.f32.gmra.mxu0 %v8079
      %v8081 = vpop.f32.mrf.mxu0
      %v8082 = vadd.f32 %v7897, %v8081
      %v8083 = vand.u32 %v7457, 4294901760
      %v8084 = vsub.f32 %v7457, %v8083
      %8085 = vmatmul.f32.gmra.mxu0 %v8084
      %v8086 = vpop.f32.mrf.mxu0
      %v8087 = vadd.f32 %v7901, %v8086
      %v8088 = vand.u32 %v7458, 4294901760
      %v8089 = vsub.f32 %v7458, %v8088
      %8090 = vmatmul.f32.gmra.mxu0 %v8089
      %v8091 = vpop.f32.mrf.mxu0
      %v8092 = vadd.f32 %v7905, %v8091
      %v8093 = vand.u32 %v7459, 4294901760
      %v8094 = vsub.f32 %v7459, %v8093
      %8095 = vmatmul.f32.gmra.mxu0 %v8094
      %v8096 = vpop.f32.mrf.mxu0
      %v8097 = vadd.f32 %v7909, %v8096
      %v8098 = vand.u32 %v7460, 4294901760
      %v8099 = vsub.f32 %v7460, %v8098
      %8100 = vmatmul.f32.gmra.mxu0 %v8099
      %v8101 = vpop.f32.mrf.mxu0
      %v8102 = vadd.f32 %v7913, %v8101
      %v8103 = vand.u32 %v7461, 4294901760
      %v8104 = vsub.f32 %v7461, %v8103
      %8105 = vmatmul.f32.gmra.mxu0 %v8104
      %v8106 = vpop.f32.mrf.mxu0
      %v8107 = vadd.f32 %v7917, %v8106
      %v8108 = vand.u32 %v7462, 4294901760
      %v8109 = vsub.f32 %v7462, %v8108
      %8110 = vmatmul.f32.gmra.mxu0 %v8109
      %v8111 = vpop.f32.mrf.mxu0
      %v8112 = vadd.f32 %v7921, %v8111
      %v8113 = vand.u32 %v7463, 4294901760
      %v8114 = vsub.f32 %v7463, %v8113
      %8115 = vmatmul.f32.gmra.mxu0 %v8114
      %v8116 = vpop.f32.mrf.mxu0
      %v8117 = vadd.f32 %v7925, %v8116
      %v8118 = vand.u32 %v7464, 4294901760
      %v8119 = vsub.f32 %v7464, %v8118
      %8120 = vmatmul.f32.gmra.mxu0 %v8119
      %v8121 = vpop.f32.mrf.mxu0
      %v8122 = vadd.f32 %v7929, %v8121
      %v8123 = vand.u32 %v7465, 4294901760
      %v8124 = vsub.f32 %v7465, %v8123
      %8125 = vmatmul.f32.gmra.mxu0 %v8124
      %v8126 = vpop.f32.mrf.mxu0
      %v8127 = vadd.f32 %v7933, %v8126
      %v8128 = vand.u32 %v7466, 4294901760
      %v8129 = vsub.f32 %v7466, %v8128
      %8130 = vmatmul.f32.gmra.mxu0 %v8129
      %v8131 = vpop.f32.mrf.mxu0
      %v8132 = vadd.f32 %v7937, %v8131
      %v8133 = vand.u32 %v7467, 4294901760
      %v8134 = vsub.f32 %v7467, %v8133
      %8135 = vmatmul.f32.gmra.mxu0 %v8134
      %v8136 = vpop.f32.mrf.mxu0
      %v8137 = vadd.f32 %v7941, %v8136
      %v8138 = vand.u32 %v7468, 4294901760
      %v8139 = vsub.f32 %v7468, %v8138
      %8140 = vmatmul.f32.gmra.mxu0 %v8139
      %v8141 = vpop.f32.mrf.mxu0
      %v8142 = vadd.f32 %v7945, %v8141
      %v8143 = vand.u32 %v7469, 4294901760
      %v8144 = vsub.f32 %v7469, %v8143
      %8145 = vmatmul.f32.gmra.mxu0 %v8144
      %v8146 = vpop.f32.mrf.mxu0
      %v8147 = vadd.f32 %v7949, %v8146
      %v8148 = vand.u32 %v7470, 4294901760
      %v8149 = vsub.f32 %v7470, %v8148
      %8150 = vmatmul.f32.gmra.mxu0 %v8149
      %v8151 = vpop.f32.mrf.mxu0
      %v8152 = vadd.f32 %v7953, %v8151
      %v8153 = vand.u32 %v7471, 4294901760
      %v8154 = vsub.f32 %v7471, %v8153
      %8155 = vmatmul.f32.gmra.mxu0 %v8154
      %v8156 = vpop.f32.mrf.mxu0
      %v8157 = vadd.f32 %v7957, %v8156
      %v8158 = vand.u32 %v7472, 4294901760
      %v8159 = vsub.f32 %v7472, %v8158
      %8160 = vmatmul.f32.gmra.mxu0 %v8159
      %v8161 = vpop.f32.mrf.mxu0
      %v8162 = vadd.f32 %v7961, %v8161
      %v8163 = vand.u32 %v7473, 4294901760
      %v8164 = vsub.f32 %v7473, %v8163
      %8165 = vmatmul.f32.gmra.mxu0 %v8164
      %v8166 = vpop.f32.mrf.mxu0
      %v8167 = vadd.f32 %v7965, %v8166
      %v8168 = vand.u32 %v7474, 4294901760
      %v8169 = vsub.f32 %v7474, %v8168
      %8170 = vmatmul.f32.gmra.mxu0 %v8169
      %v8171 = vpop.f32.mrf.mxu0
      %v8172 = vadd.f32 %v7969, %v8171
      %v8173 = vand.u32 %v7475, 4294901760
      %v8174 = vsub.f32 %v7475, %v8173
      %8175 = vmatmul.f32.gmra.mxu0 %v8174
      %v8176 = vpop.f32.mrf.mxu0
      %v8177 = vadd.f32 %v7973, %v8176
      %v8178 = vand.u32 %v7476, 4294901760
      %v8179 = vsub.f32 %v7476, %v8178
      %8180 = vmatmul.f32.gmra.mxu0 %v8179
      %v8181 = vpop.f32.mrf.mxu0
      %v8182 = vadd.f32 %v7977, %v8181
      %v8183 = vand.u32 %v7477, 4294901760
      %v8184 = vsub.f32 %v7477, %v8183
      %8185 = vmatmul.f32.gmra.mxu0 %v8184
      %v8186 = vpop.f32.mrf.mxu0
      %v8187 = vadd.f32 %v7981, %v8186
      %v8188 = vand.u32 %v7478, 4294901760
      %v8189 = vsub.f32 %v7478, %v8188
      %8190 = vmatmul.f32.gmra.mxu0 %v8189
      %v8191 = vpop.f32.mrf.mxu0
      %v8192 = vadd.f32 %v7985, %v8191
      %v8193 = vand.u32 %v7479, 4294901760
      %v8194 = vsub.f32 %v7479, %v8193
      %8195 = vmatmul.f32.gmra.mxu0 %v8194
      %v8196 = vpop.f32.mrf.mxu0
      %v8197 = vadd.f32 %v7989, %v8196
      %v8198 = vand.u32 %v7480, 4294901760
      %v8199 = vsub.f32 %v7480, %v8198
      %8200 = vmatmul.f32.gmra.mxu0 %v8199
      %v8201 = vpop.f32.mrf.mxu0
      %v8202 = vadd.f32 %v7993, %v8201
      %8203 = vdwg.mxu0
      %v8204 = vand.u32 %v186, 4294901760
      %8205 = vmatpush.msra.mxu0 %v8204
      %v8206 = vand.u32 %v185, 4294901760
      %8207 = vmatpush.msra.mxu0 %v8206
      %v8208 = vand.u32 %v184, 4294901760
      %8209 = vmatpush.msra.mxu0 %v8208
      %v8210 = vand.u32 %v183, 4294901760
      %8211 = vmatpush.msra.mxu0 %v8210
      %v8212 = vand.u32 %v182, 4294901760
      %8213 = vmatpush.msra.mxu0 %v8212
      %v8214 = vand.u32 %v181, 4294901760
      %8215 = vmatpush.msra.mxu0 %v8214
      %v8216 = vand.u32 %v180, 4294901760
      %8217 = vmatpush.msra.mxu0 %v8216
      %v8218 = vand.u32 %v179, 4294901760
      %8219 = vmatpush.msra.mxu0 %v8218
      %v8220 = vand.u32 %v178, 4294901760
      %8221 = vmatpush.msra.mxu0 %v8220
      %v8222 = vand.u32 %v177, 4294901760
      %8223 = vmatpush.msra.mxu0 %v8222
      %v8224 = vand.u32 %v176, 4294901760
      %8225 = vmatpush.msra.mxu0 %v8224
      %v8226 = vand.u32 %v175, 4294901760
      %8227 = vmatpush.msra.mxu0 %v8226
      %v8228 = vand.u32 %v174, 4294901760
      %8229 = vmatpush.msra.mxu0 %v8228
      %v8230 = vand.u32 %v173, 4294901760
      %8231 = vmatpush.msra.mxu0 %v8230
      %v8232 = vand.u32 %v172, 4294901760
      %8233 = vmatpush.msra.mxu0 %v8232
      %v8234 = vand.u32 %v171, 4294901760
      %8235 = vmatpush.msra.mxu0 %v8234
      %v8236 = vand.u32 %v7449, 4294901760
      %v8237 = vsub.f32 %v7449, %v8236
      %v8238 = vand.u32 %v8237, 4294901760
      %8239 = vmatmul.f32.gmra.mxu0 %v8238
      %v8240 = vpop.f32.mrf.mxu0
      %v8241 = vadd.f32 %v8047, %v8240
      %v8242 = vand.u32 %v7450, 4294901760
      %v8243 = vsub.f32 %v7450, %v8242
      %v8244 = vand.u32 %v8243, 4294901760
      %8245 = vmatmul.f32.gmra.mxu0 %v8244
      %v8246 = vpop.f32.mrf.mxu0
      %v8247 = vadd.f32 %v8052, %v8246
      %v8248 = vand.u32 %v7451, 4294901760
      %v8249 = vsub.f32 %v7451, %v8248
      %v8250 = vand.u32 %v8249, 4294901760
      %8251 = vmatmul.f32.gmra.mxu0 %v8250
      %v8252 = vpop.f32.mrf.mxu0
      %v8253 = vadd.f32 %v8057, %v8252
      %v8254 = vand.u32 %v7452, 4294901760
      %v8255 = vsub.f32 %v7452, %v8254
      %v8256 = vand.u32 %v8255, 4294901760
      %8257 = vmatmul.f32.gmra.mxu0 %v8256
      %v8258 = vpop.f32.mrf.mxu0
      %v8259 = vadd.f32 %v8062, %v8258
      %v8260 = vand.u32 %v7453, 4294901760
      %v8261 = vsub.f32 %v7453, %v8260
      %v8262 = vand.u32 %v8261, 4294901760
      %8263 = vmatmul.f32.gmra.mxu0 %v8262
      %v8264 = vpop.f32.mrf.mxu0
      %v8265 = vadd.f32 %v8067, %v8264
      %v8266 = vand.u32 %v7454, 4294901760
      %v8267 = vsub.f32 %v7454, %v8266
      %v8268 = vand.u32 %v8267, 4294901760
      %8269 = vmatmul.f32.gmra.mxu0 %v8268
      %v8270 = vpop.f32.mrf.mxu0
      %v8271 = vadd.f32 %v8072, %v8270
      %v8272 = vand.u32 %v7455, 4294901760
      %v8273 = vsub.f32 %v7455, %v8272
      %v8274 = vand.u32 %v8273, 4294901760
      %8275 = vmatmul.f32.gmra.mxu0 %v8274
      %v8276 = vpop.f32.mrf.mxu0
      %v8277 = vadd.f32 %v8077, %v8276
      %v8278 = vand.u32 %v7456, 4294901760
      %v8279 = vsub.f32 %v7456, %v8278
      %v8280 = vand.u32 %v8279, 4294901760
      %8281 = vmatmul.f32.gmra.mxu0 %v8280
      %v8282 = vpop.f32.mrf.mxu0
      %v8283 = vadd.f32 %v8082, %v8282
      %v8284 = vand.u32 %v7457, 4294901760
      %v8285 = vsub.f32 %v7457, %v8284
      %v8286 = vand.u32 %v8285, 4294901760
      %8287 = vmatmul.f32.gmra.mxu0 %v8286
      %v8288 = vpop.f32.mrf.mxu0
      %v8289 = vadd.f32 %v8087, %v8288
      %v8290 = vand.u32 %v7458, 4294901760
      %v8291 = vsub.f32 %v7458, %v8290
      %v8292 = vand.u32 %v8291, 4294901760
      %8293 = vmatmul.f32.gmra.mxu0 %v8292
      %v8294 = vpop.f32.mrf.mxu0
      %v8295 = vadd.f32 %v8092, %v8294
      %v8296 = vand.u32 %v7459, 4294901760
      %v8297 = vsub.f32 %v7459, %v8296
      %v8298 = vand.u32 %v8297, 4294901760
      %8299 = vmatmul.f32.gmra.mxu0 %v8298
      %v8300 = vpop.f32.mrf.mxu0
      %v8301 = vadd.f32 %v8097, %v8300
      %v8302 = vand.u32 %v7460, 4294901760
      %v8303 = vsub.f32 %v7460, %v8302
      %v8304 = vand.u32 %v8303, 4294901760
      %8305 = vmatmul.f32.gmra.mxu0 %v8304
      %v8306 = vpop.f32.mrf.mxu0
      %v8307 = vadd.f32 %v8102, %v8306
      %v8308 = vand.u32 %v7461, 4294901760
      %v8309 = vsub.f32 %v7461, %v8308
      %v8310 = vand.u32 %v8309, 4294901760
      %8311 = vmatmul.f32.gmra.mxu0 %v8310
      %v8312 = vpop.f32.mrf.mxu0
      %v8313 = vadd.f32 %v8107, %v8312
      %v8314 = vand.u32 %v7462, 4294901760
      %v8315 = vsub.f32 %v7462, %v8314
      %v8316 = vand.u32 %v8315, 4294901760
      %8317 = vmatmul.f32.gmra.mxu0 %v8316
      %v8318 = vpop.f32.mrf.mxu0
      %v8319 = vadd.f32 %v8112, %v8318
      %v8320 = vand.u32 %v7463, 4294901760
      %v8321 = vsub.f32 %v7463, %v8320
      %v8322 = vand.u32 %v8321, 4294901760
      %8323 = vmatmul.f32.gmra.mxu0 %v8322
      %v8324 = vpop.f32.mrf.mxu0
      %v8325 = vadd.f32 %v8117, %v8324
      %v8326 = vand.u32 %v7464, 4294901760
      %v8327 = vsub.f32 %v7464, %v8326
      %v8328 = vand.u32 %v8327, 4294901760
      %8329 = vmatmul.f32.gmra.mxu0 %v8328
      %v8330 = vpop.f32.mrf.mxu0
      %v8331 = vadd.f32 %v8122, %v8330
      %v8332 = vand.u32 %v7465, 4294901760
      %v8333 = vsub.f32 %v7465, %v8332
      %v8334 = vand.u32 %v8333, 4294901760
      %8335 = vmatmul.f32.gmra.mxu0 %v8334
      %v8336 = vpop.f32.mrf.mxu0
      %v8337 = vadd.f32 %v8127, %v8336
      %v8338 = vand.u32 %v7466, 4294901760
      %v8339 = vsub.f32 %v7466, %v8338
      %v8340 = vand.u32 %v8339, 4294901760
      %8341 = vmatmul.f32.gmra.mxu0 %v8340
      %v8342 = vpop.f32.mrf.mxu0
      %v8343 = vadd.f32 %v8132, %v8342
      %v8344 = vand.u32 %v7467, 4294901760
      %v8345 = vsub.f32 %v7467, %v8344
      %v8346 = vand.u32 %v8345, 4294901760
      %8347 = vmatmul.f32.gmra.mxu0 %v8346
      %v8348 = vpop.f32.mrf.mxu0
      %v8349 = vadd.f32 %v8137, %v8348
      %v8350 = vand.u32 %v7468, 4294901760
      %v8351 = vsub.f32 %v7468, %v8350
      %v8352 = vand.u32 %v8351, 4294901760
      %8353 = vmatmul.f32.gmra.mxu0 %v8352
      %v8354 = vpop.f32.mrf.mxu0
      %v8355 = vadd.f32 %v8142, %v8354
      %v8356 = vand.u32 %v7469, 4294901760
      %v8357 = vsub.f32 %v7469, %v8356
      %v8358 = vand.u32 %v8357, 4294901760
      %8359 = vmatmul.f32.gmra.mxu0 %v8358
      %v8360 = vpop.f32.mrf.mxu0
      %v8361 = vadd.f32 %v8147, %v8360
      %v8362 = vand.u32 %v7470, 4294901760
      %v8363 = vsub.f32 %v7470, %v8362
      %v8364 = vand.u32 %v8363, 4294901760
      %8365 = vmatmul.f32.gmra.mxu0 %v8364
      %v8366 = vpop.f32.mrf.mxu0
      %v8367 = vadd.f32 %v8152, %v8366
      %v8368 = vand.u32 %v7471, 4294901760
      %v8369 = vsub.f32 %v7471, %v8368
      %v8370 = vand.u32 %v8369, 4294901760
      %8371 = vmatmul.f32.gmra.mxu0 %v8370
      %v8372 = vpop.f32.mrf.mxu0
      %v8373 = vadd.f32 %v8157, %v8372
      %v8374 = vand.u32 %v7472, 4294901760
      %v8375 = vsub.f32 %v7472, %v8374
      %v8376 = vand.u32 %v8375, 4294901760
      %8377 = vmatmul.f32.gmra.mxu0 %v8376
      %v8378 = vpop.f32.mrf.mxu0
      %v8379 = vadd.f32 %v8162, %v8378
      %v8380 = vand.u32 %v7473, 4294901760
      %v8381 = vsub.f32 %v7473, %v8380
      %v8382 = vand.u32 %v8381, 4294901760
      %8383 = vmatmul.f32.gmra.mxu0 %v8382
      %v8384 = vpop.f32.mrf.mxu0
      %v8385 = vadd.f32 %v8167, %v8384
      %v8386 = vand.u32 %v7474, 4294901760
      %v8387 = vsub.f32 %v7474, %v8386
      %v8388 = vand.u32 %v8387, 4294901760
      %8389 = vmatmul.f32.gmra.mxu0 %v8388
      %v8390 = vpop.f32.mrf.mxu0
      %v8391 = vadd.f32 %v8172, %v8390
      %v8392 = vand.u32 %v7475, 4294901760
      %v8393 = vsub.f32 %v7475, %v8392
      %v8394 = vand.u32 %v8393, 4294901760
      %8395 = vmatmul.f32.gmra.mxu0 %v8394
      %v8396 = vpop.f32.mrf.mxu0
      %v8397 = vadd.f32 %v8177, %v8396
      %v8398 = vand.u32 %v7476, 4294901760
      %v8399 = vsub.f32 %v7476, %v8398
      %v8400 = vand.u32 %v8399, 4294901760
      %8401 = vmatmul.f32.gmra.mxu0 %v8400
      %v8402 = vpop.f32.mrf.mxu0
      %v8403 = vadd.f32 %v8182, %v8402
      %v8404 = vand.u32 %v7477, 4294901760
      %v8405 = vsub.f32 %v7477, %v8404
      %v8406 = vand.u32 %v8405, 4294901760
      %8407 = vmatmul.f32.gmra.mxu0 %v8406
      %v8408 = vpop.f32.mrf.mxu0
      %v8409 = vadd.f32 %v8187, %v8408
      %v8410 = vand.u32 %v7478, 4294901760
      %v8411 = vsub.f32 %v7478, %v8410
      %v8412 = vand.u32 %v8411, 4294901760
      %8413 = vmatmul.f32.gmra.mxu0 %v8412
      %v8414 = vpop.f32.mrf.mxu0
      %v8415 = vadd.f32 %v8192, %v8414
      %v8416 = vand.u32 %v7479, 4294901760
      %v8417 = vsub.f32 %v7479, %v8416
      %v8418 = vand.u32 %v8417, 4294901760
      %8419 = vmatmul.f32.gmra.mxu0 %v8418
      %v8420 = vpop.f32.mrf.mxu0
      %v8421 = vadd.f32 %v8197, %v8420
      %v8422 = vand.u32 %v7480, 4294901760
      %v8423 = vsub.f32 %v7480, %v8422
      %v8424 = vand.u32 %v8423, 4294901760
      %8425 = vmatmul.f32.gmra.mxu0 %v8424
      %v8426 = vpop.f32.mrf.mxu0
      %v8427 = vadd.f32 %v8202, %v8426
      %8428 = vdwg.mxu0
      %v8429 = vand.u32 %v186, 4294901760
      %v8430 = vsub.f32 %v186, %v8429
      %v8431 = vand.u32 %v8430, 4294901760
      %8432 = vmatpush.msra.mxu0 %v8431
      %v8433 = vand.u32 %v185, 4294901760
      %v8434 = vsub.f32 %v185, %v8433
      %v8435 = vand.u32 %v8434, 4294901760
      %8436 = vmatpush.msra.mxu0 %v8435
      %v8437 = vand.u32 %v184, 4294901760
      %v8438 = vsub.f32 %v184, %v8437
      %v8439 = vand.u32 %v8438, 4294901760
      %8440 = vmatpush.msra.mxu0 %v8439
      %v8441 = vand.u32 %v183, 4294901760
      %v8442 = vsub.f32 %v183, %v8441
      %v8443 = vand.u32 %v8442, 4294901760
      %8444 = vmatpush.msra.mxu0 %v8443
      %v8445 = vand.u32 %v182, 4294901760
      %v8446 = vsub.f32 %v182, %v8445
      %v8447 = vand.u32 %v8446, 4294901760
      %8448 = vmatpush.msra.mxu0 %v8447
      %v8449 = vand.u32 %v181, 4294901760
      %v8450 = vsub.f32 %v181, %v8449
      %v8451 = vand.u32 %v8450, 4294901760
      %8452 = vmatpush.msra.mxu0 %v8451
      %v8453 = vand.u32 %v180, 4294901760
      %v8454 = vsub.f32 %v180, %v8453
      %v8455 = vand.u32 %v8454, 4294901760
      %8456 = vmatpush.msra.mxu0 %v8455
      %v8457 = vand.u32 %v179, 4294901760
      %v8458 = vsub.f32 %v179, %v8457
      %v8459 = vand.u32 %v8458, 4294901760
      %8460 = vmatpush.msra.mxu0 %v8459
      %v8461 = vand.u32 %v178, 4294901760
      %v8462 = vsub.f32 %v178, %v8461
      %v8463 = vand.u32 %v8462, 4294901760
      %8464 = vmatpush.msra.mxu0 %v8463
      %v8465 = vand.u32 %v177, 4294901760
      %v8466 = vsub.f32 %v177, %v8465
      %v8467 = vand.u32 %v8466, 4294901760
      %8468 = vmatpush.msra.mxu0 %v8467
      %v8469 = vand.u32 %v176, 4294901760
      %v8470 = vsub.f32 %v176, %v8469
      %v8471 = vand.u32 %v8470, 4294901760
      %8472 = vmatpush.msra.mxu0 %v8471
      %v8473 = vand.u32 %v175, 4294901760
      %v8474 = vsub.f32 %v175, %v8473
      %v8475 = vand.u32 %v8474, 4294901760
      %8476 = vmatpush.msra.mxu0 %v8475
      %v8477 = vand.u32 %v174, 4294901760
      %v8478 = vsub.f32 %v174, %v8477
      %v8479 = vand.u32 %v8478, 4294901760
      %8480 = vmatpush.msra.mxu0 %v8479
      %v8481 = vand.u32 %v173, 4294901760
      %v8482 = vsub.f32 %v173, %v8481
      %v8483 = vand.u32 %v8482, 4294901760
      %8484 = vmatpush.msra.mxu0 %v8483
      %v8485 = vand.u32 %v172, 4294901760
      %v8486 = vsub.f32 %v172, %v8485
      %v8487 = vand.u32 %v8486, 4294901760
      %8488 = vmatpush.msra.mxu0 %v8487
      %v8489 = vand.u32 %v171, 4294901760
      %v8490 = vsub.f32 %v171, %v8489
      %v8491 = vand.u32 %v8490, 4294901760
      %8492 = vmatpush.msra.mxu0 %v8491
      %v8493 = vand.u32 %v7449, 4294901760
      %8494 = vmatmul.f32.gmra.mxu0 %v8493
      %v8495 = vpop.f32.mrf.mxu0
      %v8496 = vadd.f32 %v8241, %v8495
      %v8497 = vand.u32 %v7450, 4294901760
      %8498 = vmatmul.f32.gmra.mxu0 %v8497
      %v8499 = vpop.f32.mrf.mxu0
      %v8500 = vadd.f32 %v8247, %v8499
      %v8501 = vand.u32 %v7451, 4294901760
      %8502 = vmatmul.f32.gmra.mxu0 %v8501
      %v8503 = vpop.f32.mrf.mxu0
      %v8504 = vadd.f32 %v8253, %v8503
      %v8505 = vand.u32 %v7452, 4294901760
      %8506 = vmatmul.f32.gmra.mxu0 %v8505
      %v8507 = vpop.f32.mrf.mxu0
      %v8508 = vadd.f32 %v8259, %v8507
      %v8509 = vand.u32 %v7453, 4294901760
      %8510 = vmatmul.f32.gmra.mxu0 %v8509
      %v8511 = vpop.f32.mrf.mxu0
      %v8512 = vadd.f32 %v8265, %v8511
      %v8513 = vand.u32 %v7454, 4294901760
      %8514 = vmatmul.f32.gmra.mxu0 %v8513
      %v8515 = vpop.f32.mrf.mxu0
      %v8516 = vadd.f32 %v8271, %v8515
      %v8517 = vand.u32 %v7455, 4294901760
      %8518 = vmatmul.f32.gmra.mxu0 %v8517
      %v8519 = vpop.f32.mrf.mxu0
      %v8520 = vadd.f32 %v8277, %v8519
      %v8521 = vand.u32 %v7456, 4294901760
      %8522 = vmatmul.f32.gmra.mxu0 %v8521
      %v8523 = vpop.f32.mrf.mxu0
      %v8524 = vadd.f32 %v8283, %v8523
      %v8525 = vand.u32 %v7457, 4294901760
      %8526 = vmatmul.f32.gmra.mxu0 %v8525
      %v8527 = vpop.f32.mrf.mxu0
      %v8528 = vadd.f32 %v8289, %v8527
      %v8529 = vand.u32 %v7458, 4294901760
      %8530 = vmatmul.f32.gmra.mxu0 %v8529
      %v8531 = vpop.f32.mrf.mxu0
      %v8532 = vadd.f32 %v8295, %v8531
      %v8533 = vand.u32 %v7459, 4294901760
      %8534 = vmatmul.f32.gmra.mxu0 %v8533
      %v8535 = vpop.f32.mrf.mxu0
      %v8536 = vadd.f32 %v8301, %v8535
      %v8537 = vand.u32 %v7460, 4294901760
      %8538 = vmatmul.f32.gmra.mxu0 %v8537
      %v8539 = vpop.f32.mrf.mxu0
      %v8540 = vadd.f32 %v8307, %v8539
      %v8541 = vand.u32 %v7461, 4294901760
      %8542 = vmatmul.f32.gmra.mxu0 %v8541
      %v8543 = vpop.f32.mrf.mxu0
      %v8544 = vadd.f32 %v8313, %v8543
      %v8545 = vand.u32 %v7462, 4294901760
      %8546 = vmatmul.f32.gmra.mxu0 %v8545
      %v8547 = vpop.f32.mrf.mxu0
      %v8548 = vadd.f32 %v8319, %v8547
      %v8549 = vand.u32 %v7463, 4294901760
      %8550 = vmatmul.f32.gmra.mxu0 %v8549
      %v8551 = vpop.f32.mrf.mxu0
      %v8552 = vadd.f32 %v8325, %v8551
      %v8553 = vand.u32 %v7464, 4294901760
      %8554 = vmatmul.f32.gmra.mxu0 %v8553
      %v8555 = vpop.f32.mrf.mxu0
      %v8556 = vadd.f32 %v8331, %v8555
      %v8557 = vand.u32 %v7465, 4294901760
      %8558 = vmatmul.f32.gmra.mxu0 %v8557
      %v8559 = vpop.f32.mrf.mxu0
      %v8560 = vadd.f32 %v8337, %v8559
      %v8561 = vand.u32 %v7466, 4294901760
      %8562 = vmatmul.f32.gmra.mxu0 %v8561
      %v8563 = vpop.f32.mrf.mxu0
      %v8564 = vadd.f32 %v8343, %v8563
      %v8565 = vand.u32 %v7467, 4294901760
      %8566 = vmatmul.f32.gmra.mxu0 %v8565
      %v8567 = vpop.f32.mrf.mxu0
      %v8568 = vadd.f32 %v8349, %v8567
      %v8569 = vand.u32 %v7468, 4294901760
      %8570 = vmatmul.f32.gmra.mxu0 %v8569
      %v8571 = vpop.f32.mrf.mxu0
      %v8572 = vadd.f32 %v8355, %v8571
      %v8573 = vand.u32 %v7469, 4294901760
      %8574 = vmatmul.f32.gmra.mxu0 %v8573
      %v8575 = vpop.f32.mrf.mxu0
      %v8576 = vadd.f32 %v8361, %v8575
      %v8577 = vand.u32 %v7470, 4294901760
      %8578 = vmatmul.f32.gmra.mxu0 %v8577
      %v8579 = vpop.f32.mrf.mxu0
      %v8580 = vadd.f32 %v8367, %v8579
      %v8581 = vand.u32 %v7471, 4294901760
      %8582 = vmatmul.f32.gmra.mxu0 %v8581
      %v8583 = vpop.f32.mrf.mxu0
      %v8584 = vadd.f32 %v8373, %v8583
      %v8585 = vand.u32 %v7472, 4294901760
      %8586 = vmatmul.f32.gmra.mxu0 %v8585
      %v8587 = vpop.f32.mrf.mxu0
      %v8588 = vadd.f32 %v8379, %v8587
      %v8589 = vand.u32 %v7473, 4294901760
      %8590 = vmatmul.f32.gmra.mxu0 %v8589
      %v8591 = vpop.f32.mrf.mxu0
      %v8592 = vadd.f32 %v8385, %v8591
      %v8593 = vand.u32 %v7474, 4294901760
      %8594 = vmatmul.f32.gmra.mxu0 %v8593
      %v8595 = vpop.f32.mrf.mxu0
      %v8596 = vadd.f32 %v8391, %v8595
      %v8597 = vand.u32 %v7475, 4294901760
      %8598 = vmatmul.f32.gmra.mxu0 %v8597
      %v8599 = vpop.f32.mrf.mxu0
      %v8600 = vadd.f32 %v8397, %v8599
      %v8601 = vand.u32 %v7476, 4294901760
      %8602 = vmatmul.f32.gmra.mxu0 %v8601
      %v8603 = vpop.f32.mrf.mxu0
      %v8604 = vadd.f32 %v8403, %v8603
      %v8605 = vand.u32 %v7477, 4294901760
      %8606 = vmatmul.f32.gmra.mxu0 %v8605
      %v8607 = vpop.f32.mrf.mxu0
      %v8608 = vadd.f32 %v8409, %v8607
      %v8609 = vand.u32 %v7478, 4294901760
      %8610 = vmatmul.f32.gmra.mxu0 %v8609
      %v8611 = vpop.f32.mrf.mxu0
      %v8612 = vadd.f32 %v8415, %v8611
      %v8613 = vand.u32 %v7479, 4294901760
      %8614 = vmatmul.f32.gmra.mxu0 %v8613
      %v8615 = vpop.f32.mrf.mxu0
      %v8616 = vadd.f32 %v8421, %v8615
      %v8617 = vand.u32 %v7480, 4294901760
      %8618 = vmatmul.f32.gmra.mxu0 %v8617
      %v8619 = vpop.f32.mrf.mxu0
      %v8620 = vadd.f32 %v8427, %v8619
      %8621 = vdwg.mxu0
      %v8622 = vand.u32 %v186, 4294901760
      %8623 = vmatpush.msra.mxu0 %v8622
      %v8624 = vand.u32 %v185, 4294901760
      %8625 = vmatpush.msra.mxu0 %v8624
      %v8626 = vand.u32 %v184, 4294901760
      %8627 = vmatpush.msra.mxu0 %v8626
      %v8628 = vand.u32 %v183, 4294901760
      %8629 = vmatpush.msra.mxu0 %v8628
      %v8630 = vand.u32 %v182, 4294901760
      %8631 = vmatpush.msra.mxu0 %v8630
      %v8632 = vand.u32 %v181, 4294901760
      %8633 = vmatpush.msra.mxu0 %v8632
      %v8634 = vand.u32 %v180, 4294901760
      %8635 = vmatpush.msra.mxu0 %v8634
      %v8636 = vand.u32 %v179, 4294901760
      %8637 = vmatpush.msra.mxu0 %v8636
      %v8638 = vand.u32 %v178, 4294901760
      %8639 = vmatpush.msra.mxu0 %v8638
      %v8640 = vand.u32 %v177, 4294901760
      %8641 = vmatpush.msra.mxu0 %v8640
      %v8642 = vand.u32 %v176, 4294901760
      %8643 = vmatpush.msra.mxu0 %v8642
      %v8644 = vand.u32 %v175, 4294901760
      %8645 = vmatpush.msra.mxu0 %v8644
      %v8646 = vand.u32 %v174, 4294901760
      %8647 = vmatpush.msra.mxu0 %v8646
      %v8648 = vand.u32 %v173, 4294901760
      %8649 = vmatpush.msra.mxu0 %v8648
      %v8650 = vand.u32 %v172, 4294901760
      %8651 = vmatpush.msra.mxu0 %v8650
      %v8652 = vand.u32 %v171, 4294901760
      %8653 = vmatpush.msra.mxu0 %v8652
      %v8654 = vand.u32 %v7449, 4294901760
      %8655 = vmatmul.f32.gmra.mxu0 %v8654
      %v8656 = vpop.f32.mrf.mxu0
      %v8657 = vadd.f32 %v8496, %v8656
      %v8658 = vand.u32 %v7450, 4294901760
      %8659 = vmatmul.f32.gmra.mxu0 %v8658
      %v8660 = vpop.f32.mrf.mxu0
      %v8661 = vadd.f32 %v8500, %v8660
      %v8662 = vand.u32 %v7451, 4294901760
      %8663 = vmatmul.f32.gmra.mxu0 %v8662
      %v8664 = vpop.f32.mrf.mxu0
      %v8665 = vadd.f32 %v8504, %v8664
      %v8666 = vand.u32 %v7452, 4294901760
      %8667 = vmatmul.f32.gmra.mxu0 %v8666
      %v8668 = vpop.f32.mrf.mxu0
      %v8669 = vadd.f32 %v8508, %v8668
      %v8670 = vand.u32 %v7453, 4294901760
      %8671 = vmatmul.f32.gmra.mxu0 %v8670
      %v8672 = vpop.f32.mrf.mxu0
      %v8673 = vadd.f32 %v8512, %v8672
      %v8674 = vand.u32 %v7454, 4294901760
      %8675 = vmatmul.f32.gmra.mxu0 %v8674
      %v8676 = vpop.f32.mrf.mxu0
      %v8677 = vadd.f32 %v8516, %v8676
      %v8678 = vand.u32 %v7455, 4294901760
      %8679 = vmatmul.f32.gmra.mxu0 %v8678
      %v8680 = vpop.f32.mrf.mxu0
      %v8681 = vadd.f32 %v8520, %v8680
      %v8682 = vand.u32 %v7456, 4294901760
      %8683 = vmatmul.f32.gmra.mxu0 %v8682
      %v8684 = vpop.f32.mrf.mxu0
      %v8685 = vadd.f32 %v8524, %v8684
      %v8686 = vand.u32 %v7457, 4294901760
      %8687 = vmatmul.f32.gmra.mxu0 %v8686
      %v8688 = vpop.f32.mrf.mxu0
      %v8689 = vadd.f32 %v8528, %v8688
      %v8690 = vand.u32 %v7458, 4294901760
      %8691 = vmatmul.f32.gmra.mxu0 %v8690
      %v8692 = vpop.f32.mrf.mxu0
      %v8693 = vadd.f32 %v8532, %v8692
      %v8694 = vand.u32 %v7459, 4294901760
      %8695 = vmatmul.f32.gmra.mxu0 %v8694
      %v8696 = vpop.f32.mrf.mxu0
      %v8697 = vadd.f32 %v8536, %v8696
      %v8698 = vand.u32 %v7460, 4294901760
      %8699 = vmatmul.f32.gmra.mxu0 %v8698
      %v8700 = vpop.f32.mrf.mxu0
      %v8701 = vadd.f32 %v8540, %v8700
      %v8702 = vand.u32 %v7461, 4294901760
      %8703 = vmatmul.f32.gmra.mxu0 %v8702
      %v8704 = vpop.f32.mrf.mxu0
      %v8705 = vadd.f32 %v8544, %v8704
      %v8706 = vand.u32 %v7462, 4294901760
      %8707 = vmatmul.f32.gmra.mxu0 %v8706
      %v8708 = vpop.f32.mrf.mxu0
      %v8709 = vadd.f32 %v8548, %v8708
      %v8710 = vand.u32 %v7463, 4294901760
      %8711 = vmatmul.f32.gmra.mxu0 %v8710
      %v8712 = vpop.f32.mrf.mxu0
      %v8713 = vadd.f32 %v8552, %v8712
      %v8714 = vand.u32 %v7464, 4294901760
      %8715 = vmatmul.f32.gmra.mxu0 %v8714
      %v8716 = vpop.f32.mrf.mxu0
      %v8717 = vadd.f32 %v8556, %v8716
      %v8718 = vand.u32 %v7465, 4294901760
      %8719 = vmatmul.f32.gmra.mxu0 %v8718
      %v8720 = vpop.f32.mrf.mxu0
      %v8721 = vadd.f32 %v8560, %v8720
      %v8722 = vand.u32 %v7466, 4294901760
      %8723 = vmatmul.f32.gmra.mxu0 %v8722
      %v8724 = vpop.f32.mrf.mxu0
      %v8725 = vadd.f32 %v8564, %v8724
      %v8726 = vand.u32 %v7467, 4294901760
      %8727 = vmatmul.f32.gmra.mxu0 %v8726
      %v8728 = vpop.f32.mrf.mxu0
      %v8729 = vadd.f32 %v8568, %v8728
      %v8730 = vand.u32 %v7468, 4294901760
      %8731 = vmatmul.f32.gmra.mxu0 %v8730
      %v8732 = vpop.f32.mrf.mxu0
      %v8733 = vadd.f32 %v8572, %v8732
      %v8734 = vand.u32 %v7469, 4294901760
      %8735 = vmatmul.f32.gmra.mxu0 %v8734
      %v8736 = vpop.f32.mrf.mxu0
      %v8737 = vadd.f32 %v8576, %v8736
      %v8738 = vand.u32 %v7470, 4294901760
      %8739 = vmatmul.f32.gmra.mxu0 %v8738
      %v8740 = vpop.f32.mrf.mxu0
      %v8741 = vadd.f32 %v8580, %v8740
      %v8742 = vand.u32 %v7471, 4294901760
      %8743 = vmatmul.f32.gmra.mxu0 %v8742
      %v8744 = vpop.f32.mrf.mxu0
      %v8745 = vadd.f32 %v8584, %v8744
      %v8746 = vand.u32 %v7472, 4294901760
      %8747 = vmatmul.f32.gmra.mxu0 %v8746
      %v8748 = vpop.f32.mrf.mxu0
      %v8749 = vadd.f32 %v8588, %v8748
      %v8750 = vand.u32 %v7473, 4294901760
      %8751 = vmatmul.f32.gmra.mxu0 %v8750
      %v8752 = vpop.f32.mrf.mxu0
      %v8753 = vadd.f32 %v8592, %v8752
      %v8754 = vand.u32 %v7474, 4294901760
      %8755 = vmatmul.f32.gmra.mxu0 %v8754
      %v8756 = vpop.f32.mrf.mxu0
      %v8757 = vadd.f32 %v8596, %v8756
      %v8758 = vand.u32 %v7475, 4294901760
      %8759 = vmatmul.f32.gmra.mxu0 %v8758
      %v8760 = vpop.f32.mrf.mxu0
      %v8761 = vadd.f32 %v8600, %v8760
      %v8762 = vand.u32 %v7476, 4294901760
      %8763 = vmatmul.f32.gmra.mxu0 %v8762
      %v8764 = vpop.f32.mrf.mxu0
      %v8765 = vadd.f32 %v8604, %v8764
      %v8766 = vand.u32 %v7477, 4294901760
      %8767 = vmatmul.f32.gmra.mxu0 %v8766
      %v8768 = vpop.f32.mrf.mxu0
      %v8769 = vadd.f32 %v8608, %v8768
      %v8770 = vand.u32 %v7478, 4294901760
      %8771 = vmatmul.f32.gmra.mxu0 %v8770
      %v8772 = vpop.f32.mrf.mxu0
      %v8773 = vadd.f32 %v8612, %v8772
      %v8774 = vand.u32 %v7479, 4294901760
      %8775 = vmatmul.f32.gmra.mxu0 %v8774
      %v8776 = vpop.f32.mrf.mxu0
      %v8777 = vadd.f32 %v8616, %v8776
      %v8778 = vand.u32 %v7480, 4294901760
      %8779 = vmatmul.f32.gmra.mxu0 %v8778
      %v8780 = vpop.f32.mrf.mxu0
      %v8781 = vadd.f32 %v8620, %v8780
      %8782 = vdwg.mxu0
      %v8783 = vadd.f32 %v6742, %v8657
      %v8784 = vadd.f32 %v6746, %v8661
      %v8785 = vadd.f32 %v6750, %v8665
      %v8786 = vadd.f32 %v6754, %v8669
      %v8787 = vadd.f32 %v6758, %v8673
      %v8788 = vadd.f32 %v6762, %v8677
      %v8789 = vadd.f32 %v6766, %v8681
      %v8790 = vadd.f32 %v6770, %v8685
      %v8791 = vadd.f32 %v6774, %v8689
      %v8792 = vadd.f32 %v6778, %v8693
      %v8793 = vadd.f32 %v6782, %v8697
      %v8794 = vadd.f32 %v6786, %v8701
      %v8795 = vadd.f32 %v6790, %v8705
      %v8796 = vadd.f32 %v6794, %v8709
      %v8797 = vadd.f32 %v6798, %v8713
      %v8798 = vadd.f32 %v6802, %v8717
      %v8799 = vadd.f32 %v6806, %v8721
      %v8800 = vadd.f32 %v6810, %v8725
      %v8801 = vadd.f32 %v6814, %v8729
      %v8802 = vadd.f32 %v6818, %v8733
      %v8803 = vadd.f32 %v6822, %v8737
      %v8804 = vadd.f32 %v6826, %v8741
      %v8805 = vadd.f32 %v6830, %v8745
      %v8806 = vadd.f32 %v6834, %v8749
      %v8807 = vadd.f32 %v6838, %v8753
      %v8808 = vadd.f32 %v6842, %v8757
      %v8809 = vadd.f32 %v6846, %v8761
      %v8810 = vadd.f32 %v6850, %v8765
      %v8811 = vadd.f32 %v6854, %v8769
      %v8812 = vadd.f32 %v6858, %v8773
      %v8813 = vadd.f32 %v6862, %v8777
      %v8814 = vadd.f32 %v6866, %v8781
      %v8815 = vmax.f32 %v8783, %v8787
      %v8816 = vmax.f32 %v8784, %v8788
      %v8817 = vmax.f32 %v8785, %v8789
      %v8818 = vmax.f32 %v8786, %v8790
      %v8819 = vmax.f32 %v8815, %v8791
      %v8820 = vmax.f32 %v8816, %v8792
      %v8821 = vmax.f32 %v8817, %v8793
      %v8822 = vmax.f32 %v8818, %v8794
      %v8823 = vmax.f32 %v8819, %v8795
      %v8824 = vmax.f32 %v8820, %v8796
      %v8825 = vmax.f32 %v8821, %v8797
      %v8826 = vmax.f32 %v8822, %v8798
      %v8827 = vmax.f32 %v8823, %v8799
      %v8828 = vmax.f32 %v8824, %v8800
      %v8829 = vmax.f32 %v8825, %v8801
      %v8830 = vmax.f32 %v8826, %v8802
      %v8831 = vmax.f32 %v8827, %v8803
      %v8832 = vmax.f32 %v8828, %v8804
      %v8833 = vmax.f32 %v8829, %v8805
      %v8834 = vmax.f32 %v8830, %v8806
      %v8835 = vmax.f32 %v8831, %v8807
      %v8836 = vmax.f32 %v8832, %v8808
      %v8837 = vmax.f32 %v8833, %v8809
      %v8838 = vmax.f32 %v8834, %v8810
      %v8839 = vmax.f32 %v8835, %v8811
      %v8840 = vmax.f32 %v8836, %v8812
      %v8841 = vmax.f32 %v8837, %v8813
      %v8842 = vmax.f32 %v8838, %v8814
      %v8843 = vmax.f32 %v8839, %v8840
      %v8844 = vmax.f32 %v8841, %v8842
      %v8845 = vmax.f32 %v8843, %v8844
      %v8846 = vsub.f32 %v8783, %v8845
      %v8847 = vsub.f32 %v8784, %v8845
      %v8848 = vsub.f32 %v8785, %v8845
      %v8849 = vsub.f32 %v8786, %v8845
      %v8850 = vsub.f32 %v8787, %v8845
      %v8851 = vsub.f32 %v8788, %v8845
      %v8852 = vsub.f32 %v8789, %v8845
      %v8853 = vsub.f32 %v8790, %v8845
      %v8854 = vsub.f32 %v8791, %v8845
      %v8855 = vsub.f32 %v8792, %v8845
      %v8856 = vsub.f32 %v8793, %v8845
      %v8857 = vsub.f32 %v8794, %v8845
      %v8858 = vsub.f32 %v8795, %v8845
      %v8859 = vsub.f32 %v8796, %v8845
      %v8860 = vsub.f32 %v8797, %v8845
      %v8861 = vsub.f32 %v8798, %v8845
      %v8862 = vsub.f32 %v8799, %v8845
      %v8863 = vsub.f32 %v8800, %v8845
      %v8864 = vsub.f32 %v8801, %v8845
      %v8865 = vsub.f32 %v8802, %v8845
      %v8866 = vsub.f32 %v8803, %v8845
      %v8867 = vsub.f32 %v8804, %v8845
      %v8868 = vsub.f32 %v8805, %v8845
      %v8869 = vsub.f32 %v8806, %v8845
      %v8870 = vsub.f32 %v8807, %v8845
      %v8871 = vsub.f32 %v8808, %v8845
      %v8872 = vsub.f32 %v8809, %v8845
      %v8873 = vsub.f32 %v8810, %v8845
      %v8874 = vsub.f32 %v8811, %v8845
      %v8875 = vsub.f32 %v8812, %v8845
      %v8876 = vsub.f32 %v8813, %v8845
      %v8877 = vsub.f32 %v8814, %v8845
      %v8878 = vmul.f32 %v8846, 1.442695
      %v8879 = vpow.pop %v8878
      %v8880 = vmul.f32 %v8847, 1.442695
      %v8881 = vpow.pop %v8880
      %v8882 = vmul.f32 %v8848, 1.442695
      %v8883 = vpow.pop %v8882
      %v8884 = vmul.f32 %v8849, 1.442695
      %v8885 = vpow.pop %v8884
      %v8886 = vmul.f32 %v8850, 1.442695
      %v8887 = vpow.pop %v8886
      %v8888 = vmul.f32 %v8851, 1.442695
      %v8889 = vpow.pop %v8888
      %v8890 = vmul.f32 %v8852, 1.442695
      %v8891 = vpow.pop %v8890
      %v8892 = vmul.f32 %v8853, 1.442695
      %v8893 = vpow.pop %v8892
      %v8894 = vmul.f32 %v8854, 1.442695
      %v8895 = vpow.pop %v8894
      %v8896 = vmul.f32 %v8855, 1.442695
      %v8897 = vpow.pop %v8896
      %v8898 = vmul.f32 %v8856, 1.442695
      %v8899 = vpow.pop %v8898
      %v8900 = vmul.f32 %v8857, 1.442695
      %v8901 = vpow.pop %v8900
      %v8902 = vmul.f32 %v8858, 1.442695
      %v8903 = vpow.pop %v8902
      %v8904 = vmul.f32 %v8859, 1.442695
      %v8905 = vpow.pop %v8904
      %v8906 = vmul.f32 %v8860, 1.442695
      %v8907 = vpow.pop %v8906
      %v8908 = vmul.f32 %v8861, 1.442695
      %v8909 = vpow.pop %v8908
      %v8910 = vmul.f32 %v8862, 1.442695
      %v8911 = vpow.pop %v8910
      %v8912 = vmul.f32 %v8863, 1.442695
      %v8913 = vpow.pop %v8912
      %v8914 = vmul.f32 %v8864, 1.442695
      %v8915 = vpow.pop %v8914
      %v8916 = vmul.f32 %v8865, 1.442695
      %v8917 = vpow.pop %v8916
      %v8918 = vmul.f32 %v8866, 1.442695
      %v8919 = vpow.pop %v8918
      %v8920 = vmul.f32 %v8867, 1.442695
      %v8921 = vpow.pop %v8920
      %v8922 = vmul.f32 %v8868, 1.442695
      %v8923 = vpow.pop %v8922
      %v8924 = vmul.f32 %v8869, 1.442695
      %v8925 = vpow.pop %v8924
      %v8926 = vmul.f32 %v8870, 1.442695
      %v8927 = vpow.pop %v8926
      %v8928 = vmul.f32 %v8871, 1.442695
      %v8929 = vpow.pop %v8928
      %v8930 = vmul.f32 %v8872, 1.442695
      %v8931 = vpow.pop %v8930
      %v8932 = vmul.f32 %v8873, 1.442695
      %v8933 = vpow.pop %v8932
      %v8934 = vmul.f32 %v8874, 1.442695
      %v8935 = vpow.pop %v8934
      %v8936 = vmul.f32 %v8875, 1.442695
      %v8937 = vpow.pop %v8936
      %v8938 = vmul.f32 %v8876, 1.442695
      %v8939 = vpow.pop %v8938
      %v8940 = vmul.f32 %v8877, 1.442695
      %v8941 = vpow.pop %v8940
      %v8942 = vadd.f32 %v8879, %v8881
      %v8943 = vadd.f32 %v8942, %v8883
      %v8944 = vadd.f32 %v8943, %v8885
      %v8945 = vadd.f32 %v8944, %v8887
      %v8946 = vadd.f32 %v8945, %v8889
      %v8947 = vadd.f32 %v8946, %v8891
      %v8948 = vadd.f32 %v8947, %v8893
      %v8949 = vadd.f32 %v8948, %v8895
      %v8950 = vadd.f32 %v8949, %v8897
      %v8951 = vadd.f32 %v8950, %v8899
      %v8952 = vadd.f32 %v8951, %v8901
      %v8953 = vadd.f32 %v8952, %v8903
      %v8954 = vadd.f32 %v8953, %v8905
      %v8955 = vadd.f32 %v8954, %v8907
      %v8956 = vadd.f32 %v8955, %v8909
      %v8957 = vadd.f32 %v8956, %v8911
      %v8958 = vadd.f32 %v8957, %v8913
      %v8959 = vadd.f32 %v8958, %v8915
      %v8960 = vadd.f32 %v8959, %v8917
      %v8961 = vadd.f32 %v8960, %v8919
      %v8962 = vadd.f32 %v8961, %v8921
      %v8963 = vadd.f32 %v8962, %v8923
      %v8964 = vadd.f32 %v8963, %v8925
      %v8965 = vadd.f32 %v8964, %v8927
      %v8966 = vadd.f32 %v8965, %v8929
      %v8967 = vadd.f32 %v8966, %v8931
      %v8968 = vadd.f32 %v8967, %v8933
      %v8969 = vadd.f32 %v8968, %v8935
      %v8970 = vadd.f32 %v8969, %v8937
      %v8971 = vadd.f32 %v8970, %v8939
      %v8972 = vadd.f32 %v8971, %v8941
      %v8973 = vmul.f32 %v8879, %v5112
      %v8974 = vmul.f32 %v8881, %v5113
      %v8975 = vmul.f32 %v8883, %v5114
      %v8976 = vmul.f32 %v8885, %v5115
      %v8977 = vmul.f32 %v8887, %v5116
      %v8978 = vmul.f32 %v8889, %v5117
      %v8979 = vmul.f32 %v8891, %v5118
      %v8980 = vmul.f32 %v8893, %v5119
      %v8981 = vmul.f32 %v8895, %v5120
      %v8982 = vmul.f32 %v8897, %v5121
      %v8983 = vmul.f32 %v8899, %v5122
      %v8984 = vmul.f32 %v8901, %v5123
      %v8985 = vmul.f32 %v8903, %v5124
      %v8986 = vmul.f32 %v8905, %v5125
      %v8987 = vmul.f32 %v8907, %v5126
      %v8988 = vmul.f32 %v8909, %v5127
      %v8989 = vmul.f32 %v8911, %v5128
      %v8990 = vmul.f32 %v8913, %v5129
      %v8991 = vmul.f32 %v8915, %v5130
      %v8992 = vmul.f32 %v8917, %v5131
      %v8993 = vmul.f32 %v8919, %v5132
      %v8994 = vmul.f32 %v8921, %v5133
      %v8995 = vmul.f32 %v8923, %v5134
      %v8996 = vmul.f32 %v8925, %v5135
      %v8997 = vmul.f32 %v8927, %v5136
      %v8998 = vmul.f32 %v8929, %v5137
      %v8999 = vmul.f32 %v8931, %v5138
      %v9000 = vmul.f32 %v8933, %v5139
      %v9001 = vmul.f32 %v8935, %v5140
      %v9002 = vmul.f32 %v8937, %v5141
      %v9003 = vmul.f32 %v8939, %v5142
      %v9004 = vmul.f32 %v8941, %v5143
      %v9005 = vadd.f32 %v8973, %v8974
      %v9006 = vadd.f32 %v9005, %v8975
      %v9007 = vadd.f32 %v9006, %v8976
      %v9008 = vadd.f32 %v9007, %v8977
      %v9009 = vadd.f32 %v9008, %v8978
      %v9010 = vadd.f32 %v9009, %v8979
      %v9011 = vadd.f32 %v9010, %v8980
      %v9012 = vadd.f32 %v9011, %v8981
      %v9013 = vadd.f32 %v9012, %v8982
      %v9014 = vadd.f32 %v9013, %v8983
      %v9015 = vadd.f32 %v9014, %v8984
      %v9016 = vadd.f32 %v9015, %v8985
      %v9017 = vadd.f32 %v9016, %v8986
      %v9018 = vadd.f32 %v9017, %v8987
      %v9019 = vadd.f32 %v9018, %v8988
      %v9020 = vadd.f32 %v9019, %v8989
      %v9021 = vadd.f32 %v9020, %v8990
      %v9022 = vadd.f32 %v9021, %v8991
      %v9023 = vadd.f32 %v9022, %v8992
      %v9024 = vadd.f32 %v9023, %v8993
      %v9025 = vadd.f32 %v9024, %v8994
      %v9026 = vadd.f32 %v9025, %v8995
      %v9027 = vadd.f32 %v9026, %v8996
      %v9028 = vadd.f32 %v9027, %v8997
      %v9029 = vadd.f32 %v9028, %v8998
      %v9030 = vadd.f32 %v9029, %v8999
      %v9031 = vadd.f32 %v9030, %v9000
      %v9032 = vadd.f32 %v9031, %v9001
      %v9033 = vadd.f32 %v9032, %v9002
      %v9034 = vadd.f32 %v9033, %v9003
      %v9035 = vadd.f32 %v9034, %v9004
      %v9036 = vrcp.pop %v8972
      %v9037 = vmul.f32 %v9035, %v9036
      %v9038 = vmul.f32 %v9037, %v9037
      %v9039 = vand.u32 %v186, 4294901760
      %9040 = vmatpush.msra.mxu0 %v9039
      %v9041 = vand.u32 %v185, 4294901760
      %9042 = vmatpush.msra.mxu0 %v9041
      %v9043 = vand.u32 %v184, 4294901760
      %9044 = vmatpush.msra.mxu0 %v9043
      %v9045 = vand.u32 %v183, 4294901760
      %9046 = vmatpush.msra.mxu0 %v9045
      %v9047 = vand.u32 %v182, 4294901760
      %9048 = vmatpush.msra.mxu0 %v9047
      %v9049 = vand.u32 %v181, 4294901760
      %9050 = vmatpush.msra.mxu0 %v9049
      %v9051 = vand.u32 %v180, 4294901760
      %9052 = vmatpush.msra.mxu0 %v9051
      %v9053 = vand.u32 %v179, 4294901760
      %9054 = vmatpush.msra.mxu0 %v9053
      %v9055 = vand.u32 %v178, 4294901760
      %9056 = vmatpush.msra.mxu0 %v9055
      %v9057 = vand.u32 %v177, 4294901760
      %9058 = vmatpush.msra.mxu0 %v9057
      %v9059 = vand.u32 %v176, 4294901760
      %9060 = vmatpush.msra.mxu0 %v9059
      %v9061 = vand.u32 %v175, 4294901760
      %9062 = vmatpush.msra.mxu0 %v9061
      %v9063 = vand.u32 %v174, 4294901760
      %9064 = vmatpush.msra.mxu0 %v9063
      %v9065 = vand.u32 %v173, 4294901760
      %9066 = vmatpush.msra.mxu0 %v9065
      %v9067 = vand.u32 %v172, 4294901760
      %9068 = vmatpush.msra.mxu0 %v9067
      %v9069 = vand.u32 %v171, 4294901760
      %9070 = vmatpush.msra.mxu0 %v9069
      %v9071 = vand.u32 %v9038, 4294901760
      %v9072 = vsub.f32 %v9038, %v9071
      %v9073 = vand.u32 %v9072, 4294901760
      %v9074 = vsub.f32 %v9072, %v9073
      %v9075 = vand.u32 %v9074, 4294901760
      %9076 = vmatmul.f32.gmra.mxu0 %v9075
      %v9077 = vpop.f32.mrf.mxu0
      %v9078 = vadd.f32 0.0, %v9077
      %9079 = vdwg.mxu0
      %v9080 = vand.u32 %v186, 4294901760
      %v9081 = vsub.f32 %v186, %v9080
      %v9082 = vand.u32 %v9081, 4294901760
      %v9083 = vsub.f32 %v9081, %v9082
      %v9084 = vand.u32 %v9083, 4294901760
      %9085 = vmatpush.msra.mxu0 %v9084
      %v9086 = vand.u32 %v185, 4294901760
      %v9087 = vsub.f32 %v185, %v9086
      %v9088 = vand.u32 %v9087, 4294901760
      %v9089 = vsub.f32 %v9087, %v9088
      %v9090 = vand.u32 %v9089, 4294901760
      %9091 = vmatpush.msra.mxu0 %v9090
      %v9092 = vand.u32 %v184, 4294901760
      %v9093 = vsub.f32 %v184, %v9092
      %v9094 = vand.u32 %v9093, 4294901760
      %v9095 = vsub.f32 %v9093, %v9094
      %v9096 = vand.u32 %v9095, 4294901760
      %9097 = vmatpush.msra.mxu0 %v9096
      %v9098 = vand.u32 %v183, 4294901760
      %v9099 = vsub.f32 %v183, %v9098
      %v9100 = vand.u32 %v9099, 4294901760
      %v9101 = vsub.f32 %v9099, %v9100
      %v9102 = vand.u32 %v9101, 4294901760
      %9103 = vmatpush.msra.mxu0 %v9102
      %v9104 = vand.u32 %v182, 4294901760
      %v9105 = vsub.f32 %v182, %v9104
      %v9106 = vand.u32 %v9105, 4294901760
      %v9107 = vsub.f32 %v9105, %v9106
      %v9108 = vand.u32 %v9107, 4294901760
      %9109 = vmatpush.msra.mxu0 %v9108
      %v9110 = vand.u32 %v181, 4294901760
      %v9111 = vsub.f32 %v181, %v9110
      %v9112 = vand.u32 %v9111, 4294901760
      %v9113 = vsub.f32 %v9111, %v9112
      %v9114 = vand.u32 %v9113, 4294901760
      %9115 = vmatpush.msra.mxu0 %v9114
      %v9116 = vand.u32 %v180, 4294901760
      %v9117 = vsub.f32 %v180, %v9116
      %v9118 = vand.u32 %v9117, 4294901760
      %v9119 = vsub.f32 %v9117, %v9118
      %v9120 = vand.u32 %v9119, 4294901760
      %9121 = vmatpush.msra.mxu0 %v9120
      %v9122 = vand.u32 %v179, 4294901760
      %v9123 = vsub.f32 %v179, %v9122
      %v9124 = vand.u32 %v9123, 4294901760
      %v9125 = vsub.f32 %v9123, %v9124
      %v9126 = vand.u32 %v9125, 4294901760
      %9127 = vmatpush.msra.mxu0 %v9126
      %v9128 = vand.u32 %v178, 4294901760
      %v9129 = vsub.f32 %v178, %v9128
      %v9130 = vand.u32 %v9129, 4294901760
      %v9131 = vsub.f32 %v9129, %v9130
      %v9132 = vand.u32 %v9131, 4294901760
      %9133 = vmatpush.msra.mxu0 %v9132
      %v9134 = vand.u32 %v177, 4294901760
      %v9135 = vsub.f32 %v177, %v9134
      %v9136 = vand.u32 %v9135, 4294901760
      %v9137 = vsub.f32 %v9135, %v9136
      %v9138 = vand.u32 %v9137, 4294901760
      %9139 = vmatpush.msra.mxu0 %v9138
      %v9140 = vand.u32 %v176, 4294901760
      %v9141 = vsub.f32 %v176, %v9140
      %v9142 = vand.u32 %v9141, 4294901760
      %v9143 = vsub.f32 %v9141, %v9142
      %v9144 = vand.u32 %v9143, 4294901760
      %9145 = vmatpush.msra.mxu0 %v9144
      %v9146 = vand.u32 %v175, 4294901760
      %v9147 = vsub.f32 %v175, %v9146
      %v9148 = vand.u32 %v9147, 4294901760
      %v9149 = vsub.f32 %v9147, %v9148
      %v9150 = vand.u32 %v9149, 4294901760
      %9151 = vmatpush.msra.mxu0 %v9150
      %v9152 = vand.u32 %v174, 4294901760
      %v9153 = vsub.f32 %v174, %v9152
      %v9154 = vand.u32 %v9153, 4294901760
      %v9155 = vsub.f32 %v9153, %v9154
      %v9156 = vand.u32 %v9155, 4294901760
      %9157 = vmatpush.msra.mxu0 %v9156
      %v9158 = vand.u32 %v173, 4294901760
      %v9159 = vsub.f32 %v173, %v9158
      %v9160 = vand.u32 %v9159, 4294901760
      %v9161 = vsub.f32 %v9159, %v9160
      %v9162 = vand.u32 %v9161, 4294901760
      %9163 = vmatpush.msra.mxu0 %v9162
      %v9164 = vand.u32 %v172, 4294901760
      %v9165 = vsub.f32 %v172, %v9164
      %v9166 = vand.u32 %v9165, 4294901760
      %v9167 = vsub.f32 %v9165, %v9166
      %v9168 = vand.u32 %v9167, 4294901760
      %9169 = vmatpush.msra.mxu0 %v9168
      %v9170 = vand.u32 %v171, 4294901760
      %v9171 = vsub.f32 %v171, %v9170
      %v9172 = vand.u32 %v9171, 4294901760
      %v9173 = vsub.f32 %v9171, %v9172
      %v9174 = vand.u32 %v9173, 4294901760
      %9175 = vmatpush.msra.mxu0 %v9174
      %v9176 = vand.u32 %v9038, 4294901760
      %9177 = vmatmul.f32.gmra.mxu0 %v9176
      %v9178 = vpop.f32.mrf.mxu0
      %v9179 = vadd.f32 %v9078, %v9178
      %9180 = vdwg.mxu0
      %v9181 = vand.u32 %v186, 4294901760
      %v9182 = vsub.f32 %v186, %v9181
      %9183 = vmatpush.msra.mxu0 %v9182
      %v9184 = vand.u32 %v185, 4294901760
      %v9185 = vsub.f32 %v185, %v9184
      %9186 = vmatpush.msra.mxu0 %v9185
      %v9187 = vand.u32 %v184, 4294901760
      %v9188 = vsub.f32 %v184, %v9187
      %9189 = vmatpush.msra.mxu0 %v9188
      %v9190 = vand.u32 %v183, 4294901760
      %v9191 = vsub.f32 %v183, %v9190
      %9192 = vmatpush.msra.mxu0 %v9191
      %v9193 = vand.u32 %v182, 4294901760
      %v9194 = vsub.f32 %v182, %v9193
      %9195 = vmatpush.msra.mxu0 %v9194
      %v9196 = vand.u32 %v181, 4294901760
      %v9197 = vsub.f32 %v181, %v9196
      %9198 = vmatpush.msra.mxu0 %v9197
      %v9199 = vand.u32 %v180, 4294901760
      %v9200 = vsub.f32 %v180, %v9199
      %9201 = vmatpush.msra.mxu0 %v9200
      %v9202 = vand.u32 %v179, 4294901760
      %v9203 = vsub.f32 %v179, %v9202
      %9204 = vmatpush.msra.mxu0 %v9203
      %v9205 = vand.u32 %v178, 4294901760
      %v9206 = vsub.f32 %v178, %v9205
      %9207 = vmatpush.msra.mxu0 %v9206
      %v9208 = vand.u32 %v177, 4294901760
      %v9209 = vsub.f32 %v177, %v9208
      %9210 = vmatpush.msra.mxu0 %v9209
      %v9211 = vand.u32 %v176, 4294901760
      %v9212 = vsub.f32 %v176, %v9211
      %9213 = vmatpush.msra.mxu0 %v9212
      %v9214 = vand.u32 %v175, 4294901760
      %v9215 = vsub.f32 %v175, %v9214
      %9216 = vmatpush.msra.mxu0 %v9215
      %v9217 = vand.u32 %v174, 4294901760
      %v9218 = vsub.f32 %v174, %v9217
      %9219 = vmatpush.msra.mxu0 %v9218
      %v9220 = vand.u32 %v173, 4294901760
      %v9221 = vsub.f32 %v173, %v9220
      %9222 = vmatpush.msra.mxu0 %v9221
      %v9223 = vand.u32 %v172, 4294901760
      %v9224 = vsub.f32 %v172, %v9223
      %9225 = vmatpush.msra.mxu0 %v9224
      %v9226 = vand.u32 %v171, 4294901760
      %v9227 = vsub.f32 %v171, %v9226
      %9228 = vmatpush.msra.mxu0 %v9227
      %v9229 = vand.u32 %v9038, 4294901760
      %v9230 = vsub.f32 %v9038, %v9229
      %9231 = vmatmul.f32.gmra.mxu0 %v9230
      %v9232 = vpop.f32.mrf.mxu0
      %v9233 = vadd.f32 %v9179, %v9232
      %9234 = vdwg.mxu0
      %v9235 = vand.u32 %v186, 4294901760
      %9236 = vmatpush.msra.mxu0 %v9235
      %v9237 = vand.u32 %v185, 4294901760
      %9238 = vmatpush.msra.mxu0 %v9237
      %v9239 = vand.u32 %v184, 4294901760
      %9240 = vmatpush.msra.mxu0 %v9239
      %v9241 = vand.u32 %v183, 4294901760
      %9242 = vmatpush.msra.mxu0 %v9241
      %v9243 = vand.u32 %v182, 4294901760
      %9244 = vmatpush.msra.mxu0 %v9243
      %v9245 = vand.u32 %v181, 4294901760
      %9246 = vmatpush.msra.mxu0 %v9245
      %v9247 = vand.u32 %v180, 4294901760
      %9248 = vmatpush.msra.mxu0 %v9247
      %v9249 = vand.u32 %v179, 4294901760
      %9250 = vmatpush.msra.mxu0 %v9249
      %v9251 = vand.u32 %v178, 4294901760
      %9252 = vmatpush.msra.mxu0 %v9251
      %v9253 = vand.u32 %v177, 4294901760
      %9254 = vmatpush.msra.mxu0 %v9253
      %v9255 = vand.u32 %v176, 4294901760
      %9256 = vmatpush.msra.mxu0 %v9255
      %v9257 = vand.u32 %v175, 4294901760
      %9258 = vmatpush.msra.mxu0 %v9257
      %v9259 = vand.u32 %v174, 4294901760
      %9260 = vmatpush.msra.mxu0 %v9259
      %v9261 = vand.u32 %v173, 4294901760
      %9262 = vmatpush.msra.mxu0 %v9261
      %v9263 = vand.u32 %v172, 4294901760
      %9264 = vmatpush.msra.mxu0 %v9263
      %v9265 = vand.u32 %v171, 4294901760
      %9266 = vmatpush.msra.mxu0 %v9265
      %v9267 = vand.u32 %v9038, 4294901760
      %v9268 = vsub.f32 %v9038, %v9267
      %v9269 = vand.u32 %v9268, 4294901760
      %9270 = vmatmul.f32.gmra.mxu0 %v9269
      %v9271 = vpop.f32.mrf.mxu0
      %v9272 = vadd.f32 %v9233, %v9271
      %9273 = vdwg.mxu0
      %v9274 = vand.u32 %v186, 4294901760
      %v9275 = vsub.f32 %v186, %v9274
      %v9276 = vand.u32 %v9275, 4294901760
      %9277 = vmatpush.msra.mxu0 %v9276
      %v9278 = vand.u32 %v185, 4294901760
      %v9279 = vsub.f32 %v185, %v9278
      %v9280 = vand.u32 %v9279, 4294901760
      %9281 = vmatpush.msra.mxu0 %v9280
      %v9282 = vand.u32 %v184, 4294901760
      %v9283 = vsub.f32 %v184, %v9282
      %v9284 = vand.u32 %v9283, 4294901760
      %9285 = vmatpush.msra.mxu0 %v9284
      %v9286 = vand.u32 %v183, 4294901760
      %v9287 = vsub.f32 %v183, %v9286
      %v9288 = vand.u32 %v9287, 4294901760
      %9289 = vmatpush.msra.mxu0 %v9288
      %v9290 = vand.u32 %v182, 4294901760
      %v9291 = vsub.f32 %v182, %v9290
      %v9292 = vand.u32 %v9291, 4294901760
      %9293 = vmatpush.msra.mxu0 %v9292
      %v9294 = vand.u32 %v181, 4294901760
      %v9295 = vsub.f32 %v181, %v9294
      %v9296 = vand.u32 %v9295, 4294901760
      %9297 = vmatpush.msra.mxu0 %v9296
      %v9298 = vand.u32 %v180, 4294901760
      %v9299 = vsub.f32 %v180, %v9298
      %v9300 = vand.u32 %v9299, 4294901760
      %9301 = vmatpush.msra.mxu0 %v9300
      %v9302 = vand.u32 %v179, 4294901760
      %v9303 = vsub.f32 %v179, %v9302
      %v9304 = vand.u32 %v9303, 4294901760
      %9305 = vmatpush.msra.mxu0 %v9304
      %v9306 = vand.u32 %v178, 4294901760
      %v9307 = vsub.f32 %v178, %v9306
      %v9308 = vand.u32 %v9307, 4294901760
      %9309 = vmatpush.msra.mxu0 %v9308
      %v9310 = vand.u32 %v177, 4294901760
      %v9311 = vsub.f32 %v177, %v9310
      %v9312 = vand.u32 %v9311, 4294901760
      %9313 = vmatpush.msra.mxu0 %v9312
      %v9314 = vand.u32 %v176, 4294901760
      %v9315 = vsub.f32 %v176, %v9314
      %v9316 = vand.u32 %v9315, 4294901760
      %9317 = vmatpush.msra.mxu0 %v9316
      %v9318 = vand.u32 %v175, 4294901760
      %v9319 = vsub.f32 %v175, %v9318
      %v9320 = vand.u32 %v9319, 4294901760
      %9321 = vmatpush.msra.mxu0 %v9320
      %v9322 = vand.u32 %v174, 4294901760
      %v9323 = vsub.f32 %v174, %v9322
      %v9324 = vand.u32 %v9323, 4294901760
      %9325 = vmatpush.msra.mxu0 %v9324
      %v9326 = vand.u32 %v173, 4294901760
      %v9327 = vsub.f32 %v173, %v9326
      %v9328 = vand.u32 %v9327, 4294901760
      %9329 = vmatpush.msra.mxu0 %v9328
      %v9330 = vand.u32 %v172, 4294901760
      %v9331 = vsub.f32 %v172, %v9330
      %v9332 = vand.u32 %v9331, 4294901760
      %9333 = vmatpush.msra.mxu0 %v9332
      %v9334 = vand.u32 %v171, 4294901760
      %v9335 = vsub.f32 %v171, %v9334
      %v9336 = vand.u32 %v9335, 4294901760
      %9337 = vmatpush.msra.mxu0 %v9336
      %v9338 = vand.u32 %v9038, 4294901760
      %9339 = vmatmul.f32.gmra.mxu0 %v9338
      %v9340 = vpop.f32.mrf.mxu0
      %v9341 = vadd.f32 %v9272, %v9340
      %9342 = vdwg.mxu0
      %v9343 = vand.u32 %v186, 4294901760
      %9344 = vmatpush.msra.mxu0 %v9343
      %v9345 = vand.u32 %v185, 4294901760
      %9346 = vmatpush.msra.mxu0 %v9345
      %v9347 = vand.u32 %v184, 4294901760
      %9348 = vmatpush.msra.mxu0 %v9347
      %v9349 = vand.u32 %v183, 4294901760
      %9350 = vmatpush.msra.mxu0 %v9349
      %v9351 = vand.u32 %v182, 4294901760
      %9352 = vmatpush.msra.mxu0 %v9351
      %v9353 = vand.u32 %v181, 4294901760
      %9354 = vmatpush.msra.mxu0 %v9353
      %v9355 = vand.u32 %v180, 4294901760
      %9356 = vmatpush.msra.mxu0 %v9355
      %v9357 = vand.u32 %v179, 4294901760
      %9358 = vmatpush.msra.mxu0 %v9357
      %v9359 = vand.u32 %v178, 4294901760
      %9360 = vmatpush.msra.mxu0 %v9359
      %v9361 = vand.u32 %v177, 4294901760
      %9362 = vmatpush.msra.mxu0 %v9361
      %v9363 = vand.u32 %v176, 4294901760
      %9364 = vmatpush.msra.mxu0 %v9363
      %v9365 = vand.u32 %v175, 4294901760
      %9366 = vmatpush.msra.mxu0 %v9365
      %v9367 = vand.u32 %v174, 4294901760
      %9368 = vmatpush.msra.mxu0 %v9367
      %v9369 = vand.u32 %v173, 4294901760
      %9370 = vmatpush.msra.mxu0 %v9369
      %v9371 = vand.u32 %v172, 4294901760
      %9372 = vmatpush.msra.mxu0 %v9371
      %v9373 = vand.u32 %v171, 4294901760
      %9374 = vmatpush.msra.mxu0 %v9373
      %v9375 = vand.u32 %v9038, 4294901760
      %9376 = vmatmul.f32.gmra.mxu0 %v9375
      %v9377 = vpop.f32.mrf.mxu0
      %v9378 = vadd.f32 %v9341, %v9377
      %9379 = vdwg.mxu0
      %v9380 = vadd.f32 %v9378, 1.0
      %v9381 = vrcp.pop %v9380
      %v9382 = vmul.f32 %v9378, %v9381
      %v9383 = vadd.f32 %v9378, 1e-07
      %v9384 = vrsqrt.pop %v9383
      %v9385 = vmul.f32 %v9384, %v9383
      %v9386 = vmul.f32 %v9385, %v9384
      %v9387 = vmul.f32 0.5, %v9386
      %v9388 = vsub.f32 1.5, %v9387
      %v9389 = vmul.f32 %v9384, %v9388
      %vm9390 = vweird.f32 %v9383
      %vm9391 = vweird.f32 %v9384
      %vm9392 = vmor %vm9390, %vm9391
      %v9393 = vsel %vm9392, %v9384, %v9389
      %v9394 = vmul.f32 %v9382, %v9393
      %v9395 = vmul.f32 %v9037, %v9394
      %9396 = vst [vmem:[%s168] sm:$0xff] %v9395
      %p9397 = scmp.lt.s32.totalorder %s14, 1
      %s9398 = scalar_select %p9397, %s14, 1
      %s9399 = smul.addr %s9398, 8
      %s9400 = scalar_lea.vmem %s3, %s9399
      // Predicated region
      $region33: #{routing_forward.1} parent=31 // pred_check
        %p9401 = pneg %p100
      $region34: #{routing_forward.1} parent=31 // pred_check_branch
        %9403 = sbr.rel (%p9401) target = $region36
      $region35: #{routing_forward.1} parent=31 // pred_region
        _
      $region36: #{routing_forward.1} parent=31 // pred_fallthru
        _
    $region32: #{routing_forward.1} parent=5 // pred_fallthru
      _
    %p9404 = scmp.le.s32.totalorder 2, %s9
    // Predicated region
    $region37: #{routing_forward.1} parent=5 // pred_check
      %p9405 = pneg %p9404
    $region38: #{routing_forward.1} parent=5 // pred_check_branch
      %9407 = sbr.rel (%p9405) target = $region40
    $region39: #{routing_forward.1} parent=5 // pred_region
      %s9408 = ssub.s32 %s9, 2
      // Predicated region
      $region41: #{routing_forward.1} parent=39 // pred_check
        %p9409 = pneg %p106
      $region42: #{routing_forward.1} parent=39 // pred_check_branch
        %9411 = sbr.rel (%p9409) target = $region44
      $region43: #{routing_forward.1} parent=39 // pred_region
        %p9412 = scmp.lt.s32.totalorder %s15, 1
        %s9413 = scalar_select %p9412, %s15, 1
        %s9414 = smul.addr %s9413, 8
        %s9415 = scalar_lea.vmem %s3, %s9414
      $region44: #{routing_forward.1} parent=39 // pred_fallthru
        _
    $region40: #{routing_forward.1} parent=5 // pred_fallthru
      _
  $region6: #{routing_forward.1} parent=0 // loop_footer
    %s13 = sadd.s32 1, %s9
  $region7: #{routing_forward.1} parent=0 // loop_footer_branch
    %8 = sbr.rel target = $region3
  $region8: #{routing_forward.1} parent=0 // loop_exit
    _

</llo_original>
